<compile_context>
chip_gen: v7x
topology: tpu7x:2x2x1
jax: 0.10.0
libtpu: 0.0.40
codegen_flags: <defaults>
</compile_context>

<pallas_src>
import math
import numpy as np
import jax
import jax.numpy as jnp
from jax import lax
from jax.experimental import pallas as pl
from jax.experimental.pallas import tpu as pltpu

# ----------------------------- configuration --------------------------------
D_MODEL    = 32          # constructor arg d_model
N_LAYERS   = 2           # constructor arg N
N_HEADS    = 4           # constructor arg heads
DH         = D_MODEL // N_HEADS
DIM_FF     = 2048        # hardcoded in nn.TransformerEncoderLayer call
FEAT_SIZE  = 48          # mat2vec feature width (synthetic, small)
VOCAB      = 20          # number of "elements"; index 0 = zero/pad row
RESOLUTION = 5000        # FractionalEncoder resolution
LN_EPS     = 1e-5
B, T       = 16, 8       # batch, max elements per formula  ->  B*T = 128 rows
FF_DTYPE   = jnp.bfloat16
NEG_BIG    = -1e30       # finite "-inf" for key-padding / cross-formula mask
N_SMALL    = 16          # packed per-layer small-param rows (padded to 16)
# packed rows: 0 bq(*1/sqrt(dh)) 1 bk 2 bv 3 bo 4 ln1w 5 ln1b 6 b2 7 ln2w 8 ln2b


# ------------------------------- kernel --------------------------------------
def _layer_norm(x, w, b, eps=LN_EPS):
    """x: [BT, D]; w, b: [1, D]."""
    mu = jnp.mean(x, axis=-1, keepdims=True)
    var = jnp.mean((x - mu) ** 2, axis=-1, keepdims=True)
    return (x - mu) * lax.rsqrt(var + eps) * w + b


def _encoder_kernel(emb_ref, w_m2v_ref, pe_ref, bias_ref, valid_ref,
                    wqkv_ref, wo_ref, w1_ref, b1_ref, w2_ref, small_ref,
                    out_ref, x_acc):
    """One encoder layer per grid step; x stays resident in VMEM scratch."""
    # TODO(synk): dropout (p=0.1) is stochastic; eval-mode (identity) semantics used.
    l = pl.program_id(0)
    last = pl.num_programs(0) - 1

    # ---- layer 0: embedding projection (+ pre-folded emb scale / bias / pe) ----
    @pl.when(l == 0)
    def _():
        x_acc[...] = jnp.dot(emb_ref[...], w_m2v_ref[...],
                             preferred_element_type=jnp.float32) + pe_ref[...]

    x = x_acc[...]                               # [BT, D]
    bias = bias_ref[...]                         # [BT, BT]  0 / -1e30
    small = small_ref[...]                       # [16, D]

    # ---------------- self-attention (1/sqrt(DH) pre-folded into Wq, bq) -------
    qkv = jnp.dot(x, wqkv_ref[...], preferred_element_type=jnp.float32)   # [BT,3D]
    q = qkv[:, 0:D_MODEL] + small[0:1, :]
    k = qkv[:, D_MODEL:2 * D_MODEL] + small[1:2, :]
    v = qkv[:, 2 * D_MODEL:3 * D_MODEL] + small[2:3, :]

    ctx_heads = []
    for h in range(N_HEADS):
        sl = slice(h * DH, (h + 1) * DH)
        # full-row NT matmul: [BT, DH] x [BT, DH]^T -> [BT, BT]
        s = lax.dot_general(q[:, sl], k[:, sl],
                            (((1,), (1,)), ((), ())),
                            preferred_element_type=jnp.float32)
        s = s + bias                              # block-diag + key-padding mask
        m = jnp.max(s, axis=-1, keepdims=True)
        p = jnp.exp(s - m)
        p = p * pl.reciprocal(jnp.sum(p, axis=-1, keepdims=True), approx=True)
        ctx_heads.append(jnp.dot(p, v[:, sl],
                                 preferred_element_type=jnp.float32))     # [BT,DH]
    ctx = jnp.concatenate(ctx_heads, axis=-1)                             # [BT,D]

    # single out-projection GEMM for all heads
    attn = jnp.dot(ctx, wo_ref[...],
                   preferred_element_type=jnp.float32) + small[3:4, :]

    # residual + LayerNorm 1
    y = _layer_norm(x + attn, small[4:5, :], small[5:6, :])

    # ------------- feed-forward (bf16 weights at MXU, f32 accumulate) ----------
    h1 = jnp.dot(y.astype(FF_DTYPE), w1_ref[...],
                 preferred_element_type=jnp.float32) + b1_ref[...]        # [BT,FF]
    h1 = jnp.maximum(h1, 0.0)
    h2 = jnp.dot(h1.astype(FF_DTYPE), w2_ref[...],
                 preferred_element_type=jnp.float32) + small[6:7, :]      # [BT,D]

    # residual + LayerNorm 2
    x_new = _layer_norm(y + h2, small[7:8, :], small[8:9, :])
    x_acc[...] = x_new

    # final hmask masked_fill:  x * hmask  (hmask is 0/1 per row)
    @pl.when(l == last)
    def _():
        out_ref[...] = x_new * valid_ref[...]


# ------------------------------ forward --------------------------------------
def encoder_forward(src, frac, params):
    """Encoder.forward(src, frac) with attention=True, fractional=False."""
    res = float(RESOLUTION)
    Bq, Tq = src.shape
    bt = Bq * Tq

    # --- Embedder: embedding-table gather (glue) ---
    emb = jnp.take(params['cat_array'], src, axis=0).reshape(bt, FEAT_SIZE)

    # --- FractionalEncoder (pe, log10=False) index math + gather (glue) ---
    x_pe = jnp.where(frac < 1.0 / res, 1.0 / res, frac)
    idx_pe = jnp.round(x_pe * res).astype(jnp.int32) - 1
    pe_half = jnp.take(params['pe_table'], idx_pe, axis=0)       # [B,T,D/2]

    # --- FractionalEncoder (ple, log10=True) ---
    x_ple = 0.0025 * jnp.log2(frac) ** 2
    x_ple = jnp.where(x_ple > 1.0, 1.0, x_ple)
    x_ple = jnp.where(x_ple < 1.0 / res, 1.0 / res, x_ple)
    idx_ple = jnp.round(x_ple * res).astype(jnp.int32) - 1
    ple_half = jnp.take(params['pe_table'], idx_ple, axis=0)     # [B,T,D/2]

    # learned positional scalers (tiny scalar glue)
    pe_scale = 2.0 ** ((1.0 - params['pos_scaler']) ** 2)
    ple_scale = 2.0 ** ((1.0 - params['pos_scaler_log']) ** 2)

    # concatenate + pre-scale; fold the (emb-scaled) mat2vec bias in as well so
    # the kernel does a single full-D add.
    pe_full = jnp.concatenate([pe_half * pe_scale, ple_half * ple_scale], axis=-1)
    pe_plus = (pe_full.reshape(bt, D_MODEL) + params['b_m2v']).astype(jnp.float32)

    # mask = (frac frac^T != 0); src key padding + hmask share the same flag
    valid = (frac * frac[:, 0:1] != 0.0).reshape(bt)             # [BT] bool
    bid = jnp.arange(bt, dtype=jnp.int32) // Tq
    same = bid[:, None] == bid[None, :]                          # same-formula blocks
    attn_bias = jnp.where(same & valid[None, :], 0.0, NEG_BIG).astype(jnp.float32)
    valid_f = valid.astype(jnp.float32).reshape(bt, 1)

    grid_spec = pltpu.PrefetchScalarGridSpec(
        num_scalar_prefetch=0,
        grid=(N_LAYERS,),
        in_specs=[
            pl.BlockSpec((bt, FEAT_SIZE), lambda l: (0, 0)),             # emb
            pl.BlockSpec((FEAT_SIZE, D_MODEL), lambda l: (0, 0)),        # w_m2v_t
            pl.BlockSpec((bt, D_MODEL), lambda l: (0, 0)),               # pe_plus
            pl.BlockSpec((bt, bt), lambda l: (0, 0)),                    # attn bias
            pl.BlockSpec((bt, 1), lambda l: (0, 0)),                     # valid
            pl.BlockSpec((None, D_MODEL, 3 * D_MODEL), lambda l: (l, 0, 0)),  # wqkv
            pl.BlockSpec((None, D_MODEL, D_MODEL), lambda l: (l, 0, 0)),      # wo
            pl.BlockSpec((None, D_MODEL, DIM_FF), lambda l: (l, 0, 0)),       # w1 bf16
            pl.BlockSpec((None, 1, DIM_FF), lambda l: (l, 0, 0)),             # b1
            pl.BlockSpec((None, DIM_FF, D_MODEL), lambda l: (l, 0, 0)),       # w2 bf16
            pl.BlockSpec((None, N_SMALL, D_MODEL), lambda l: (l, 0, 0)),      # packed
        ],
        out_specs=pl.BlockSpec((bt, D_MODEL), lambda l: (0, 0)),
        scratch_shapes=[pltpu.VMEM((bt, D_MODEL), jnp.float32)],
    )

    out2d = pl.pallas_call(
        _encoder_kernel,
        out_shape=jax.ShapeDtypeStruct((bt, D_MODEL), jnp.float32),
        grid_spec=grid_spec,
        compiler_params=pltpu.CompilerParams(
            dimension_semantics=("arbitrary",)),
    )(emb, params['w_m2v_t'], pe_plus, attn_bias, valid_f,
      params['wqkv_t'], params['wo_t'], params['w1_t'], params['b1'],
      params['w2_t'], params['small'])

    return out2d.reshape(Bq, Tq, D_MODEL)


# --------------------------- deterministic params ----------------------------
def make_params(key):
    d, dhalf = D_MODEL, D_MODEL // 2
    keys = jax.random.split(key, 4 + 8 * N_LAYERS)
    ki = iter(keys)

    # mat2vec table (row 0 is the zero/pad row, as in Embedder)
    cbfv = jax.random.normal(next(ki), (VOCAB, FEAT_SIZE), jnp.float32) * 0.5
    cat_array = jnp.concatenate([jnp.zeros((1, FEAT_SIZE), jnp.float32), cbfv], 0)

    # FractionalEncoder sinusoid table [RESOLUTION, d_model//2]
    xs = np.arange(RESOLUTION, dtype=np.float32).reshape(RESOLUTION, 1)
    js = np.arange(dhalf, dtype=np.float32).reshape(1, dhalf)
    div = np.power(50.0, 2.0 * js / dhalf)
    pe_table = np.zeros((RESOLUTION, dhalf), np.float32)
    pe_table[:, 0::2] = np.sin(xs / div[:, 0::2])
    pe_table[:, 1::2] = np.cos(xs / div[:, 1::2])

    emb_scaler = jnp.float32(1.0)
    emb_mult = 2.0 ** emb_scaler        # one-time host fold into w_m2v / b_m2v

    w_m2v = jax.random.normal(next(ki), (d, FEAT_SIZE), jnp.float32) * 0.05
    b_m2v = jax.random.normal(next(ki), (1, d), jnp.float32) * 0.05

    params = {
        'cat_array': cat_array,
        'pe_table': jnp.asarray(pe_table),
        'w_m2v_t': jnp.transpose(w_m2v) * emb_mult,     # [FEAT, D], emb scale folded
        'b_m2v': b_m2v * emb_mult,                      # [1, D],   emb scale folded
        'emb_scaler': emb_scaler,
        'pos_scaler': jnp.float32(1.0),
        'pos_scaler_log': jnp.float32(1.0),
    }
    next(ki)  # burn one key for parity with earlier version

    inv_sqrt_dh = 1.0 / math.sqrt(DH)
    wqkv_t, wo_t, w1_t, b1, w2_t, small = [], [], [], [], [], []
    for _ in range(N_LAYERS):
        wqkv = jax.random.normal(next(ki), (3 * d, d), jnp.float32) * 0.05
        bqkv = jax.random.normal(next(ki), (3 * d,), jnp.float32) * 0.02
        wo = jax.random.normal(next(ki), (d, d), jnp.float32) * 0.05
        bo = jax.random.normal(next(ki), (d,), jnp.float32) * 0.02
        w1 = jax.random.normal(next(ki), (DIM_FF, d), jnp.float32) * 0.05
        b1v = jax.random.normal(next(ki), (DIM_FF,), jnp.float32) * 0.05
        w2 = jax.random.normal(next(ki), (d, DIM_FF), jnp.float32) * 0.02
        b2v = jax.random.normal(next(ki), (d,), jnp.float32) * 0.05

        # fold 1/sqrt(DH) into the query projection (rows 0:d of in_proj)
        wqkv = wqkv.at[:d].multiply(inv_sqrt_dh)
        bqkv = bqkv.at[:d].multiply(inv_sqrt_dh)

        wqkv_t.append(jnp.transpose(wqkv))                  # [D, 3D]
        wo_t.append(jnp.transpose(wo))                      # [D, D]
        w1_t.append(jnp.transpose(w1).astype(FF_DTYPE))     # [D, FF] bf16
        b1.append(b1v.reshape(1, DIM_FF))
        w2_t.append(jnp.transpose(w2).astype(FF_DTYPE))     # [FF, D] bf16

        sm = jnp.zeros((N_SMALL, d), jnp.float32)
        sm = sm.at[0].set(bqkv[0:d])          # bq (scaled)
        sm = sm.at[1].set(bqkv[d:2 * d])      # bk
        sm = sm.at[2].set(bqkv[2 * d:])       # bv
        sm = sm.at[3].set(bo)                 # out-proj bias
        sm = sm.at[4].set(jnp.ones((d,), jnp.float32))    # ln1 weight
        sm = sm.at[5].set(jnp.zeros((d,), jnp.float32))   # ln1 bias
        sm = sm.at[6].set(b2v)                # FFN second bias
        sm = sm.at[7].set(jnp.ones((d,), jnp.float32))    # ln2 weight
        sm = sm.at[8].set(jnp.zeros((d,), jnp.float32))   # ln2 bias
        small.append(sm)

    params.update({
        'wqkv_t': jnp.stack(wqkv_t), 'wo_t': jnp.stack(wo_t),
        'w1_t': jnp.stack(w1_t), 'b1': jnp.stack(b1),
        'w2_t': jnp.stack(w2_t), 'small': jnp.stack(small),
    })
    return params


# --------------------------------- main ---------------------------------------
if __name__ == "__main__":
    key = jax.random.PRNGKey(0)
    k_src, k_frac, k_nv, k_par = jax.random.split(key, 4)

    # synthetic formulas: first n_valid positions are real elements, rest padded
    n_valid = np.array(jax.random.randint(k_nv, (B,), 1, T + 1))
    src_all = np.array(jax.random.randint(k_src, (B, T), 1, VOCAB + 1))
    frac_all = np.array(jax.random.uniform(k_frac, (B, T), minval=0.1, maxval=1.0))
    src_np = np.zeros((B, T), np.int32)
    frac_np = np.zeros((B, T), np.float32)
    for b in range(B):
        nv = int(n_valid[b])
        src_np[b, :nv] = src_all[b, :nv]
        f = frac_all[b, :nv]
        frac_np[b, :nv] = f / f.sum()

    src = jnp.asarray(src_np)        # int32 [B, T]
    frac = jnp.asarray(frac_np)      # float32 [B, T]

    params = make_params(k_par)

    out = jax.jit(encoder_forward)(src, frac, params)
    out = jax.block_until_ready(out)
    assert out.shape == (B, T, D_MODEL)
    assert bool(jnp.all(jnp.isfinite(out)))
    print("KERNEL_OK")
</pallas_src>

<mosaic_0001>
module attributes {stable_mosaic.version = 11 : i64} {
  func.func @_encoder_kernel(%arg0: i32, %arg1: memref<128x48xf32, #tpu.memory_space<vmem>>, %arg2: memref<48x32xf32, #tpu.memory_space<vmem>>, %arg3: memref<128x32xf32, #tpu.memory_space<vmem>>, %arg4: memref<128x128xf32, #tpu.memory_space<vmem>>, %arg5: memref<128x1xf32, #tpu.memory_space<vmem>>, %arg6: memref<1x32x96xf32, #tpu.memory_space<vmem>>, %arg7: memref<1x32x32xf32, #tpu.memory_space<vmem>>, %arg8: memref<1x32x2048xbf16, #tpu.memory_space<vmem>>, %arg9: memref<1x1x2048xf32, #tpu.memory_space<vmem>>, %arg10: memref<1x2048x32xbf16, #tpu.memory_space<vmem>>, %arg11: memref<1x16x32xf32, #tpu.memory_space<vmem>>, %arg12: memref<128x32xf32, #tpu.memory_space<vmem>>, %arg13: memref<128x32xf32, #tpu.memory_space<vmem>>) attributes {dimension_semantics = [#tpu.dimension_semantics<arbitrary>], iteration_bounds = array<i64: 2>, scalar_prefetch = 0 : i64, scratch_operands = 1 : i64, tpu.core_type = #tpu.core_type<tc>, window_params = [{pipeline_mode = #tpu.pipeline_mode<synchronous>, transform_indices = @transform_0, window_bounds = array<i64: 128, 48>}, {pipeline_mode = #tpu.pipeline_mode<synchronous>, transform_indices = @transform_1, window_bounds = array<i64: 48, 32>}, {pipeline_mode = #tpu.pipeline_mode<synchronous>, transform_indices = @transform_2, window_bounds = array<i64: 128, 32>}, {pipeline_mode = #tpu.pipeline_mode<synchronous>, transform_indices = @transform_3, window_bounds = array<i64: 128, 128>}, {pipeline_mode = #tpu.pipeline_mode<synchronous>, transform_indices = @transform_4, window_bounds = array<i64: 128, 1>}, {transform_indices = @transform_5, window_bounds = array<i64: 1, 32, 96>}, {transform_indices = @transform_6, window_bounds = array<i64: 1, 32, 32>}, {transform_indices = @transform_7, window_bounds = array<i64: 1, 32, 2048>}, {transform_indices = @transform_8, window_bounds = array<i64: 1, 1, 2048>}, {transform_indices = @transform_9, window_bounds = array<i64: 1, 2048, 32>}, {transform_indices = @transform_10, window_bounds = array<i64: 1, 16, 32>}, {pipeline_mode = #tpu.pipeline_mode<synchronous>, transform_indices = @transform_11, window_bounds = array<i64: 128, 32>}]} {
    %c0_i32 = arith.constant 0 : i32
    %0 = arith.cmpi eq, %arg0, %c0_i32 : i32
    %1 = arith.extui %0 : i1 to i32
    %c0_i32_0 = arith.constant 0 : i32
    %2 = arith.cmpi ne, %1, %c0_i32_0 : i32
    scf.if %2 {
      %c0_55 = arith.constant 0 : index
      %c0_56 = arith.constant 0 : index
      %164 = vector.load %arg1[%c0_55, %c0_56] : memref<128x48xf32, #tpu.memory_space<vmem>>, vector<128x48xf32>
      %c0_57 = arith.constant 0 : index
      %c0_58 = arith.constant 0 : index
      %165 = vector.load %arg2[%c0_57, %c0_58] : memref<48x32xf32, #tpu.memory_space<vmem>>, vector<48x32xf32>
      %cst_59 = arith.constant dense<0.000000e+00> : vector<128x32xf32>
      %166 = tpu.matmul %164, %165, %cst_59 {dimension_numbers = #tpu.dot_dimension_numbers<[1], [0], [0], [1], [0, 0, 1, 1], [], []>} : vector<128x48xf32>, vector<48x32xf32>, vector<128x32xf32> -> vector<128x32xf32>
      %c0_60 = arith.constant 0 : index
      %c0_61 = arith.constant 0 : index
      %167 = vector.load %arg3[%c0_60, %c0_61] : memref<128x32xf32, #tpu.memory_space<vmem>>, vector<128x32xf32>
      %168 = arith.addf %166, %167 : vector<128x32xf32>
      %c0_62 = arith.constant 0 : index
      %c0_63 = arith.constant 0 : index
      %169 = vector.load %arg13[%c0_62, %c0_63] : memref<128x32xf32, #tpu.memory_space<vmem>>, vector<128x32xf32>
      tpu.vector_store %arg13[%c0_62, %c0_63], %168 {strides = array<i32>} : memref<128x32xf32, #tpu.memory_space<vmem>>, vector<128x32xf32>,
    } else {
    }
    %c0 = arith.constant 0 : index
    %c0_1 = arith.constant 0 : index
    %3 = vector.load %arg13[%c0, %c0_1] : memref<128x32xf32, #tpu.memory_space<vmem>>, vector<128x32xf32>
    %c0_2 = arith.constant 0 : index
    %c0_3 = arith.constant 0 : index
    %4 = vector.load %arg4[%c0_2, %c0_3] : memref<128x128xf32, #tpu.memory_space<vmem>>, vector<128x128xf32>
    %c0_4 = arith.constant 0 : index
    %c0_5 = arith.constant 0 : index
    %c0_6 = arith.constant 0 : index
    %5 = vector.load %arg11[%c0_4, %c0_5, %c0_6] : memref<1x16x32xf32, #tpu.memory_space<vmem>>, vector<1x16x32xf32>
    %6 = vector.shape_cast %5 : vector<1x16x32xf32> to vector<16x32xf32>
    %c0_7 = arith.constant 0 : index
    %c0_8 = arith.constant 0 : index
    %c0_9 = arith.constant 0 : index
    %7 = vector.load %arg6[%c0_7, %c0_8, %c0_9] : memref<1x32x96xf32, #tpu.memory_space<vmem>>, vector<1x32x96xf32>
    %8 = vector.shape_cast %7 : vector<1x32x96xf32> to vector<32x96xf32>
    %cst = arith.constant dense<0.000000e+00> : vector<128x96xf32>
    %9 = tpu.matmul %3, %8, %cst {dimension_numbers = #tpu.dot_dimension_numbers<[1], [0], [0], [1], [0, 0, 1, 1], [], []>} : vector<128x32xf32>, vector<32x96xf32>, vector<128x96xf32> -> vector<128x96xf32>
    %10 = vector.extract_strided_slice %9 {offsets = [0, 0], sizes = [128, 32], strides = [1, 1]} : vector<128x96xf32> to vector<128x32xf32>
    %11 = vector.extract_strided_slice %6 {offsets = [0, 0], sizes = [1, 32], strides = [1, 1]} : vector<16x32xf32> to vector<1x32xf32>
    %12 = vector.broadcast %11 : vector<1x32xf32> to vector<128x32xf32>
    %13 = arith.addf %10, %12 : vector<128x32xf32>
    %14 = vector.extract_strided_slice %9 {offsets = [0, 32], sizes = [128, 32], strides = [1, 1]} : vector<128x96xf32> to vector<128x32xf32>
    %15 = vector.extract_strided_slice %6 {offsets = [1, 0], sizes = [1, 32], strides = [1, 1]} : vector<16x32xf32> to vector<1x32xf32>
    %16 = vector.broadcast %15 : vector<1x32xf32> to vector<128x32xf32>
    %17 = arith.addf %14, %16 : vector<128x32xf32>
    %18 = vector.extract_strided_slice %9 {offsets = [0, 64], sizes = [128, 32], strides = [1, 1]} : vector<128x96xf32> to vector<128x32xf32>
    %19 = vector.extract_strided_slice %6 {offsets = [2, 0], sizes = [1, 32], strides = [1, 1]} : vector<16x32xf32> to vector<1x32xf32>
    %20 = vector.broadcast %19 : vector<1x32xf32> to vector<128x32xf32>
    %21 = arith.addf %18, %20 : vector<128x32xf32>
    %22 = vector.extract_strided_slice %13 {offsets = [0, 0], sizes = [128, 8], strides = [1, 1]} : vector<128x32xf32> to vector<128x8xf32>
    %23 = vector.extract_strided_slice %17 {offsets = [0, 0], sizes = [128, 8], strides = [1, 1]} : vector<128x32xf32> to vector<128x8xf32>
    %cst_10 = arith.constant dense<0.000000e+00> : vector<128x128xf32>
    %24 = tpu.matmul %22, %23, %cst_10 {dimension_numbers = #tpu.dot_dimension_numbers<[1], [1], [0], [0], [0, 0, 1, 0], [], []>} : vector<128x8xf32>, vector<128x8xf32>, vector<128x128xf32> -> vector<128x128xf32>
    %25 = arith.addf %24, %4 : vector<128x128xf32>
    %cst_11 = arith.constant dense<0xFF800000> : vector<128xf32>
    %26 = vector.multi_reduction <maximumf>, %25, %cst_11 [1] : vector<128x128xf32> to vector<128xf32>
    %27 = vector.shape_cast %26 : vector<128xf32> to vector<128x1xf32>
    %28 = vector.broadcast %27 : vector<128x1xf32> to vector<128x128xf32>
    %29 = arith.subf %25, %28 : vector<128x128xf32>
    %30 = math.exp %29 : vector<128x128xf32>
    %cst_12 = arith.constant dense<0.000000e+00> : vector<128xf32>
    %31 = vector.multi_reduction <add>, %30, %cst_12 [1] : vector<128x128xf32> to vector<128xf32>
    %32 = vector.shape_cast %31 : vector<128xf32> to vector<128x1xf32>
    %33 = tpu.reciprocal %32 {approx = true} : vector<128x1xf32> -> vector<128x1xf32>
    %34 = vector.broadcast %33 : vector<128x1xf32> to vector<128x128xf32>
    %35 = arith.mulf %30, %34 : vector<128x128xf32>
    %36 = vector.extract_strided_slice %21 {offsets = [0, 0], sizes = [128, 8], strides = [1, 1]} : vector<128x32xf32> to vector<128x8xf32>
    %cst_13 = arith.constant dense<0.000000e+00> : vector<128x8xf32>
    %37 = tpu.matmul %35, %36, %cst_13 {dimension_numbers = #tpu.dot_dimension_numbers<[1], [0], [0], [1], [0, 0, 1, 1], [], []>} : vector<128x128xf32>, vector<128x8xf32>, vector<128x8xf32> -> vector<128x8xf32>
    %38 = vector.extract_strided_slice %13 {offsets = [0, 8], sizes = [128, 8], strides = [1, 1]} : vector<128x32xf32> to vector<128x8xf32>
    %39 = vector.extract_strided_slice %17 {offsets = [0, 8], sizes = [128, 8], strides = [1, 1]} : vector<128x32xf32> to vector<128x8xf32>
    %cst_14 = arith.constant dense<0.000000e+00> : vector<128x128xf32>
    %40 = tpu.matmul %38, %39, %cst_14 {dimension_numbers = #tpu.dot_dimension_numbers<[1], [1], [0], [0], [0, 0, 1, 0], [], []>} : vector<128x8xf32>, vector<128x8xf32>, vector<128x128xf32> -> vector<128x128xf32>
    %41 = arith.addf %40, %4 : vector<128x128xf32>
    %cst_15 = arith.constant dense<0xFF800000> : vector<128xf32>
    %42 = vector.multi_reduction <maximumf>, %41, %cst_15 [1] : vector<128x128xf32> to vector<128xf32>
    %43 = vector.shape_cast %42 : vector<128xf32> to vector<128x1xf32>
    %44 = vector.broadcast %43 : vector<128x1xf32> to vector<128x128xf32>
    %45 = arith.subf %41, %44 : vector<128x128xf32>
    %46 = math.exp %45 : vector<128x128xf32>
    %cst_16 = arith.constant dense<0.000000e+00> : vector<128xf32>
    %47 = vector.multi_reduction <add>, %46, %cst_16 [1] : vector<128x128xf32> to vector<128xf32>
    %48 = vector.shape_cast %47 : vector<128xf32> to vector<128x1xf32>
    %49 = tpu.reciprocal %48 {approx = true} : vector<128x1xf32> -> vector<128x1xf32>
    %50 = vector.broadcast %49 : vector<128x1xf32> to vector<128x128xf32>
    %51 = arith.mulf %46, %50 : vector<128x128xf32>
    %52 = vector.extract_strided_slice %21 {offsets = [0, 8], sizes = [128, 8], strides = [1, 1]} : vector<128x32xf32> to vector<128x8xf32>
    %cst_17 = arith.constant dense<0.000000e+00> : vector<128x8xf32>
    %53 = tpu.matmul %51, %52, %cst_17 {dimension_numbers = #tpu.dot_dimension_numbers<[1], [0], [0], [1], [0, 0, 1, 1], [], []>} : vector<128x128xf32>, vector<128x8xf32>, vector<128x8xf32> -> vector<128x8xf32>
    %54 = vector.extract_strided_slice %13 {offsets = [0, 16], sizes = [128, 8], strides = [1, 1]} : vector<128x32xf32> to vector<128x8xf32>
    %55 = vector.extract_strided_slice %17 {offsets = [0, 16], sizes = [128, 8], strides = [1, 1]} : vector<128x32xf32> to vector<128x8xf32>
    %cst_18 = arith.constant dense<0.000000e+00> : vector<128x128xf32>
    %56 = tpu.matmul %54, %55, %cst_18 {dimension_numbers = #tpu.dot_dimension_numbers<[1], [1], [0], [0], [0, 0, 1, 0], [], []>} : vector<128x8xf32>, vector<128x8xf32>, vector<128x128xf32> -> vector<128x128xf32>
    %57 = arith.addf %56, %4 : vector<128x128xf32>
    %cst_19 = arith.constant dense<0xFF800000> : vector<128xf32>
    %58 = vector.multi_reduction <maximumf>, %57, %cst_19 [1] : vector<128x128xf32> to vector<128xf32>
    %59 = vector.shape_cast %58 : vector<128xf32> to vector<128x1xf32>
    %60 = vector.broadcast %59 : vector<128x1xf32> to vector<128x128xf32>
    %61 = arith.subf %57, %60 : vector<128x128xf32>
    %62 = math.exp %61 : vector<128x128xf32>
    %cst_20 = arith.constant dense<0.000000e+00> : vector<128xf32>
    %63 = vector.multi_reduction <add>, %62, %cst_20 [1] : vector<128x128xf32> to vector<128xf32>
    %64 = vector.shape_cast %63 : vector<128xf32> to vector<128x1xf32>
    %65 = tpu.reciprocal %64 {approx = true} : vector<128x1xf32> -> vector<128x1xf32>
    %66 = vector.broadcast %65 : vector<128x1xf32> to vector<128x128xf32>
    %67 = arith.mulf %62, %66 : vector<128x128xf32>
    %68 = vector.extract_strided_slice %21 {offsets = [0, 16], sizes = [128, 8], strides = [1, 1]} : vector<128x32xf32> to vector<128x8xf32>
    %cst_21 = arith.constant dense<0.000000e+00> : vector<128x8xf32>
    %69 = tpu.matmul %67, %68, %cst_21 {dimension_numbers = #tpu.dot_dimension_numbers<[1], [0], [0], [1], [0, 0, 1, 1], [], []>} : vector<128x128xf32>, vector<128x8xf32>, vector<128x8xf32> -> vector<128x8xf32>
    %70 = vector.extract_strided_slice %13 {offsets = [0, 24], sizes = [128, 8], strides = [1, 1]} : vector<128x32xf32> to vector<128x8xf32>
    %71 = vector.extract_strided_slice %17 {offsets = [0, 24], sizes = [128, 8], strides = [1, 1]} : vector<128x32xf32> to vector<128x8xf32>
    %cst_22 = arith.constant dense<0.000000e+00> : vector<128x128xf32>
    %72 = tpu.matmul %70, %71, %cst_22 {dimension_numbers = #tpu.dot_dimension_numbers<[1], [1], [0], [0], [0, 0, 1, 0], [], []>} : vector<128x8xf32>, vector<128x8xf32>, vector<128x128xf32> -> vector<128x128xf32>
    %73 = arith.addf %72, %4 : vector<128x128xf32>
    %cst_23 = arith.constant dense<0xFF800000> : vector<128xf32>
    %74 = vector.multi_reduction <maximumf>, %73, %cst_23 [1] : vector<128x128xf32> to vector<128xf32>
    %75 = vector.shape_cast %74 : vector<128xf32> to vector<128x1xf32>
    %76 = vector.broadcast %75 : vector<128x1xf32> to vector<128x128xf32>
    %77 = arith.subf %73, %76 : vector<128x128xf32>
    %78 = math.exp %77 : vector<128x128xf32>
    %cst_24 = arith.constant dense<0.000000e+00> : vector<128xf32>
    %79 = vector.multi_reduction <add>, %78, %cst_24 [1] : vector<128x128xf32> to vector<128xf32>
    %80 = vector.shape_cast %79 : vector<128xf32> to vector<128x1xf32>
    %81 = tpu.reciprocal %80 {approx = true} : vector<128x1xf32> -> vector<128x1xf32>
    %82 = vector.broadcast %81 : vector<128x1xf32> to vector<128x128xf32>
    %83 = arith.mulf %78, %82 : vector<128x128xf32>
    %84 = vector.extract_strided_slice %21 {offsets = [0, 24], sizes = [128, 8], strides = [1, 1]} : vector<128x32xf32> to vector<128x8xf32>
    %cst_25 = arith.constant dense<0.000000e+00> : vector<128x8xf32>
    %85 = tpu.matmul %83, %84, %cst_25 {dimension_numbers = #tpu.dot_dimension_numbers<[1], [0], [0], [1], [0, 0, 1, 1], [], []>} : vector<128x128xf32>, vector<128x8xf32>, vector<128x8xf32> -> vector<128x8xf32>
    %86 = tpu.concatenate %37, %53, %69, %85 in 1 : vector<128x8xf32>, vector<128x8xf32>, vector<128x8xf32>, vector<128x8xf32> -> vector<128x32xf32>
    %c0_26 = arith.constant 0 : index
    %c0_27 = arith.constant 0 : index
    %c0_28 = arith.constant 0 : index
    %87 = vector.load %arg7[%c0_26, %c0_27, %c0_28] : memref<1x32x32xf32, #tpu.memory_space<vmem>>, vector<1x32x32xf32>
    %88 = vector.shape_cast %87 : vector<1x32x32xf32> to vector<32x32xf32>
    %cst_29 = arith.constant dense<0.000000e+00> : vector<128x32xf32>
    %89 = tpu.matmul %86, %88, %cst_29 {dimension_numbers = #tpu.dot_dimension_numbers<[1], [0], [0], [1], [0, 0, 1, 1], [], []>} : vector<128x32xf32>, vector<32x32xf32>, vector<128x32xf32> -> vector<128x32xf32>
    %90 = vector.extract_strided_slice %6 {offsets = [3, 0], sizes = [1, 32], strides = [1, 1]} : vector<16x32xf32> to vector<1x32xf32>
    %91 = vector.broadcast %90 : vector<1x32xf32> to vector<128x32xf32>
    %92 = arith.addf %89, %91 : vector<128x32xf32>
    %93 = arith.addf %3, %92 : vector<128x32xf32>
    %94 = vector.extract_strided_slice %6 {offsets = [4, 0], sizes = [1, 32], strides = [1, 1]} : vector<16x32xf32> to vector<1x32xf32>
    %95 = vector.extract_strided_slice %6 {offsets = [5, 0], sizes = [1, 32], strides = [1, 1]} : vector<16x32xf32> to vector<1x32xf32>
    %cst_30 = arith.constant dense<0.000000e+00> : vector<128xf32>
    %96 = vector.multi_reduction <add>, %93, %cst_30 [1] : vector<128x32xf32> to vector<128xf32>
    %97 = vector.shape_cast %96 : vector<128xf32> to vector<128x1xf32>
    %cst_31 = arith.constant 3.200000e+01 : f32
    %98 = vector.broadcast %cst_31 : f32 to vector<128x1xf32>
    %99 = arith.divf %97, %98 : vector<128x1xf32>
    %100 = vector.broadcast %99 : vector<128x1xf32> to vector<128x32xf32>
    %101 = arith.subf %93, %100 : vector<128x32xf32>
    %102 = arith.mulf %101, %101 : vector<128x32xf32>
    %cst_32 = arith.constant dense<0.000000e+00> : vector<128xf32>
    %103 = vector.multi_reduction <add>, %102, %cst_32 [1] : vector<128x32xf32> to vector<128xf32>
    %104 = vector.shape_cast %103 : vector<128xf32> to vector<128x1xf32>
    %cst_33 = arith.constant 3.200000e+01 : f32
    %105 = vector.broadcast %cst_33 : f32 to vector<128x1xf32>
    %106 = arith.divf %104, %105 : vector<128x1xf32>
    %107 = vector.broadcast %99 : vector<128x1xf32> to vector<128x32xf32>
    %108 = arith.subf %93, %107 : vector<128x32xf32>
    %cst_34 = arith.constant 9.99999974E-6 : f32
    %109 = vector.broadcast %cst_34 : f32 to vector<128x1xf32>
    %110 = arith.addf %106, %109 : vector<128x1xf32>
    %111 = math.rsqrt %110 : vector<128x1xf32>
    %112 = vector.broadcast %111 : vector<128x1xf32> to vector<128x32xf32>
    %113 = arith.mulf %108, %112 : vector<128x32xf32>
    %114 = vector.broadcast %94 : vector<1x32xf32> to vector<128x32xf32>
    %115 = arith.mulf %113, %114 : vector<128x32xf32>
    %116 = vector.broadcast %95 : vector<1x32xf32> to vector<128x32xf32>
    %117 = arith.addf %115, %116 : vector<128x32xf32>
    %118 = arith.truncf %117 : vector<128x32xf32> to vector<128x32xbf16>
    %c0_35 = arith.constant 0 : index
    %c0_36 = arith.constant 0 : index
    %c0_37 = arith.constant 0 : index
    %119 = vector.load %arg8[%c0_35, %c0_36, %c0_37] : memref<1x32x2048xbf16, #tpu.memory_space<vmem>>, vector<1x32x2048xbf16>
    %120 = vector.shape_cast %119 : vector<1x32x2048xbf16> to vector<32x2048xbf16>
    %cst_38 = arith.constant dense<0.000000e+00> : vector<128x2048xf32>
    %121 = tpu.matmul %118, %120, %cst_38 {dimension_numbers = #tpu.dot_dimension_numbers<[1], [0], [0], [1], [0, 0, 1, 1], [], []>} : vector<128x32xbf16>, vector<32x2048xbf16>, vector<128x2048xf32> -> vector<128x2048xf32>
    %c0_39 = arith.constant 0 : index
    %c0_40 = arith.constant 0 : index
    %c0_41 = arith.constant 0 : index
    %122 = vector.load %arg9[%c0_39, %c0_40, %c0_41] : memref<1x1x2048xf32, #tpu.memory_space<vmem>>, vector<1x1x2048xf32>
    %123 = vector.shape_cast %122 : vector<1x1x2048xf32> to vector<1x2048xf32>
    %124 = vector.broadcast %123 : vector<1x2048xf32> to vector<128x2048xf32>
    %125 = arith.addf %121, %124 : vector<128x2048xf32>
    %cst_42 = arith.constant 0.000000e+00 : f32
    %126 = vector.broadcast %cst_42 : f32 to vector<128x2048xf32>
    %127 = arith.maximumf %125, %126 : vector<128x2048xf32>
    %128 = arith.truncf %127 : vector<128x2048xf32> to vector<128x2048xbf16>
    %c0_43 = arith.constant 0 : index
    %c0_44 = arith.constant 0 : index
    %c0_45 = arith.constant 0 : index
    %129 = vector.load %arg10[%c0_43, %c0_44, %c0_45] : memref<1x2048x32xbf16, #tpu.memory_space<vmem>>, vector<1x2048x32xbf16>
    %130 = vector.shape_cast %129 : vector<1x2048x32xbf16> to vector<2048x32xbf16>
    %cst_46 = arith.constant dense<0.000000e+00> : vector<128x32xf32>
    %131 = tpu.matmul %128, %130, %cst_46 {dimension_numbers = #tpu.dot_dimension_numbers<[1], [0], [0], [1], [0, 0, 1, 1], [], []>} : vector<128x2048xbf16>, vector<2048x32xbf16>, vector<128x32xf32> -> vector<128x32xf32>
    %132 = vector.extract_strided_slice %6 {offsets = [6, 0], sizes = [1, 32], strides = [1, 1]} : vector<16x32xf32> to vector<1x32xf32>
    %133 = vector.broadcast %132 : vector<1x32xf32> to vector<128x32xf32>
    %134 = arith.addf %131, %133 : vector<128x32xf32>
    %135 = arith.addf %117, %134 : vector<128x32xf32>
    %136 = vector.extract_strided_slice %6 {offsets = [7, 0], sizes = [1, 32], strides = [1, 1]} : vector<16x32xf32> to vector<1x32xf32>
    %137 = vector.extract_strided_slice %6 {offsets = [8, 0], sizes = [1, 32], strides = [1, 1]} : vector<16x32xf32> to vector<1x32xf32>
    %cst_47 = arith.constant dense<0.000000e+00> : vector<128xf32>
    %138 = vector.multi_reduction <add>, %135, %cst_47 [1] : vector<128x32xf32> to vector<128xf32>
    %139 = vector.shape_cast %138 : vector<128xf32> to vector<128x1xf32>
    %cst_48 = arith.constant 3.200000e+01 : f32
    %140 = vector.broadcast %cst_48 : f32 to vector<128x1xf32>
    %141 = arith.divf %139, %140 : vector<128x1xf32>
    %142 = vector.broadcast %141 : vector<128x1xf32> to vector<128x32xf32>
    %143 = arith.subf %135, %142 : vector<128x32xf32>
    %144 = arith.mulf %143, %143 : vector<128x32xf32>
    %cst_49 = arith.constant dense<0.000000e+00> : vector<128xf32>
    %145 = vector.multi_reduction <add>, %144, %cst_49 [1] : vector<128x32xf32> to vector<128xf32>
    %146 = vector.shape_cast %145 : vector<128xf32> to vector<128x1xf32>
    %cst_50 = arith.constant 3.200000e+01 : f32
    %147 = vector.broadcast %cst_50 : f32 to vector<128x1xf32>
    %148 = arith.divf %146, %147 : vector<128x1xf32>
    %149 = vector.broadcast %141 : vector<128x1xf32> to vector<128x32xf32>
    %150 = arith.subf %135, %149 : vector<128x32xf32>
    %cst_51 = arith.constant 9.99999974E-6 : f32
    %151 = vector.broadcast %cst_51 : f32 to vector<128x1xf32>
    %152 = arith.addf %148, %151 : vector<128x1xf32>
    %153 = math.rsqrt %152 : vector<128x1xf32>
    %154 = vector.broadcast %153 : vector<128x1xf32> to vector<128x32xf32>
    %155 = arith.mulf %150, %154 : vector<128x32xf32>
    %156 = vector.broadcast %136 : vector<1x32xf32> to vector<128x32xf32>
    %157 = arith.mulf %155, %156 : vector<128x32xf32>
    %158 = vector.broadcast %137 : vector<1x32xf32> to vector<128x32xf32>
    %159 = arith.addf %157, %158 : vector<128x32xf32>
    %c0_52 = arith.constant 0 : index
    %c0_53 = arith.constant 0 : index
    %160 = vector.load %arg13[%c0_52, %c0_53] : memref<128x32xf32, #tpu.memory_space<vmem>>, vector<128x32xf32>
    tpu.vector_store %arg13[%c0_52, %c0_53], %159 {strides = array<i32>} : memref<128x32xf32, #tpu.memory_space<vmem>>, vector<128x32xf32>,
    %c1_i32 = arith.constant 1 : i32
    %161 = arith.cmpi eq, %arg0, %c1_i32 : i32
    %162 = arith.extui %161 : i1 to i32
    %c0_i32_54 = arith.constant 0 : i32
    %163 = arith.cmpi ne, %162, %c0_i32_54 : i32
    scf.if %163 {
      %c0_55 = arith.constant 0 : index
      %c0_56 = arith.constant 0 : index
      %164 = vector.load %arg5[%c0_55, %c0_56] : memref<128x1xf32, #tpu.memory_space<vmem>>, vector<128x1xf32>
      %165 = vector.broadcast %164 : vector<128x1xf32> to vector<128x32xf32>
      %166 = arith.mulf %159, %165 : vector<128x32xf32>
      %c0_57 = arith.constant 0 : index
      %c0_58 = arith.constant 0 : index
      %167 = vector.load %arg12[%c0_57, %c0_58] : memref<128x32xf32, #tpu.memory_space<vmem>>, vector<128x32xf32>
      tpu.vector_store %arg12[%c0_57, %c0_58], %166 {strides = array<i32>} : memref<128x32xf32, #tpu.memory_space<vmem>>, vector<128x32xf32>,
    } else {
    }
    return
  }
  func.func @transform_0(%arg0: i32) -> (i32, i32) {
    %c0_i32 = arith.constant 0 : i32
    %c0_i32_0 = arith.constant 0 : i32
    %c0_i32_1 = arith.constant 0 : i32
    return %c0_i32, %c0_i32_0 : i32, i32
  }
  func.func @transform_1(%arg0: i32) -> (i32, i32) {
    %c0_i32 = arith.constant 0 : i32
    %c0_i32_0 = arith.constant 0 : i32
    %c0_i32_1 = arith.constant 0 : i32
    return %c0_i32, %c0_i32_0 : i32, i32
  }
  func.func @transform_2(%arg0: i32) -> (i32, i32) {
    %c0_i32 = arith.constant 0 : i32
    %c0_i32_0 = arith.constant 0 : i32
    %c0_i32_1 = arith.constant 0 : i32
    return %c0_i32, %c0_i32_0 : i32, i32
  }
  func.func @transform_3(%arg0: i32) -> (i32, i32) {
    %c0_i32 = arith.constant 0 : i32
    %c0_i32_0 = arith.constant 0 : i32
    %c0_i32_1 = arith.constant 0 : i32
    return %c0_i32, %c0_i32_0 : i32, i32
  }
  func.func @transform_4(%arg0: i32) -> (i32, i32) {
    %c0_i32 = arith.constant 0 : i32
    %c0_i32_0 = arith.constant 0 : i32
    %c0_i32_1 = arith.constant 0 : i32
    return %c0_i32, %c0_i32_0 : i32, i32
  }
  func.func @transform_5(%arg0: i32) -> (i32, i32, i32) {
    %c0_i32 = arith.constant 0 : i32
    %c0_i32_0 = arith.constant 0 : i32
    %c0_i32_1 = arith.constant 0 : i32
    return %arg0, %c0_i32, %c0_i32_0 : i32, i32, i32
  }
  func.func @transform_6(%arg0: i32) -> (i32, i32, i32) {
    %c0_i32 = arith.constant 0 : i32
    %c0_i32_0 = arith.constant 0 : i32
    %c0_i32_1 = arith.constant 0 : i32
    return %arg0, %c0_i32, %c0_i32_0 : i32, i32, i32
  }
  func.func @transform_7(%arg0: i32) -> (i32, i32, i32) {
    %c0_i32 = arith.constant 0 : i32
    %c0_i32_0 = arith.constant 0 : i32
    %c0_i32_1 = arith.constant 0 : i32
    return %arg0, %c0_i32, %c0_i32_0 : i32, i32, i32
  }
  func.func @transform_8(%arg0: i32) -> (i32, i32, i32) {
    %c0_i32 = arith.constant 0 : i32
    %c0_i32_0 = arith.constant 0 : i32
    %c0_i32_1 = arith.constant 0 : i32
    return %arg0, %c0_i32, %c0_i32_0 : i32, i32, i32
  }
  func.func @transform_9(%arg0: i32) -> (i32, i32, i32) {
    %c0_i32 = arith.constant 0 : i32
    %c0_i32_0 = arith.constant 0 : i32
    %c0_i32_1 = arith.constant 0 : i32
    return %arg0, %c0_i32, %c0_i32_0 : i32, i32, i32
  }
  func.func @transform_10(%arg0: i32) -> (i32, i32, i32) {
    %c0_i32 = arith.constant 0 : i32
    %c0_i32_0 = arith.constant 0 : i32
    %c0_i32_1 = arith.constant 0 : i32
    return %arg0, %c0_i32, %c0_i32_0 : i32, i32, i32
  }
  func.func @transform_11(%arg0: i32) -> (i32, i32) {
    %c0_i32 = arith.constant 0 : i32
    %c0_i32_0 = arith.constant 0 : i32
    %c0_i32_1 = arith.constant 0 : i32
    return %c0_i32, %c0_i32_0 : i32, i32
  }
}

</mosaic_0001>

<llo_original>
// kernel: encoder_forward.1
$region0: #{encoder_forward.1}
  #allocation0 [shape = 'u32[]', space=smem, size = 0x4, offset = 0x4, fixed_abs, tag = 'smem constant byte address 0x4 - core index']
  #allocation1 [shape = 'u32[144,128]{1,0:T(1,128)}', space=vmem, size = 0x12000, scoped, tag = 'internal scratch']
  #allocation2 [shape = 'f32[128,32]{1,0:T(8,128)}', space=vmem, size = 0x10000, scoped, tag = 'scratch operand']
  %s0 = inlined_call_operand.vmem [shape: f32[128,48], index: 0, kind: input, shape index: {}]
  %s1 = inlined_call_operand.vmem [shape: f32[48,32], index: 1, kind: input, shape index: {}]
  %s2 = inlined_call_operand.vmem [shape: f32[128,32], index: 2, kind: input, shape index: {}]
  %s3 = inlined_call_operand.vmem [shape: f32[128,128], index: 3, kind: input, shape index: {}]
  %s4 = inlined_call_operand.vmem [shape: f32[128,1], index: 4, kind: input, shape index: {}]
  %s5 = inlined_call_operand.vmem [shape: f32[2,32,96], index: 5, kind: input, shape index: {}]
  %s6 = inlined_call_operand.vmem [shape: f32[2,32,32], index: 6, kind: input, shape index: {}]
  %s7 = inlined_call_operand.vmem [shape: bf16[2,32,2048], index: 7, kind: input, shape index: {}]
  %s8 = inlined_call_operand.vmem [shape: f32[2,1,2048], index: 8, kind: input, shape index: {}]
  %s9 = inlined_call_operand.vmem [shape: bf16[2,2048,32], index: 9, kind: input, shape index: {}]
  %s10 = inlined_call_operand.vmem [shape: f32[2,16,32], index: 10, kind: input, shape index: {}]
  %s11 = inlined_call_operand.hbm [shape: f32[128,32], index: 11, kind: output, shape index: {}]
  %s12 = sld [smem:[#allocation0]]
  $region85: #{encoder_forward.1} parent=0
    _
  %s14 = ssub.s32 1, %s12
  %s15 = scalar_select 0, %s14, %s12
  $region1: #{encoder_forward.1} parent=0
    #allocation3 [shape = 'u8[65536]{0}', space=vmem, size = 0x10000, scoped, tag = 'output window, operand 0, single buffered']
    #allocation4 [shape = 's32[2]{0}', space=sflag, size = 0x8, scoped, tag = 'scoped memory for encoder_forward.1']
    %16 = vsyncpa [#allocation4], 0
    loop: start=0, step=1, limit=4
    $region2: #{encoder_forward.1} parent=1 // loop_pre_header
      _
    $region3: #{encoder_forward.1} parent=1 // loop_header
      %s18 = sphi 0, %s22
      %p19 = scmp.ge.s32.totalorder %s18, 4
      %s26 = sphi 0, %s26
      %s28 = sphi 0, %s26
      %s29 = sphi 0, %s28
      %s43 = sphi 0, %s29
      %s47 = sphi 0, %s47
      %s49 = sphi 0, %s47
      %s50 = sphi 0, %s49
      %s64 = sphi 0, %s50
      %s68 = sphi 0, %s68
      %s70 = sphi 0, %s68
      %s71 = sphi 0, %s70
      %s85 = sphi 0, %s71
      %s89 = sphi 0, %s89
      %s91 = sphi 0, %s89
      %s92 = sphi 0, %s91
      %s106 = sphi 0, %s92
      %s110 = sphi 0, %s110
      %s112 = sphi 0, %s110
      %s113 = sphi 0, %s112
      %s127 = sphi 0, %s113
      %s133 = sphi 0, %s135
      %s136 = sphi 0, %s133
      %s137 = sphi 0, %s136
      %s153 = sphi 0, %s137
      %s159 = sphi 0, %s161
      %s162 = sphi 0, %s159
      %s163 = sphi 0, %s162
      %s179 = sphi 0, %s163
      %s185 = sphi 0, %s187
      %s188 = sphi 0, %s185
      %s189 = sphi 0, %s188
      %s205 = sphi 0, %s189
      %s211 = sphi 0, %s213
      %s214 = sphi 0, %s211
      %s215 = sphi 0, %s214
      %s231 = sphi 0, %s215
      %s237 = sphi 0, %s239
      %s240 = sphi 0, %s237
      %s241 = sphi 0, %s240
      %s257 = sphi 0, %s241
      %s263 = sphi 0, %s265
      %s266 = sphi 0, %s263
      %s267 = sphi 0, %s266
      %s283 = sphi 0, %s267
      %s287 = sphi 0, %s287
      %s289 = sphi 0, %s287
      %s290 = sphi 0, %s289
      %s304 = sphi 0, %s290
    $region4: #{encoder_forward.1} parent=1 // loop_header_branch
      %21 = sbr.rel (%p19) target = $region8
    $region5: #{encoder_forward.1} parent=1 // loop_body
      %s23 = ssub.s32 %s18, 1
      %s24 = ssub.s32 %s18, 2
      %s25 = sadd.s32 %s18, 1
      %s27 = sadd.s32 %s26, 1
      %p30 = scmp.eq.s32.totalorder %s18, 1
      %p31 = scmp.ne.s32.totalorder %s26, %s28
      %p32 = scmp.eq.s32.totalorder %s18, 0
      %p33 = por %p31, %p32
      %p34 = scmp.ne.s32.totalorder %s26, %s28
      %p35 = scmp.eq.s32.totalorder %s23, 1
      %p36 = por %p34, %p35
      %p37 = scmp.ne.s32.totalorder %s28, %s29
      %p38 = scmp.eq.s32.totalorder %s23, 0
      %p39 = por %p37, %p38
      %p40 = scmp.ne.s32.totalorder %s28, %s29
      %p41 = scmp.eq.s32.totalorder %s24, 1
      %p42 = por %p40, %p41
      %p44 = scmp.ne.s32.totalorder %s29, %s43
      %p45 = scmp.eq.s32.totalorder %s24, 0
      %p46 = por %p44, %p45
      %s48 = sadd.s32 %s47, 1
      %p51 = scmp.eq.s32.totalorder %s18, 1
      %p52 = scmp.ne.s32.totalorder %s47, %s49
      %p53 = scmp.eq.s32.totalorder %s18, 0
      %p54 = por %p52, %p53
      %p55 = scmp.ne.s32.totalorder %s47, %s49
      %p56 = scmp.eq.s32.totalorder %s23, 1
      %p57 = por %p55, %p56
      %p58 = scmp.ne.s32.totalorder %s49, %s50
      %p59 = scmp.eq.s32.totalorder %s23, 0
      %p60 = por %p58, %p59
      %p61 = scmp.ne.s32.totalorder %s49, %s50
      %p62 = scmp.eq.s32.totalorder %s24, 1
      %p63 = por %p61, %p62
      %p65 = scmp.ne.s32.totalorder %s50, %s64
      %p66 = scmp.eq.s32.totalorder %s24, 0
      %p67 = por %p65, %p66
      %s69 = sadd.s32 %s68, 1
      %p72 = scmp.eq.s32.totalorder %s18, 1
      %p73 = scmp.ne.s32.totalorder %s68, %s70
      %p74 = scmp.eq.s32.totalorder %s18, 0
      %p75 = por %p73, %p74
      %p76 = scmp.ne.s32.totalorder %s68, %s70
      %p77 = scmp.eq.s32.totalorder %s23, 1
      %p78 = por %p76, %p77
      %p79 = scmp.ne.s32.totalorder %s70, %s71
      %p80 = scmp.eq.s32.totalorder %s23, 0
      %p81 = por %p79, %p80
      %p82 = scmp.ne.s32.totalorder %s70, %s71
      %p83 = scmp.eq.s32.totalorder %s24, 1
      %p84 = por %p82, %p83
      %p86 = scmp.ne.s32.totalorder %s71, %s85
      %p87 = scmp.eq.s32.totalorder %s24, 0
      %p88 = por %p86, %p87
      %s90 = sadd.s32 %s89, 1
      %p93 = scmp.eq.s32.totalorder %s18, 1
      %p94 = scmp.ne.s32.totalorder %s89, %s91
      %p95 = scmp.eq.s32.totalorder %s18, 0
      %p96 = por %p94, %p95
      %p97 = scmp.ne.s32.totalorder %s89, %s91
      %p98 = scmp.eq.s32.totalorder %s23, 1
      %p99 = por %p97, %p98
      %p100 = scmp.ne.s32.totalorder %s91, %s92
      %p101 = scmp.eq.s32.totalorder %s23, 0
      %p102 = por %p100, %p101
      %p103 = scmp.ne.s32.totalorder %s91, %s92
      %p104 = scmp.eq.s32.totalorder %s24, 1
      %p105 = por %p103, %p104
      %p107 = scmp.ne.s32.totalorder %s92, %s106
      %p108 = scmp.eq.s32.totalorder %s24, 0
      %p109 = por %p107, %p108
      %s111 = sadd.s32 %s110, 1
      %p114 = scmp.eq.s32.totalorder %s18, 1
      %p115 = scmp.ne.s32.totalorder %s110, %s112
      %p116 = scmp.eq.s32.totalorder %s18, 0
      %p117 = por %p115, %p116
      %p118 = scmp.ne.s32.totalorder %s110, %s112
      %p119 = scmp.eq.s32.totalorder %s23, 1
      %p120 = por %p118, %p119
      %p121 = scmp.ne.s32.totalorder %s112, %s113
      %p122 = scmp.eq.s32.totalorder %s23, 0
      %p123 = por %p121, %p122
      %p124 = scmp.ne.s32.totalorder %s112, %s113
      %p125 = scmp.eq.s32.totalorder %s24, 1
      %p126 = por %p124, %p125
      %p128 = scmp.ne.s32.totalorder %s113, %s127
      %p129 = scmp.eq.s32.totalorder %s24, 0
      %p130 = por %p128, %p129
      %s131 = ssub.s32 %s18, %s25
      %p132 = scmp.eq.s32.totalorder %s131, 0
      %s134 = sadd.s32 %s133, 1
      %s135 = scalar_select %p132, %s133, %s134
      %p138 = pneg %p132
      %p139 = scmp.eq.s32.totalorder %s18, 1
      %p140 = por %p138, %p139
      %p141 = scmp.ne.s32.totalorder %s133, %s136
      %p142 = scmp.eq.s32.totalorder %s18, 0
      %p143 = por %p141, %p142
      %p144 = scmp.ne.s32.totalorder %s133, %s136
      %p145 = scmp.eq.s32.totalorder %s23, 1
      %p146 = por %p144, %p145
      %p147 = scmp.ne.s32.totalorder %s136, %s137
      %p148 = scmp.eq.s32.totalorder %s23, 0
      %p149 = por %p147, %p148
      %p150 = scmp.ne.s32.totalorder %s136, %s137
      %p151 = scmp.eq.s32.totalorder %s24, 1
      %p152 = por %p150, %p151
      %p154 = scmp.ne.s32.totalorder %s137, %s153
      %p155 = scmp.eq.s32.totalorder %s24, 0
      %p156 = por %p154, %p155
      %s157 = ssub.s32 %s18, %s25
      %p158 = scmp.eq.s32.totalorder %s157, 0
      %s160 = sadd.s32 %s159, 1
      %s161 = scalar_select %p158, %s159, %s160
      %p164 = pneg %p158
      %p165 = scmp.eq.s32.totalorder %s18, 1
      %p166 = por %p164, %p165
      %p167 = scmp.ne.s32.totalorder %s159, %s162
      %p168 = scmp.eq.s32.totalorder %s18, 0
      %p169 = por %p167, %p168
      %p170 = scmp.ne.s32.totalorder %s159, %s162
      %p171 = scmp.eq.s32.totalorder %s23, 1
      %p172 = por %p170, %p171
      %p173 = scmp.ne.s32.totalorder %s162, %s163
      %p174 = scmp.eq.s32.totalorder %s23, 0
      %p175 = por %p173, %p174
      %p176 = scmp.ne.s32.totalorder %s162, %s163
      %p177 = scmp.eq.s32.totalorder %s24, 1
      %p178 = por %p176, %p177
      %p180 = scmp.ne.s32.totalorder %s163, %s179
      %p181 = scmp.eq.s32.totalorder %s24, 0
      %p182 = por %p180, %p181
      %s183 = ssub.s32 %s18, %s25
      %p184 = scmp.eq.s32.totalorder %s183, 0
      %s186 = sadd.s32 %s185, 1
      %s187 = scalar_select %p184, %s185, %s186
      %p190 = pneg %p184
      %p191 = scmp.eq.s32.totalorder %s18, 1
      %p192 = por %p190, %p191
      %p193 = scmp.ne.s32.totalorder %s185, %s188
      %p194 = scmp.eq.s32.totalorder %s18, 0
      %p195 = por %p193, %p194
      %p196 = scmp.ne.s32.totalorder %s185, %s188
      %p197 = scmp.eq.s32.totalorder %s23, 1
      %p198 = por %p196, %p197
      %p199 = scmp.ne.s32.totalorder %s188, %s189
      %p200 = scmp.eq.s32.totalorder %s23, 0
      %p201 = por %p199, %p200
      %p202 = scmp.ne.s32.totalorder %s188, %s189
      %p203 = scmp.eq.s32.totalorder %s24, 1
      %p204 = por %p202, %p203
      %p206 = scmp.ne.s32.totalorder %s189, %s205
      %p207 = scmp.eq.s32.totalorder %s24, 0
      %p208 = por %p206, %p207
      %s209 = ssub.s32 %s18, %s25
      %p210 = scmp.eq.s32.totalorder %s209, 0
      %s212 = sadd.s32 %s211, 1
      %s213 = scalar_select %p210, %s211, %s212
      %p216 = pneg %p210
      %p217 = scmp.eq.s32.totalorder %s18, 1
      %p218 = por %p216, %p217
      %p219 = scmp.ne.s32.totalorder %s211, %s214
      %p220 = scmp.eq.s32.totalorder %s18, 0
      %p221 = por %p219, %p220
      %p222 = scmp.ne.s32.totalorder %s211, %s214
      %p223 = scmp.eq.s32.totalorder %s23, 1
      %p224 = por %p222, %p223
      %p225 = scmp.ne.s32.totalorder %s214, %s215
      %p226 = scmp.eq.s32.totalorder %s23, 0
      %p227 = por %p225, %p226
      %p228 = scmp.ne.s32.totalorder %s214, %s215
      %p229 = scmp.eq.s32.totalorder %s24, 1
      %p230 = por %p228, %p229
      %p232 = scmp.ne.s32.totalorder %s215, %s231
      %p233 = scmp.eq.s32.totalorder %s24, 0
      %p234 = por %p232, %p233
      %s235 = ssub.s32 %s18, %s25
      %p236 = scmp.eq.s32.totalorder %s235, 0
      %s238 = sadd.s32 %s237, 1
      %s239 = scalar_select %p236, %s237, %s238
      %p242 = pneg %p236
      %p243 = scmp.eq.s32.totalorder %s18, 1
      %p244 = por %p242, %p243
      %p245 = scmp.ne.s32.totalorder %s237, %s240
      %p246 = scmp.eq.s32.totalorder %s18, 0
      %p247 = por %p245, %p246
      %p248 = scmp.ne.s32.totalorder %s237, %s240
      %p249 = scmp.eq.s32.totalorder %s23, 1
      %p250 = por %p248, %p249
      %p251 = scmp.ne.s32.totalorder %s240, %s241
      %p252 = scmp.eq.s32.totalorder %s23, 0
      %p253 = por %p251, %p252
      %p254 = scmp.ne.s32.totalorder %s240, %s241
      %p255 = scmp.eq.s32.totalorder %s24, 1
      %p256 = por %p254, %p255
      %p258 = scmp.ne.s32.totalorder %s241, %s257
      %p259 = scmp.eq.s32.totalorder %s24, 0
      %p260 = por %p258, %p259
      %s261 = ssub.s32 %s18, %s25
      %p262 = scmp.eq.s32.totalorder %s261, 0
      %s264 = sadd.s32 %s263, 1
      %s265 = scalar_select %p262, %s263, %s264
      %p268 = pneg %p262
      %p269 = scmp.eq.s32.totalorder %s18, 1
      %p270 = por %p268, %p269
      %p271 = scmp.ne.s32.totalorder %s263, %s266
      %p272 = scmp.eq.s32.totalorder %s18, 0
      %p273 = por %p271, %p272
      %p274 = scmp.ne.s32.totalorder %s263, %s266
      %p275 = scmp.eq.s32.totalorder %s23, 1
      %p276 = por %p274, %p275
      %p277 = scmp.ne.s32.totalorder %s266, %s267
      %p278 = scmp.eq.s32.totalorder %s23, 0
      %p279 = por %p277, %p278
      %p280 = scmp.ne.s32.totalorder %s266, %s267
      %p281 = scmp.eq.s32.totalorder %s24, 1
      %p282 = por %p280, %p281
      %p284 = scmp.ne.s32.totalorder %s267, %s283
      %p285 = scmp.eq.s32.totalorder %s24, 0
      %p286 = por %p284, %p285
      %s288 = sadd.s32 %s287, 1
      %p291 = scmp.eq.s32.totalorder %s18, 1
      %p292 = scmp.ne.s32.totalorder %s287, %s289
      %p293 = scmp.eq.s32.totalorder %s18, 0
      %p294 = por %p292, %p293
      %p295 = scmp.ne.s32.totalorder %s287, %s289
      %p296 = scmp.eq.s32.totalorder %s23, 1
      %p297 = por %p295, %p296
      %p298 = scmp.ne.s32.totalorder %s289, %s290
      %p299 = scmp.eq.s32.totalorder %s23, 0
      %p300 = por %p298, %p299
      %p301 = scmp.ne.s32.totalorder %s289, %s290
      %p302 = scmp.eq.s32.totalorder %s24, 1
      %p303 = por %p301, %p302
      %p305 = scmp.ne.s32.totalorder %s290, %s304
      %p306 = scmp.eq.s32.totalorder %s24, 0
      %p307 = por %p305, %p306
      %p308 = scmp.le.s32.totalorder 1, %s18
      %p309 = scmp.lt.s32.totalorder %s18, 3
      %p310 = pnand %p308, %p309
      %p311 = pneg %p310
      // Predicated region
      $region9: #{encoder_forward.1} parent=5 // pred_check
        _
      $region10: #{encoder_forward.1} parent=5 // pred_check_branch
        %313 = sbr.rel (%p310) target = $region12
      $region11: #{encoder_forward.1} parent=5 // pred_region
        %s314 = ssub.s32 %s18, 1
        // Predicated region
        $region13: #{encoder_forward.1} parent=11 // pred_check
          %p315 = pneg %p39
        $region14: #{encoder_forward.1} parent=11 // pred_check_branch
          %317 = sbr.rel (%p315) target = $region16
        $region15: #{encoder_forward.1} parent=11 // pred_region
          _
        $region16: #{encoder_forward.1} parent=11 // pred_fallthru
          _
        // Predicated region
        $region17: #{encoder_forward.1} parent=11 // pred_check
          %p318 = pneg %p60
        $region18: #{encoder_forward.1} parent=11 // pred_check_branch
          %320 = sbr.rel (%p318) target = $region20
        $region19: #{encoder_forward.1} parent=11 // pred_region
          _
        $region20: #{encoder_forward.1} parent=11 // pred_fallthru
          _
        // Predicated region
        $region21: #{encoder_forward.1} parent=11 // pred_check
          %p321 = pneg %p81
        $region22: #{encoder_forward.1} parent=11 // pred_check_branch
          %323 = sbr.rel (%p321) target = $region24
        $region23: #{encoder_forward.1} parent=11 // pred_region
          _
        $region24: #{encoder_forward.1} parent=11 // pred_fallthru
          _
        // Predicated region
        $region25: #{encoder_forward.1} parent=11 // pred_check
          %p324 = pneg %p102
        $region26: #{encoder_forward.1} parent=11 // pred_check_branch
          %326 = sbr.rel (%p324) target = $region28
        $region27: #{encoder_forward.1} parent=11 // pred_region
          _
        $region28: #{encoder_forward.1} parent=11 // pred_fallthru
          _
        // Predicated region
        $region29: #{encoder_forward.1} parent=11 // pred_check
          %p327 = pneg %p123
        $region30: #{encoder_forward.1} parent=11 // pred_check_branch
          %329 = sbr.rel (%p327) target = $region32
        $region31: #{encoder_forward.1} parent=11 // pred_region
          _
        $region32: #{encoder_forward.1} parent=11 // pred_fallthru
          _
      $region12: #{encoder_forward.1} parent=5 // pred_fallthru
        _
      %p330 = scmp.lt.s32.totalorder %s18, 2
      // Predicated region
      $region33: #{encoder_forward.1} parent=5 // pred_check
        %p331 = pneg %p330
      $region34: #{encoder_forward.1} parent=5 // pred_check_branch
        %333 = sbr.rel (%p331) target = $region36
      $region35: #{encoder_forward.1} parent=5 // pred_region
        // Predicated region
        $region37: #{encoder_forward.1} parent=35 // pred_check
          %p334 = pneg %p143
        $region38: #{encoder_forward.1} parent=35 // pred_check_branch
          %336 = sbr.rel (%p334) target = $region40
        $region39: #{encoder_forward.1} parent=35 // pred_region
          %p337 = scmp.lt.s32.totalorder %s18, 1
          %s338 = scalar_select %p337, %s18, 1
          %s339 = smul.addr %s338, 4
          %s340 = smul.addr %s339, 8
          %s341 = scalar_lea.vmem %s5, %s340
        $region40: #{encoder_forward.1} parent=35 // pred_fallthru
          _
        // Predicated region
        $region41: #{encoder_forward.1} parent=35 // pred_check
          %p342 = pneg %p169
        $region42: #{encoder_forward.1} parent=35 // pred_check_branch
          %344 = sbr.rel (%p342) target = $region44
        $region43: #{encoder_forward.1} parent=35 // pred_region
          %p345 = scmp.lt.s32.totalorder %s18, 1
          %s346 = scalar_select %p345, %s18, 1
          %s347 = smul.addr %s346, 4
          %s348 = smul.addr %s347, 8
          %s349 = scalar_lea.vmem %s6, %s348
        $region44: #{encoder_forward.1} parent=35 // pred_fallthru
          _
        // Predicated region
        $region45: #{encoder_forward.1} parent=35 // pred_check
          %p350 = pneg %p195
        $region46: #{encoder_forward.1} parent=35 // pred_check_branch
          %352 = sbr.rel (%p350) target = $region48
        $region47: #{encoder_forward.1} parent=35 // pred_region
          %p353 = scmp.lt.s32.totalorder %s18, 1
          %s354 = scalar_select %p353, %s18, 1
          %s355 = smul.addr %s354, 64
          %s356 = smul.addr %s355, 4
          %s357 = scalar_lea.vmem %s7, %s356
        $region48: #{encoder_forward.1} parent=35 // pred_fallthru
          _
        // Predicated region
        $region49: #{encoder_forward.1} parent=35 // pred_check
          %p358 = pneg %p221
        $region50: #{encoder_forward.1} parent=35 // pred_check_branch
          %360 = sbr.rel (%p358) target = $region52
        $region51: #{encoder_forward.1} parent=35 // pred_region
          %p361 = scmp.lt.s32.totalorder %s18, 1
          %s362 = scalar_select %p361, %s18, 1
          %s363 = smul.addr %s362, 16
          %s364 = scalar_lea.vmem %s8, %s363
        $region52: #{encoder_forward.1} parent=35 // pred_fallthru
          _
        // Predicated region
        $region53: #{encoder_forward.1} parent=35 // pred_check
          %p365 = pneg %p247
        $region54: #{encoder_forward.1} parent=35 // pred_check_branch
          %367 = sbr.rel (%p365) target = $region56
        $region55: #{encoder_forward.1} parent=35 // pred_region
          %p368 = scmp.lt.s32.totalorder %s18, 1
          %s369 = scalar_select %p368, %s18, 1
          %s370 = smul.addr %s369, 256
          %s371 = smul.addr %s370, 4
          %s372 = scalar_lea.vmem %s9, %s371
        $region56: #{encoder_forward.1} parent=35 // pred_fallthru
          _
        // Predicated region
        $region57: #{encoder_forward.1} parent=35 // pred_check
          %p373 = pneg %p273
        $region58: #{encoder_forward.1} parent=35 // pred_check_branch
          %375 = sbr.rel (%p373) target = $region60
        $region59: #{encoder_forward.1} parent=35 // pred_region
          %p376 = scmp.lt.s32.totalorder %s18, 1
          %s377 = scalar_select %p376, %s18, 1
          %s378 = smul.addr %s377, 2
          %s379 = smul.addr %s378, 8
          %s380 = scalar_lea.vmem %s10, %s379
        $region60: #{encoder_forward.1} parent=35 // pred_fallthru
          _
      $region36: #{encoder_forward.1} parent=5 // pred_fallthru
        _
      %p381 = scmp.le.s32.totalorder 1, %s18
      %p382 = scmp.lt.s32.totalorder %s18, 3
      %p383 = pnand %p381, %p382
      %p384 = pneg %p383
      // Predicated region
      $region61: #{encoder_forward.1} parent=5 // pred_check
        _
      $region62: #{encoder_forward.1} parent=5 // pred_check_branch
        %386 = sbr.rel (%p383) target = $region64
      $region63: #{encoder_forward.1} parent=5 // pred_region
        %s387 = ssub.s32 %s18, 1
        %p388 = pneg %p39
        %p389 = pneg %p36
        %p390 = pneg %p60
        %p391 = pneg %p57
        %p392 = pneg %p81
        %p393 = pneg %p78
        %p394 = pneg %p102
        %p395 = pneg %p99
        %p396 = pneg %p123
        %p397 = pneg %p120
        %p398 = scmp.lt.s32.totalorder %s23, 1
        %s399 = scalar_select %p398, %s23, 1
        %s400 = smul.addr %s399, 4
        %s401 = smul.addr %s400, 8
        %s402 = scalar_lea.vmem %s5, %s401
        %p403 = pneg %p149
        %p404 = pneg %p146
        %p405 = scmp.lt.s32.totalorder %s23, 1
        %s406 = scalar_select %p405, %s23, 1
        %s407 = smul.addr %s406, 4
        %s408 = smul.addr %s407, 8
        %s409 = scalar_lea.vmem %s6, %s408
        %p410 = pneg %p175
        %p411 = pneg %p172
        %p412 = scmp.lt.s32.totalorder %s23, 1
        %s413 = scalar_select %p412, %s23, 1
        %s414 = smul.addr %s413, 64
        %s415 = smul.addr %s414, 4
        %s416 = scalar_lea.vmem %s7, %s415
        %p417 = pneg %p201
        %p418 = pneg %p198
        %p419 = scmp.lt.s32.totalorder %s23, 1
        %s420 = scalar_select %p419, %s23, 1
        %s421 = smul.addr %s420, 16
        %s422 = scalar_lea.vmem %s8, %s421
        %p423 = pneg %p227
        %p424 = pneg %p224
        %p425 = scmp.lt.s32.totalorder %s23, 1
        %s426 = scalar_select %p425, %s23, 1
        %s427 = smul.addr %s426, 256
        %s428 = smul.addr %s427, 4
        %s429 = scalar_lea.vmem %s9, %s428
        %p430 = pneg %p253
        %p431 = pneg %p250
        %p432 = scmp.lt.s32.totalorder %s23, 1
        %s433 = scalar_select %p432, %s23, 1
        %s434 = smul.addr %s433, 2
        %s435 = smul.addr %s434, 8
        %s436 = scalar_lea.vmem %s10, %s435
        %p437 = pneg %p279
        %p438 = pneg %p276
        %p439 = pneg %p300
        %p440 = pneg %p297
        %p441 = scmp.lt.s32.totalorder %s23, 1
        %s442 = scalar_select %p441, %s23, 1
        %s443 = smul.addr %s442, 4
        %s444 = smul.addr %s443, 8
        %s445 = scalar_lea.vmem %s5, %s444
        %p446 = scmp.lt.s32.totalorder %s23, 1
        %s447 = scalar_select %p446, %s23, 1
        %s448 = smul.addr %s447, 4
        %s449 = smul.addr %s448, 8
        %s450 = scalar_lea.vmem %s6, %s449
        %p451 = scmp.lt.s32.totalorder %s23, 1
        %s452 = scalar_select %p451, %s23, 1
        %s453 = smul.addr %s452, 64
        %s454 = smul.addr %s453, 4
        %s455 = scalar_lea.vmem %s7, %s454
        %p456 = scmp.lt.s32.totalorder %s23, 1
        %s457 = scalar_select %p456, %s23, 1
        %s458 = smul.addr %s457, 16
        %s459 = scalar_lea.vmem %s8, %s458
        %p460 = scmp.lt.s32.totalorder %s23, 1
        %s461 = scalar_select %p460, %s23, 1
        %s462 = smul.addr %s461, 256
        %s463 = smul.addr %s462, 4
        %s464 = scalar_lea.vmem %s9, %s463
        %p465 = scmp.lt.s32.totalorder %s23, 1
        %s466 = scalar_select %p465, %s23, 1
        %s467 = smul.addr %s466, 2
        %s468 = smul.addr %s467, 8
        %s469 = scalar_lea.vmem %s10, %s468
        %p471 = scmp.eq.s32.totalorder %s23, 0
        // Predicated region
        $region65: #{encoder_forward.1} parent=63 // pred_check
          %p472 = pneg %p471
        $region66: #{encoder_forward.1} parent=63 // pred_check_branch
          %474 = sbr.rel (%p472) target = $region68
        $region67: #{encoder_forward.1} parent=63 // pred_region
          %v475 = vld [vmem:[%s0] sm:$0xff]
          %v476 = vld [vmem:[%s0 + $0x8] sm:$0xff]
          %v477 = vld [vmem:[%s0 + $0x10] sm:$0xff]
          %v478 = vld [vmem:[%s0 + $0x18] sm:$0xff]
          %v479 = vld [vmem:[%s0 + $0x20] sm:$0xff]
          %v480 = vld [vmem:[%s0 + $0x28] sm:$0xff]
          %v481 = vld [vmem:[%s0 + $0x30] sm:$0xff]
          %v482 = vld [vmem:[%s0 + $0x38] sm:$0xff]
          %v483 = vld [vmem:[%s0 + $0x40] sm:$0xff]
          %v484 = vld [vmem:[%s0 + $0x48] sm:$0xff]
          %v485 = vld [vmem:[%s0 + $0x50] sm:$0xff]
          %v486 = vld [vmem:[%s0 + $0x58] sm:$0xff]
          %v487 = vld [vmem:[%s0 + $0x60] sm:$0xff]
          %v488 = vld [vmem:[%s0 + $0x68] sm:$0xff]
          %v489 = vld [vmem:[%s0 + $0x70] sm:$0xff]
          %v490 = vld [vmem:[%s0 + $0x78] sm:$0xff]
          %v491 = vld [vmem:[%s1] sm:$0xff]
          %v492 = vld [vmem:[%s1 + $0x8] sm:$0xff]
          %v493 = vld [vmem:[%s1 + $0x10] sm:$0xff]
          %v494 = vld [vmem:[%s1 + $0x18] sm:$0xff]
          %v495 = vld [vmem:[%s1 + $0x20] sm:$0xff]
          %v496 = vld [vmem:[%s1 + $0x28] sm:$0xff]
          %v497 = vld [vmem:[%s2] sm:$0xff]
          %v498 = vld [vmem:[%s2 + $0x8] sm:$0xff]
          %v499 = vld [vmem:[%s2 + $0x10] sm:$0xff]
          %v500 = vld [vmem:[%s2 + $0x18] sm:$0xff]
          %v501 = vld [vmem:[%s2 + $0x20] sm:$0xff]
          %v502 = vld [vmem:[%s2 + $0x28] sm:$0xff]
          %v503 = vld [vmem:[%s2 + $0x30] sm:$0xff]
          %v504 = vld [vmem:[%s2 + $0x38] sm:$0xff]
          %v505 = vld [vmem:[%s2 + $0x40] sm:$0xff]
          %v506 = vld [vmem:[%s2 + $0x48] sm:$0xff]
          %v507 = vld [vmem:[%s2 + $0x50] sm:$0xff]
          %v508 = vld [vmem:[%s2 + $0x58] sm:$0xff]
          %v509 = vld [vmem:[%s2 + $0x60] sm:$0xff]
          %v510 = vld [vmem:[%s2 + $0x68] sm:$0xff]
          %v511 = vld [vmem:[%s2 + $0x70] sm:$0xff]
          %v512 = vld [vmem:[%s2 + $0x78] sm:$0xff]
          %vm513 = vcmask 392192
          %v515 = vsel %vm513, %v475, 0
          %v518 = vsel %vm513, %v476, 0
          %v521 = vsel %vm513, %v477, 0
          %v524 = vsel %vm513, %v478, 0
          %v527 = vsel %vm513, %v479, 0
          %v530 = vsel %vm513, %v480, 0
          %v533 = vsel %vm513, %v481, 0
          %v536 = vsel %vm513, %v482, 0
          %v539 = vsel %vm513, %v483, 0
          %v542 = vsel %vm513, %v484, 0
          %v545 = vsel %vm513, %v485, 0
          %v548 = vsel %vm513, %v486, 0
          %v551 = vsel %vm513, %v487, 0
          %v554 = vsel %vm513, %v488, 0
          %v557 = vsel %vm513, %v489, 0
          %v560 = vsel %vm513, %v490, 0
          %562 = vmatprep.subr.mxu0 0.0
          %563 = vmatpush1.msra.mxu0 %v491
          %564 = vmatprep.subr.mxu0 0.0
          %565 = vmatpush1.msra.mxu0 %v492
          %566 = vmatprep.subr.mxu0 0.0
          %567 = vmatpush1.msra.mxu0 %v493
          %568 = vmatprep.subr.mxu0 0.0
          %569 = vmatpush1.msra.mxu0 %v494
          %570 = vmatprep.subr.mxu0 0.0
          %571 = vmatpush1.msra.mxu0 %v495
          %572 = vmatprep.subr.mxu0 0.0
          %573 = vmatpush1.msra.mxu0 %v496
          %574 = vmatprep.subr.mxu0 0.0
          %575 = vmatpush1.msra.mxu0 0.0
          %576 = vmatprep.subr.mxu0 0.0
          %577 = vmatpush1.msra.mxu0 0.0
          %578 = vmatprep.subr.mxu0 0.0
          %579 = vmatpush1.msra.mxu0 0.0
          %580 = vmatprep.subr.mxu0 0.0
          %581 = vmatpush1.msra.mxu0 0.0
          %582 = vmatprep.subr.mxu0 0.0
          %583 = vmatpush1.msra.mxu0 0.0
          %584 = vmatprep.subr.mxu0 0.0
          %585 = vmatpush1.msra.mxu0 0.0
          %586 = vmatprep.subr.mxu0 0.0
          %587 = vmatpush1.msra.mxu0 0.0
          %588 = vmatprep.subr.mxu0 0.0
          %589 = vmatpush1.msra.mxu0 0.0
          %590 = vmatprep.subr.mxu0 0.0
          %591 = vmatpush1.msra.mxu0 0.0
          %592 = vmatprep.subr.mxu0 0.0
          %593 = vmatpush1.msra.mxu0 0.0
          %594 = vmatprep.subr.mxu0 0.0
          %595 = vmatpush1.msra.mxu0 0.0
          %596 = vmatprep.subr.mxu0 0.0
          %597 = vmatpush1.msra.mxu0 0.0
          %598 = vmatprep.subr.mxu0 0.0
          %599 = vmatpush1.msra.mxu0 0.0
          %600 = vmatprep.subr.mxu0 0.0
          %601 = vmatpush1.msra.mxu0 0.0
          %602 = vmatprep.subr.mxu0 0.0
          %603 = vmatpush1.msra.mxu0 0.0
          %604 = vmatprep.subr.mxu0 0.0
          %605 = vmatpush1.msra.mxu0 0.0
          %606 = vmatprep.subr.mxu0 0.0
          %607 = vmatpush1.msra.mxu0 0.0
          %608 = vmatprep.subr.mxu0 0.0
          %609 = vmatpush1.msra.mxu0 0.0
          %610 = vmatprep.subr.mxu0 0.0
          %611 = vmatpush1.msra.mxu0 0.0
          %612 = vmatprep.subr.mxu0 0.0
          %613 = vmatpush1.msra.mxu0 0.0
          %614 = vmatprep.subr.mxu0 0.0
          %615 = vmatpush1.msra.mxu0 0.0
          %616 = vmatprep.subr.mxu0 0.0
          %617 = vmatpush1.msra.mxu0 0.0
          %618 = vmatprep.subr.mxu0 0.0
          %619 = vmatpush1.msra.mxu0 0.0
          %620 = vmatprep.subr.mxu0 0.0
          %621 = vmatpush1.msra.mxu0 0.0
          %622 = vmatprep.subr.mxu0 0.0
          %623 = vmatpush1.msra.mxu0 0.0
          %624 = vmatprep.subr.mxu0 0.0
          %625 = vmatpush1.msra.mxu0 0.0
          %626 = vmatprep.mubr.f32.mxu0 0.0
          %627 = vmatmul.mubr.f32.gmra.mrb[0].mxu0 %v515
          %v628 = vpop.f32.mrb[0].mxu0
          %v629 = vadd.f32 %v497, %v628
          %v630 = vpop.f32.mrb[0].mxu0
          %631 = vmatprep.mubr.f32.mxu0 0.0
          %632 = vmatmul.mubr.f32.gmra.mrb[0].mxu0 %v518
          %v633 = vpop.f32.mrb[0].mxu0
          %v634 = vadd.f32 %v498, %v633
          %v635 = vpop.f32.mrb[0].mxu0
          %636 = vmatprep.mubr.f32.mxu0 0.0
          %637 = vmatmul.mubr.f32.gmra.mrb[0].mxu0 %v521
          %v638 = vpop.f32.mrb[0].mxu0
          %v639 = vadd.f32 %v499, %v638
          %v640 = vpop.f32.mrb[0].mxu0
          %641 = vmatprep.mubr.f32.mxu0 0.0
          %642 = vmatmul.mubr.f32.gmra.mrb[0].mxu0 %v524
          %v643 = vpop.f32.mrb[0].mxu0
          %v644 = vadd.f32 %v500, %v643
          %v645 = vpop.f32.mrb[0].mxu0
          %646 = vmatprep.mubr.f32.mxu0 0.0
          %647 = vmatmul.mubr.f32.gmra.mrb[0].mxu0 %v527
          %v648 = vpop.f32.mrb[0].mxu0
          %v649 = vadd.f32 %v501, %v648
          %v650 = vpop.f32.mrb[0].mxu0
          %651 = vmatprep.mubr.f32.mxu0 0.0
          %652 = vmatmul.mubr.f32.gmra.mrb[0].mxu0 %v530
          %v653 = vpop.f32.mrb[0].mxu0
          %v654 = vadd.f32 %v502, %v653
          %v655 = vpop.f32.mrb[0].mxu0
          %656 = vmatprep.mubr.f32.mxu0 0.0
          %657 = vmatmul.mubr.f32.gmra.mrb[0].mxu0 %v533
          %v658 = vpop.f32.mrb[0].mxu0
          %v659 = vadd.f32 %v503, %v658
          %v660 = vpop.f32.mrb[0].mxu0
          %661 = vmatprep.mubr.f32.mxu0 0.0
          %662 = vmatmul.mubr.f32.gmra.mrb[0].mxu0 %v536
          %v663 = vpop.f32.mrb[0].mxu0
          %v664 = vadd.f32 %v504, %v663
          %v665 = vpop.f32.mrb[0].mxu0
          %666 = vmatprep.mubr.f32.mxu0 0.0
          %667 = vmatmul.mubr.f32.gmra.mrb[0].mxu0 %v539
          %v668 = vpop.f32.mrb[0].mxu0
          %v669 = vadd.f32 %v505, %v668
          %v670 = vpop.f32.mrb[0].mxu0
          %671 = vmatprep.mubr.f32.mxu0 0.0
          %672 = vmatmul.mubr.f32.gmra.mrb[0].mxu0 %v542
          %v673 = vpop.f32.mrb[0].mxu0
          %v674 = vadd.f32 %v506, %v673
          %v675 = vpop.f32.mrb[0].mxu0
          %676 = vmatprep.mubr.f32.mxu0 0.0
          %677 = vmatmul.mubr.f32.gmra.mrb[0].mxu0 %v545
          %v678 = vpop.f32.mrb[0].mxu0
          %v679 = vadd.f32 %v507, %v678
          %v680 = vpop.f32.mrb[0].mxu0
          %681 = vmatprep.mubr.f32.mxu0 0.0
          %682 = vmatmul.mubr.f32.gmra.mrb[0].mxu0 %v548
          %v683 = vpop.f32.mrb[0].mxu0
          %v684 = vadd.f32 %v508, %v683
          %v685 = vpop.f32.mrb[0].mxu0
          %686 = vmatprep.mubr.f32.mxu0 0.0
          %687 = vmatmul.mubr.f32.gmra.mrb[0].mxu0 %v551
          %v688 = vpop.f32.mrb[0].mxu0
          %v689 = vadd.f32 %v509, %v688
          %v690 = vpop.f32.mrb[0].mxu0
          %691 = vmatprep.mubr.f32.mxu0 0.0
          %692 = vmatmul.mubr.f32.gmra.mrb[0].mxu0 %v554
          %v693 = vpop.f32.mrb[0].mxu0
          %v694 = vadd.f32 %v510, %v693
          %v695 = vpop.f32.mrb[0].mxu0
          %696 = vmatprep.mubr.f32.mxu0 0.0
          %697 = vmatmul.mubr.f32.gmra.mrb[0].mxu0 %v557
          %v698 = vpop.f32.mrb[0].mxu0
          %v699 = vadd.f32 %v511, %v698
          %v700 = vpop.f32.mrb[0].mxu0
          %701 = vmatprep.mubr.f32.mxu0 0.0
          %702 = vmatmul.mubr.f32.gmra.mrb[0].mxu0 %v560
          %v703 = vpop.f32.mrb[0].mxu0
          %v704 = vadd.f32 %v512, %v703
          %v705 = vpop.f32.mrb[0].mxu0
          %706 = vdwg.mxu0
          %vm707 = vcmask 261120
          %708 = vst.msk [vmem:[#allocation2] sm:$0xff] %vm707, %v629
          %709 = vst.msk [vmem:[#allocation2 + $0x8] sm:$0xff] %vm707, %v634
          %710 = vst.msk [vmem:[#allocation2 + $0x10] sm:$0xff] %vm707, %v639
          %711 = vst.msk [vmem:[#allocation2 + $0x18] sm:$0xff] %vm707, %v644
          %712 = vst.msk [vmem:[#allocation2 + $0x20] sm:$0xff] %vm707, %v649
          %713 = vst.msk [vmem:[#allocation2 + $0x28] sm:$0xff] %vm707, %v654
          %714 = vst.msk [vmem:[#allocation2 + $0x30] sm:$0xff] %vm707, %v659
          %715 = vst.msk [vmem:[#allocation2 + $0x38] sm:$0xff] %vm707, %v664
          %716 = vst.msk [vmem:[#allocation2 + $0x40] sm:$0xff] %vm707, %v669
          %717 = vst.msk [vmem:[#allocation2 + $0x48] sm:$0xff] %vm707, %v674
          %718 = vst.msk [vmem:[#allocation2 + $0x50] sm:$0xff] %vm707, %v679
          %719 = vst.msk [vmem:[#allocation2 + $0x58] sm:$0xff] %vm707, %v684
          %720 = vst.msk [vmem:[#allocation2 + $0x60] sm:$0xff] %vm707, %v689
          %721 = vst.msk [vmem:[#allocation2 + $0x68] sm:$0xff] %vm707, %v694
          %722 = vst.msk [vmem:[#allocation2 + $0x70] sm:$0xff] %vm707, %v699
          %723 = vst.msk [vmem:[#allocation2 + $0x78] sm:$0xff] %vm707, %v704
        $region68: #{encoder_forward.1} parent=63 // pred_fallthru
          _
        %v724 = vld [vmem:[#allocation2] sm:$0xff]
        %v725 = vld [vmem:[#allocation2 + $0x8] sm:$0xff]
        %v726 = vld [vmem:[#allocation2 + $0x10] sm:$0xff]
        %v727 = vld [vmem:[#allocation2 + $0x18] sm:$0xff]
        %v728 = vld [vmem:[#allocation2 + $0x20] sm:$0xff]
        %v729 = vld [vmem:[#allocation2 + $0x28] sm:$0xff]
        %v730 = vld [vmem:[#allocation2 + $0x30] sm:$0xff]
        %v731 = vld [vmem:[#allocation2 + $0x38] sm:$0xff]
        %v732 = vld [vmem:[#allocation2 + $0x40] sm:$0xff]
        %v733 = vld [vmem:[#allocation2 + $0x48] sm:$0xff]
        %v734 = vld [vmem:[#allocation2 + $0x50] sm:$0xff]
        %v735 = vld [vmem:[#allocation2 + $0x58] sm:$0xff]
        %v736 = vld [vmem:[#allocation2 + $0x60] sm:$0xff]
        %v737 = vld [vmem:[#allocation2 + $0x68] sm:$0xff]
        %v738 = vld [vmem:[#allocation2 + $0x70] sm:$0xff]
        %v739 = vld [vmem:[#allocation2 + $0x78] sm:$0xff]
        %v740 = vld [vmem:[%s3] sm:$0xff]
        %v741 = vld [vmem:[%s3 + $0x8] sm:$0xff]
        %v742 = vld [vmem:[%s3 + $0x10] sm:$0xff]
        %v743 = vld [vmem:[%s3 + $0x18] sm:$0xff]
        %v744 = vld [vmem:[%s3 + $0x20] sm:$0xff]
        %v745 = vld [vmem:[%s3 + $0x28] sm:$0xff]
        %v746 = vld [vmem:[%s3 + $0x30] sm:$0xff]
        %v747 = vld [vmem:[%s3 + $0x38] sm:$0xff]
        %v748 = vld [vmem:[%s3 + $0x40] sm:$0xff]
        %v749 = vld [vmem:[%s3 + $0x48] sm:$0xff]
        %v750 = vld [vmem:[%s3 + $0x50] sm:$0xff]
        %v751 = vld [vmem:[%s3 + $0x58] sm:$0xff]
        %v752 = vld [vmem:[%s3 + $0x60] sm:$0xff]
        %v753 = vld [vmem:[%s3 + $0x68] sm:$0xff]
        %v754 = vld [vmem:[%s3 + $0x70] sm:$0xff]
        %v755 = vld [vmem:[%s3 + $0x78] sm:$0xff]
        %v756 = vld [vmem:[%s469] sm:$0xff]
        %v757 = vld [vmem:[%s469 + $0x8] sm:$0xff]
        %v758 = vld [vmem:[%s445] sm:$0xff]
        %v759 = vld [vmem:[%s445 + $0x8] sm:$0xff]
        %v760 = vld [vmem:[%s445 + $0x10] sm:$0xff]
        %v761 = vld [vmem:[%s445 + $0x18] sm:$0xff]
        %vm762 = vcmask 261120
        %v764 = vsel %vm762, %v724, 0
        %v767 = vsel %vm762, %v725, 0
        %v770 = vsel %vm762, %v726, 0
        %v773 = vsel %vm762, %v727, 0
        %v776 = vsel %vm762, %v728, 0
        %v779 = vsel %vm762, %v729, 0
        %v782 = vsel %vm762, %v730, 0
        %v785 = vsel %vm762, %v731, 0
        %v788 = vsel %vm762, %v732, 0
        %v791 = vsel %vm762, %v733, 0
        %v794 = vsel %vm762, %v734, 0
        %v797 = vsel %vm762, %v735, 0
        %v800 = vsel %vm762, %v736, 0
        %v803 = vsel %vm762, %v737, 0
        %v806 = vsel %vm762, %v738, 0
        %v809 = vsel %vm762, %v739, 0
        %811 = vmatprep.subr.mxu0 0.0
        %812 = vmatpush1.msra.mxu0 %v758
        %813 = vmatprep.subr.mxu0 0.0
        %814 = vmatpush1.msra.mxu0 %v759
        %815 = vmatprep.subr.mxu0 0.0
        %816 = vmatpush1.msra.mxu0 %v760
        %817 = vmatprep.subr.mxu0 0.0
        %818 = vmatpush1.msra.mxu0 %v761
        %819 = vmatprep.subr.mxu0 0.0
        %820 = vmatpush1.msra.mxu0 0.0
        %821 = vmatprep.subr.mxu0 0.0
        %822 = vmatpush1.msra.mxu0 0.0
        %823 = vmatprep.subr.mxu0 0.0
        %824 = vmatpush1.msra.mxu0 0.0
        %825 = vmatprep.subr.mxu0 0.0
        %826 = vmatpush1.msra.mxu0 0.0
        %827 = vmatprep.subr.mxu0 0.0
        %828 = vmatpush1.msra.mxu0 0.0
        %829 = vmatprep.subr.mxu0 0.0
        %830 = vmatpush1.msra.mxu0 0.0
        %831 = vmatprep.subr.mxu0 0.0
        %832 = vmatpush1.msra.mxu0 0.0
        %833 = vmatprep.subr.mxu0 0.0
        %834 = vmatpush1.msra.mxu0 0.0
        %835 = vmatprep.subr.mxu0 0.0
        %836 = vmatpush1.msra.mxu0 0.0
        %837 = vmatprep.subr.mxu0 0.0
        %838 = vmatpush1.msra.mxu0 0.0
        %839 = vmatprep.subr.mxu0 0.0
        %840 = vmatpush1.msra.mxu0 0.0
        %841 = vmatprep.subr.mxu0 0.0
        %842 = vmatpush1.msra.mxu0 0.0
        %843 = vmatprep.subr.mxu0 0.0
        %844 = vmatpush1.msra.mxu0 0.0
        %845 = vmatprep.subr.mxu0 0.0
        %846 = vmatpush1.msra.mxu0 0.0
        %847 = vmatprep.subr.mxu0 0.0
        %848 = vmatpush1.msra.mxu0 0.0
        %849 = vmatprep.subr.mxu0 0.0
        %850 = vmatpush1.msra.mxu0 0.0
        %851 = vmatprep.subr.mxu0 0.0
        %852 = vmatpush1.msra.mxu0 0.0
        %853 = vmatprep.subr.mxu0 0.0
        %854 = vmatpush1.msra.mxu0 0.0
        %855 = vmatprep.subr.mxu0 0.0
        %856 = vmatpush1.msra.mxu0 0.0
        %857 = vmatprep.subr.mxu0 0.0
        %858 = vmatpush1.msra.mxu0 0.0
        %859 = vmatprep.subr.mxu0 0.0
        %860 = vmatpush1.msra.mxu0 0.0
        %861 = vmatprep.subr.mxu0 0.0
        %862 = vmatpush1.msra.mxu0 0.0
        %863 = vmatprep.subr.mxu0 0.0
        %864 = vmatpush1.msra.mxu0 0.0
        %865 = vmatprep.subr.mxu0 0.0
        %866 = vmatpush1.msra.mxu0 0.0
        %867 = vmatprep.subr.mxu0 0.0
        %868 = vmatpush1.msra.mxu0 0.0
        %869 = vmatprep.subr.mxu0 0.0
        %870 = vmatpush1.msra.mxu0 0.0
        %871 = vmatprep.subr.mxu0 0.0
        %872 = vmatpush1.msra.mxu0 0.0
        %873 = vmatprep.subr.mxu0 0.0
        %874 = vmatpush1.msra.mxu0 0.0
        %875 = vmatprep.mubr.f32.mxu0 0.0
        %876 = vmatmul.mubr.f32.gmra.mrb[0].mxu0 %v764
        %v877 = vpop.f32.mrb[0].mxu0
        %v878 = vadd.f32 0.0, %v877
        %v879 = vpop.f32.mrb[0].mxu0
        %880 = vmatprep.mubr.f32.mxu0 0.0
        %881 = vmatmul.mubr.f32.gmra.mrb[0].mxu0 %v767
        %v882 = vpop.f32.mrb[0].mxu0
        %v883 = vadd.f32 0.0, %v882
        %v884 = vpop.f32.mrb[0].mxu0
        %885 = vmatprep.mubr.f32.mxu0 0.0
        %886 = vmatmul.mubr.f32.gmra.mrb[0].mxu0 %v770
        %v887 = vpop.f32.mrb[0].mxu0
        %v888 = vadd.f32 0.0, %v887
        %v889 = vpop.f32.mrb[0].mxu0
        %890 = vmatprep.mubr.f32.mxu0 0.0
        %891 = vmatmul.mubr.f32.gmra.mrb[0].mxu0 %v773
        %v892 = vpop.f32.mrb[0].mxu0
        %v893 = vadd.f32 0.0, %v892
        %v894 = vpop.f32.mrb[0].mxu0
        %895 = vmatprep.mubr.f32.mxu0 0.0
        %896 = vmatmul.mubr.f32.gmra.mrb[0].mxu0 %v776
        %v897 = vpop.f32.mrb[0].mxu0
        %v898 = vadd.f32 0.0, %v897
        %v899 = vpop.f32.mrb[0].mxu0
        %900 = vmatprep.mubr.f32.mxu0 0.0
        %901 = vmatmul.mubr.f32.gmra.mrb[0].mxu0 %v779
        %v902 = vpop.f32.mrb[0].mxu0
        %v903 = vadd.f32 0.0, %v902
        %v904 = vpop.f32.mrb[0].mxu0
        %905 = vmatprep.mubr.f32.mxu0 0.0
        %906 = vmatmul.mubr.f32.gmra.mrb[0].mxu0 %v782
        %v907 = vpop.f32.mrb[0].mxu0
        %v908 = vadd.f32 0.0, %v907
        %v909 = vpop.f32.mrb[0].mxu0
        %910 = vmatprep.mubr.f32.mxu0 0.0
        %911 = vmatmul.mubr.f32.gmra.mrb[0].mxu0 %v785
        %v912 = vpop.f32.mrb[0].mxu0
        %v913 = vadd.f32 0.0, %v912
        %v914 = vpop.f32.mrb[0].mxu0
        %915 = vmatprep.mubr.f32.mxu0 0.0
        %916 = vmatmul.mubr.f32.gmra.mrb[0].mxu0 %v788
        %v917 = vpop.f32.mrb[0].mxu0
        %v918 = vadd.f32 0.0, %v917
        %v919 = vpop.f32.mrb[0].mxu0
        %920 = vmatprep.mubr.f32.mxu0 0.0
        %921 = vmatmul.mubr.f32.gmra.mrb[0].mxu0 %v791
        %v922 = vpop.f32.mrb[0].mxu0
        %v923 = vadd.f32 0.0, %v922
        %v924 = vpop.f32.mrb[0].mxu0
        %925 = vmatprep.mubr.f32.mxu0 0.0
        %926 = vmatmul.mubr.f32.gmra.mrb[0].mxu0 %v794
        %v927 = vpop.f32.mrb[0].mxu0
        %v928 = vadd.f32 0.0, %v927
        %v929 = vpop.f32.mrb[0].mxu0
        %930 = vmatprep.mubr.f32.mxu0 0.0
        %931 = vmatmul.mubr.f32.gmra.mrb[0].mxu0 %v797
        %v932 = vpop.f32.mrb[0].mxu0
        %v933 = vadd.f32 0.0, %v932
        %v934 = vpop.f32.mrb[0].mxu0
        %935 = vmatprep.mubr.f32.mxu0 0.0
        %936 = vmatmul.mubr.f32.gmra.mrb[0].mxu0 %v800
        %v937 = vpop.f32.mrb[0].mxu0
        %v938 = vadd.f32 0.0, %v937
        %v939 = vpop.f32.mrb[0].mxu0
        %940 = vmatprep.mubr.f32.mxu0 0.0
        %941 = vmatmul.mubr.f32.gmra.mrb[0].mxu0 %v803
        %v942 = vpop.f32.mrb[0].mxu0
        %v943 = vadd.f32 0.0, %v942
        %v944 = vpop.f32.mrb[0].mxu0
        %945 = vmatprep.mubr.f32.mxu0 0.0
        %946 = vmatmul.mubr.f32.gmra.mrb[0].mxu0 %v806
        %v947 = vpop.f32.mrb[0].mxu0
        %v948 = vadd.f32 0.0, %v947
        %v949 = vpop.f32.mrb[0].mxu0
        %950 = vmatprep.mubr.f32.mxu0 0.0
        %951 = vmatmul.mubr.f32.gmra.mrb[0].mxu0 %v809
        %v952 = vpop.f32.mrb[0].mxu0
        %v953 = vadd.f32 0.0, %v952
        %v954 = vpop.f32.mrb[0].mxu0
        %955 = vdwg.mxu0
        %v956 = vlaneseq
        %v957 = vshrl.u32 %v956, 7
        %v958 = vsub.s32 0, %v957
        %v959 = vrot.slane %v756, %v958
        %v960 = vadd.f32 %v878, %v959
        %v961 = vadd.f32 %v883, %v959
        %v962 = vadd.f32 %v888, %v959
        %v963 = vadd.f32 %v893, %v959
        %v964 = vadd.f32 %v898, %v959
        %v965 = vadd.f32 %v903, %v959
        %v966 = vadd.f32 %v908, %v959
        %v967 = vadd.f32 %v913, %v959
        %v968 = vadd.f32 %v918, %v959
        %v969 = vadd.f32 %v923, %v959
        %v970 = vadd.f32 %v928, %v959
        %v971 = vadd.f32 %v933, %v959
        %v972 = vadd.f32 %v938, %v959
        %v973 = vadd.f32 %v943, %v959
        %v974 = vadd.f32 %v948, %v959
        %v975 = vadd.f32 %v953, %v959
        %v976 = vlaneseq
        %v977 = vshrl.u32 %v976, 7
        %v978 = vsub.s32 1, %v977
        %v979 = vrot.slane %v756, %v978
        %981 = vrot.lane.b32.xlu0 %v979, 32
        %v982 = vpop.permute.xlu0 %981
        %v984 = vadd.f32 %v878, %v982
        %v985 = vadd.f32 %v883, %v982
        %v986 = vadd.f32 %v888, %v982
        %v987 = vadd.f32 %v893, %v982
        %v988 = vadd.f32 %v898, %v982
        %v989 = vadd.f32 %v903, %v982
        %v990 = vadd.f32 %v908, %v982
        %v991 = vadd.f32 %v913, %v982
        %v992 = vadd.f32 %v918, %v982
        %v993 = vadd.f32 %v923, %v982
        %v994 = vadd.f32 %v928, %v982
        %v995 = vadd.f32 %v933, %v982
        %v996 = vadd.f32 %v938, %v982
        %v997 = vadd.f32 %v943, %v982
        %v998 = vadd.f32 %v948, %v982
        %v999 = vadd.f32 %v953, %v982
        %v1000 = vlaneseq
        %v1001 = vshrl.u32 %v1000, 7
        %v1002 = vsub.s32 2, %v1001
        %v1003 = vrot.slane %v756, %v1002
        %1005 = vrot.lane.b32.xlu0 %v1003, 64
        %v1006 = vpop.permute.xlu0 %1005
        %v1008 = vadd.f32 %v878, %v1006
        %v1009 = vadd.f32 %v883, %v1006
        %v1010 = vadd.f32 %v888, %v1006
        %v1011 = vadd.f32 %v893, %v1006
        %v1012 = vadd.f32 %v898, %v1006
        %v1013 = vadd.f32 %v903, %v1006
        %v1014 = vadd.f32 %v908, %v1006
        %v1015 = vadd.f32 %v913, %v1006
        %v1016 = vadd.f32 %v918, %v1006
        %v1017 = vadd.f32 %v923, %v1006
        %v1018 = vadd.f32 %v928, %v1006
        %v1019 = vadd.f32 %v933, %v1006
        %v1020 = vadd.f32 %v938, %v1006
        %v1021 = vadd.f32 %v943, %v1006
        %v1022 = vadd.f32 %v948, %v1006
        %v1023 = vadd.f32 %v953, %v1006
        %1040 = vrot.lane.b32.xlu0 %v984, 96
        %v1041 = vpop.permute.xlu0 %1040
        %1042 = vrot.lane.b32.xlu0 %v985, 96
        %v1043 = vpop.permute.xlu0 %1042
        %1044 = vrot.lane.b32.xlu0 %v986, 96
        %v1045 = vpop.permute.xlu0 %1044
        %1046 = vrot.lane.b32.xlu0 %v987, 96
        %v1047 = vpop.permute.xlu0 %1046
        %1048 = vrot.lane.b32.xlu0 %v988, 96
        %v1049 = vpop.permute.xlu0 %1048
        %1050 = vrot.lane.b32.xlu0 %v989, 96
        %v1051 = vpop.permute.xlu0 %1050
        %1052 = vrot.lane.b32.xlu0 %v990, 96
        %v1053 = vpop.permute.xlu0 %1052
        %1054 = vrot.lane.b32.xlu0 %v991, 96
        %v1055 = vpop.permute.xlu0 %1054
        %1056 = vrot.lane.b32.xlu0 %v992, 96
        %v1057 = vpop.permute.xlu0 %1056
        %1058 = vrot.lane.b32.xlu0 %v993, 96
        %v1059 = vpop.permute.xlu0 %1058
        %1060 = vrot.lane.b32.xlu0 %v994, 96
        %v1061 = vpop.permute.xlu0 %1060
        %1062 = vrot.lane.b32.xlu0 %v995, 96
        %v1063 = vpop.permute.xlu0 %1062
        %1064 = vrot.lane.b32.xlu0 %v996, 96
        %v1065 = vpop.permute.xlu0 %1064
        %1066 = vrot.lane.b32.xlu0 %v997, 96
        %v1067 = vpop.permute.xlu0 %1066
        %1068 = vrot.lane.b32.xlu0 %v998, 96
        %v1069 = vpop.permute.xlu0 %1068
        %1070 = vrot.lane.b32.xlu0 %v999, 96
        %v1071 = vpop.permute.xlu0 %1070
        %vm1072 = vcmask 64512
        %v1074 = vsel %vm1072, %v960, 0
        %v1077 = vsel %vm1072, %v961, 0
        %v1080 = vsel %vm1072, %v962, 0
        %v1083 = vsel %vm1072, %v963, 0
        %v1086 = vsel %vm1072, %v964, 0
        %v1089 = vsel %vm1072, %v965, 0
        %v1092 = vsel %vm1072, %v966, 0
        %v1095 = vsel %vm1072, %v967, 0
        %v1098 = vsel %vm1072, %v968, 0
        %v1101 = vsel %vm1072, %v969, 0
        %v1104 = vsel %vm1072, %v970, 0
        %v1107 = vsel %vm1072, %v971, 0
        %v1110 = vsel %vm1072, %v972, 0
        %v1113 = vsel %vm1072, %v973, 0
        %v1116 = vsel %vm1072, %v974, 0
        %v1119 = vsel %vm1072, %v975, 0
        %v1121 = vsel %vm1072, %v1041, 0
        %v1123 = vsel %vm1072, %v1043, 0
        %v1125 = vsel %vm1072, %v1045, 0
        %v1127 = vsel %vm1072, %v1047, 0
        %v1129 = vsel %vm1072, %v1049, 0
        %v1131 = vsel %vm1072, %v1051, 0
        %v1133 = vsel %vm1072, %v1053, 0
        %v1135 = vsel %vm1072, %v1055, 0
        %v1137 = vsel %vm1072, %v1057, 0
        %v1139 = vsel %vm1072, %v1059, 0
        %v1141 = vsel %vm1072, %v1061, 0
        %v1143 = vsel %vm1072, %v1063, 0
        %v1145 = vsel %vm1072, %v1065, 0
        %v1147 = vsel %vm1072, %v1067, 0
        %v1149 = vsel %vm1072, %v1069, 0
        %v1151 = vsel %vm1072, %v1071, 0
        %1153 = vmatprep.subr.mxu0 0.0
        %1154 = vmatpush1.xpose.msra.mxu0 %v1121
        %1155 = vmatprep.subr.mxu0 0.0
        %1156 = vmatpush1.xpose.msra.mxu0 %v1123
        %1157 = vmatprep.subr.mxu0 0.0
        %1158 = vmatpush1.xpose.msra.mxu0 %v1125
        %1159 = vmatprep.subr.mxu0 0.0
        %1160 = vmatpush1.xpose.msra.mxu0 %v1127
        %1161 = vmatprep.subr.mxu0 0.0
        %1162 = vmatpush1.xpose.msra.mxu0 %v1129
        %1163 = vmatprep.subr.mxu0 0.0
        %1164 = vmatpush1.xpose.msra.mxu0 %v1131
        %1165 = vmatprep.subr.mxu0 0.0
        %1166 = vmatpush1.xpose.msra.mxu0 %v1133
        %1167 = vmatprep.subr.mxu0 0.0
        %1168 = vmatpush1.xpose.msra.mxu0 %v1135
        %1169 = vmatprep.subr.mxu0 0.0
        %1170 = vmatpush1.xpose.msra.mxu0 %v1137
        %1171 = vmatprep.subr.mxu0 0.0
        %1172 = vmatpush1.xpose.msra.mxu0 %v1139
        %1173 = vmatprep.subr.mxu0 0.0
        %1174 = vmatpush1.xpose.msra.mxu0 %v1141
        %1175 = vmatprep.subr.mxu0 0.0
        %1176 = vmatpush1.xpose.msra.mxu0 %v1143
        %1177 = vmatprep.subr.mxu0 0.0
        %1178 = vmatpush1.xpose.msra.mxu0 %v1145
        %1179 = vmatprep.subr.mxu0 0.0
        %1180 = vmatpush1.xpose.msra.mxu0 %v1147
        %1181 = vmatprep.subr.mxu0 0.0
        %1182 = vmatpush1.xpose.msra.mxu0 %v1149
        %1183 = vmatprep.subr.mxu0 0.0
        %1184 = vmatpush1.xpose.msra.mxu0 %v1151
        %1185 = vmatprep.subr.mxu0 0.0
        %1186 = vmatpush1.xpose.msra.mxu0 0.0
        %1187 = vmatprep.subr.mxu0 0.0
        %1188 = vmatpush1.xpose.msra.mxu0 0.0
        %1189 = vmatprep.subr.mxu0 0.0
        %1190 = vmatpush1.xpose.msra.mxu0 0.0
        %1191 = vmatprep.subr.mxu0 0.0
        %1192 = vmatpush1.xpose.msra.mxu0 0.0
        %1193 = vmatprep.subr.mxu0 0.0
        %1194 = vmatpush1.xpose.msra.mxu0 0.0
        %1195 = vmatprep.subr.mxu0 0.0
        %1196 = vmatpush1.xpose.msra.mxu0 0.0
        %1197 = vmatprep.subr.mxu0 0.0
        %1198 = vmatpush1.xpose.msra.mxu0 0.0
        %1199 = vmatprep.subr.mxu0 0.0
        %1200 = vmatpush1.xpose.msra.mxu0 0.0
        %1201 = vmatprep.subr.mxu0 0.0
        %1202 = vmatpush1.xpose.msra.mxu0 0.0
        %1203 = vmatprep.subr.mxu0 0.0
        %1204 = vmatpush1.xpose.msra.mxu0 0.0
        %1205 = vmatprep.subr.mxu0 0.0
        %1206 = vmatpush1.xpose.msra.mxu0 0.0
        %1207 = vmatprep.subr.mxu0 0.0
        %1208 = vmatpush1.xpose.msra.mxu0 0.0
        %1209 = vmatprep.subr.mxu0 0.0
        %1210 = vmatpush1.xpose.msra.mxu0 0.0
        %1211 = vmatprep.subr.mxu0 0.0
        %1212 = vmatpush1.xpose.msra.mxu0 0.0
        %1213 = vmatprep.subr.mxu0 0.0
        %1214 = vmatpush1.xpose.msra.mxu0 0.0
        %1215 = vmatprep.subr.mxu0 0.0
        %1216 = vmatpush1.xpose.msra.mxu0 0.0
        %1217 = vmatprep.mubr.f32.mxu0 0.0
        %1218 = vmatmul.mubr.f32.gmra.mrb[0].mxu0 %v1074
        %v1219 = vpop.f32.mrb[0].mxu0
        %v1220 = vadd.f32 %v740, %v1219
        %v1221 = vpop.f32.mrb[0].mxu0
        %1222 = vmatprep.mubr.f32.mxu0 0.0
        %1223 = vmatmul.mubr.f32.gmra.mrb[0].mxu0 %v1077
        %v1224 = vpop.f32.mrb[0].mxu0
        %v1225 = vadd.f32 %v741, %v1224
        %v1226 = vpop.f32.mrb[0].mxu0
        %1227 = vmatprep.mubr.f32.mxu0 0.0
        %1228 = vmatmul.mubr.f32.gmra.mrb[0].mxu0 %v1080
        %v1229 = vpop.f32.mrb[0].mxu0
        %v1230 = vadd.f32 %v742, %v1229
        %v1231 = vpop.f32.mrb[0].mxu0
        %1232 = vmatprep.mubr.f32.mxu0 0.0
        %1233 = vmatmul.mubr.f32.gmra.mrb[0].mxu0 %v1083
        %v1234 = vpop.f32.mrb[0].mxu0
        %v1235 = vadd.f32 %v743, %v1234
        %v1236 = vpop.f32.mrb[0].mxu0
        %1237 = vmatprep.mubr.f32.mxu0 0.0
        %1238 = vmatmul.mubr.f32.gmra.mrb[0].mxu0 %v1086
        %v1239 = vpop.f32.mrb[0].mxu0
        %v1240 = vadd.f32 %v744, %v1239
        %v1241 = vpop.f32.mrb[0].mxu0
        %1242 = vmatprep.mubr.f32.mxu0 0.0
        %1243 = vmatmul.mubr.f32.gmra.mrb[0].mxu0 %v1089
        %v1244 = vpop.f32.mrb[0].mxu0
        %v1245 = vadd.f32 %v745, %v1244
        %v1246 = vpop.f32.mrb[0].mxu0
        %1247 = vmatprep.mubr.f32.mxu0 0.0
        %1248 = vmatmul.mubr.f32.gmra.mrb[0].mxu0 %v1092
        %v1249 = vpop.f32.mrb[0].mxu0
        %v1250 = vadd.f32 %v746, %v1249
        %v1251 = vpop.f32.mrb[0].mxu0
        %1252 = vmatprep.mubr.f32.mxu0 0.0
        %1253 = vmatmul.mubr.f32.gmra.mrb[0].mxu0 %v1095
        %v1254 = vpop.f32.mrb[0].mxu0
        %v1255 = vadd.f32 %v747, %v1254
        %v1256 = vpop.f32.mrb[0].mxu0
        %1257 = vmatprep.mubr.f32.mxu0 0.0
        %1258 = vmatmul.mubr.f32.gmra.mrb[0].mxu0 %v1098
        %v1259 = vpop.f32.mrb[0].mxu0
        %v1260 = vadd.f32 %v748, %v1259
        %v1261 = vpop.f32.mrb[0].mxu0
        %1262 = vmatprep.mubr.f32.mxu0 0.0
        %1263 = vmatmul.mubr.f32.gmra.mrb[0].mxu0 %v1101
        %v1264 = vpop.f32.mrb[0].mxu0
        %v1265 = vadd.f32 %v749, %v1264
        %v1266 = vpop.f32.mrb[0].mxu0
        %1267 = vmatprep.mubr.f32.mxu0 0.0
        %1268 = vmatmul.mubr.f32.gmra.mrb[0].mxu0 %v1104
        %v1269 = vpop.f32.mrb[0].mxu0
        %v1270 = vadd.f32 %v750, %v1269
        %v1271 = vpop.f32.mrb[0].mxu0
        %1272 = vmatprep.mubr.f32.mxu0 0.0
        %1273 = vmatmul.mubr.f32.gmra.mrb[0].mxu0 %v1107
        %v1274 = vpop.f32.mrb[0].mxu0
        %v1275 = vadd.f32 %v751, %v1274
        %v1276 = vpop.f32.mrb[0].mxu0
        %1277 = vmatprep.mubr.f32.mxu0 0.0
        %1278 = vmatmul.mubr.f32.gmra.mrb[0].mxu0 %v1110
        %v1279 = vpop.f32.mrb[0].mxu0
        %v1280 = vadd.f32 %v752, %v1279
        %v1281 = vpop.f32.mrb[0].mxu0
        %1282 = vmatprep.mubr.f32.mxu0 0.0
        %1283 = vmatmul.mubr.f32.gmra.mrb[0].mxu0 %v1113
        %v1284 = vpop.f32.mrb[0].mxu0
        %v1285 = vadd.f32 %v753, %v1284
        %v1286 = vpop.f32.mrb[0].mxu0
        %1287 = vmatprep.mubr.f32.mxu0 0.0
        %1288 = vmatmul.mubr.f32.gmra.mrb[0].mxu0 %v1116
        %v1289 = vpop.f32.mrb[0].mxu0
        %v1290 = vadd.f32 %v754, %v1289
        %v1291 = vpop.f32.mrb[0].mxu0
        %1292 = vmatprep.mubr.f32.mxu0 0.0
        %1293 = vmatmul.mubr.f32.gmra.mrb[0].mxu0 %v1119
        %v1294 = vpop.f32.mrb[0].mxu0
        %v1295 = vadd.f32 %v755, %v1294
        %v1296 = vpop.f32.mrb[0].mxu0
        %1297 = vdwg.mxu0
        %1298 = vmax.xlane.f32.xlu0 %v1220
        %v1299 = vpop.xlane.xlu0 %1298
        %1300 = vmax.xlane.f32.xlu0 %v1225
        %v1301 = vpop.xlane.xlu0 %1300
        %1302 = vmax.xlane.f32.xlu0 %v1230
        %v1303 = vpop.xlane.xlu0 %1302
        %1304 = vmax.xlane.f32.xlu0 %v1235
        %v1305 = vpop.xlane.xlu0 %1304
        %1306 = vmax.xlane.f32.xlu0 %v1240
        %v1307 = vpop.xlane.xlu0 %1306
        %1308 = vmax.xlane.f32.xlu0 %v1245
        %v1309 = vpop.xlane.xlu0 %1308
        %1310 = vmax.xlane.f32.xlu0 %v1250
        %v1311 = vpop.xlane.xlu0 %1310
        %1312 = vmax.xlane.f32.xlu0 %v1255
        %v1313 = vpop.xlane.xlu0 %1312
        %1314 = vmax.xlane.f32.xlu0 %v1260
        %v1315 = vpop.xlane.xlu0 %1314
        %1316 = vmax.xlane.f32.xlu0 %v1265
        %v1317 = vpop.xlane.xlu0 %1316
        %1318 = vmax.xlane.f32.xlu0 %v1270
        %v1319 = vpop.xlane.xlu0 %1318
        %1320 = vmax.xlane.f32.xlu0 %v1275
        %v1321 = vpop.xlane.xlu0 %1320
        %1322 = vmax.xlane.f32.xlu0 %v1280
        %v1323 = vpop.xlane.xlu0 %1322
        %1324 = vmax.xlane.f32.xlu0 %v1285
        %v1325 = vpop.xlane.xlu0 %1324
        %1326 = vmax.xlane.f32.xlu0 %v1290
        %v1327 = vpop.xlane.xlu0 %1326
        %1328 = vmax.xlane.f32.xlu0 %v1295
        %v1329 = vpop.xlane.xlu0 %1328
        %v1330 = vsub.f32 %v1220, %v1299
        %v1331 = vsub.f32 %v1225, %v1301
        %v1332 = vsub.f32 %v1230, %v1303
        %v1333 = vsub.f32 %v1235, %v1305
        %v1334 = vsub.f32 %v1240, %v1307
        %v1335 = vsub.f32 %v1245, %v1309
        %v1336 = vsub.f32 %v1250, %v1311
        %v1337 = vsub.f32 %v1255, %v1313
        %v1338 = vsub.f32 %v1260, %v1315
        %v1339 = vsub.f32 %v1265, %v1317
        %v1340 = vsub.f32 %v1270, %v1319
        %v1341 = vsub.f32 %v1275, %v1321
        %v1342 = vsub.f32 %v1280, %v1323
        %v1343 = vsub.f32 %v1285, %v1325
        %v1344 = vsub.f32 %v1290, %v1327
        %v1345 = vsub.f32 %v1295, %v1329
        %v1346 = vmul.f32 %v1330, 1.442695
        %v1347 = vpow.pop %v1346
        %v1348 = vmul.f32 %v1331, 1.442695
        %v1349 = vpow.pop %v1348
        %v1350 = vmul.f32 %v1332, 1.442695
        %v1351 = vpow.pop %v1350
        %v1352 = vmul.f32 %v1333, 1.442695
        %v1353 = vpow.pop %v1352
        %v1354 = vmul.f32 %v1334, 1.442695
        %v1355 = vpow.pop %v1354
        %v1356 = vmul.f32 %v1335, 1.442695
        %v1357 = vpow.pop %v1356
        %v1358 = vmul.f32 %v1336, 1.442695
        %v1359 = vpow.pop %v1358
        %v1360 = vmul.f32 %v1337, 1.442695
        %v1361 = vpow.pop %v1360
        %v1362 = vmul.f32 %v1338, 1.442695
        %v1363 = vpow.pop %v1362
        %v1364 = vmul.f32 %v1339, 1.442695
        %v1365 = vpow.pop %v1364
        %v1366 = vmul.f32 %v1340, 1.442695
        %v1367 = vpow.pop %v1366
        %v1368 = vmul.f32 %v1341, 1.442695
        %v1369 = vpow.pop %v1368
        %v1370 = vmul.f32 %v1342, 1.442695
        %v1371 = vpow.pop %v1370
        %v1372 = vmul.f32 %v1343, 1.442695
        %v1373 = vpow.pop %v1372
        %v1374 = vmul.f32 %v1344, 1.442695
        %v1375 = vpow.pop %v1374
        %v1376 = vmul.f32 %v1345, 1.442695
        %v1377 = vpow.pop %v1376
        %1378 = vadd.xlane.f32.xlu0 %v1347
        %v1379 = vpop.xlane.xlu0 %1378
        %1380 = vadd.xlane.f32.xlu0 %v1349
        %v1381 = vpop.xlane.xlu0 %1380
        %1382 = vadd.xlane.f32.xlu0 %v1351
        %v1383 = vpop.xlane.xlu0 %1382
        %1384 = vadd.xlane.f32.xlu0 %v1353
        %v1385 = vpop.xlane.xlu0 %1384
        %1386 = vadd.xlane.f32.xlu0 %v1355
        %v1387 = vpop.xlane.xlu0 %1386
        %1388 = vadd.xlane.f32.xlu0 %v1357
        %v1389 = vpop.xlane.xlu0 %1388
        %1390 = vadd.xlane.f32.xlu0 %v1359
        %v1391 = vpop.xlane.xlu0 %1390
        %1392 = vadd.xlane.f32.xlu0 %v1361
        %v1393 = vpop.xlane.xlu0 %1392
        %1394 = vadd.xlane.f32.xlu0 %v1363
        %v1395 = vpop.xlane.xlu0 %1394
        %1396 = vadd.xlane.f32.xlu0 %v1365
        %v1397 = vpop.xlane.xlu0 %1396
        %1398 = vadd.xlane.f32.xlu0 %v1367
        %v1399 = vpop.xlane.xlu0 %1398
        %1400 = vadd.xlane.f32.xlu0 %v1369
        %v1401 = vpop.xlane.xlu0 %1400
        %1402 = vadd.xlane.f32.xlu0 %v1371
        %v1403 = vpop.xlane.xlu0 %1402
        %1404 = vadd.xlane.f32.xlu0 %v1373
        %v1405 = vpop.xlane.xlu0 %1404
        %1406 = vadd.xlane.f32.xlu0 %v1375
        %v1407 = vpop.xlane.xlu0 %1406
        %1408 = vadd.xlane.f32.xlu0 %v1377
        %v1409 = vpop.xlane.xlu0 %1408
        %v1410 = vrcp.pop %v1379
        %v1411 = vrcp.pop %v1381
        %v1412 = vrcp.pop %v1383
        %v1413 = vrcp.pop %v1385
        %v1414 = vrcp.pop %v1387
        %v1415 = vrcp.pop %v1389
        %v1416 = vrcp.pop %v1391
        %v1417 = vrcp.pop %v1393
        %v1418 = vrcp.pop %v1395
        %v1419 = vrcp.pop %v1397
        %v1420 = vrcp.pop %v1399
        %v1421 = vrcp.pop %v1401
        %v1422 = vrcp.pop %v1403
        %v1423 = vrcp.pop %v1405
        %v1424 = vrcp.pop %v1407
        %v1425 = vrcp.pop %v1409
        %v1426 = vmul.f32 %v1347, %v1410
        %v1427 = vmul.f32 %v1349, %v1411
        %v1428 = vmul.f32 %v1351, %v1412
        %v1429 = vmul.f32 %v1353, %v1413
        %v1430 = vmul.f32 %v1355, %v1414
        %v1431 = vmul.f32 %v1357, %v1415
        %v1432 = vmul.f32 %v1359, %v1416
        %v1433 = vmul.f32 %v1361, %v1417
        %v1434 = vmul.f32 %v1363, %v1418
        %v1435 = vmul.f32 %v1365, %v1419
        %v1436 = vmul.f32 %v1367, %v1420
        %v1437 = vmul.f32 %v1369, %v1421
        %v1438 = vmul.f32 %v1371, %v1422
        %v1439 = vmul.f32 %v1373, %v1423
        %v1440 = vmul.f32 %v1375, %v1424
        %v1441 = vmul.f32 %v1377, %v1425
        %1458 = vrot.lane.b32.xlu0 %v1008, 64
        %v1459 = vpop.permute.xlu0 %1458
        %1460 = vrot.lane.b32.xlu0 %v1009, 64
        %v1461 = vpop.permute.xlu0 %1460
        %1462 = vrot.lane.b32.xlu0 %v1010, 64
        %v1463 = vpop.permute.xlu0 %1462
        %1464 = vrot.lane.b32.xlu0 %v1011, 64
        %v1465 = vpop.permute.xlu0 %1464
        %1466 = vrot.lane.b32.xlu0 %v1012, 64
        %v1467 = vpop.permute.xlu0 %1466
        %1468 = vrot.lane.b32.xlu0 %v1013, 64
        %v1469 = vpop.permute.xlu0 %1468
        %1470 = vrot.lane.b32.xlu0 %v1014, 64
        %v1471 = vpop.permute.xlu0 %1470
        %1472 = vrot.lane.b32.xlu0 %v1015, 64
        %v1473 = vpop.permute.xlu0 %1472
        %1474 = vrot.lane.b32.xlu0 %v1016, 64
        %v1475 = vpop.permute.xlu0 %1474
        %1476 = vrot.lane.b32.xlu0 %v1017, 64
        %v1477 = vpop.permute.xlu0 %1476
        %1478 = vrot.lane.b32.xlu0 %v1018, 64
        %v1479 = vpop.permute.xlu0 %1478
        %1480 = vrot.lane.b32.xlu0 %v1019, 64
        %v1481 = vpop.permute.xlu0 %1480
        %1482 = vrot.lane.b32.xlu0 %v1020, 64
        %v1483 = vpop.permute.xlu0 %1482
        %1484 = vrot.lane.b32.xlu0 %v1021, 64
        %v1485 = vpop.permute.xlu0 %1484
        %1486 = vrot.lane.b32.xlu0 %v1022, 64
        %v1487 = vpop.permute.xlu0 %1486
        %1488 = vrot.lane.b32.xlu0 %v1023, 64
        %v1489 = vpop.permute.xlu0 %1488
        %1506 = vmatprep.subr.mxu0 0.0
        %1507 = vmatpush1.msra.mxu0 %v1459
        %1508 = vmatprep.subr.mxu0 0.0
        %1509 = vmatpush1.msra.mxu0 %v1461
        %1510 = vmatprep.subr.mxu0 0.0
        %1511 = vmatpush1.msra.mxu0 %v1463
        %1512 = vmatprep.subr.mxu0 0.0
        %1513 = vmatpush1.msra.mxu0 %v1465
        %1514 = vmatprep.subr.mxu0 0.0
        %1515 = vmatpush1.msra.mxu0 %v1467
        %1516 = vmatprep.subr.mxu0 0.0
        %1517 = vmatpush1.msra.mxu0 %v1469
        %1518 = vmatprep.subr.mxu0 0.0
        %1519 = vmatpush1.msra.mxu0 %v1471
        %1520 = vmatprep.subr.mxu0 0.0
        %1521 = vmatpush1.msra.mxu0 %v1473
        %1522 = vmatprep.subr.mxu0 0.0
        %1523 = vmatpush1.msra.mxu0 %v1475
        %1524 = vmatprep.subr.mxu0 0.0
        %1525 = vmatpush1.msra.mxu0 %v1477
        %1526 = vmatprep.subr.mxu0 0.0
        %1527 = vmatpush1.msra.mxu0 %v1479
        %1528 = vmatprep.subr.mxu0 0.0
        %1529 = vmatpush1.msra.mxu0 %v1481
        %1530 = vmatprep.subr.mxu0 0.0
        %1531 = vmatpush1.msra.mxu0 %v1483
        %1532 = vmatprep.subr.mxu0 0.0
        %1533 = vmatpush1.msra.mxu0 %v1485
        %1534 = vmatprep.subr.mxu0 0.0
        %1535 = vmatpush1.msra.mxu0 %v1487
        %1536 = vmatprep.subr.mxu0 0.0
        %1537 = vmatpush1.msra.mxu0 %v1489
        %1538 = vmatprep.subr.mxu0 0.0
        %1539 = vmatpush1.msra.mxu0 0.0
        %1540 = vmatprep.subr.mxu0 0.0
        %1541 = vmatpush1.msra.mxu0 0.0
        %1542 = vmatprep.subr.mxu0 0.0
        %1543 = vmatpush1.msra.mxu0 0.0
        %1544 = vmatprep.subr.mxu0 0.0
        %1545 = vmatpush1.msra.mxu0 0.0
        %1546 = vmatprep.subr.mxu0 0.0
        %1547 = vmatpush1.msra.mxu0 0.0
        %1548 = vmatprep.subr.mxu0 0.0
        %1549 = vmatpush1.msra.mxu0 0.0
        %1550 = vmatprep.subr.mxu0 0.0
        %1551 = vmatpush1.msra.mxu0 0.0
        %1552 = vmatprep.subr.mxu0 0.0
        %1553 = vmatpush1.msra.mxu0 0.0
        %1554 = vmatprep.subr.mxu0 0.0
        %1555 = vmatpush1.msra.mxu0 0.0
        %1556 = vmatprep.subr.mxu0 0.0
        %1557 = vmatpush1.msra.mxu0 0.0
        %1558 = vmatprep.subr.mxu0 0.0
        %1559 = vmatpush1.msra.mxu0 0.0
        %1560 = vmatprep.subr.mxu0 0.0
        %1561 = vmatpush1.msra.mxu0 0.0
        %1562 = vmatprep.subr.mxu0 0.0
        %1563 = vmatpush1.msra.mxu0 0.0
        %1564 = vmatprep.subr.mxu0 0.0
        %1565 = vmatpush1.msra.mxu0 0.0
        %1566 = vmatprep.subr.mxu0 0.0
        %1567 = vmatpush1.msra.mxu0 0.0
        %1568 = vmatprep.subr.mxu0 0.0
        %1569 = vmatpush1.msra.mxu0 0.0
        %1570 = vmatprep.mubr.f32.mxu0 0.0
        %1571 = vmatmul.mubr.f32.gmra.mrb[0].mxu0 %v1426
        %v1572 = vpop.f32.mrb[0].mxu0
        %v1573 = vadd.f32 0.0, %v1572
        %v1574 = vpop.f32.mrb[0].mxu0
        %1575 = vmatprep.mubr.f32.mxu0 0.0
        %1576 = vmatmul.mubr.f32.gmra.mrb[0].mxu0 %v1427
        %v1577 = vpop.f32.mrb[0].mxu0
        %v1578 = vadd.f32 0.0, %v1577
        %v1579 = vpop.f32.mrb[0].mxu0
        %1580 = vmatprep.mubr.f32.mxu0 0.0
        %1581 = vmatmul.mubr.f32.gmra.mrb[0].mxu0 %v1428
        %v1582 = vpop.f32.mrb[0].mxu0
        %v1583 = vadd.f32 0.0, %v1582
        %v1584 = vpop.f32.mrb[0].mxu0
        %1585 = vmatprep.mubr.f32.mxu0 0.0
        %1586 = vmatmul.mubr.f32.gmra.mrb[0].mxu0 %v1429
        %v1587 = vpop.f32.mrb[0].mxu0
        %v1588 = vadd.f32 0.0, %v1587
        %v1589 = vpop.f32.mrb[0].mxu0
        %1590 = vmatprep.mubr.f32.mxu0 0.0
        %1591 = vmatmul.mubr.f32.gmra.mrb[0].mxu0 %v1430
        %v1592 = vpop.f32.mrb[0].mxu0
        %v1593 = vadd.f32 0.0, %v1592
        %v1594 = vpop.f32.mrb[0].mxu0
        %1595 = vmatprep.mubr.f32.mxu0 0.0
        %1596 = vmatmul.mubr.f32.gmra.mrb[0].mxu0 %v1431
        %v1597 = vpop.f32.mrb[0].mxu0
        %v1598 = vadd.f32 0.0, %v1597
        %v1599 = vpop.f32.mrb[0].mxu0
        %1600 = vmatprep.mubr.f32.mxu0 0.0
        %1601 = vmatmul.mubr.f32.gmra.mrb[0].mxu0 %v1432
        %v1602 = vpop.f32.mrb[0].mxu0
        %v1603 = vadd.f32 0.0, %v1602
        %v1604 = vpop.f32.mrb[0].mxu0
        %1605 = vmatprep.mubr.f32.mxu0 0.0
        %1606 = vmatmul.mubr.f32.gmra.mrb[0].mxu0 %v1433
        %v1607 = vpop.f32.mrb[0].mxu0
        %v1608 = vadd.f32 0.0, %v1607
        %v1609 = vpop.f32.mrb[0].mxu0
        %1610 = vmatprep.mubr.f32.mxu0 0.0
        %1611 = vmatmul.mubr.f32.gmra.mrb[0].mxu0 %v1434
        %v1612 = vpop.f32.mrb[0].mxu0
        %v1613 = vadd.f32 0.0, %v1612
        %v1614 = vpop.f32.mrb[0].mxu0
        %1615 = vmatprep.mubr.f32.mxu0 0.0
        %1616 = vmatmul.mubr.f32.gmra.mrb[0].mxu0 %v1435
        %v1617 = vpop.f32.mrb[0].mxu0
        %v1618 = vadd.f32 0.0, %v1617
        %v1619 = vpop.f32.mrb[0].mxu0
        %1620 = vmatprep.mubr.f32.mxu0 0.0
        %1621 = vmatmul.mubr.f32.gmra.mrb[0].mxu0 %v1436
        %v1622 = vpop.f32.mrb[0].mxu0
        %v1623 = vadd.f32 0.0, %v1622
        %v1624 = vpop.f32.mrb[0].mxu0
        %1625 = vmatprep.mubr.f32.mxu0 0.0
        %1626 = vmatmul.mubr.f32.gmra.mrb[0].mxu0 %v1437
        %v1627 = vpop.f32.mrb[0].mxu0
        %v1628 = vadd.f32 0.0, %v1627
        %v1629 = vpop.f32.mrb[0].mxu0
        %1630 = vmatprep.mubr.f32.mxu0 0.0
        %1631 = vmatmul.mubr.f32.gmra.mrb[0].mxu0 %v1438
        %v1632 = vpop.f32.mrb[0].mxu0
        %v1633 = vadd.f32 0.0, %v1632
        %v1634 = vpop.f32.mrb[0].mxu0
        %1635 = vmatprep.mubr.f32.mxu0 0.0
        %1636 = vmatmul.mubr.f32.gmra.mrb[0].mxu0 %v1439
        %v1637 = vpop.f32.mrb[0].mxu0
        %v1638 = vadd.f32 0.0, %v1637
        %v1639 = vpop.f32.mrb[0].mxu0
        %1640 = vmatprep.mubr.f32.mxu0 0.0
        %1641 = vmatmul.mubr.f32.gmra.mrb[0].mxu0 %v1440
        %v1642 = vpop.f32.mrb[0].mxu0
        %v1643 = vadd.f32 0.0, %v1642
        %v1644 = vpop.f32.mrb[0].mxu0
        %1645 = vmatprep.mubr.f32.mxu0 0.0
        %1646 = vmatmul.mubr.f32.gmra.mrb[0].mxu0 %v1441
        %v1647 = vpop.f32.mrb[0].mxu0
        %v1648 = vadd.f32 0.0, %v1647
        %v1649 = vpop.f32.mrb[0].mxu0
        %1650 = vdwg.mxu0
        %1651 = vrot.lane.b32.xlu0 %v960, 120
        %v1652 = vpop.permute.xlu0 %1651
        %1653 = vrot.lane.b32.xlu0 %v961, 120
        %v1654 = vpop.permute.xlu0 %1653
        %1655 = vrot.lane.b32.xlu0 %v962, 120
        %v1656 = vpop.permute.xlu0 %1655
        %1657 = vrot.lane.b32.xlu0 %v963, 120
        %v1658 = vpop.permute.xlu0 %1657
        %1659 = vrot.lane.b32.xlu0 %v964, 120
        %v1660 = vpop.permute.xlu0 %1659
        %1661 = vrot.lane.b32.xlu0 %v965, 120
        %v1662 = vpop.permute.xlu0 %1661
        %1663 = vrot.lane.b32.xlu0 %v966, 120
        %v1664 = vpop.permute.xlu0 %1663
        %1665 = vrot.lane.b32.xlu0 %v967, 120
        %v1666 = vpop.permute.xlu0 %1665
        %1667 = vrot.lane.b32.xlu0 %v968, 120
        %v1668 = vpop.permute.xlu0 %1667
        %1669 = vrot.lane.b32.xlu0 %v969, 120
        %v1670 = vpop.permute.xlu0 %1669
        %1671 = vrot.lane.b32.xlu0 %v970, 120
        %v1672 = vpop.permute.xlu0 %1671
        %1673 = vrot.lane.b32.xlu0 %v971, 120
        %v1674 = vpop.permute.xlu0 %1673
        %1675 = vrot.lane.b32.xlu0 %v972, 120
        %v1676 = vpop.permute.xlu0 %1675
        %1677 = vrot.lane.b32.xlu0 %v973, 120
        %v1678 = vpop.permute.xlu0 %1677
        %1679 = vrot.lane.b32.xlu0 %v974, 120
        %v1680 = vpop.permute.xlu0 %1679
        %1681 = vrot.lane.b32.xlu0 %v975, 120
        %v1682 = vpop.permute.xlu0 %1681
        %1683 = vrot.lane.b32.xlu0 %v984, 88
        %v1684 = vpop.permute.xlu0 %1683
        %1685 = vrot.lane.b32.xlu0 %v985, 88
        %v1686 = vpop.permute.xlu0 %1685
        %1687 = vrot.lane.b32.xlu0 %v986, 88
        %v1688 = vpop.permute.xlu0 %1687
        %1689 = vrot.lane.b32.xlu0 %v987, 88
        %v1690 = vpop.permute.xlu0 %1689
        %1691 = vrot.lane.b32.xlu0 %v988, 88
        %v1692 = vpop.permute.xlu0 %1691
        %1693 = vrot.lane.b32.xlu0 %v989, 88
        %v1694 = vpop.permute.xlu0 %1693
        %1695 = vrot.lane.b32.xlu0 %v990, 88
        %v1696 = vpop.permute.xlu0 %1695
        %1697 = vrot.lane.b32.xlu0 %v991, 88
        %v1698 = vpop.permute.xlu0 %1697
        %1699 = vrot.lane.b32.xlu0 %v992, 88
        %v1700 = vpop.permute.xlu0 %1699
        %1701 = vrot.lane.b32.xlu0 %v993, 88
        %v1702 = vpop.permute.xlu0 %1701
        %1703 = vrot.lane.b32.xlu0 %v994, 88
        %v1704 = vpop.permute.xlu0 %1703
        %1705 = vrot.lane.b32.xlu0 %v995, 88
        %v1706 = vpop.permute.xlu0 %1705
        %1707 = vrot.lane.b32.xlu0 %v996, 88
        %v1708 = vpop.permute.xlu0 %1707
        %1709 = vrot.lane.b32.xlu0 %v997, 88
        %v1710 = vpop.permute.xlu0 %1709
        %1711 = vrot.lane.b32.xlu0 %v998, 88
        %v1712 = vpop.permute.xlu0 %1711
        %1713 = vrot.lane.b32.xlu0 %v999, 88
        %v1714 = vpop.permute.xlu0 %1713
        %v1715 = vsel %vm1072, %v1652, 0
        %v1717 = vsel %vm1072, %v1654, 0
        %v1719 = vsel %vm1072, %v1656, 0
        %v1721 = vsel %vm1072, %v1658, 0
        %v1723 = vsel %vm1072, %v1660, 0
        %v1725 = vsel %vm1072, %v1662, 0
        %v1727 = vsel %vm1072, %v1664, 0
        %v1729 = vsel %vm1072, %v1666, 0
        %v1731 = vsel %vm1072, %v1668, 0
        %v1733 = vsel %vm1072, %v1670, 0
        %v1735 = vsel %vm1072, %v1672, 0
        %v1737 = vsel %vm1072, %v1674, 0
        %v1739 = vsel %vm1072, %v1676, 0
        %v1741 = vsel %vm1072, %v1678, 0
        %v1743 = vsel %vm1072, %v1680, 0
        %v1745 = vsel %vm1072, %v1682, 0
        %v1747 = vsel %vm1072, %v1684, 0
        %v1749 = vsel %vm1072, %v1686, 0
        %v1751 = vsel %vm1072, %v1688, 0
        %v1753 = vsel %vm1072, %v1690, 0
        %v1755 = vsel %vm1072, %v1692, 0
        %v1757 = vsel %vm1072, %v1694, 0
        %v1759 = vsel %vm1072, %v1696, 0
        %v1761 = vsel %vm1072, %v1698, 0
        %v1763 = vsel %vm1072, %v1700, 0
        %v1765 = vsel %vm1072, %v1702, 0
        %v1767 = vsel %vm1072, %v1704, 0
        %v1769 = vsel %vm1072, %v1706, 0
        %v1771 = vsel %vm1072, %v1708, 0
        %v1773 = vsel %vm1072, %v1710, 0
        %v1775 = vsel %vm1072, %v1712, 0
        %v1777 = vsel %vm1072, %v1714, 0
        %1779 = vmatprep.subr.mxu0 0.0
        %1780 = vmatpush1.xpose.msra.mxu0 %v1747
        %1781 = vmatprep.subr.mxu0 0.0
        %1782 = vmatpush1.xpose.msra.mxu0 %v1749
        %1783 = vmatprep.subr.mxu0 0.0
        %1784 = vmatpush1.xpose.msra.mxu0 %v1751
        %1785 = vmatprep.subr.mxu0 0.0
        %1786 = vmatpush1.xpose.msra.mxu0 %v1753
        %1787 = vmatprep.subr.mxu0 0.0
        %1788 = vmatpush1.xpose.msra.mxu0 %v1755
        %1789 = vmatprep.subr.mxu0 0.0
        %1790 = vmatpush1.xpose.msra.mxu0 %v1757
        %1791 = vmatprep.subr.mxu0 0.0
        %1792 = vmatpush1.xpose.msra.mxu0 %v1759
        %1793 = vmatprep.subr.mxu0 0.0
        %1794 = vmatpush1.xpose.msra.mxu0 %v1761
        %1795 = vmatprep.subr.mxu0 0.0
        %1796 = vmatpush1.xpose.msra.mxu0 %v1763
        %1797 = vmatprep.subr.mxu0 0.0
        %1798 = vmatpush1.xpose.msra.mxu0 %v1765
        %1799 = vmatprep.subr.mxu0 0.0
        %1800 = vmatpush1.xpose.msra.mxu0 %v1767
        %1801 = vmatprep.subr.mxu0 0.0
        %1802 = vmatpush1.xpose.msra.mxu0 %v1769
        %1803 = vmatprep.subr.mxu0 0.0
        %1804 = vmatpush1.xpose.msra.mxu0 %v1771
        %1805 = vmatprep.subr.mxu0 0.0
        %1806 = vmatpush1.xpose.msra.mxu0 %v1773
        %1807 = vmatprep.subr.mxu0 0.0
        %1808 = vmatpush1.xpose.msra.mxu0 %v1775
        %1809 = vmatprep.subr.mxu0 0.0
        %1810 = vmatpush1.xpose.msra.mxu0 %v1777
        %1811 = vmatprep.subr.mxu0 0.0
        %1812 = vmatpush1.xpose.msra.mxu0 0.0
        %1813 = vmatprep.subr.mxu0 0.0
        %1814 = vmatpush1.xpose.msra.mxu0 0.0
        %1815 = vmatprep.subr.mxu0 0.0
        %1816 = vmatpush1.xpose.msra.mxu0 0.0
        %1817 = vmatprep.subr.mxu0 0.0
        %1818 = vmatpush1.xpose.msra.mxu0 0.0
        %1819 = vmatprep.subr.mxu0 0.0
        %1820 = vmatpush1.xpose.msra.mxu0 0.0
        %1821 = vmatprep.subr.mxu0 0.0
        %1822 = vmatpush1.xpose.msra.mxu0 0.0
        %1823 = vmatprep.subr.mxu0 0.0
        %1824 = vmatpush1.xpose.msra.mxu0 0.0
        %1825 = vmatprep.subr.mxu0 0.0
        %1826 = vmatpush1.xpose.msra.mxu0 0.0
        %1827 = vmatprep.subr.mxu0 0.0
        %1828 = vmatpush1.xpose.msra.mxu0 0.0
        %1829 = vmatprep.subr.mxu0 0.0
        %1830 = vmatpush1.xpose.msra.mxu0 0.0
        %1831 = vmatprep.subr.mxu0 0.0
        %1832 = vmatpush1.xpose.msra.mxu0 0.0
        %1833 = vmatprep.subr.mxu0 0.0
        %1834 = vmatpush1.xpose.msra.mxu0 0.0
        %1835 = vmatprep.subr.mxu0 0.0
        %1836 = vmatpush1.xpose.msra.mxu0 0.0
        %1837 = vmatprep.subr.mxu0 0.0
        %1838 = vmatpush1.xpose.msra.mxu0 0.0
        %1839 = vmatprep.subr.mxu0 0.0
        %1840 = vmatpush1.xpose.msra.mxu0 0.0
        %1841 = vmatprep.subr.mxu0 0.0
        %1842 = vmatpush1.xpose.msra.mxu0 0.0
        %1843 = vmatprep.mubr.f32.mxu0 0.0
        %1844 = vmatmul.mubr.f32.gmra.mrb[0].mxu0 %v1715
        %v1845 = vpop.f32.mrb[0].mxu0
        %v1846 = vadd.f32 %v740, %v1845
        %v1847 = vpop.f32.mrb[0].mxu0
        %1848 = vmatprep.mubr.f32.mxu0 0.0
        %1849 = vmatmul.mubr.f32.gmra.mrb[0].mxu0 %v1717
        %v1850 = vpop.f32.mrb[0].mxu0
        %v1851 = vadd.f32 %v741, %v1850
        %v1852 = vpop.f32.mrb[0].mxu0
        %1853 = vmatprep.mubr.f32.mxu0 0.0
        %1854 = vmatmul.mubr.f32.gmra.mrb[0].mxu0 %v1719
        %v1855 = vpop.f32.mrb[0].mxu0
        %v1856 = vadd.f32 %v742, %v1855
        %v1857 = vpop.f32.mrb[0].mxu0
        %1858 = vmatprep.mubr.f32.mxu0 0.0
        %1859 = vmatmul.mubr.f32.gmra.mrb[0].mxu0 %v1721
        %v1860 = vpop.f32.mrb[0].mxu0
        %v1861 = vadd.f32 %v743, %v1860
        %v1862 = vpop.f32.mrb[0].mxu0
        %1863 = vmatprep.mubr.f32.mxu0 0.0
        %1864 = vmatmul.mubr.f32.gmra.mrb[0].mxu0 %v1723
        %v1865 = vpop.f32.mrb[0].mxu0
        %v1866 = vadd.f32 %v744, %v1865
        %v1867 = vpop.f32.mrb[0].mxu0
        %1868 = vmatprep.mubr.f32.mxu0 0.0
        %1869 = vmatmul.mubr.f32.gmra.mrb[0].mxu0 %v1725
        %v1870 = vpop.f32.mrb[0].mxu0
        %v1871 = vadd.f32 %v745, %v1870
        %v1872 = vpop.f32.mrb[0].mxu0
        %1873 = vmatprep.mubr.f32.mxu0 0.0
        %1874 = vmatmul.mubr.f32.gmra.mrb[0].mxu0 %v1727
        %v1875 = vpop.f32.mrb[0].mxu0
        %v1876 = vadd.f32 %v746, %v1875
        %v1877 = vpop.f32.mrb[0].mxu0
        %1878 = vmatprep.mubr.f32.mxu0 0.0
        %1879 = vmatmul.mubr.f32.gmra.mrb[0].mxu0 %v1729
        %v1880 = vpop.f32.mrb[0].mxu0
        %v1881 = vadd.f32 %v747, %v1880
        %v1882 = vpop.f32.mrb[0].mxu0
        %1883 = vmatprep.mubr.f32.mxu0 0.0
        %1884 = vmatmul.mubr.f32.gmra.mrb[0].mxu0 %v1731
        %v1885 = vpop.f32.mrb[0].mxu0
        %v1886 = vadd.f32 %v748, %v1885
        %v1887 = vpop.f32.mrb[0].mxu0
        %1888 = vmatprep.mubr.f32.mxu0 0.0
        %1889 = vmatmul.mubr.f32.gmra.mrb[0].mxu0 %v1733
        %v1890 = vpop.f32.mrb[0].mxu0
        %v1891 = vadd.f32 %v749, %v1890
        %v1892 = vpop.f32.mrb[0].mxu0
        %1893 = vmatprep.mubr.f32.mxu0 0.0
        %1894 = vmatmul.mubr.f32.gmra.mrb[0].mxu0 %v1735
        %v1895 = vpop.f32.mrb[0].mxu0
        %v1896 = vadd.f32 %v750, %v1895
        %v1897 = vpop.f32.mrb[0].mxu0
        %1898 = vmatprep.mubr.f32.mxu0 0.0
        %1899 = vmatmul.mubr.f32.gmra.mrb[0].mxu0 %v1737
        %v1900 = vpop.f32.mrb[0].mxu0
        %v1901 = vadd.f32 %v751, %v1900
        %v1902 = vpop.f32.mrb[0].mxu0
        %1903 = vmatprep.mubr.f32.mxu0 0.0
        %1904 = vmatmul.mubr.f32.gmra.mrb[0].mxu0 %v1739
        %v1905 = vpop.f32.mrb[0].mxu0
        %v1906 = vadd.f32 %v752, %v1905
        %v1907 = vpop.f32.mrb[0].mxu0
        %1908 = vmatprep.mubr.f32.mxu0 0.0
        %1909 = vmatmul.mubr.f32.gmra.mrb[0].mxu0 %v1741
        %v1910 = vpop.f32.mrb[0].mxu0
        %v1911 = vadd.f32 %v753, %v1910
        %v1912 = vpop.f32.mrb[0].mxu0
        %1913 = vmatprep.mubr.f32.mxu0 0.0
        %1914 = vmatmul.mubr.f32.gmra.mrb[0].mxu0 %v1743
        %v1915 = vpop.f32.mrb[0].mxu0
        %v1916 = vadd.f32 %v754, %v1915
        %v1917 = vpop.f32.mrb[0].mxu0
        %1918 = vmatprep.mubr.f32.mxu0 0.0
        %1919 = vmatmul.mubr.f32.gmra.mrb[0].mxu0 %v1745
        %v1920 = vpop.f32.mrb[0].mxu0
        %v1921 = vadd.f32 %v755, %v1920
        %v1922 = vpop.f32.mrb[0].mxu0
        %1923 = vdwg.mxu0
        %1924 = vmax.xlane.f32.xlu0 %v1846
        %v1925 = vpop.xlane.xlu0 %1924
        %1926 = vmax.xlane.f32.xlu0 %v1851
        %v1927 = vpop.xlane.xlu0 %1926
        %1928 = vmax.xlane.f32.xlu0 %v1856
        %v1929 = vpop.xlane.xlu0 %1928
        %1930 = vmax.xlane.f32.xlu0 %v1861
        %v1931 = vpop.xlane.xlu0 %1930
        %1932 = vmax.xlane.f32.xlu0 %v1866
        %v1933 = vpop.xlane.xlu0 %1932
        %1934 = vmax.xlane.f32.xlu0 %v1871
        %v1935 = vpop.xlane.xlu0 %1934
        %1936 = vmax.xlane.f32.xlu0 %v1876
        %v1937 = vpop.xlane.xlu0 %1936
        %1938 = vmax.xlane.f32.xlu0 %v1881
        %v1939 = vpop.xlane.xlu0 %1938
        %1940 = vmax.xlane.f32.xlu0 %v1886
        %v1941 = vpop.xlane.xlu0 %1940
        %1942 = vmax.xlane.f32.xlu0 %v1891
        %v1943 = vpop.xlane.xlu0 %1942
        %1944 = vmax.xlane.f32.xlu0 %v1896
        %v1945 = vpop.xlane.xlu0 %1944
        %1946 = vmax.xlane.f32.xlu0 %v1901
        %v1947 = vpop.xlane.xlu0 %1946
        %1948 = vmax.xlane.f32.xlu0 %v1906
        %v1949 = vpop.xlane.xlu0 %1948
        %1950 = vmax.xlane.f32.xlu0 %v1911
        %v1951 = vpop.xlane.xlu0 %1950
        %1952 = vmax.xlane.f32.xlu0 %v1916
        %v1953 = vpop.xlane.xlu0 %1952
        %1954 = vmax.xlane.f32.xlu0 %v1921
        %v1955 = vpop.xlane.xlu0 %1954
        %v1956 = vsub.f32 %v1846, %v1925
        %v1957 = vsub.f32 %v1851, %v1927
        %v1958 = vsub.f32 %v1856, %v1929
        %v1959 = vsub.f32 %v1861, %v1931
        %v1960 = vsub.f32 %v1866, %v1933
        %v1961 = vsub.f32 %v1871, %v1935
        %v1962 = vsub.f32 %v1876, %v1937
        %v1963 = vsub.f32 %v1881, %v1939
        %v1964 = vsub.f32 %v1886, %v1941
        %v1965 = vsub.f32 %v1891, %v1943
        %v1966 = vsub.f32 %v1896, %v1945
        %v1967 = vsub.f32 %v1901, %v1947
        %v1968 = vsub.f32 %v1906, %v1949
        %v1969 = vsub.f32 %v1911, %v1951
        %v1970 = vsub.f32 %v1916, %v1953
        %v1971 = vsub.f32 %v1921, %v1955
        %v1972 = vmul.f32 %v1956, 1.442695
        %v1973 = vpow.pop %v1972
        %v1974 = vmul.f32 %v1957, 1.442695
        %v1975 = vpow.pop %v1974
        %v1976 = vmul.f32 %v1958, 1.442695
        %v1977 = vpow.pop %v1976
        %v1978 = vmul.f32 %v1959, 1.442695
        %v1979 = vpow.pop %v1978
        %v1980 = vmul.f32 %v1960, 1.442695
        %v1981 = vpow.pop %v1980
        %v1982 = vmul.f32 %v1961, 1.442695
        %v1983 = vpow.pop %v1982
        %v1984 = vmul.f32 %v1962, 1.442695
        %v1985 = vpow.pop %v1984
        %v1986 = vmul.f32 %v1963, 1.442695
        %v1987 = vpow.pop %v1986
        %v1988 = vmul.f32 %v1964, 1.442695
        %v1989 = vpow.pop %v1988
        %v1990 = vmul.f32 %v1965, 1.442695
        %v1991 = vpow.pop %v1990
        %v1992 = vmul.f32 %v1966, 1.442695
        %v1993 = vpow.pop %v1992
        %v1994 = vmul.f32 %v1967, 1.442695
        %v1995 = vpow.pop %v1994
        %v1996 = vmul.f32 %v1968, 1.442695
        %v1997 = vpow.pop %v1996
        %v1998 = vmul.f32 %v1969, 1.442695
        %v1999 = vpow.pop %v1998
        %v2000 = vmul.f32 %v1970, 1.442695
        %v2001 = vpow.pop %v2000
        %v2002 = vmul.f32 %v1971, 1.442695
        %v2003 = vpow.pop %v2002
        %2004 = vadd.xlane.f32.xlu0 %v1973
        %v2005 = vpop.xlane.xlu0 %2004
        %2006 = vadd.xlane.f32.xlu0 %v1975
        %v2007 = vpop.xlane.xlu0 %2006
        %2008 = vadd.xlane.f32.xlu0 %v1977
        %v2009 = vpop.xlane.xlu0 %2008
        %2010 = vadd.xlane.f32.xlu0 %v1979
        %v2011 = vpop.xlane.xlu0 %2010
        %2012 = vadd.xlane.f32.xlu0 %v1981
        %v2013 = vpop.xlane.xlu0 %2012
        %2014 = vadd.xlane.f32.xlu0 %v1983
        %v2015 = vpop.xlane.xlu0 %2014
        %2016 = vadd.xlane.f32.xlu0 %v1985
        %v2017 = vpop.xlane.xlu0 %2016
        %2018 = vadd.xlane.f32.xlu0 %v1987
        %v2019 = vpop.xlane.xlu0 %2018
        %2020 = vadd.xlane.f32.xlu0 %v1989
        %v2021 = vpop.xlane.xlu0 %2020
        %2022 = vadd.xlane.f32.xlu0 %v1991
        %v2023 = vpop.xlane.xlu0 %2022
        %2024 = vadd.xlane.f32.xlu0 %v1993
        %v2025 = vpop.xlane.xlu0 %2024
        %2026 = vadd.xlane.f32.xlu0 %v1995
        %v2027 = vpop.xlane.xlu0 %2026
        %2028 = vadd.xlane.f32.xlu0 %v1997
        %v2029 = vpop.xlane.xlu0 %2028
        %2030 = vadd.xlane.f32.xlu0 %v1999
        %v2031 = vpop.xlane.xlu0 %2030
        %2032 = vadd.xlane.f32.xlu0 %v2001
        %v2033 = vpop.xlane.xlu0 %2032
        %2034 = vadd.xlane.f32.xlu0 %v2003
        %v2035 = vpop.xlane.xlu0 %2034
        %v2036 = vrcp.pop %v2005
        %v2037 = vrcp.pop %v2007
        %v2038 = vrcp.pop %v2009
        %v2039 = vrcp.pop %v2011
        %v2040 = vrcp.pop %v2013
        %v2041 = vrcp.pop %v2015
        %v2042 = vrcp.pop %v2017
        %v2043 = vrcp.pop %v2019
        %v2044 = vrcp.pop %v2021
        %v2045 = vrcp.pop %v2023
        %v2046 = vrcp.pop %v2025
        %v2047 = vrcp.pop %v2027
        %v2048 = vrcp.pop %v2029
        %v2049 = vrcp.pop %v2031
        %v2050 = vrcp.pop %v2033
        %v2051 = vrcp.pop %v2035
        %v2052 = vmul.f32 %v1973, %v2036
        %v2053 = vmul.f32 %v1975, %v2037
        %v2054 = vmul.f32 %v1977, %v2038
        %v2055 = vmul.f32 %v1979, %v2039
        %v2056 = vmul.f32 %v1981, %v2040
        %v2057 = vmul.f32 %v1983, %v2041
        %v2058 = vmul.f32 %v1985, %v2042
        %v2059 = vmul.f32 %v1987, %v2043
        %v2060 = vmul.f32 %v1989, %v2044
        %v2061 = vmul.f32 %v1991, %v2045
        %v2062 = vmul.f32 %v1993, %v2046
        %v2063 = vmul.f32 %v1995, %v2047
        %v2064 = vmul.f32 %v1997, %v2048
        %v2065 = vmul.f32 %v1999, %v2049
        %v2066 = vmul.f32 %v2001, %v2050
        %v2067 = vmul.f32 %v2003, %v2051
        %2068 = vrot.lane.b32.xlu0 %v1008, 56
        %v2069 = vpop.permute.xlu0 %2068
        %2070 = vrot.lane.b32.xlu0 %v1009, 56
        %v2071 = vpop.permute.xlu0 %2070
        %2072 = vrot.lane.b32.xlu0 %v1010, 56
        %v2073 = vpop.permute.xlu0 %2072
        %2074 = vrot.lane.b32.xlu0 %v1011, 56
        %v2075 = vpop.permute.xlu0 %2074
        %2076 = vrot.lane.b32.xlu0 %v1012, 56
        %v2077 = vpop.permute.xlu0 %2076
        %2078 = vrot.lane.b32.xlu0 %v1013, 56
        %v2079 = vpop.permute.xlu0 %2078
        %2080 = vrot.lane.b32.xlu0 %v1014, 56
        %v2081 = vpop.permute.xlu0 %2080
        %2082 = vrot.lane.b32.xlu0 %v1015, 56
        %v2083 = vpop.permute.xlu0 %2082
        %2084 = vrot.lane.b32.xlu0 %v1016, 56
        %v2085 = vpop.permute.xlu0 %2084
        %2086 = vrot.lane.b32.xlu0 %v1017, 56
        %v2087 = vpop.permute.xlu0 %2086
        %2088 = vrot.lane.b32.xlu0 %v1018, 56
        %v2089 = vpop.permute.xlu0 %2088
        %2090 = vrot.lane.b32.xlu0 %v1019, 56
        %v2091 = vpop.permute.xlu0 %2090
        %2092 = vrot.lane.b32.xlu0 %v1020, 56
        %v2093 = vpop.permute.xlu0 %2092
        %2094 = vrot.lane.b32.xlu0 %v1021, 56
        %v2095 = vpop.permute.xlu0 %2094
        %2096 = vrot.lane.b32.xlu0 %v1022, 56
        %v2097 = vpop.permute.xlu0 %2096
        %2098 = vrot.lane.b32.xlu0 %v1023, 56
        %v2099 = vpop.permute.xlu0 %2098
        %2116 = vmatprep.subr.mxu0 0.0
        %2117 = vmatpush1.msra.mxu0 %v2069
        %2118 = vmatprep.subr.mxu0 0.0
        %2119 = vmatpush1.msra.mxu0 %v2071
        %2120 = vmatprep.subr.mxu0 0.0
        %2121 = vmatpush1.msra.mxu0 %v2073
        %2122 = vmatprep.subr.mxu0 0.0
        %2123 = vmatpush1.msra.mxu0 %v2075
        %2124 = vmatprep.subr.mxu0 0.0
        %2125 = vmatpush1.msra.mxu0 %v2077
        %2126 = vmatprep.subr.mxu0 0.0
        %2127 = vmatpush1.msra.mxu0 %v2079
        %2128 = vmatprep.subr.mxu0 0.0
        %2129 = vmatpush1.msra.mxu0 %v2081
        %2130 = vmatprep.subr.mxu0 0.0
        %2131 = vmatpush1.msra.mxu0 %v2083
        %2132 = vmatprep.subr.mxu0 0.0
        %2133 = vmatpush1.msra.mxu0 %v2085
        %2134 = vmatprep.subr.mxu0 0.0
        %2135 = vmatpush1.msra.mxu0 %v2087
        %2136 = vmatprep.subr.mxu0 0.0
        %2137 = vmatpush1.msra.mxu0 %v2089
        %2138 = vmatprep.subr.mxu0 0.0
        %2139 = vmatpush1.msra.mxu0 %v2091
        %2140 = vmatprep.subr.mxu0 0.0
        %2141 = vmatpush1.msra.mxu0 %v2093
        %2142 = vmatprep.subr.mxu0 0.0
        %2143 = vmatpush1.msra.mxu0 %v2095
        %2144 = vmatprep.subr.mxu0 0.0
        %2145 = vmatpush1.msra.mxu0 %v2097
        %2146 = vmatprep.subr.mxu0 0.0
        %2147 = vmatpush1.msra.mxu0 %v2099
        %2148 = vmatprep.subr.mxu0 0.0
        %2149 = vmatpush1.msra.mxu0 0.0
        %2150 = vmatprep.subr.mxu0 0.0
        %2151 = vmatpush1.msra.mxu0 0.0
        %2152 = vmatprep.subr.mxu0 0.0
        %2153 = vmatpush1.msra.mxu0 0.0
        %2154 = vmatprep.subr.mxu0 0.0
        %2155 = vmatpush1.msra.mxu0 0.0
        %2156 = vmatprep.subr.mxu0 0.0
        %2157 = vmatpush1.msra.mxu0 0.0
        %2158 = vmatprep.subr.mxu0 0.0
        %2159 = vmatpush1.msra.mxu0 0.0
        %2160 = vmatprep.subr.mxu0 0.0
        %2161 = vmatpush1.msra.mxu0 0.0
        %2162 = vmatprep.subr.mxu0 0.0
        %2163 = vmatpush1.msra.mxu0 0.0
        %2164 = vmatprep.subr.mxu0 0.0
        %2165 = vmatpush1.msra.mxu0 0.0
        %2166 = vmatprep.subr.mxu0 0.0
        %2167 = vmatpush1.msra.mxu0 0.0
        %2168 = vmatprep.subr.mxu0 0.0
        %2169 = vmatpush1.msra.mxu0 0.0
        %2170 = vmatprep.subr.mxu0 0.0
        %2171 = vmatpush1.msra.mxu0 0.0
        %2172 = vmatprep.subr.mxu0 0.0
        %2173 = vmatpush1.msra.mxu0 0.0
        %2174 = vmatprep.subr.mxu0 0.0
        %2175 = vmatpush1.msra.mxu0 0.0
        %2176 = vmatprep.subr.mxu0 0.0
        %2177 = vmatpush1.msra.mxu0 0.0
        %2178 = vmatprep.subr.mxu0 0.0
        %2179 = vmatpush1.msra.mxu0 0.0
        %2180 = vmatprep.mubr.f32.mxu0 0.0
        %2181 = vmatmul.mubr.f32.gmra.mrb[0].mxu0 %v2052
        %v2182 = vpop.f32.mrb[0].mxu0
        %v2183 = vadd.f32 0.0, %v2182
        %v2184 = vpop.f32.mrb[0].mxu0
        %2185 = vmatprep.mubr.f32.mxu0 0.0
        %2186 = vmatmul.mubr.f32.gmra.mrb[0].mxu0 %v2053
        %v2187 = vpop.f32.mrb[0].mxu0
        %v2188 = vadd.f32 0.0, %v2187
        %v2189 = vpop.f32.mrb[0].mxu0
        %2190 = vmatprep.mubr.f32.mxu0 0.0
        %2191 = vmatmul.mubr.f32.gmra.mrb[0].mxu0 %v2054
        %v2192 = vpop.f32.mrb[0].mxu0
        %v2193 = vadd.f32 0.0, %v2192
        %v2194 = vpop.f32.mrb[0].mxu0
        %2195 = vmatprep.mubr.f32.mxu0 0.0
        %2196 = vmatmul.mubr.f32.gmra.mrb[0].mxu0 %v2055
        %v2197 = vpop.f32.mrb[0].mxu0
        %v2198 = vadd.f32 0.0, %v2197
        %v2199 = vpop.f32.mrb[0].mxu0
        %2200 = vmatprep.mubr.f32.mxu0 0.0
        %2201 = vmatmul.mubr.f32.gmra.mrb[0].mxu0 %v2056
        %v2202 = vpop.f32.mrb[0].mxu0
        %v2203 = vadd.f32 0.0, %v2202
        %v2204 = vpop.f32.mrb[0].mxu0
        %2205 = vmatprep.mubr.f32.mxu0 0.0
        %2206 = vmatmul.mubr.f32.gmra.mrb[0].mxu0 %v2057
        %v2207 = vpop.f32.mrb[0].mxu0
        %v2208 = vadd.f32 0.0, %v2207
        %v2209 = vpop.f32.mrb[0].mxu0
        %2210 = vmatprep.mubr.f32.mxu0 0.0
        %2211 = vmatmul.mubr.f32.gmra.mrb[0].mxu0 %v2058
        %v2212 = vpop.f32.mrb[0].mxu0
        %v2213 = vadd.f32 0.0, %v2212
        %v2214 = vpop.f32.mrb[0].mxu0
        %2215 = vmatprep.mubr.f32.mxu0 0.0
        %2216 = vmatmul.mubr.f32.gmra.mrb[0].mxu0 %v2059
        %v2217 = vpop.f32.mrb[0].mxu0
        %v2218 = vadd.f32 0.0, %v2217
        %v2219 = vpop.f32.mrb[0].mxu0
        %2220 = vmatprep.mubr.f32.mxu0 0.0
        %2221 = vmatmul.mubr.f32.gmra.mrb[0].mxu0 %v2060
        %v2222 = vpop.f32.mrb[0].mxu0
        %v2223 = vadd.f32 0.0, %v2222
        %v2224 = vpop.f32.mrb[0].mxu0
        %2225 = vmatprep.mubr.f32.mxu0 0.0
        %2226 = vmatmul.mubr.f32.gmra.mrb[0].mxu0 %v2061
        %v2227 = vpop.f32.mrb[0].mxu0
        %v2228 = vadd.f32 0.0, %v2227
        %v2229 = vpop.f32.mrb[0].mxu0
        %2230 = vmatprep.mubr.f32.mxu0 0.0
        %2231 = vmatmul.mubr.f32.gmra.mrb[0].mxu0 %v2062
        %v2232 = vpop.f32.mrb[0].mxu0
        %v2233 = vadd.f32 0.0, %v2232
        %v2234 = vpop.f32.mrb[0].mxu0
        %2235 = vmatprep.mubr.f32.mxu0 0.0
        %2236 = vmatmul.mubr.f32.gmra.mrb[0].mxu0 %v2063
        %v2237 = vpop.f32.mrb[0].mxu0
        %v2238 = vadd.f32 0.0, %v2237
        %v2239 = vpop.f32.mrb[0].mxu0
        %2240 = vmatprep.mubr.f32.mxu0 0.0
        %2241 = vmatmul.mubr.f32.gmra.mrb[0].mxu0 %v2064
        %v2242 = vpop.f32.mrb[0].mxu0
        %v2243 = vadd.f32 0.0, %v2242
        %v2244 = vpop.f32.mrb[0].mxu0
        %2245 = vmatprep.mubr.f32.mxu0 0.0
        %2246 = vmatmul.mubr.f32.gmra.mrb[0].mxu0 %v2065
        %v2247 = vpop.f32.mrb[0].mxu0
        %v2248 = vadd.f32 0.0, %v2247
        %v2249 = vpop.f32.mrb[0].mxu0
        %2250 = vmatprep.mubr.f32.mxu0 0.0
        %2251 = vmatmul.mubr.f32.gmra.mrb[0].mxu0 %v2066
        %v2252 = vpop.f32.mrb[0].mxu0
        %v2253 = vadd.f32 0.0, %v2252
        %v2254 = vpop.f32.mrb[0].mxu0
        %2255 = vmatprep.mubr.f32.mxu0 0.0
        %2256 = vmatmul.mubr.f32.gmra.mrb[0].mxu0 %v2067
        %v2257 = vpop.f32.mrb[0].mxu0
        %v2258 = vadd.f32 0.0, %v2257
        %v2259 = vpop.f32.mrb[0].mxu0
        %2260 = vdwg.mxu0
        %2261 = vrot.lane.b32.xlu0 %v960, 112
        %v2262 = vpop.permute.xlu0 %2261
        %2263 = vrot.lane.b32.xlu0 %v961, 112
        %v2264 = vpop.permute.xlu0 %2263
        %2265 = vrot.lane.b32.xlu0 %v962, 112
        %v2266 = vpop.permute.xlu0 %2265
        %2267 = vrot.lane.b32.xlu0 %v963, 112
        %v2268 = vpop.permute.xlu0 %2267
        %2269 = vrot.lane.b32.xlu0 %v964, 112
        %v2270 = vpop.permute.xlu0 %2269
        %2271 = vrot.lane.b32.xlu0 %v965, 112
        %v2272 = vpop.permute.xlu0 %2271
        %2273 = vrot.lane.b32.xlu0 %v966, 112
        %v2274 = vpop.permute.xlu0 %2273
        %2275 = vrot.lane.b32.xlu0 %v967, 112
        %v2276 = vpop.permute.xlu0 %2275
        %2277 = vrot.lane.b32.xlu0 %v968, 112
        %v2278 = vpop.permute.xlu0 %2277
        %2279 = vrot.lane.b32.xlu0 %v969, 112
        %v2280 = vpop.permute.xlu0 %2279
        %2281 = vrot.lane.b32.xlu0 %v970, 112
        %v2282 = vpop.permute.xlu0 %2281
        %2283 = vrot.lane.b32.xlu0 %v971, 112
        %v2284 = vpop.permute.xlu0 %2283
        %2285 = vrot.lane.b32.xlu0 %v972, 112
        %v2286 = vpop.permute.xlu0 %2285
        %2287 = vrot.lane.b32.xlu0 %v973, 112
        %v2288 = vpop.permute.xlu0 %2287
        %2289 = vrot.lane.b32.xlu0 %v974, 112
        %v2290 = vpop.permute.xlu0 %2289
        %2291 = vrot.lane.b32.xlu0 %v975, 112
        %v2292 = vpop.permute.xlu0 %2291
        %2293 = vrot.lane.b32.xlu0 %v984, 80
        %v2294 = vpop.permute.xlu0 %2293
        %2295 = vrot.lane.b32.xlu0 %v985, 80
        %v2296 = vpop.permute.xlu0 %2295
        %2297 = vrot.lane.b32.xlu0 %v986, 80
        %v2298 = vpop.permute.xlu0 %2297
        %2299 = vrot.lane.b32.xlu0 %v987, 80
        %v2300 = vpop.permute.xlu0 %2299
        %2301 = vrot.lane.b32.xlu0 %v988, 80
        %v2302 = vpop.permute.xlu0 %2301
        %2303 = vrot.lane.b32.xlu0 %v989, 80
        %v2304 = vpop.permute.xlu0 %2303
        %2305 = vrot.lane.b32.xlu0 %v990, 80
        %v2306 = vpop.permute.xlu0 %2305
        %2307 = vrot.lane.b32.xlu0 %v991, 80
        %v2308 = vpop.permute.xlu0 %2307
        %2309 = vrot.lane.b32.xlu0 %v992, 80
        %v2310 = vpop.permute.xlu0 %2309
        %2311 = vrot.lane.b32.xlu0 %v993, 80
        %v2312 = vpop.permute.xlu0 %2311
        %2313 = vrot.lane.b32.xlu0 %v994, 80
        %v2314 = vpop.permute.xlu0 %2313
        %2315 = vrot.lane.b32.xlu0 %v995, 80
        %v2316 = vpop.permute.xlu0 %2315
        %2317 = vrot.lane.b32.xlu0 %v996, 80
        %v2318 = vpop.permute.xlu0 %2317
        %2319 = vrot.lane.b32.xlu0 %v997, 80
        %v2320 = vpop.permute.xlu0 %2319
        %2321 = vrot.lane.b32.xlu0 %v998, 80
        %v2322 = vpop.permute.xlu0 %2321
        %2323 = vrot.lane.b32.xlu0 %v999, 80
        %v2324 = vpop.permute.xlu0 %2323
        %v2325 = vsel %vm1072, %v2262, 0
        %v2327 = vsel %vm1072, %v2264, 0
        %v2329 = vsel %vm1072, %v2266, 0
        %v2331 = vsel %vm1072, %v2268, 0
        %v2333 = vsel %vm1072, %v2270, 0
        %v2335 = vsel %vm1072, %v2272, 0
        %v2337 = vsel %vm1072, %v2274, 0
        %v2339 = vsel %vm1072, %v2276, 0
        %v2341 = vsel %vm1072, %v2278, 0
        %v2343 = vsel %vm1072, %v2280, 0
        %v2345 = vsel %vm1072, %v2282, 0
        %v2347 = vsel %vm1072, %v2284, 0
        %v2349 = vsel %vm1072, %v2286, 0
        %v2351 = vsel %vm1072, %v2288, 0
        %v2353 = vsel %vm1072, %v2290, 0
        %v2355 = vsel %vm1072, %v2292, 0
        %v2357 = vsel %vm1072, %v2294, 0
        %v2359 = vsel %vm1072, %v2296, 0
        %v2361 = vsel %vm1072, %v2298, 0
        %v2363 = vsel %vm1072, %v2300, 0
        %v2365 = vsel %vm1072, %v2302, 0
        %v2367 = vsel %vm1072, %v2304, 0
        %v2369 = vsel %vm1072, %v2306, 0
        %v2371 = vsel %vm1072, %v2308, 0
        %v2373 = vsel %vm1072, %v2310, 0
        %v2375 = vsel %vm1072, %v2312, 0
        %v2377 = vsel %vm1072, %v2314, 0
        %v2379 = vsel %vm1072, %v2316, 0
        %v2381 = vsel %vm1072, %v2318, 0
        %v2383 = vsel %vm1072, %v2320, 0
        %v2385 = vsel %vm1072, %v2322, 0
        %v2387 = vsel %vm1072, %v2324, 0
        %2389 = vmatprep.subr.mxu0 0.0
        %2390 = vmatpush1.xpose.msra.mxu0 %v2357
        %2391 = vmatprep.subr.mxu0 0.0
        %2392 = vmatpush1.xpose.msra.mxu0 %v2359
        %2393 = vmatprep.subr.mxu0 0.0
        %2394 = vmatpush1.xpose.msra.mxu0 %v2361
        %2395 = vmatprep.subr.mxu0 0.0
        %2396 = vmatpush1.xpose.msra.mxu0 %v2363
        %2397 = vmatprep.subr.mxu0 0.0
        %2398 = vmatpush1.xpose.msra.mxu0 %v2365
        %2399 = vmatprep.subr.mxu0 0.0
        %2400 = vmatpush1.xpose.msra.mxu0 %v2367
        %2401 = vmatprep.subr.mxu0 0.0
        %2402 = vmatpush1.xpose.msra.mxu0 %v2369
        %2403 = vmatprep.subr.mxu0 0.0
        %2404 = vmatpush1.xpose.msra.mxu0 %v2371
        %2405 = vmatprep.subr.mxu0 0.0
        %2406 = vmatpush1.xpose.msra.mxu0 %v2373
        %2407 = vmatprep.subr.mxu0 0.0
        %2408 = vmatpush1.xpose.msra.mxu0 %v2375
        %2409 = vmatprep.subr.mxu0 0.0
        %2410 = vmatpush1.xpose.msra.mxu0 %v2377
        %2411 = vmatprep.subr.mxu0 0.0
        %2412 = vmatpush1.xpose.msra.mxu0 %v2379
        %2413 = vmatprep.subr.mxu0 0.0
        %2414 = vmatpush1.xpose.msra.mxu0 %v2381
        %2415 = vmatprep.subr.mxu0 0.0
        %2416 = vmatpush1.xpose.msra.mxu0 %v2383
        %2417 = vmatprep.subr.mxu0 0.0
        %2418 = vmatpush1.xpose.msra.mxu0 %v2385
        %2419 = vmatprep.subr.mxu0 0.0
        %2420 = vmatpush1.xpose.msra.mxu0 %v2387
        %2421 = vmatprep.subr.mxu0 0.0
        %2422 = vmatpush1.xpose.msra.mxu0 0.0
        %2423 = vmatprep.subr.mxu0 0.0
        %2424 = vmatpush1.xpose.msra.mxu0 0.0
        %2425 = vmatprep.subr.mxu0 0.0
        %2426 = vmatpush1.xpose.msra.mxu0 0.0
        %2427 = vmatprep.subr.mxu0 0.0
        %2428 = vmatpush1.xpose.msra.mxu0 0.0
        %2429 = vmatprep.subr.mxu0 0.0
        %2430 = vmatpush1.xpose.msra.mxu0 0.0
        %2431 = vmatprep.subr.mxu0 0.0
        %2432 = vmatpush1.xpose.msra.mxu0 0.0
        %2433 = vmatprep.subr.mxu0 0.0
        %2434 = vmatpush1.xpose.msra.mxu0 0.0
        %2435 = vmatprep.subr.mxu0 0.0
        %2436 = vmatpush1.xpose.msra.mxu0 0.0
        %2437 = vmatprep.subr.mxu0 0.0
        %2438 = vmatpush1.xpose.msra.mxu0 0.0
        %2439 = vmatprep.subr.mxu0 0.0
        %2440 = vmatpush1.xpose.msra.mxu0 0.0
        %2441 = vmatprep.subr.mxu0 0.0
        %2442 = vmatpush1.xpose.msra.mxu0 0.0
        %2443 = vmatprep.subr.mxu0 0.0
        %2444 = vmatpush1.xpose.msra.mxu0 0.0
        %2445 = vmatprep.subr.mxu0 0.0
        %2446 = vmatpush1.xpose.msra.mxu0 0.0
        %2447 = vmatprep.subr.mxu0 0.0
        %2448 = vmatpush1.xpose.msra.mxu0 0.0
        %2449 = vmatprep.subr.mxu0 0.0
        %2450 = vmatpush1.xpose.msra.mxu0 0.0
        %2451 = vmatprep.subr.mxu0 0.0
        %2452 = vmatpush1.xpose.msra.mxu0 0.0
        %2453 = vmatprep.mubr.f32.mxu0 0.0
        %2454 = vmatmul.mubr.f32.gmra.mrb[0].mxu0 %v2325
        %v2455 = vpop.f32.mrb[0].mxu0
        %v2456 = vadd.f32 %v740, %v2455
        %v2457 = vpop.f32.mrb[0].mxu0
        %2458 = vmatprep.mubr.f32.mxu0 0.0
        %2459 = vmatmul.mubr.f32.gmra.mrb[0].mxu0 %v2327
        %v2460 = vpop.f32.mrb[0].mxu0
        %v2461 = vadd.f32 %v741, %v2460
        %v2462 = vpop.f32.mrb[0].mxu0
        %2463 = vmatprep.mubr.f32.mxu0 0.0
        %2464 = vmatmul.mubr.f32.gmra.mrb[0].mxu0 %v2329
        %v2465 = vpop.f32.mrb[0].mxu0
        %v2466 = vadd.f32 %v742, %v2465
        %v2467 = vpop.f32.mrb[0].mxu0
        %2468 = vmatprep.mubr.f32.mxu0 0.0
        %2469 = vmatmul.mubr.f32.gmra.mrb[0].mxu0 %v2331
        %v2470 = vpop.f32.mrb[0].mxu0
        %v2471 = vadd.f32 %v743, %v2470
        %v2472 = vpop.f32.mrb[0].mxu0
        %2473 = vmatprep.mubr.f32.mxu0 0.0
        %2474 = vmatmul.mubr.f32.gmra.mrb[0].mxu0 %v2333
        %v2475 = vpop.f32.mrb[0].mxu0
        %v2476 = vadd.f32 %v744, %v2475
        %v2477 = vpop.f32.mrb[0].mxu0
        %2478 = vmatprep.mubr.f32.mxu0 0.0
        %2479 = vmatmul.mubr.f32.gmra.mrb[0].mxu0 %v2335
        %v2480 = vpop.f32.mrb[0].mxu0
        %v2481 = vadd.f32 %v745, %v2480
        %v2482 = vpop.f32.mrb[0].mxu0
        %2483 = vmatprep.mubr.f32.mxu0 0.0
        %2484 = vmatmul.mubr.f32.gmra.mrb[0].mxu0 %v2337
        %v2485 = vpop.f32.mrb[0].mxu0
        %v2486 = vadd.f32 %v746, %v2485
        %v2487 = vpop.f32.mrb[0].mxu0
        %2488 = vmatprep.mubr.f32.mxu0 0.0
        %2489 = vmatmul.mubr.f32.gmra.mrb[0].mxu0 %v2339
        %v2490 = vpop.f32.mrb[0].mxu0
        %v2491 = vadd.f32 %v747, %v2490
        %v2492 = vpop.f32.mrb[0].mxu0
        %2493 = vmatprep.mubr.f32.mxu0 0.0
        %2494 = vmatmul.mubr.f32.gmra.mrb[0].mxu0 %v2341
        %v2495 = vpop.f32.mrb[0].mxu0
        %v2496 = vadd.f32 %v748, %v2495
        %v2497 = vpop.f32.mrb[0].mxu0
        %2498 = vmatprep.mubr.f32.mxu0 0.0
        %2499 = vmatmul.mubr.f32.gmra.mrb[0].mxu0 %v2343
        %v2500 = vpop.f32.mrb[0].mxu0
        %v2501 = vadd.f32 %v749, %v2500
        %v2502 = vpop.f32.mrb[0].mxu0
        %2503 = vmatprep.mubr.f32.mxu0 0.0
        %2504 = vmatmul.mubr.f32.gmra.mrb[0].mxu0 %v2345
        %v2505 = vpop.f32.mrb[0].mxu0
        %v2506 = vadd.f32 %v750, %v2505
        %v2507 = vpop.f32.mrb[0].mxu0
        %2508 = vmatprep.mubr.f32.mxu0 0.0
        %2509 = vmatmul.mubr.f32.gmra.mrb[0].mxu0 %v2347
        %v2510 = vpop.f32.mrb[0].mxu0
        %v2511 = vadd.f32 %v751, %v2510
        %v2512 = vpop.f32.mrb[0].mxu0
        %2513 = vmatprep.mubr.f32.mxu0 0.0
        %2514 = vmatmul.mubr.f32.gmra.mrb[0].mxu0 %v2349
        %v2515 = vpop.f32.mrb[0].mxu0
        %v2516 = vadd.f32 %v752, %v2515
        %v2517 = vpop.f32.mrb[0].mxu0
        %2518 = vmatprep.mubr.f32.mxu0 0.0
        %2519 = vmatmul.mubr.f32.gmra.mrb[0].mxu0 %v2351
        %v2520 = vpop.f32.mrb[0].mxu0
        %v2521 = vadd.f32 %v753, %v2520
        %v2522 = vpop.f32.mrb[0].mxu0
        %2523 = vmatprep.mubr.f32.mxu0 0.0
        %2524 = vmatmul.mubr.f32.gmra.mrb[0].mxu0 %v2353
        %v2525 = vpop.f32.mrb[0].mxu0
        %v2526 = vadd.f32 %v754, %v2525
        %v2527 = vpop.f32.mrb[0].mxu0
        %2528 = vmatprep.mubr.f32.mxu0 0.0
        %2529 = vmatmul.mubr.f32.gmra.mrb[0].mxu0 %v2355
        %v2530 = vpop.f32.mrb[0].mxu0
        %v2531 = vadd.f32 %v755, %v2530
        %v2532 = vpop.f32.mrb[0].mxu0
        %2533 = vdwg.mxu0
        %2534 = vmax.xlane.f32.xlu0 %v2456
        %v2535 = vpop.xlane.xlu0 %2534
        %2536 = vmax.xlane.f32.xlu0 %v2461
        %v2537 = vpop.xlane.xlu0 %2536
        %2538 = vmax.xlane.f32.xlu0 %v2466
        %v2539 = vpop.xlane.xlu0 %2538
        %2540 = vmax.xlane.f32.xlu0 %v2471
        %v2541 = vpop.xlane.xlu0 %2540
        %2542 = vmax.xlane.f32.xlu0 %v2476
        %v2543 = vpop.xlane.xlu0 %2542
        %2544 = vmax.xlane.f32.xlu0 %v2481
        %v2545 = vpop.xlane.xlu0 %2544
        %2546 = vmax.xlane.f32.xlu0 %v2486
        %v2547 = vpop.xlane.xlu0 %2546
        %2548 = vmax.xlane.f32.xlu0 %v2491
        %v2549 = vpop.xlane.xlu0 %2548
        %2550 = vmax.xlane.f32.xlu0 %v2496
        %v2551 = vpop.xlane.xlu0 %2550
        %2552 = vmax.xlane.f32.xlu0 %v2501
        %v2553 = vpop.xlane.xlu0 %2552
        %2554 = vmax.xlane.f32.xlu0 %v2506
        %v2555 = vpop.xlane.xlu0 %2554
        %2556 = vmax.xlane.f32.xlu0 %v2511
        %v2557 = vpop.xlane.xlu0 %2556
        %2558 = vmax.xlane.f32.xlu0 %v2516
        %v2559 = vpop.xlane.xlu0 %2558
        %2560 = vmax.xlane.f32.xlu0 %v2521
        %v2561 = vpop.xlane.xlu0 %2560
        %2562 = vmax.xlane.f32.xlu0 %v2526
        %v2563 = vpop.xlane.xlu0 %2562
        %2564 = vmax.xlane.f32.xlu0 %v2531
        %v2565 = vpop.xlane.xlu0 %2564
        %v2566 = vsub.f32 %v2456, %v2535
        %v2567 = vsub.f32 %v2461, %v2537
        %v2568 = vsub.f32 %v2466, %v2539
        %v2569 = vsub.f32 %v2471, %v2541
        %v2570 = vsub.f32 %v2476, %v2543
        %v2571 = vsub.f32 %v2481, %v2545
        %v2572 = vsub.f32 %v2486, %v2547
        %v2573 = vsub.f32 %v2491, %v2549
        %v2574 = vsub.f32 %v2496, %v2551
        %v2575 = vsub.f32 %v2501, %v2553
        %v2576 = vsub.f32 %v2506, %v2555
        %v2577 = vsub.f32 %v2511, %v2557
        %v2578 = vsub.f32 %v2516, %v2559
        %v2579 = vsub.f32 %v2521, %v2561
        %v2580 = vsub.f32 %v2526, %v2563
        %v2581 = vsub.f32 %v2531, %v2565
        %v2582 = vmul.f32 %v2566, 1.442695
        %v2583 = vpow.pop %v2582
        %v2584 = vmul.f32 %v2567, 1.442695
        %v2585 = vpow.pop %v2584
        %v2586 = vmul.f32 %v2568, 1.442695
        %v2587 = vpow.pop %v2586
        %v2588 = vmul.f32 %v2569, 1.442695
        %v2589 = vpow.pop %v2588
        %v2590 = vmul.f32 %v2570, 1.442695
        %v2591 = vpow.pop %v2590
        %v2592 = vmul.f32 %v2571, 1.442695
        %v2593 = vpow.pop %v2592
        %v2594 = vmul.f32 %v2572, 1.442695
        %v2595 = vpow.pop %v2594
        %v2596 = vmul.f32 %v2573, 1.442695
        %v2597 = vpow.pop %v2596
        %v2598 = vmul.f32 %v2574, 1.442695
        %v2599 = vpow.pop %v2598
        %v2600 = vmul.f32 %v2575, 1.442695
        %v2601 = vpow.pop %v2600
        %v2602 = vmul.f32 %v2576, 1.442695
        %v2603 = vpow.pop %v2602
        %v2604 = vmul.f32 %v2577, 1.442695
        %v2605 = vpow.pop %v2604
        %v2606 = vmul.f32 %v2578, 1.442695
        %v2607 = vpow.pop %v2606
        %v2608 = vmul.f32 %v2579, 1.442695
        %v2609 = vpow.pop %v2608
        %v2610 = vmul.f32 %v2580, 1.442695
        %v2611 = vpow.pop %v2610
        %v2612 = vmul.f32 %v2581, 1.442695
        %v2613 = vpow.pop %v2612
        %2614 = vadd.xlane.f32.xlu0 %v2583
        %v2615 = vpop.xlane.xlu0 %2614
        %2616 = vadd.xlane.f32.xlu0 %v2585
        %v2617 = vpop.xlane.xlu0 %2616
        %2618 = vadd.xlane.f32.xlu0 %v2587
        %v2619 = vpop.xlane.xlu0 %2618
        %2620 = vadd.xlane.f32.xlu0 %v2589
        %v2621 = vpop.xlane.xlu0 %2620
        %2622 = vadd.xlane.f32.xlu0 %v2591
        %v2623 = vpop.xlane.xlu0 %2622
        %2624 = vadd.xlane.f32.xlu0 %v2593
        %v2625 = vpop.xlane.xlu0 %2624
        %2626 = vadd.xlane.f32.xlu0 %v2595
        %v2627 = vpop.xlane.xlu0 %2626
        %2628 = vadd.xlane.f32.xlu0 %v2597
        %v2629 = vpop.xlane.xlu0 %2628
        %2630 = vadd.xlane.f32.xlu0 %v2599
        %v2631 = vpop.xlane.xlu0 %2630
        %2632 = vadd.xlane.f32.xlu0 %v2601
        %v2633 = vpop.xlane.xlu0 %2632
        %2634 = vadd.xlane.f32.xlu0 %v2603
        %v2635 = vpop.xlane.xlu0 %2634
        %2636 = vadd.xlane.f32.xlu0 %v2605
        %v2637 = vpop.xlane.xlu0 %2636
        %2638 = vadd.xlane.f32.xlu0 %v2607
        %v2639 = vpop.xlane.xlu0 %2638
        %2640 = vadd.xlane.f32.xlu0 %v2609
        %v2641 = vpop.xlane.xlu0 %2640
        %2642 = vadd.xlane.f32.xlu0 %v2611
        %v2643 = vpop.xlane.xlu0 %2642
        %2644 = vadd.xlane.f32.xlu0 %v2613
        %v2645 = vpop.xlane.xlu0 %2644
        %v2646 = vrcp.pop %v2615
        %v2647 = vrcp.pop %v2617
        %v2648 = vrcp.pop %v2619
        %v2649 = vrcp.pop %v2621
        %v2650 = vrcp.pop %v2623
        %v2651 = vrcp.pop %v2625
        %v2652 = vrcp.pop %v2627
        %v2653 = vrcp.pop %v2629
        %v2654 = vrcp.pop %v2631
        %v2655 = vrcp.pop %v2633
        %v2656 = vrcp.pop %v2635
        %v2657 = vrcp.pop %v2637
        %v2658 = vrcp.pop %v2639
        %v2659 = vrcp.pop %v2641
        %v2660 = vrcp.pop %v2643
        %v2661 = vrcp.pop %v2645
        %v2662 = vmul.f32 %v2583, %v2646
        %v2663 = vmul.f32 %v2585, %v2647
        %v2664 = vmul.f32 %v2587, %v2648
        %v2665 = vmul.f32 %v2589, %v2649
        %v2666 = vmul.f32 %v2591, %v2650
        %v2667 = vmul.f32 %v2593, %v2651
        %v2668 = vmul.f32 %v2595, %v2652
        %v2669 = vmul.f32 %v2597, %v2653
        %v2670 = vmul.f32 %v2599, %v2654
        %v2671 = vmul.f32 %v2601, %v2655
        %v2672 = vmul.f32 %v2603, %v2656
        %v2673 = vmul.f32 %v2605, %v2657
        %v2674 = vmul.f32 %v2607, %v2658
        %v2675 = vmul.f32 %v2609, %v2659
        %v2676 = vmul.f32 %v2611, %v2660
        %v2677 = vmul.f32 %v2613, %v2661
        %2678 = vrot.lane.b32.xlu0 %v1008, 48
        %v2679 = vpop.permute.xlu0 %2678
        %2680 = vrot.lane.b32.xlu0 %v1009, 48
        %v2681 = vpop.permute.xlu0 %2680
        %2682 = vrot.lane.b32.xlu0 %v1010, 48
        %v2683 = vpop.permute.xlu0 %2682
        %2684 = vrot.lane.b32.xlu0 %v1011, 48
        %v2685 = vpop.permute.xlu0 %2684
        %2686 = vrot.lane.b32.xlu0 %v1012, 48
        %v2687 = vpop.permute.xlu0 %2686
        %2688 = vrot.lane.b32.xlu0 %v1013, 48
        %v2689 = vpop.permute.xlu0 %2688
        %2690 = vrot.lane.b32.xlu0 %v1014, 48
        %v2691 = vpop.permute.xlu0 %2690
        %2692 = vrot.lane.b32.xlu0 %v1015, 48
        %v2693 = vpop.permute.xlu0 %2692
        %2694 = vrot.lane.b32.xlu0 %v1016, 48
        %v2695 = vpop.permute.xlu0 %2694
        %2696 = vrot.lane.b32.xlu0 %v1017, 48
        %v2697 = vpop.permute.xlu0 %2696
        %2698 = vrot.lane.b32.xlu0 %v1018, 48
        %v2699 = vpop.permute.xlu0 %2698
        %2700 = vrot.lane.b32.xlu0 %v1019, 48
        %v2701 = vpop.permute.xlu0 %2700
        %2702 = vrot.lane.b32.xlu0 %v1020, 48
        %v2703 = vpop.permute.xlu0 %2702
        %2704 = vrot.lane.b32.xlu0 %v1021, 48
        %v2705 = vpop.permute.xlu0 %2704
        %2706 = vrot.lane.b32.xlu0 %v1022, 48
        %v2707 = vpop.permute.xlu0 %2706
        %2708 = vrot.lane.b32.xlu0 %v1023, 48
        %v2709 = vpop.permute.xlu0 %2708
        %2726 = vmatprep.subr.mxu0 0.0
        %2727 = vmatpush1.msra.mxu0 %v2679
        %2728 = vmatprep.subr.mxu0 0.0
        %2729 = vmatpush1.msra.mxu0 %v2681
        %2730 = vmatprep.subr.mxu0 0.0
        %2731 = vmatpush1.msra.mxu0 %v2683
        %2732 = vmatprep.subr.mxu0 0.0
        %2733 = vmatpush1.msra.mxu0 %v2685
        %2734 = vmatprep.subr.mxu0 0.0
        %2735 = vmatpush1.msra.mxu0 %v2687
        %2736 = vmatprep.subr.mxu0 0.0
        %2737 = vmatpush1.msra.mxu0 %v2689
        %2738 = vmatprep.subr.mxu0 0.0
        %2739 = vmatpush1.msra.mxu0 %v2691
        %2740 = vmatprep.subr.mxu0 0.0
        %2741 = vmatpush1.msra.mxu0 %v2693
        %2742 = vmatprep.subr.mxu0 0.0
        %2743 = vmatpush1.msra.mxu0 %v2695
        %2744 = vmatprep.subr.mxu0 0.0
        %2745 = vmatpush1.msra.mxu0 %v2697
        %2746 = vmatprep.subr.mxu0 0.0
        %2747 = vmatpush1.msra.mxu0 %v2699
        %2748 = vmatprep.subr.mxu0 0.0
        %2749 = vmatpush1.msra.mxu0 %v2701
        %2750 = vmatprep.subr.mxu0 0.0
        %2751 = vmatpush1.msra.mxu0 %v2703
        %2752 = vmatprep.subr.mxu0 0.0
        %2753 = vmatpush1.msra.mxu0 %v2705
        %2754 = vmatprep.subr.mxu0 0.0
        %2755 = vmatpush1.msra.mxu0 %v2707
        %2756 = vmatprep.subr.mxu0 0.0
        %2757 = vmatpush1.msra.mxu0 %v2709
        %2758 = vmatprep.subr.mxu0 0.0
        %2759 = vmatpush1.msra.mxu0 0.0
        %2760 = vmatprep.subr.mxu0 0.0
        %2761 = vmatpush1.msra.mxu0 0.0
        %2762 = vmatprep.subr.mxu0 0.0
        %2763 = vmatpush1.msra.mxu0 0.0
        %2764 = vmatprep.subr.mxu0 0.0
        %2765 = vmatpush1.msra.mxu0 0.0
        %2766 = vmatprep.subr.mxu0 0.0
        %2767 = vmatpush1.msra.mxu0 0.0
        %2768 = vmatprep.subr.mxu0 0.0
        %2769 = vmatpush1.msra.mxu0 0.0
        %2770 = vmatprep.subr.mxu0 0.0
        %2771 = vmatpush1.msra.mxu0 0.0
        %2772 = vmatprep.subr.mxu0 0.0
        %2773 = vmatpush1.msra.mxu0 0.0
        %2774 = vmatprep.subr.mxu0 0.0
        %2775 = vmatpush1.msra.mxu0 0.0
        %2776 = vmatprep.subr.mxu0 0.0
        %2777 = vmatpush1.msra.mxu0 0.0
        %2778 = vmatprep.subr.mxu0 0.0
        %2779 = vmatpush1.msra.mxu0 0.0
        %2780 = vmatprep.subr.mxu0 0.0
        %2781 = vmatpush1.msra.mxu0 0.0
        %2782 = vmatprep.subr.mxu0 0.0
        %2783 = vmatpush1.msra.mxu0 0.0
        %2784 = vmatprep.subr.mxu0 0.0
        %2785 = vmatpush1.msra.mxu0 0.0
        %2786 = vmatprep.subr.mxu0 0.0
        %2787 = vmatpush1.msra.mxu0 0.0
        %2788 = vmatprep.subr.mxu0 0.0
        %2789 = vmatpush1.msra.mxu0 0.0
        %2790 = vmatprep.mubr.f32.mxu0 0.0
        %2791 = vmatmul.mubr.f32.gmra.mrb[0].mxu0 %v2662
        %v2792 = vpop.f32.mrb[0].mxu0
        %v2793 = vadd.f32 0.0, %v2792
        %v2794 = vpop.f32.mrb[0].mxu0
        %2795 = vmatprep.mubr.f32.mxu0 0.0
        %2796 = vmatmul.mubr.f32.gmra.mrb[0].mxu0 %v2663
        %v2797 = vpop.f32.mrb[0].mxu0
        %v2798 = vadd.f32 0.0, %v2797
        %v2799 = vpop.f32.mrb[0].mxu0
        %2800 = vmatprep.mubr.f32.mxu0 0.0
        %2801 = vmatmul.mubr.f32.gmra.mrb[0].mxu0 %v2664
        %v2802 = vpop.f32.mrb[0].mxu0
        %v2803 = vadd.f32 0.0, %v2802
        %v2804 = vpop.f32.mrb[0].mxu0
        %2805 = vmatprep.mubr.f32.mxu0 0.0
        %2806 = vmatmul.mubr.f32.gmra.mrb[0].mxu0 %v2665
        %v2807 = vpop.f32.mrb[0].mxu0
        %v2808 = vadd.f32 0.0, %v2807
        %v2809 = vpop.f32.mrb[0].mxu0
        %2810 = vmatprep.mubr.f32.mxu0 0.0
        %2811 = vmatmul.mubr.f32.gmra.mrb[0].mxu0 %v2666
        %v2812 = vpop.f32.mrb[0].mxu0
        %v2813 = vadd.f32 0.0, %v2812
        %v2814 = vpop.f32.mrb[0].mxu0
        %2815 = vmatprep.mubr.f32.mxu0 0.0
        %2816 = vmatmul.mubr.f32.gmra.mrb[0].mxu0 %v2667
        %v2817 = vpop.f32.mrb[0].mxu0
        %v2818 = vadd.f32 0.0, %v2817
        %v2819 = vpop.f32.mrb[0].mxu0
        %2820 = vmatprep.mubr.f32.mxu0 0.0
        %2821 = vmatmul.mubr.f32.gmra.mrb[0].mxu0 %v2668
        %v2822 = vpop.f32.mrb[0].mxu0
        %v2823 = vadd.f32 0.0, %v2822
        %v2824 = vpop.f32.mrb[0].mxu0
        %2825 = vmatprep.mubr.f32.mxu0 0.0
        %2826 = vmatmul.mubr.f32.gmra.mrb[0].mxu0 %v2669
        %v2827 = vpop.f32.mrb[0].mxu0
        %v2828 = vadd.f32 0.0, %v2827
        %v2829 = vpop.f32.mrb[0].mxu0
        %2830 = vmatprep.mubr.f32.mxu0 0.0
        %2831 = vmatmul.mubr.f32.gmra.mrb[0].mxu0 %v2670
        %v2832 = vpop.f32.mrb[0].mxu0
        %v2833 = vadd.f32 0.0, %v2832
        %v2834 = vpop.f32.mrb[0].mxu0
        %2835 = vmatprep.mubr.f32.mxu0 0.0
        %2836 = vmatmul.mubr.f32.gmra.mrb[0].mxu0 %v2671
        %v2837 = vpop.f32.mrb[0].mxu0
        %v2838 = vadd.f32 0.0, %v2837
        %v2839 = vpop.f32.mrb[0].mxu0
        %2840 = vmatprep.mubr.f32.mxu0 0.0
        %2841 = vmatmul.mubr.f32.gmra.mrb[0].mxu0 %v2672
        %v2842 = vpop.f32.mrb[0].mxu0
        %v2843 = vadd.f32 0.0, %v2842
        %v2844 = vpop.f32.mrb[0].mxu0
        %2845 = vmatprep.mubr.f32.mxu0 0.0
        %2846 = vmatmul.mubr.f32.gmra.mrb[0].mxu0 %v2673
        %v2847 = vpop.f32.mrb[0].mxu0
        %v2848 = vadd.f32 0.0, %v2847
        %v2849 = vpop.f32.mrb[0].mxu0
        %2850 = vmatprep.mubr.f32.mxu0 0.0
        %2851 = vmatmul.mubr.f32.gmra.mrb[0].mxu0 %v2674
        %v2852 = vpop.f32.mrb[0].mxu0
        %v2853 = vadd.f32 0.0, %v2852
        %v2854 = vpop.f32.mrb[0].mxu0
        %2855 = vmatprep.mubr.f32.mxu0 0.0
        %2856 = vmatmul.mubr.f32.gmra.mrb[0].mxu0 %v2675
        %v2857 = vpop.f32.mrb[0].mxu0
        %v2858 = vadd.f32 0.0, %v2857
        %v2859 = vpop.f32.mrb[0].mxu0
        %2860 = vmatprep.mubr.f32.mxu0 0.0
        %2861 = vmatmul.mubr.f32.gmra.mrb[0].mxu0 %v2676
        %v2862 = vpop.f32.mrb[0].mxu0
        %v2863 = vadd.f32 0.0, %v2862
        %v2864 = vpop.f32.mrb[0].mxu0
        %2865 = vmatprep.mubr.f32.mxu0 0.0
        %2866 = vmatmul.mubr.f32.gmra.mrb[0].mxu0 %v2677
        %v2867 = vpop.f32.mrb[0].mxu0
        %v2868 = vadd.f32 0.0, %v2867
        %v2869 = vpop.f32.mrb[0].mxu0
        %2870 = vdwg.mxu0
        %2871 = vrot.lane.b32.xlu0 %v960, 104
        %v2872 = vpop.permute.xlu0 %2871
        %2873 = vrot.lane.b32.xlu0 %v961, 104
        %v2874 = vpop.permute.xlu0 %2873
        %2875 = vrot.lane.b32.xlu0 %v962, 104
        %v2876 = vpop.permute.xlu0 %2875
        %2877 = vrot.lane.b32.xlu0 %v963, 104
        %v2878 = vpop.permute.xlu0 %2877
        %2879 = vrot.lane.b32.xlu0 %v964, 104
        %v2880 = vpop.permute.xlu0 %2879
        %2881 = vrot.lane.b32.xlu0 %v965, 104
        %v2882 = vpop.permute.xlu0 %2881
        %2883 = vrot.lane.b32.xlu0 %v966, 104
        %v2884 = vpop.permute.xlu0 %2883
        %2885 = vrot.lane.b32.xlu0 %v967, 104
        %v2886 = vpop.permute.xlu0 %2885
        %2887 = vrot.lane.b32.xlu0 %v968, 104
        %v2888 = vpop.permute.xlu0 %2887
        %2889 = vrot.lane.b32.xlu0 %v969, 104
        %v2890 = vpop.permute.xlu0 %2889
        %2891 = vrot.lane.b32.xlu0 %v970, 104
        %v2892 = vpop.permute.xlu0 %2891
        %2893 = vrot.lane.b32.xlu0 %v971, 104
        %v2894 = vpop.permute.xlu0 %2893
        %2895 = vrot.lane.b32.xlu0 %v972, 104
        %v2896 = vpop.permute.xlu0 %2895
        %2897 = vrot.lane.b32.xlu0 %v973, 104
        %v2898 = vpop.permute.xlu0 %2897
        %2899 = vrot.lane.b32.xlu0 %v974, 104
        %v2900 = vpop.permute.xlu0 %2899
        %2901 = vrot.lane.b32.xlu0 %v975, 104
        %v2902 = vpop.permute.xlu0 %2901
        %2903 = vrot.lane.b32.xlu0 %v984, 72
        %v2904 = vpop.permute.xlu0 %2903
        %2905 = vrot.lane.b32.xlu0 %v985, 72
        %v2906 = vpop.permute.xlu0 %2905
        %2907 = vrot.lane.b32.xlu0 %v986, 72
        %v2908 = vpop.permute.xlu0 %2907
        %2909 = vrot.lane.b32.xlu0 %v987, 72
        %v2910 = vpop.permute.xlu0 %2909
        %2911 = vrot.lane.b32.xlu0 %v988, 72
        %v2912 = vpop.permute.xlu0 %2911
        %2913 = vrot.lane.b32.xlu0 %v989, 72
        %v2914 = vpop.permute.xlu0 %2913
        %2915 = vrot.lane.b32.xlu0 %v990, 72
        %v2916 = vpop.permute.xlu0 %2915
        %2917 = vrot.lane.b32.xlu0 %v991, 72
        %v2918 = vpop.permute.xlu0 %2917
        %2919 = vrot.lane.b32.xlu0 %v992, 72
        %v2920 = vpop.permute.xlu0 %2919
        %2921 = vrot.lane.b32.xlu0 %v993, 72
        %v2922 = vpop.permute.xlu0 %2921
        %2923 = vrot.lane.b32.xlu0 %v994, 72
        %v2924 = vpop.permute.xlu0 %2923
        %2925 = vrot.lane.b32.xlu0 %v995, 72
        %v2926 = vpop.permute.xlu0 %2925
        %2927 = vrot.lane.b32.xlu0 %v996, 72
        %v2928 = vpop.permute.xlu0 %2927
        %2929 = vrot.lane.b32.xlu0 %v997, 72
        %v2930 = vpop.permute.xlu0 %2929
        %2931 = vrot.lane.b32.xlu0 %v998, 72
        %v2932 = vpop.permute.xlu0 %2931
        %2933 = vrot.lane.b32.xlu0 %v999, 72
        %v2934 = vpop.permute.xlu0 %2933
        %v2935 = vsel %vm1072, %v2872, 0
        %v2937 = vsel %vm1072, %v2874, 0
        %v2939 = vsel %vm1072, %v2876, 0
        %v2941 = vsel %vm1072, %v2878, 0
        %v2943 = vsel %vm1072, %v2880, 0
        %v2945 = vsel %vm1072, %v2882, 0
        %v2947 = vsel %vm1072, %v2884, 0
        %v2949 = vsel %vm1072, %v2886, 0
        %v2951 = vsel %vm1072, %v2888, 0
        %v2953 = vsel %vm1072, %v2890, 0
        %v2955 = vsel %vm1072, %v2892, 0
        %v2957 = vsel %vm1072, %v2894, 0
        %v2959 = vsel %vm1072, %v2896, 0
        %v2961 = vsel %vm1072, %v2898, 0
        %v2963 = vsel %vm1072, %v2900, 0
        %v2965 = vsel %vm1072, %v2902, 0
        %v2967 = vsel %vm1072, %v2904, 0
        %v2969 = vsel %vm1072, %v2906, 0
        %v2971 = vsel %vm1072, %v2908, 0
        %v2973 = vsel %vm1072, %v2910, 0
        %v2975 = vsel %vm1072, %v2912, 0
        %v2977 = vsel %vm1072, %v2914, 0
        %v2979 = vsel %vm1072, %v2916, 0
        %v2981 = vsel %vm1072, %v2918, 0
        %v2983 = vsel %vm1072, %v2920, 0
        %v2985 = vsel %vm1072, %v2922, 0
        %v2987 = vsel %vm1072, %v2924, 0
        %v2989 = vsel %vm1072, %v2926, 0
        %v2991 = vsel %vm1072, %v2928, 0
        %v2993 = vsel %vm1072, %v2930, 0
        %v2995 = vsel %vm1072, %v2932, 0
        %v2997 = vsel %vm1072, %v2934, 0
        %2999 = vmatprep.subr.mxu0 0.0
        %3000 = vmatpush1.xpose.msra.mxu0 %v2967
        %3001 = vmatprep.subr.mxu0 0.0
        %3002 = vmatpush1.xpose.msra.mxu0 %v2969
        %3003 = vmatprep.subr.mxu0 0.0
        %3004 = vmatpush1.xpose.msra.mxu0 %v2971
        %3005 = vmatprep.subr.mxu0 0.0
        %3006 = vmatpush1.xpose.msra.mxu0 %v2973
        %3007 = vmatprep.subr.mxu0 0.0
        %3008 = vmatpush1.xpose.msra.mxu0 %v2975
        %3009 = vmatprep.subr.mxu0 0.0
        %3010 = vmatpush1.xpose.msra.mxu0 %v2977
        %3011 = vmatprep.subr.mxu0 0.0
        %3012 = vmatpush1.xpose.msra.mxu0 %v2979
        %3013 = vmatprep.subr.mxu0 0.0
        %3014 = vmatpush1.xpose.msra.mxu0 %v2981
        %3015 = vmatprep.subr.mxu0 0.0
        %3016 = vmatpush1.xpose.msra.mxu0 %v2983
        %3017 = vmatprep.subr.mxu0 0.0
        %3018 = vmatpush1.xpose.msra.mxu0 %v2985
        %3019 = vmatprep.subr.mxu0 0.0
        %3020 = vmatpush1.xpose.msra.mxu0 %v2987
        %3021 = vmatprep.subr.mxu0 0.0
        %3022 = vmatpush1.xpose.msra.mxu0 %v2989
        %3023 = vmatprep.subr.mxu0 0.0
        %3024 = vmatpush1.xpose.msra.mxu0 %v2991
        %3025 = vmatprep.subr.mxu0 0.0
        %3026 = vmatpush1.xpose.msra.mxu0 %v2993
        %3027 = vmatprep.subr.mxu0 0.0
        %3028 = vmatpush1.xpose.msra.mxu0 %v2995
        %3029 = vmatprep.subr.mxu0 0.0
        %3030 = vmatpush1.xpose.msra.mxu0 %v2997
        %3031 = vmatprep.subr.mxu0 0.0
        %3032 = vmatpush1.xpose.msra.mxu0 0.0
        %3033 = vmatprep.subr.mxu0 0.0
        %3034 = vmatpush1.xpose.msra.mxu0 0.0
        %3035 = vmatprep.subr.mxu0 0.0
        %3036 = vmatpush1.xpose.msra.mxu0 0.0
        %3037 = vmatprep.subr.mxu0 0.0
        %3038 = vmatpush1.xpose.msra.mxu0 0.0
        %3039 = vmatprep.subr.mxu0 0.0
        %3040 = vmatpush1.xpose.msra.mxu0 0.0
        %3041 = vmatprep.subr.mxu0 0.0
        %3042 = vmatpush1.xpose.msra.mxu0 0.0
        %3043 = vmatprep.subr.mxu0 0.0
        %3044 = vmatpush1.xpose.msra.mxu0 0.0
        %3045 = vmatprep.subr.mxu0 0.0
        %3046 = vmatpush1.xpose.msra.mxu0 0.0
        %3047 = vmatprep.subr.mxu0 0.0
        %3048 = vmatpush1.xpose.msra.mxu0 0.0
        %3049 = vmatprep.subr.mxu0 0.0
        %3050 = vmatpush1.xpose.msra.mxu0 0.0
        %3051 = vmatprep.subr.mxu0 0.0
        %3052 = vmatpush1.xpose.msra.mxu0 0.0
        %3053 = vmatprep.subr.mxu0 0.0
        %3054 = vmatpush1.xpose.msra.mxu0 0.0
        %3055 = vmatprep.subr.mxu0 0.0
        %3056 = vmatpush1.xpose.msra.mxu0 0.0
        %3057 = vmatprep.subr.mxu0 0.0
        %3058 = vmatpush1.xpose.msra.mxu0 0.0
        %3059 = vmatprep.subr.mxu0 0.0
        %3060 = vmatpush1.xpose.msra.mxu0 0.0
        %3061 = vmatprep.subr.mxu0 0.0
        %3062 = vmatpush1.xpose.msra.mxu0 0.0
        %3063 = vmatprep.mubr.f32.mxu0 0.0
        %3064 = vmatmul.mubr.f32.gmra.mrb[0].mxu0 %v2935
        %v3065 = vpop.f32.mrb[0].mxu0
        %v3066 = vadd.f32 %v740, %v3065
        %v3067 = vpop.f32.mrb[0].mxu0
        %3068 = vmatprep.mubr.f32.mxu0 0.0
        %3069 = vmatmul.mubr.f32.gmra.mrb[0].mxu0 %v2937
        %v3070 = vpop.f32.mrb[0].mxu0
        %v3071 = vadd.f32 %v741, %v3070
        %v3072 = vpop.f32.mrb[0].mxu0
        %3073 = vmatprep.mubr.f32.mxu0 0.0
        %3074 = vmatmul.mubr.f32.gmra.mrb[0].mxu0 %v2939
        %v3075 = vpop.f32.mrb[0].mxu0
        %v3076 = vadd.f32 %v742, %v3075
        %v3077 = vpop.f32.mrb[0].mxu0
        %3078 = vmatprep.mubr.f32.mxu0 0.0
        %3079 = vmatmul.mubr.f32.gmra.mrb[0].mxu0 %v2941
        %v3080 = vpop.f32.mrb[0].mxu0
        %v3081 = vadd.f32 %v743, %v3080
        %v3082 = vpop.f32.mrb[0].mxu0
        %3083 = vmatprep.mubr.f32.mxu0 0.0
        %3084 = vmatmul.mubr.f32.gmra.mrb[0].mxu0 %v2943
        %v3085 = vpop.f32.mrb[0].mxu0
        %v3086 = vadd.f32 %v744, %v3085
        %v3087 = vpop.f32.mrb[0].mxu0
        %3088 = vmatprep.mubr.f32.mxu0 0.0
        %3089 = vmatmul.mubr.f32.gmra.mrb[0].mxu0 %v2945
        %v3090 = vpop.f32.mrb[0].mxu0
        %v3091 = vadd.f32 %v745, %v3090
        %v3092 = vpop.f32.mrb[0].mxu0
        %3093 = vmatprep.mubr.f32.mxu0 0.0
        %3094 = vmatmul.mubr.f32.gmra.mrb[0].mxu0 %v2947
        %v3095 = vpop.f32.mrb[0].mxu0
        %v3096 = vadd.f32 %v746, %v3095
        %v3097 = vpop.f32.mrb[0].mxu0
        %3098 = vmatprep.mubr.f32.mxu0 0.0
        %3099 = vmatmul.mubr.f32.gmra.mrb[0].mxu0 %v2949
        %v3100 = vpop.f32.mrb[0].mxu0
        %v3101 = vadd.f32 %v747, %v3100
        %v3102 = vpop.f32.mrb[0].mxu0
        %3103 = vmatprep.mubr.f32.mxu0 0.0
        %3104 = vmatmul.mubr.f32.gmra.mrb[0].mxu0 %v2951
        %v3105 = vpop.f32.mrb[0].mxu0
        %v3106 = vadd.f32 %v748, %v3105
        %v3107 = vpop.f32.mrb[0].mxu0
        %3108 = vmatprep.mubr.f32.mxu0 0.0
        %3109 = vmatmul.mubr.f32.gmra.mrb[0].mxu0 %v2953
        %v3110 = vpop.f32.mrb[0].mxu0
        %v3111 = vadd.f32 %v749, %v3110
        %v3112 = vpop.f32.mrb[0].mxu0
        %3113 = vmatprep.mubr.f32.mxu0 0.0
        %3114 = vmatmul.mubr.f32.gmra.mrb[0].mxu0 %v2955
        %v3115 = vpop.f32.mrb[0].mxu0
        %v3116 = vadd.f32 %v750, %v3115
        %v3117 = vpop.f32.mrb[0].mxu0
        %3118 = vmatprep.mubr.f32.mxu0 0.0
        %3119 = vmatmul.mubr.f32.gmra.mrb[0].mxu0 %v2957
        %v3120 = vpop.f32.mrb[0].mxu0
        %v3121 = vadd.f32 %v751, %v3120
        %v3122 = vpop.f32.mrb[0].mxu0
        %3123 = vmatprep.mubr.f32.mxu0 0.0
        %3124 = vmatmul.mubr.f32.gmra.mrb[0].mxu0 %v2959
        %v3125 = vpop.f32.mrb[0].mxu0
        %v3126 = vadd.f32 %v752, %v3125
        %v3127 = vpop.f32.mrb[0].mxu0
        %3128 = vmatprep.mubr.f32.mxu0 0.0
        %3129 = vmatmul.mubr.f32.gmra.mrb[0].mxu0 %v2961
        %v3130 = vpop.f32.mrb[0].mxu0
        %v3131 = vadd.f32 %v753, %v3130
        %v3132 = vpop.f32.mrb[0].mxu0
        %3133 = vmatprep.mubr.f32.mxu0 0.0
        %3134 = vmatmul.mubr.f32.gmra.mrb[0].mxu0 %v2963
        %v3135 = vpop.f32.mrb[0].mxu0
        %v3136 = vadd.f32 %v754, %v3135
        %v3137 = vpop.f32.mrb[0].mxu0
        %3138 = vmatprep.mubr.f32.mxu0 0.0
        %3139 = vmatmul.mubr.f32.gmra.mrb[0].mxu0 %v2965
        %v3140 = vpop.f32.mrb[0].mxu0
        %v3141 = vadd.f32 %v755, %v3140
        %v3142 = vpop.f32.mrb[0].mxu0
        %3143 = vdwg.mxu0
        %3144 = vmax.xlane.f32.xlu0 %v3066
        %v3145 = vpop.xlane.xlu0 %3144
        %3146 = vmax.xlane.f32.xlu0 %v3071
        %v3147 = vpop.xlane.xlu0 %3146
        %3148 = vmax.xlane.f32.xlu0 %v3076
        %v3149 = vpop.xlane.xlu0 %3148
        %3150 = vmax.xlane.f32.xlu0 %v3081
        %v3151 = vpop.xlane.xlu0 %3150
        %3152 = vmax.xlane.f32.xlu0 %v3086
        %v3153 = vpop.xlane.xlu0 %3152
        %3154 = vmax.xlane.f32.xlu0 %v3091
        %v3155 = vpop.xlane.xlu0 %3154
        %3156 = vmax.xlane.f32.xlu0 %v3096
        %v3157 = vpop.xlane.xlu0 %3156
        %3158 = vmax.xlane.f32.xlu0 %v3101
        %v3159 = vpop.xlane.xlu0 %3158
        %3160 = vmax.xlane.f32.xlu0 %v3106
        %v3161 = vpop.xlane.xlu0 %3160
        %3162 = vmax.xlane.f32.xlu0 %v3111
        %v3163 = vpop.xlane.xlu0 %3162
        %3164 = vmax.xlane.f32.xlu0 %v3116
        %v3165 = vpop.xlane.xlu0 %3164
        %3166 = vmax.xlane.f32.xlu0 %v3121
        %v3167 = vpop.xlane.xlu0 %3166
        %3168 = vmax.xlane.f32.xlu0 %v3126
        %v3169 = vpop.xlane.xlu0 %3168
        %3170 = vmax.xlane.f32.xlu0 %v3131
        %v3171 = vpop.xlane.xlu0 %3170
        %3172 = vmax.xlane.f32.xlu0 %v3136
        %v3173 = vpop.xlane.xlu0 %3172
        %3174 = vmax.xlane.f32.xlu0 %v3141
        %v3175 = vpop.xlane.xlu0 %3174
        %v3176 = vsub.f32 %v3066, %v3145
        %v3177 = vsub.f32 %v3071, %v3147
        %v3178 = vsub.f32 %v3076, %v3149
        %v3179 = vsub.f32 %v3081, %v3151
        %v3180 = vsub.f32 %v3086, %v3153
        %v3181 = vsub.f32 %v3091, %v3155
        %v3182 = vsub.f32 %v3096, %v3157
        %v3183 = vsub.f32 %v3101, %v3159
        %v3184 = vsub.f32 %v3106, %v3161
        %v3185 = vsub.f32 %v3111, %v3163
        %v3186 = vsub.f32 %v3116, %v3165
        %v3187 = vsub.f32 %v3121, %v3167
        %v3188 = vsub.f32 %v3126, %v3169
        %v3189 = vsub.f32 %v3131, %v3171
        %v3190 = vsub.f32 %v3136, %v3173
        %v3191 = vsub.f32 %v3141, %v3175
        %v3192 = vmul.f32 %v3176, 1.442695
        %v3193 = vpow.pop %v3192
        %v3194 = vmul.f32 %v3177, 1.442695
        %v3195 = vpow.pop %v3194
        %v3196 = vmul.f32 %v3178, 1.442695
        %v3197 = vpow.pop %v3196
        %v3198 = vmul.f32 %v3179, 1.442695
        %v3199 = vpow.pop %v3198
        %v3200 = vmul.f32 %v3180, 1.442695
        %v3201 = vpow.pop %v3200
        %v3202 = vmul.f32 %v3181, 1.442695
        %v3203 = vpow.pop %v3202
        %v3204 = vmul.f32 %v3182, 1.442695
        %v3205 = vpow.pop %v3204
        %v3206 = vmul.f32 %v3183, 1.442695
        %v3207 = vpow.pop %v3206
        %v3208 = vmul.f32 %v3184, 1.442695
        %v3209 = vpow.pop %v3208
        %v3210 = vmul.f32 %v3185, 1.442695
        %v3211 = vpow.pop %v3210
        %v3212 = vmul.f32 %v3186, 1.442695
        %v3213 = vpow.pop %v3212
        %v3214 = vmul.f32 %v3187, 1.442695
        %v3215 = vpow.pop %v3214
        %v3216 = vmul.f32 %v3188, 1.442695
        %v3217 = vpow.pop %v3216
        %v3218 = vmul.f32 %v3189, 1.442695
        %v3219 = vpow.pop %v3218
        %v3220 = vmul.f32 %v3190, 1.442695
        %v3221 = vpow.pop %v3220
        %v3222 = vmul.f32 %v3191, 1.442695
        %v3223 = vpow.pop %v3222
        %3224 = vadd.xlane.f32.xlu0 %v3193
        %v3225 = vpop.xlane.xlu0 %3224
        %3226 = vadd.xlane.f32.xlu0 %v3195
        %v3227 = vpop.xlane.xlu0 %3226
        %3228 = vadd.xlane.f32.xlu0 %v3197
        %v3229 = vpop.xlane.xlu0 %3228
        %3230 = vadd.xlane.f32.xlu0 %v3199
        %v3231 = vpop.xlane.xlu0 %3230
        %3232 = vadd.xlane.f32.xlu0 %v3201
        %v3233 = vpop.xlane.xlu0 %3232
        %3234 = vadd.xlane.f32.xlu0 %v3203
        %v3235 = vpop.xlane.xlu0 %3234
        %3236 = vadd.xlane.f32.xlu0 %v3205
        %v3237 = vpop.xlane.xlu0 %3236
        %3238 = vadd.xlane.f32.xlu0 %v3207
        %v3239 = vpop.xlane.xlu0 %3238
        %3240 = vadd.xlane.f32.xlu0 %v3209
        %v3241 = vpop.xlane.xlu0 %3240
        %3242 = vadd.xlane.f32.xlu0 %v3211
        %v3243 = vpop.xlane.xlu0 %3242
        %3244 = vadd.xlane.f32.xlu0 %v3213
        %v3245 = vpop.xlane.xlu0 %3244
        %3246 = vadd.xlane.f32.xlu0 %v3215
        %v3247 = vpop.xlane.xlu0 %3246
        %3248 = vadd.xlane.f32.xlu0 %v3217
        %v3249 = vpop.xlane.xlu0 %3248
        %3250 = vadd.xlane.f32.xlu0 %v3219
        %v3251 = vpop.xlane.xlu0 %3250
        %3252 = vadd.xlane.f32.xlu0 %v3221
        %v3253 = vpop.xlane.xlu0 %3252
        %3254 = vadd.xlane.f32.xlu0 %v3223
        %v3255 = vpop.xlane.xlu0 %3254
        %v3256 = vrcp.pop %v3225
        %v3257 = vrcp.pop %v3227
        %v3258 = vrcp.pop %v3229
        %v3259 = vrcp.pop %v3231
        %v3260 = vrcp.pop %v3233
        %v3261 = vrcp.pop %v3235
        %v3262 = vrcp.pop %v3237
        %v3263 = vrcp.pop %v3239
        %v3264 = vrcp.pop %v3241
        %v3265 = vrcp.pop %v3243
        %v3266 = vrcp.pop %v3245
        %v3267 = vrcp.pop %v3247
        %v3268 = vrcp.pop %v3249
        %v3269 = vrcp.pop %v3251
        %v3270 = vrcp.pop %v3253
        %v3271 = vrcp.pop %v3255
        %v3272 = vmul.f32 %v3193, %v3256
        %v3273 = vmul.f32 %v3195, %v3257
        %v3274 = vmul.f32 %v3197, %v3258
        %v3275 = vmul.f32 %v3199, %v3259
        %v3276 = vmul.f32 %v3201, %v3260
        %v3277 = vmul.f32 %v3203, %v3261
        %v3278 = vmul.f32 %v3205, %v3262
        %v3279 = vmul.f32 %v3207, %v3263
        %v3280 = vmul.f32 %v3209, %v3264
        %v3281 = vmul.f32 %v3211, %v3265
        %v3282 = vmul.f32 %v3213, %v3266
        %v3283 = vmul.f32 %v3215, %v3267
        %v3284 = vmul.f32 %v3217, %v3268
        %v3285 = vmul.f32 %v3219, %v3269
        %v3286 = vmul.f32 %v3221, %v3270
        %v3287 = vmul.f32 %v3223, %v3271
        %3288 = vrot.lane.b32.xlu0 %v1008, 40
        %v3289 = vpop.permute.xlu0 %3288
        %3290 = vrot.lane.b32.xlu0 %v1009, 40
        %v3291 = vpop.permute.xlu0 %3290
        %3292 = vrot.lane.b32.xlu0 %v1010, 40
        %v3293 = vpop.permute.xlu0 %3292
        %3294 = vrot.lane.b32.xlu0 %v1011, 40
        %v3295 = vpop.permute.xlu0 %3294
        %3296 = vrot.lane.b32.xlu0 %v1012, 40
        %v3297 = vpop.permute.xlu0 %3296
        %3298 = vrot.lane.b32.xlu0 %v1013, 40
        %v3299 = vpop.permute.xlu0 %3298
        %3300 = vrot.lane.b32.xlu0 %v1014, 40
        %v3301 = vpop.permute.xlu0 %3300
        %3302 = vrot.lane.b32.xlu0 %v1015, 40
        %v3303 = vpop.permute.xlu0 %3302
        %3304 = vrot.lane.b32.xlu0 %v1016, 40
        %v3305 = vpop.permute.xlu0 %3304
        %3306 = vrot.lane.b32.xlu0 %v1017, 40
        %v3307 = vpop.permute.xlu0 %3306
        %3308 = vrot.lane.b32.xlu0 %v1018, 40
        %v3309 = vpop.permute.xlu0 %3308
        %3310 = vrot.lane.b32.xlu0 %v1019, 40
        %v3311 = vpop.permute.xlu0 %3310
        %3312 = vrot.lane.b32.xlu0 %v1020, 40
        %v3313 = vpop.permute.xlu0 %3312
        %3314 = vrot.lane.b32.xlu0 %v1021, 40
        %v3315 = vpop.permute.xlu0 %3314
        %3316 = vrot.lane.b32.xlu0 %v1022, 40
        %v3317 = vpop.permute.xlu0 %3316
        %3318 = vrot.lane.b32.xlu0 %v1023, 40
        %v3319 = vpop.permute.xlu0 %3318
        %3336 = vmatprep.subr.mxu0 0.0
        %3337 = vmatpush1.msra.mxu0 %v3289
        %3338 = vmatprep.subr.mxu0 0.0
        %3339 = vmatpush1.msra.mxu0 %v3291
        %3340 = vmatprep.subr.mxu0 0.0
        %3341 = vmatpush1.msra.mxu0 %v3293
        %3342 = vmatprep.subr.mxu0 0.0
        %3343 = vmatpush1.msra.mxu0 %v3295
        %3344 = vmatprep.subr.mxu0 0.0
        %3345 = vmatpush1.msra.mxu0 %v3297
        %3346 = vmatprep.subr.mxu0 0.0
        %3347 = vmatpush1.msra.mxu0 %v3299
        %3348 = vmatprep.subr.mxu0 0.0
        %3349 = vmatpush1.msra.mxu0 %v3301
        %3350 = vmatprep.subr.mxu0 0.0
        %3351 = vmatpush1.msra.mxu0 %v3303
        %3352 = vmatprep.subr.mxu0 0.0
        %3353 = vmatpush1.msra.mxu0 %v3305
        %3354 = vmatprep.subr.mxu0 0.0
        %3355 = vmatpush1.msra.mxu0 %v3307
        %3356 = vmatprep.subr.mxu0 0.0
        %3357 = vmatpush1.msra.mxu0 %v3309
        %3358 = vmatprep.subr.mxu0 0.0
        %3359 = vmatpush1.msra.mxu0 %v3311
        %3360 = vmatprep.subr.mxu0 0.0
        %3361 = vmatpush1.msra.mxu0 %v3313
        %3362 = vmatprep.subr.mxu0 0.0
        %3363 = vmatpush1.msra.mxu0 %v3315
        %3364 = vmatprep.subr.mxu0 0.0
        %3365 = vmatpush1.msra.mxu0 %v3317
        %3366 = vmatprep.subr.mxu0 0.0
        %3367 = vmatpush1.msra.mxu0 %v3319
        %3368 = vmatprep.subr.mxu0 0.0
        %3369 = vmatpush1.msra.mxu0 0.0
        %3370 = vmatprep.subr.mxu0 0.0
        %3371 = vmatpush1.msra.mxu0 0.0
        %3372 = vmatprep.subr.mxu0 0.0
        %3373 = vmatpush1.msra.mxu0 0.0
        %3374 = vmatprep.subr.mxu0 0.0
        %3375 = vmatpush1.msra.mxu0 0.0
        %3376 = vmatprep.subr.mxu0 0.0
        %3377 = vmatpush1.msra.mxu0 0.0
        %3378 = vmatprep.subr.mxu0 0.0
        %3379 = vmatpush1.msra.mxu0 0.0
        %3380 = vmatprep.subr.mxu0 0.0
        %3381 = vmatpush1.msra.mxu0 0.0
        %3382 = vmatprep.subr.mxu0 0.0
        %3383 = vmatpush1.msra.mxu0 0.0
        %3384 = vmatprep.subr.mxu0 0.0
        %3385 = vmatpush1.msra.mxu0 0.0
        %3386 = vmatprep.subr.mxu0 0.0
        %3387 = vmatpush1.msra.mxu0 0.0
        %3388 = vmatprep.subr.mxu0 0.0
        %3389 = vmatpush1.msra.mxu0 0.0
        %3390 = vmatprep.subr.mxu0 0.0
        %3391 = vmatpush1.msra.mxu0 0.0
        %3392 = vmatprep.subr.mxu0 0.0
        %3393 = vmatpush1.msra.mxu0 0.0
        %3394 = vmatprep.subr.mxu0 0.0
        %3395 = vmatpush1.msra.mxu0 0.0
        %3396 = vmatprep.subr.mxu0 0.0
        %3397 = vmatpush1.msra.mxu0 0.0
        %3398 = vmatprep.subr.mxu0 0.0
        %3399 = vmatpush1.msra.mxu0 0.0
        %3400 = vmatprep.mubr.f32.mxu0 0.0
        %3401 = vmatmul.mubr.f32.gmra.mrb[0].mxu0 %v3272
        %v3402 = vpop.f32.mrb[0].mxu0
        %v3403 = vadd.f32 0.0, %v3402
        %v3404 = vpop.f32.mrb[0].mxu0
        %3405 = vmatprep.mubr.f32.mxu0 0.0
        %3406 = vmatmul.mubr.f32.gmra.mrb[0].mxu0 %v3273
        %v3407 = vpop.f32.mrb[0].mxu0
        %v3408 = vadd.f32 0.0, %v3407
        %v3409 = vpop.f32.mrb[0].mxu0
        %3410 = vmatprep.mubr.f32.mxu0 0.0
        %3411 = vmatmul.mubr.f32.gmra.mrb[0].mxu0 %v3274
        %v3412 = vpop.f32.mrb[0].mxu0
        %v3413 = vadd.f32 0.0, %v3412
        %v3414 = vpop.f32.mrb[0].mxu0
        %3415 = vmatprep.mubr.f32.mxu0 0.0
        %3416 = vmatmul.mubr.f32.gmra.mrb[0].mxu0 %v3275
        %v3417 = vpop.f32.mrb[0].mxu0
        %v3418 = vadd.f32 0.0, %v3417
        %v3419 = vpop.f32.mrb[0].mxu0
        %3420 = vmatprep.mubr.f32.mxu0 0.0
        %3421 = vmatmul.mubr.f32.gmra.mrb[0].mxu0 %v3276
        %v3422 = vpop.f32.mrb[0].mxu0
        %v3423 = vadd.f32 0.0, %v3422
        %v3424 = vpop.f32.mrb[0].mxu0
        %3425 = vmatprep.mubr.f32.mxu0 0.0
        %3426 = vmatmul.mubr.f32.gmra.mrb[0].mxu0 %v3277
        %v3427 = vpop.f32.mrb[0].mxu0
        %v3428 = vadd.f32 0.0, %v3427
        %v3429 = vpop.f32.mrb[0].mxu0
        %3430 = vmatprep.mubr.f32.mxu0 0.0
        %3431 = vmatmul.mubr.f32.gmra.mrb[0].mxu0 %v3278
        %v3432 = vpop.f32.mrb[0].mxu0
        %v3433 = vadd.f32 0.0, %v3432
        %v3434 = vpop.f32.mrb[0].mxu0
        %3435 = vmatprep.mubr.f32.mxu0 0.0
        %3436 = vmatmul.mubr.f32.gmra.mrb[0].mxu0 %v3279
        %v3437 = vpop.f32.mrb[0].mxu0
        %v3438 = vadd.f32 0.0, %v3437
        %v3439 = vpop.f32.mrb[0].mxu0
        %3440 = vmatprep.mubr.f32.mxu0 0.0
        %3441 = vmatmul.mubr.f32.gmra.mrb[0].mxu0 %v3280
        %v3442 = vpop.f32.mrb[0].mxu0
        %v3443 = vadd.f32 0.0, %v3442
        %v3444 = vpop.f32.mrb[0].mxu0
        %3445 = vmatprep.mubr.f32.mxu0 0.0
        %3446 = vmatmul.mubr.f32.gmra.mrb[0].mxu0 %v3281
        %v3447 = vpop.f32.mrb[0].mxu0
        %v3448 = vadd.f32 0.0, %v3447
        %v3449 = vpop.f32.mrb[0].mxu0
        %3450 = vmatprep.mubr.f32.mxu0 0.0
        %3451 = vmatmul.mubr.f32.gmra.mrb[0].mxu0 %v3282
        %v3452 = vpop.f32.mrb[0].mxu0
        %v3453 = vadd.f32 0.0, %v3452
        %v3454 = vpop.f32.mrb[0].mxu0
        %3455 = vmatprep.mubr.f32.mxu0 0.0
        %3456 = vmatmul.mubr.f32.gmra.mrb[0].mxu0 %v3283
        %v3457 = vpop.f32.mrb[0].mxu0
        %v3458 = vadd.f32 0.0, %v3457
        %v3459 = vpop.f32.mrb[0].mxu0
        %3460 = vmatprep.mubr.f32.mxu0 0.0
        %3461 = vmatmul.mubr.f32.gmra.mrb[0].mxu0 %v3284
        %v3462 = vpop.f32.mrb[0].mxu0
        %v3463 = vadd.f32 0.0, %v3462
        %v3464 = vpop.f32.mrb[0].mxu0
        %3465 = vmatprep.mubr.f32.mxu0 0.0
        %3466 = vmatmul.mubr.f32.gmra.mrb[0].mxu0 %v3285
        %v3467 = vpop.f32.mrb[0].mxu0
        %v3468 = vadd.f32 0.0, %v3467
        %v3469 = vpop.f32.mrb[0].mxu0
        %3470 = vmatprep.mubr.f32.mxu0 0.0
        %3471 = vmatmul.mubr.f32.gmra.mrb[0].mxu0 %v3286
        %v3472 = vpop.f32.mrb[0].mxu0
        %v3473 = vadd.f32 0.0, %v3472
        %v3474 = vpop.f32.mrb[0].mxu0
        %3475 = vmatprep.mubr.f32.mxu0 0.0
        %3476 = vmatmul.mubr.f32.gmra.mrb[0].mxu0 %v3287
        %v3477 = vpop.f32.mrb[0].mxu0
        %v3478 = vadd.f32 0.0, %v3477
        %v3479 = vpop.f32.mrb[0].mxu0
        %3480 = vdwg.mxu0
        %3497 = vrot.lane.b32.xlu0 %v2183, 8
        %v3498 = vpop.permute.xlu0 %3497
        %3499 = vrot.lane.b32.xlu0 %v2188, 8
        %v3500 = vpop.permute.xlu0 %3499
        %3501 = vrot.lane.b32.xlu0 %v2193, 8
        %v3502 = vpop.permute.xlu0 %3501
        %3503 = vrot.lane.b32.xlu0 %v2198, 8
        %v3504 = vpop.permute.xlu0 %3503
        %3505 = vrot.lane.b32.xlu0 %v2203, 8
        %v3506 = vpop.permute.xlu0 %3505
        %3507 = vrot.lane.b32.xlu0 %v2208, 8
        %v3508 = vpop.permute.xlu0 %3507
        %3509 = vrot.lane.b32.xlu0 %v2213, 8
        %v3510 = vpop.permute.xlu0 %3509
        %3511 = vrot.lane.b32.xlu0 %v2218, 8
        %v3512 = vpop.permute.xlu0 %3511
        %3513 = vrot.lane.b32.xlu0 %v2223, 8
        %v3514 = vpop.permute.xlu0 %3513
        %3515 = vrot.lane.b32.xlu0 %v2228, 8
        %v3516 = vpop.permute.xlu0 %3515
        %3517 = vrot.lane.b32.xlu0 %v2233, 8
        %v3518 = vpop.permute.xlu0 %3517
        %3519 = vrot.lane.b32.xlu0 %v2238, 8
        %v3520 = vpop.permute.xlu0 %3519
        %3521 = vrot.lane.b32.xlu0 %v2243, 8
        %v3522 = vpop.permute.xlu0 %3521
        %3523 = vrot.lane.b32.xlu0 %v2248, 8
        %v3524 = vpop.permute.xlu0 %3523
        %3525 = vrot.lane.b32.xlu0 %v2253, 8
        %v3526 = vpop.permute.xlu0 %3525
        %3527 = vrot.lane.b32.xlu0 %v2258, 8
        %v3528 = vpop.permute.xlu0 %3527
        %3561 = vrot.lane.b32.xlu0 %v2793, 16
        %v3562 = vpop.permute.xlu0 %3561
        %3563 = vrot.lane.b32.xlu0 %v2798, 16
        %v3564 = vpop.permute.xlu0 %3563
        %3565 = vrot.lane.b32.xlu0 %v2803, 16
        %v3566 = vpop.permute.xlu0 %3565
        %3567 = vrot.lane.b32.xlu0 %v2808, 16
        %v3568 = vpop.permute.xlu0 %3567
        %3569 = vrot.lane.b32.xlu0 %v2813, 16
        %v3570 = vpop.permute.xlu0 %3569
        %3571 = vrot.lane.b32.xlu0 %v2818, 16
        %v3572 = vpop.permute.xlu0 %3571
        %3573 = vrot.lane.b32.xlu0 %v2823, 16
        %v3574 = vpop.permute.xlu0 %3573
        %3575 = vrot.lane.b32.xlu0 %v2828, 16
        %v3576 = vpop.permute.xlu0 %3575
        %3577 = vrot.lane.b32.xlu0 %v2833, 16
        %v3578 = vpop.permute.xlu0 %3577
        %3579 = vrot.lane.b32.xlu0 %v2838, 16
        %v3580 = vpop.permute.xlu0 %3579
        %3581 = vrot.lane.b32.xlu0 %v2843, 16
        %v3582 = vpop.permute.xlu0 %3581
        %3583 = vrot.lane.b32.xlu0 %v2848, 16
        %v3584 = vpop.permute.xlu0 %3583
        %3585 = vrot.lane.b32.xlu0 %v2853, 16
        %v3586 = vpop.permute.xlu0 %3585
        %3587 = vrot.lane.b32.xlu0 %v2858, 16
        %v3588 = vpop.permute.xlu0 %3587
        %3589 = vrot.lane.b32.xlu0 %v2863, 16
        %v3590 = vpop.permute.xlu0 %3589
        %3591 = vrot.lane.b32.xlu0 %v2868, 16
        %v3592 = vpop.permute.xlu0 %3591
        %3625 = vrot.lane.b32.xlu0 %v3403, 24
        %v3626 = vpop.permute.xlu0 %3625
        %3627 = vrot.lane.b32.xlu0 %v3408, 24
        %v3628 = vpop.permute.xlu0 %3627
        %3629 = vrot.lane.b32.xlu0 %v3413, 24
        %v3630 = vpop.permute.xlu0 %3629
        %3631 = vrot.lane.b32.xlu0 %v3418, 24
        %v3632 = vpop.permute.xlu0 %3631
        %3633 = vrot.lane.b32.xlu0 %v3423, 24
        %v3634 = vpop.permute.xlu0 %3633
        %3635 = vrot.lane.b32.xlu0 %v3428, 24
        %v3636 = vpop.permute.xlu0 %3635
        %3637 = vrot.lane.b32.xlu0 %v3433, 24
        %v3638 = vpop.permute.xlu0 %3637
        %3639 = vrot.lane.b32.xlu0 %v3438, 24
        %v3640 = vpop.permute.xlu0 %3639
        %3641 = vrot.lane.b32.xlu0 %v3443, 24
        %v3642 = vpop.permute.xlu0 %3641
        %3643 = vrot.lane.b32.xlu0 %v3448, 24
        %v3644 = vpop.permute.xlu0 %3643
        %3645 = vrot.lane.b32.xlu0 %v3453, 24
        %v3646 = vpop.permute.xlu0 %3645
        %3647 = vrot.lane.b32.xlu0 %v3458, 24
        %v3648 = vpop.permute.xlu0 %3647
        %3649 = vrot.lane.b32.xlu0 %v3463, 24
        %v3650 = vpop.permute.xlu0 %3649
        %3651 = vrot.lane.b32.xlu0 %v3468, 24
        %v3652 = vpop.permute.xlu0 %3651
        %3653 = vrot.lane.b32.xlu0 %v3473, 24
        %v3654 = vpop.permute.xlu0 %3653
        %3655 = vrot.lane.b32.xlu0 %v3478, 24
        %v3656 = vpop.permute.xlu0 %3655
        %v3673 = vsel %vm1072, %v1573, %v3498
        %v3674 = vsel %vm1072, %v1578, %v3500
        %v3675 = vsel %vm1072, %v1583, %v3502
        %v3676 = vsel %vm1072, %v1588, %v3504
        %v3677 = vsel %vm1072, %v1593, %v3506
        %v3678 = vsel %vm1072, %v1598, %v3508
        %v3679 = vsel %vm1072, %v1603, %v3510
        %v3680 = vsel %vm1072, %v1608, %v3512
        %v3681 = vsel %vm1072, %v1613, %v3514
        %v3682 = vsel %vm1072, %v1618, %v3516
        %v3683 = vsel %vm1072, %v1623, %v3518
        %v3684 = vsel %vm1072, %v1628, %v3520
        %v3685 = vsel %vm1072, %v1633, %v3522
        %v3686 = vsel %vm1072, %v1638, %v3524
        %v3687 = vsel %vm1072, %v1643, %v3526
        %v3688 = vsel %vm1072, %v1648, %v3528
        %vm3689 = vcmask 130048
        %v3690 = vsel %vm3689, %v3673, %v3562
        %v3691 = vsel %vm3689, %v3674, %v3564
        %v3692 = vsel %vm3689, %v3675, %v3566
        %v3693 = vsel %vm3689, %v3676, %v3568
        %v3694 = vsel %vm3689, %v3677, %v3570
        %v3695 = vsel %vm3689, %v3678, %v3572
        %v3696 = vsel %vm3689, %v3679, %v3574
        %v3697 = vsel %vm3689, %v3680, %v3576
        %v3698 = vsel %vm3689, %v3681, %v3578
        %v3699 = vsel %vm3689, %v3682, %v3580
        %v3700 = vsel %vm3689, %v3683, %v3582
        %v3701 = vsel %vm3689, %v3684, %v3584
        %v3702 = vsel %vm3689, %v3685, %v3586
        %v3703 = vsel %vm3689, %v3686, %v3588
        %v3704 = vsel %vm3689, %v3687, %v3590
        %v3705 = vsel %vm3689, %v3688, %v3592
        %vm3706 = vcmask 195584
        %v3707 = vsel %vm3706, %v3690, %v3626
        %v3708 = vsel %vm3706, %v3691, %v3628
        %v3709 = vsel %vm3706, %v3692, %v3630
        %v3710 = vsel %vm3706, %v3693, %v3632
        %v3711 = vsel %vm3706, %v3694, %v3634
        %v3712 = vsel %vm3706, %v3695, %v3636
        %v3713 = vsel %vm3706, %v3696, %v3638
        %v3714 = vsel %vm3706, %v3697, %v3640
        %v3715 = vsel %vm3706, %v3698, %v3642
        %v3716 = vsel %vm3706, %v3699, %v3644
        %v3717 = vsel %vm3706, %v3700, %v3646
        %v3718 = vsel %vm3706, %v3701, %v3648
        %v3719 = vsel %vm3706, %v3702, %v3650
        %v3720 = vsel %vm3706, %v3703, %v3652
        %v3721 = vsel %vm3706, %v3704, %v3654
        %v3722 = vsel %vm3706, %v3705, %v3656
        %v3723 = vld [vmem:[%s450] sm:$0xff]
        %v3724 = vld [vmem:[%s450 + $0x8] sm:$0xff]
        %v3725 = vld [vmem:[%s450 + $0x10] sm:$0xff]
        %v3726 = vld [vmem:[%s450 + $0x18] sm:$0xff]
        %v3727 = vlaneseq
        %v3728 = vshrl.u32 %v3727, 7
        %v3729 = vsub.s32 3, %v3728
        %v3730 = vrot.slane %v756, %v3729
        %v3732 = vsel %vm762, %v3707, 0
        %v3735 = vsel %vm762, %v3708, 0
        %v3738 = vsel %vm762, %v3709, 0
        %v3741 = vsel %vm762, %v3710, 0
        %v3744 = vsel %vm762, %v3711, 0
        %v3747 = vsel %vm762, %v3712, 0
        %v3750 = vsel %vm762, %v3713, 0
        %v3753 = vsel %vm762, %v3714, 0
        %v3756 = vsel %vm762, %v3715, 0
        %v3759 = vsel %vm762, %v3716, 0
        %v3762 = vsel %vm762, %v3717, 0
        %v3765 = vsel %vm762, %v3718, 0
        %v3768 = vsel %vm762, %v3719, 0
        %v3771 = vsel %vm762, %v3720, 0
        %v3774 = vsel %vm762, %v3721, 0
        %v3777 = vsel %vm762, %v3722, 0
        %3779 = vmatprep.subr.mxu0 0.0
        %3780 = vmatpush1.msra.mxu0 %v3723
        %3781 = vmatprep.subr.mxu0 0.0
        %3782 = vmatpush1.msra.mxu0 %v3724
        %3783 = vmatprep.subr.mxu0 0.0
        %3784 = vmatpush1.msra.mxu0 %v3725
        %3785 = vmatprep.subr.mxu0 0.0
        %3786 = vmatpush1.msra.mxu0 %v3726
        %3787 = vmatprep.subr.mxu0 0.0
        %3788 = vmatpush1.msra.mxu0 0.0
        %3789 = vmatprep.subr.mxu0 0.0
        %3790 = vmatpush1.msra.mxu0 0.0
        %3791 = vmatprep.subr.mxu0 0.0
        %3792 = vmatpush1.msra.mxu0 0.0
        %3793 = vmatprep.subr.mxu0 0.0
        %3794 = vmatpush1.msra.mxu0 0.0
        %3795 = vmatprep.subr.mxu0 0.0
        %3796 = vmatpush1.msra.mxu0 0.0
        %3797 = vmatprep.subr.mxu0 0.0
        %3798 = vmatpush1.msra.mxu0 0.0
        %3799 = vmatprep.subr.mxu0 0.0
        %3800 = vmatpush1.msra.mxu0 0.0
        %3801 = vmatprep.subr.mxu0 0.0
        %3802 = vmatpush1.msra.mxu0 0.0
        %3803 = vmatprep.subr.mxu0 0.0
        %3804 = vmatpush1.msra.mxu0 0.0
        %3805 = vmatprep.subr.mxu0 0.0
        %3806 = vmatpush1.msra.mxu0 0.0
        %3807 = vmatprep.subr.mxu0 0.0
        %3808 = vmatpush1.msra.mxu0 0.0
        %3809 = vmatprep.subr.mxu0 0.0
        %3810 = vmatpush1.msra.mxu0 0.0
        %3811 = vmatprep.subr.mxu0 0.0
        %3812 = vmatpush1.msra.mxu0 0.0
        %3813 = vmatprep.subr.mxu0 0.0
        %3814 = vmatpush1.msra.mxu0 0.0
        %3815 = vmatprep.subr.mxu0 0.0
        %3816 = vmatpush1.msra.mxu0 0.0
        %3817 = vmatprep.subr.mxu0 0.0
        %3818 = vmatpush1.msra.mxu0 0.0
        %3819 = vmatprep.subr.mxu0 0.0
        %3820 = vmatpush1.msra.mxu0 0.0
        %3821 = vmatprep.subr.mxu0 0.0
        %3822 = vmatpush1.msra.mxu0 0.0
        %3823 = vmatprep.subr.mxu0 0.0
        %3824 = vmatpush1.msra.mxu0 0.0
        %3825 = vmatprep.subr.mxu0 0.0
        %3826 = vmatpush1.msra.mxu0 0.0
        %3827 = vmatprep.subr.mxu0 0.0
        %3828 = vmatpush1.msra.mxu0 0.0
        %3829 = vmatprep.subr.mxu0 0.0
        %3830 = vmatpush1.msra.mxu0 0.0
        %3831 = vmatprep.subr.mxu0 0.0
        %3832 = vmatpush1.msra.mxu0 0.0
        %3833 = vmatprep.subr.mxu0 0.0
        %3834 = vmatpush1.msra.mxu0 0.0
        %3835 = vmatprep.subr.mxu0 0.0
        %3836 = vmatpush1.msra.mxu0 0.0
        %3837 = vmatprep.subr.mxu0 0.0
        %3838 = vmatpush1.msra.mxu0 0.0
        %3839 = vmatprep.subr.mxu0 0.0
        %3840 = vmatpush1.msra.mxu0 0.0
        %3841 = vmatprep.subr.mxu0 0.0
        %3842 = vmatpush1.msra.mxu0 0.0
        %3843 = vmatprep.mubr.f32.mxu0 0.0
        %3844 = vmatmul.mubr.f32.gmra.mrb[0].mxu0 %v3732
        %v3845 = vpop.f32.mrb[0].mxu0
        %v3846 = vadd.f32 %v3730, %v3845
        %v3847 = vpop.f32.mrb[0].mxu0
        %3848 = vmatprep.mubr.f32.mxu0 0.0
        %3849 = vmatmul.mubr.f32.gmra.mrb[0].mxu0 %v3735
        %v3850 = vpop.f32.mrb[0].mxu0
        %v3851 = vadd.f32 %v3730, %v3850
        %v3852 = vpop.f32.mrb[0].mxu0
        %3853 = vmatprep.mubr.f32.mxu0 0.0
        %3854 = vmatmul.mubr.f32.gmra.mrb[0].mxu0 %v3738
        %v3855 = vpop.f32.mrb[0].mxu0
        %v3856 = vadd.f32 %v3730, %v3855
        %v3857 = vpop.f32.mrb[0].mxu0
        %3858 = vmatprep.mubr.f32.mxu0 0.0
        %3859 = vmatmul.mubr.f32.gmra.mrb[0].mxu0 %v3741
        %v3860 = vpop.f32.mrb[0].mxu0
        %v3861 = vadd.f32 %v3730, %v3860
        %v3862 = vpop.f32.mrb[0].mxu0
        %3863 = vmatprep.mubr.f32.mxu0 0.0
        %3864 = vmatmul.mubr.f32.gmra.mrb[0].mxu0 %v3744
        %v3865 = vpop.f32.mrb[0].mxu0
        %v3866 = vadd.f32 %v3730, %v3865
        %v3867 = vpop.f32.mrb[0].mxu0
        %3868 = vmatprep.mubr.f32.mxu0 0.0
        %3869 = vmatmul.mubr.f32.gmra.mrb[0].mxu0 %v3747
        %v3870 = vpop.f32.mrb[0].mxu0
        %v3871 = vadd.f32 %v3730, %v3870
        %v3872 = vpop.f32.mrb[0].mxu0
        %3873 = vmatprep.mubr.f32.mxu0 0.0
        %3874 = vmatmul.mubr.f32.gmra.mrb[0].mxu0 %v3750
        %v3875 = vpop.f32.mrb[0].mxu0
        %v3876 = vadd.f32 %v3730, %v3875
        %v3877 = vpop.f32.mrb[0].mxu0
        %3878 = vmatprep.mubr.f32.mxu0 0.0
        %3879 = vmatmul.mubr.f32.gmra.mrb[0].mxu0 %v3753
        %v3880 = vpop.f32.mrb[0].mxu0
        %v3881 = vadd.f32 %v3730, %v3880
        %v3882 = vpop.f32.mrb[0].mxu0
        %3883 = vmatprep.mubr.f32.mxu0 0.0
        %3884 = vmatmul.mubr.f32.gmra.mrb[0].mxu0 %v3756
        %v3885 = vpop.f32.mrb[0].mxu0
        %v3886 = vadd.f32 %v3730, %v3885
        %v3887 = vpop.f32.mrb[0].mxu0
        %3888 = vmatprep.mubr.f32.mxu0 0.0
        %3889 = vmatmul.mubr.f32.gmra.mrb[0].mxu0 %v3759
        %v3890 = vpop.f32.mrb[0].mxu0
        %v3891 = vadd.f32 %v3730, %v3890
        %v3892 = vpop.f32.mrb[0].mxu0
        %3893 = vmatprep.mubr.f32.mxu0 0.0
        %3894 = vmatmul.mubr.f32.gmra.mrb[0].mxu0 %v3762
        %v3895 = vpop.f32.mrb[0].mxu0
        %v3896 = vadd.f32 %v3730, %v3895
        %v3897 = vpop.f32.mrb[0].mxu0
        %3898 = vmatprep.mubr.f32.mxu0 0.0
        %3899 = vmatmul.mubr.f32.gmra.mrb[0].mxu0 %v3765
        %v3900 = vpop.f32.mrb[0].mxu0
        %v3901 = vadd.f32 %v3730, %v3900
        %v3902 = vpop.f32.mrb[0].mxu0
        %3903 = vmatprep.mubr.f32.mxu0 0.0
        %3904 = vmatmul.mubr.f32.gmra.mrb[0].mxu0 %v3768
        %v3905 = vpop.f32.mrb[0].mxu0
        %v3906 = vadd.f32 %v3730, %v3905
        %v3907 = vpop.f32.mrb[0].mxu0
        %3908 = vmatprep.mubr.f32.mxu0 0.0
        %3909 = vmatmul.mubr.f32.gmra.mrb[0].mxu0 %v3771
        %v3910 = vpop.f32.mrb[0].mxu0
        %v3911 = vadd.f32 %v3730, %v3910
        %v3912 = vpop.f32.mrb[0].mxu0
        %3913 = vmatprep.mubr.f32.mxu0 0.0
        %3914 = vmatmul.mubr.f32.gmra.mrb[0].mxu0 %v3774
        %v3915 = vpop.f32.mrb[0].mxu0
        %v3916 = vadd.f32 %v3730, %v3915
        %v3917 = vpop.f32.mrb[0].mxu0
        %3918 = vmatprep.mubr.f32.mxu0 0.0
        %3919 = vmatmul.mubr.f32.gmra.mrb[0].mxu0 %v3777
        %v3920 = vpop.f32.mrb[0].mxu0
        %v3921 = vadd.f32 %v3730, %v3920
        %v3922 = vpop.f32.mrb[0].mxu0
        %3923 = vdwg.mxu0
        %v3924 = vadd.f32 %v724, %v3846
        %v3925 = vadd.f32 %v725, %v3851
        %v3926 = vadd.f32 %v726, %v3856
        %v3927 = vadd.f32 %v727, %v3861
        %v3928 = vadd.f32 %v728, %v3866
        %v3929 = vadd.f32 %v729, %v3871
        %v3930 = vadd.f32 %v730, %v3876
        %v3931 = vadd.f32 %v731, %v3881
        %v3932 = vadd.f32 %v732, %v3886
        %v3933 = vadd.f32 %v733, %v3891
        %v3934 = vadd.f32 %v734, %v3896
        %v3935 = vadd.f32 %v735, %v3901
        %v3936 = vadd.f32 %v736, %v3906
        %v3937 = vadd.f32 %v737, %v3911
        %v3938 = vadd.f32 %v738, %v3916
        %v3939 = vadd.f32 %v739, %v3921
        %v3940 = vsel %vm762, %v3924, 0.0
        %3941 = vadd.xlane.f32.xlu0 %v3940
        %v3942 = vpop.xlane.xlu0 %3941
        %v3943 = vsel %vm762, %v3925, 0.0
        %3944 = vadd.xlane.f32.xlu0 %v3943
        %v3945 = vpop.xlane.xlu0 %3944
        %v3946 = vsel %vm762, %v3926, 0.0
        %3947 = vadd.xlane.f32.xlu0 %v3946
        %v3948 = vpop.xlane.xlu0 %3947
        %v3949 = vsel %vm762, %v3927, 0.0
        %3950 = vadd.xlane.f32.xlu0 %v3949
        %v3951 = vpop.xlane.xlu0 %3950
        %v3952 = vsel %vm762, %v3928, 0.0
        %3953 = vadd.xlane.f32.xlu0 %v3952
        %v3954 = vpop.xlane.xlu0 %3953
        %v3955 = vsel %vm762, %v3929, 0.0
        %3956 = vadd.xlane.f32.xlu0 %v3955
        %v3957 = vpop.xlane.xlu0 %3956
        %v3958 = vsel %vm762, %v3930, 0.0
        %3959 = vadd.xlane.f32.xlu0 %v3958
        %v3960 = vpop.xlane.xlu0 %3959
        %v3961 = vsel %vm762, %v3931, 0.0
        %3962 = vadd.xlane.f32.xlu0 %v3961
        %v3963 = vpop.xlane.xlu0 %3962
        %v3964 = vsel %vm762, %v3932, 0.0
        %3965 = vadd.xlane.f32.xlu0 %v3964
        %v3966 = vpop.xlane.xlu0 %3965
        %v3967 = vsel %vm762, %v3933, 0.0
        %3968 = vadd.xlane.f32.xlu0 %v3967
        %v3969 = vpop.xlane.xlu0 %3968
        %v3970 = vsel %vm762, %v3934, 0.0
        %3971 = vadd.xlane.f32.xlu0 %v3970
        %v3972 = vpop.xlane.xlu0 %3971
        %v3973 = vsel %vm762, %v3935, 0.0
        %3974 = vadd.xlane.f32.xlu0 %v3973
        %v3975 = vpop.xlane.xlu0 %3974
        %v3976 = vsel %vm762, %v3936, 0.0
        %3977 = vadd.xlane.f32.xlu0 %v3976
        %v3978 = vpop.xlane.xlu0 %3977
        %v3979 = vsel %vm762, %v3937, 0.0
        %3980 = vadd.xlane.f32.xlu0 %v3979
        %v3981 = vpop.xlane.xlu0 %3980
        %v3982 = vsel %vm762, %v3938, 0.0
        %3983 = vadd.xlane.f32.xlu0 %v3982
        %v3984 = vpop.xlane.xlu0 %3983
        %v3985 = vsel %vm762, %v3939, 0.0
        %3986 = vadd.xlane.f32.xlu0 %v3985
        %v3987 = vpop.xlane.xlu0 %3986
        %v3988 = vrcp.pop 32.0
        %v3989 = vmul.f32 %v3942, %v3988
        %v3990 = vmul.f32 %v3945, %v3988
        %v3991 = vmul.f32 %v3948, %v3988
        %v3992 = vmul.f32 %v3951, %v3988
        %v3993 = vmul.f32 %v3954, %v3988
        %v3994 = vmul.f32 %v3957, %v3988
        %v3995 = vmul.f32 %v3960, %v3988
        %v3996 = vmul.f32 %v3963, %v3988
        %v3997 = vmul.f32 %v3966, %v3988
        %v3998 = vmul.f32 %v3969, %v3988
        %v3999 = vmul.f32 %v3972, %v3988
        %v4000 = vmul.f32 %v3975, %v3988
        %v4001 = vmul.f32 %v3978, %v3988
        %v4002 = vmul.f32 %v3981, %v3988
        %v4003 = vmul.f32 %v3984, %v3988
        %v4004 = vmul.f32 %v3987, %v3988
        %v4005 = vsub.f32 %v3924, %v3989
        %v4006 = vsub.f32 %v3925, %v3990
        %v4007 = vsub.f32 %v3926, %v3991
        %v4008 = vsub.f32 %v3927, %v3992
        %v4009 = vsub.f32 %v3928, %v3993
        %v4010 = vsub.f32 %v3929, %v3994
        %v4011 = vsub.f32 %v3930, %v3995
        %v4012 = vsub.f32 %v3931, %v3996
        %v4013 = vsub.f32 %v3932, %v3997
        %v4014 = vsub.f32 %v3933, %v3998
        %v4015 = vsub.f32 %v3934, %v3999
        %v4016 = vsub.f32 %v3935, %v4000
        %v4017 = vsub.f32 %v3936, %v4001
        %v4018 = vsub.f32 %v3937, %v4002
        %v4019 = vsub.f32 %v3938, %v4003
        %v4020 = vsub.f32 %v3939, %v4004
        %v4021 = vmul.f32 %v4005, %v4005
        %v4022 = vmul.f32 %v4006, %v4006
        %v4023 = vmul.f32 %v4007, %v4007
        %v4024 = vmul.f32 %v4008, %v4008
        %v4025 = vmul.f32 %v4009, %v4009
        %v4026 = vmul.f32 %v4010, %v4010
        %v4027 = vmul.f32 %v4011, %v4011
        %v4028 = vmul.f32 %v4012, %v4012
        %v4029 = vmul.f32 %v4013, %v4013
        %v4030 = vmul.f32 %v4014, %v4014
        %v4031 = vmul.f32 %v4015, %v4015
        %v4032 = vmul.f32 %v4016, %v4016
        %v4033 = vmul.f32 %v4017, %v4017
        %v4034 = vmul.f32 %v4018, %v4018
        %v4035 = vmul.f32 %v4019, %v4019
        %v4036 = vmul.f32 %v4020, %v4020
        %v4037 = vsel %vm762, %v4021, 0.0
        %4038 = vadd.xlane.f32.xlu0 %v4037
        %v4039 = vpop.xlane.xlu0 %4038
        %v4040 = vsel %vm762, %v4022, 0.0
        %4041 = vadd.xlane.f32.xlu0 %v4040
        %v4042 = vpop.xlane.xlu0 %4041
        %v4043 = vsel %vm762, %v4023, 0.0
        %4044 = vadd.xlane.f32.xlu0 %v4043
        %v4045 = vpop.xlane.xlu0 %4044
        %v4046 = vsel %vm762, %v4024, 0.0
        %4047 = vadd.xlane.f32.xlu0 %v4046
        %v4048 = vpop.xlane.xlu0 %4047
        %v4049 = vsel %vm762, %v4025, 0.0
        %4050 = vadd.xlane.f32.xlu0 %v4049
        %v4051 = vpop.xlane.xlu0 %4050
        %v4052 = vsel %vm762, %v4026, 0.0
        %4053 = vadd.xlane.f32.xlu0 %v4052
        %v4054 = vpop.xlane.xlu0 %4053
        %v4055 = vsel %vm762, %v4027, 0.0
        %4056 = vadd.xlane.f32.xlu0 %v4055
        %v4057 = vpop.xlane.xlu0 %4056
        %v4058 = vsel %vm762, %v4028, 0.0
        %4059 = vadd.xlane.f32.xlu0 %v4058
        %v4060 = vpop.xlane.xlu0 %4059
        %v4061 = vsel %vm762, %v4029, 0.0
        %4062 = vadd.xlane.f32.xlu0 %v4061
        %v4063 = vpop.xlane.xlu0 %4062
        %v4064 = vsel %vm762, %v4030, 0.0
        %4065 = vadd.xlane.f32.xlu0 %v4064
        %v4066 = vpop.xlane.xlu0 %4065
        %v4067 = vsel %vm762, %v4031, 0.0
        %4068 = vadd.xlane.f32.xlu0 %v4067
        %v4069 = vpop.xlane.xlu0 %4068
        %v4070 = vsel %vm762, %v4032, 0.0
        %4071 = vadd.xlane.f32.xlu0 %v4070
        %v4072 = vpop.xlane.xlu0 %4071
        %v4073 = vsel %vm762, %v4033, 0.0
        %4074 = vadd.xlane.f32.xlu0 %v4073
        %v4075 = vpop.xlane.xlu0 %4074
        %v4076 = vsel %vm762, %v4034, 0.0
        %4077 = vadd.xlane.f32.xlu0 %v4076
        %v4078 = vpop.xlane.xlu0 %4077
        %v4079 = vsel %vm762, %v4035, 0.0
        %4080 = vadd.xlane.f32.xlu0 %v4079
        %v4081 = vpop.xlane.xlu0 %4080
        %v4082 = vsel %vm762, %v4036, 0.0
        %4083 = vadd.xlane.f32.xlu0 %v4082
        %v4084 = vpop.xlane.xlu0 %4083
        %v4085 = vmul.f32 %v4039, %v3988
        %v4086 = vmul.f32 %v4042, %v3988
        %v4087 = vmul.f32 %v4045, %v3988
        %v4088 = vmul.f32 %v4048, %v3988
        %v4089 = vmul.f32 %v4051, %v3988
        %v4090 = vmul.f32 %v4054, %v3988
        %v4091 = vmul.f32 %v4057, %v3988
        %v4092 = vmul.f32 %v4060, %v3988
        %v4093 = vmul.f32 %v4063, %v3988
        %v4094 = vmul.f32 %v4066, %v3988
        %v4095 = vmul.f32 %v4069, %v3988
        %v4096 = vmul.f32 %v4072, %v3988
        %v4097 = vmul.f32 %v4075, %v3988
        %v4098 = vmul.f32 %v4078, %v3988
        %v4099 = vmul.f32 %v4081, %v3988
        %v4100 = vmul.f32 %v4084, %v3988
        %v4101 = vadd.f32 %v4085, 1e-05
        %v4102 = vadd.f32 %v4086, 1e-05
        %v4103 = vadd.f32 %v4087, 1e-05
        %v4104 = vadd.f32 %v4088, 1e-05
        %v4105 = vadd.f32 %v4089, 1e-05
        %v4106 = vadd.f32 %v4090, 1e-05
        %v4107 = vadd.f32 %v4091, 1e-05
        %v4108 = vadd.f32 %v4092, 1e-05
        %v4109 = vadd.f32 %v4093, 1e-05
        %v4110 = vadd.f32 %v4094, 1e-05
        %v4111 = vadd.f32 %v4095, 1e-05
        %v4112 = vadd.f32 %v4096, 1e-05
        %v4113 = vadd.f32 %v4097, 1e-05
        %v4114 = vadd.f32 %v4098, 1e-05
        %v4115 = vadd.f32 %v4099, 1e-05
        %v4116 = vadd.f32 %v4100, 1e-05
        %v4117 = vrsqrt.pop %v4101
        %v4118 = vrsqrt.pop %v4102
        %v4119 = vrsqrt.pop %v4103
        %v4120 = vrsqrt.pop %v4104
        %v4121 = vrsqrt.pop %v4105
        %v4122 = vrsqrt.pop %v4106
        %v4123 = vrsqrt.pop %v4107
        %v4124 = vrsqrt.pop %v4108
        %v4125 = vrsqrt.pop %v4109
        %v4126 = vrsqrt.pop %v4110
        %v4127 = vrsqrt.pop %v4111
        %v4128 = vrsqrt.pop %v4112
        %v4129 = vrsqrt.pop %v4113
        %v4130 = vrsqrt.pop %v4114
        %v4131 = vrsqrt.pop %v4115
        %v4132 = vrsqrt.pop %v4116
        %v4133 = vmul.f32 %v4005, %v4117
        %v4134 = vmul.f32 %v4006, %v4118
        %v4135 = vmul.f32 %v4007, %v4119
        %v4136 = vmul.f32 %v4008, %v4120
        %v4137 = vmul.f32 %v4009, %v4121
        %v4138 = vmul.f32 %v4010, %v4122
        %v4139 = vmul.f32 %v4011, %v4123
        %v4140 = vmul.f32 %v4012, %v4124
        %v4141 = vmul.f32 %v4013, %v4125
        %v4142 = vmul.f32 %v4014, %v4126
        %v4143 = vmul.f32 %v4015, %v4127
        %v4144 = vmul.f32 %v4016, %v4128
        %v4145 = vmul.f32 %v4017, %v4129
        %v4146 = vmul.f32 %v4018, %v4130
        %v4147 = vmul.f32 %v4019, %v4131
        %v4148 = vmul.f32 %v4020, %v4132
        %v4149 = vlaneseq
        %v4150 = vshrl.u32 %v4149, 7
        %v4151 = vsub.s32 4, %v4150
        %v4152 = vrot.slane %v756, %v4151
        %v4153 = vmul.f32 %v4133, %v4152
        %v4154 = vmul.f32 %v4134, %v4152
        %v4155 = vmul.f32 %v4135, %v4152
        %v4156 = vmul.f32 %v4136, %v4152
        %v4157 = vmul.f32 %v4137, %v4152
        %v4158 = vmul.f32 %v4138, %v4152
        %v4159 = vmul.f32 %v4139, %v4152
        %v4160 = vmul.f32 %v4140, %v4152
        %v4161 = vmul.f32 %v4141, %v4152
        %v4162 = vmul.f32 %v4142, %v4152
        %v4163 = vmul.f32 %v4143, %v4152
        %v4164 = vmul.f32 %v4144, %v4152
        %v4165 = vmul.f32 %v4145, %v4152
        %v4166 = vmul.f32 %v4146, %v4152
        %v4167 = vmul.f32 %v4147, %v4152
        %v4168 = vmul.f32 %v4148, %v4152
        %v4169 = vlaneseq
        %v4170 = vshrl.u32 %v4169, 7
        %v4171 = vsub.s32 5, %v4170
        %v4172 = vrot.slane %v756, %v4171
        %v4173 = vadd.f32 %v4153, %v4172
        %v4174 = vadd.f32 %v4154, %v4172
        %v4175 = vadd.f32 %v4155, %v4172
        %v4176 = vadd.f32 %v4156, %v4172
        %v4177 = vadd.f32 %v4157, %v4172
        %v4178 = vadd.f32 %v4158, %v4172
        %v4179 = vadd.f32 %v4159, %v4172
        %v4180 = vadd.f32 %v4160, %v4172
        %v4181 = vadd.f32 %v4161, %v4172
        %v4182 = vadd.f32 %v4162, %v4172
        %v4183 = vadd.f32 %v4163, %v4172
        %v4184 = vadd.f32 %v4164, %v4172
        %v4185 = vadd.f32 %v4165, %v4172
        %v4186 = vadd.f32 %v4166, %v4172
        %v4187 = vadd.f32 %v4167, %v4172
        %v4188 = vadd.f32 %v4168, %v4172
        %v4189 = vpack.c.bf16 %v4174, %v4173
        %v4190 = vpack.c.bf16 %v4176, %v4175
        %v4191 = vpack.c.bf16 %v4178, %v4177
        %v4192 = vpack.c.bf16 %v4180, %v4179
        %v4193 = vpack.c.bf16 %v4182, %v4181
        %v4194 = vpack.c.bf16 %v4184, %v4183
        %v4195 = vpack.c.bf16 %v4186, %v4185
        %v4196 = vpack.c.bf16 %v4188, %v4187
        %v4197 = vld [vmem:[%s455] sm:$0xff]
        %v4198 = vld [vmem:[%s455 + $0x8] sm:$0xff]
        %v4199 = vld [vmem:[%s455 + $0x10] sm:$0xff]
        %v4200 = vld [vmem:[%s455 + $0x18] sm:$0xff]
        %v4201 = vld [vmem:[%s455 + $0x20] sm:$0xff]
        %v4202 = vld [vmem:[%s455 + $0x28] sm:$0xff]
        %v4203 = vld [vmem:[%s455 + $0x30] sm:$0xff]
        %v4204 = vld [vmem:[%s455 + $0x38] sm:$0xff]
        %v4205 = vld [vmem:[%s455 + $0x40] sm:$0xff]
        %v4206 = vld [vmem:[%s455 + $0x48] sm:$0xff]
        %v4207 = vld [vmem:[%s455 + $0x50] sm:$0xff]
        %v4208 = vld [vmem:[%s455 + $0x58] sm:$0xff]
        %v4209 = vld [vmem:[%s455 + $0x60] sm:$0xff]
        %v4210 = vld [vmem:[%s455 + $0x68] sm:$0xff]
        %v4211 = vld [vmem:[%s455 + $0x70] sm:$0xff]
        %v4212 = vld [vmem:[%s455 + $0x78] sm:$0xff]
        %v4213 = vld [vmem:[%s455 + $0x80] sm:$0xff]
        %v4214 = vld [vmem:[%s455 + $0x88] sm:$0xff]
        %v4215 = vld [vmem:[%s455 + $0x90] sm:$0xff]
        %v4216 = vld [vmem:[%s455 + $0x98] sm:$0xff]
        %v4217 = vld [vmem:[%s455 + $0xa0] sm:$0xff]
        %v4218 = vld [vmem:[%s455 + $0xa8] sm:$0xff]
        %v4219 = vld [vmem:[%s455 + $0xb0] sm:$0xff]
        %v4220 = vld [vmem:[%s455 + $0xb8] sm:$0xff]
        %v4221 = vld [vmem:[%s455 + $0xc0] sm:$0xff]
        %v4222 = vld [vmem:[%s455 + $0xc8] sm:$0xff]
        %v4223 = vld [vmem:[%s455 + $0xd0] sm:$0xff]
        %v4224 = vld [vmem:[%s455 + $0xd8] sm:$0xff]
        %v4225 = vld [vmem:[%s455 + $0xe0] sm:$0xff]
        %v4226 = vld [vmem:[%s455 + $0xe8] sm:$0xff]
        %v4227 = vld [vmem:[%s455 + $0xf0] sm:$0xff]
        %v4228 = vld [vmem:[%s455 + $0xf8] sm:$0xff]
        %v4229 = vld [vmem:[%s459] sm:$0xff]
        %v4230 = vld [vmem:[%s459 + $0x8] sm:$0xff]
        %v4233 = vlaneseq
        %v4234 = vshrl.u32 %v4233, 7
        %v4235 = vsub.s32 0, %v4234
        %v4236 = vrot.slane %v4229, %v4235
        %v4237 = vlaneseq
        %v4238 = vshrl.u32 %v4237, 7
        %v4239 = vsub.s32 1, %v4238
        %v4240 = vrot.slane %v4229, %v4239
        %v4241 = vlaneseq
        %v4242 = vshrl.u32 %v4241, 7
        %v4243 = vsub.s32 2, %v4242
        %v4244 = vrot.slane %v4229, %v4243
        %v4245 = vlaneseq
        %v4246 = vshrl.u32 %v4245, 7
        %v4247 = vsub.s32 3, %v4246
        %v4248 = vrot.slane %v4229, %v4247
        %v4249 = vlaneseq
        %v4250 = vshrl.u32 %v4249, 7
        %v4251 = vsub.s32 4, %v4250
        %v4252 = vrot.slane %v4229, %v4251
        %v4253 = vlaneseq
        %v4254 = vshrl.u32 %v4253, 7
        %v4255 = vsub.s32 5, %v4254
        %v4256 = vrot.slane %v4229, %v4255
        %v4257 = vlaneseq
        %v4258 = vshrl.u32 %v4257, 7
        %v4259 = vsub.s32 6, %v4258
        %v4260 = vrot.slane %v4229, %v4259
        %v4261 = vlaneseq
        %v4262 = vshrl.u32 %v4261, 7
        %v4263 = vsub.s32 7, %v4262
        %v4264 = vrot.slane %v4229, %v4263
        %v4265 = vlaneseq
        %v4266 = vshrl.u32 %v4265, 7
        %v4267 = vsub.s32 0, %v4266
        %v4268 = vrot.slane %v4230, %v4267
        %v4269 = vlaneseq
        %v4270 = vshrl.u32 %v4269, 7
        %v4271 = vsub.s32 1, %v4270
        %v4272 = vrot.slane %v4230, %v4271
        %v4273 = vlaneseq
        %v4274 = vshrl.u32 %v4273, 7
        %v4275 = vsub.s32 2, %v4274
        %v4276 = vrot.slane %v4230, %v4275
        %v4277 = vlaneseq
        %v4278 = vshrl.u32 %v4277, 7
        %v4279 = vsub.s32 3, %v4278
        %v4280 = vrot.slane %v4230, %v4279
        %v4281 = vlaneseq
        %v4282 = vshrl.u32 %v4281, 7
        %v4283 = vsub.s32 4, %v4282
        %v4284 = vrot.slane %v4230, %v4283
        %v4285 = vlaneseq
        %v4286 = vshrl.u32 %v4285, 7
        %v4287 = vsub.s32 5, %v4286
        %v4288 = vrot.slane %v4230, %v4287
        %v4289 = vlaneseq
        %v4290 = vshrl.u32 %v4289, 7
        %v4291 = vsub.s32 6, %v4290
        %v4292 = vrot.slane %v4230, %v4291
        %v4293 = vlaneseq
        %v4294 = vshrl.u32 %v4293, 7
        %v4295 = vsub.s32 7, %v4294
        %v4296 = vrot.slane %v4230, %v4295
        %v4345 = vunpack.c.l.b16 %v4197
        %v4346 = vunpack.c.h.b16 %v4197
        %v4347 = vunpack.c.l.b16 %v4198
        %v4348 = vunpack.c.h.b16 %v4198
        %v4349 = vunpack.c.l.b16 %v4199
        %v4350 = vunpack.c.h.b16 %v4199
        %v4351 = vunpack.c.l.b16 %v4200
        %v4352 = vunpack.c.h.b16 %v4200
        %v4353 = vunpack.c.l.b16 %v4201
        %v4354 = vunpack.c.h.b16 %v4201
        %v4355 = vunpack.c.l.b16 %v4202
        %v4356 = vunpack.c.h.b16 %v4202
        %v4357 = vunpack.c.l.b16 %v4203
        %v4358 = vunpack.c.h.b16 %v4203
        %v4359 = vunpack.c.l.b16 %v4204
        %v4360 = vunpack.c.h.b16 %v4204
        %v4361 = vunpack.c.l.b16 %v4205
        %v4362 = vunpack.c.h.b16 %v4205
        %v4363 = vunpack.c.l.b16 %v4206
        %v4364 = vunpack.c.h.b16 %v4206
        %v4365 = vunpack.c.l.b16 %v4207
        %v4366 = vunpack.c.h.b16 %v4207
        %v4367 = vunpack.c.l.b16 %v4208
        %v4368 = vunpack.c.h.b16 %v4208
        %v4369 = vunpack.c.l.b16 %v4209
        %v4370 = vunpack.c.h.b16 %v4209
        %v4371 = vunpack.c.l.b16 %v4210
        %v4372 = vunpack.c.h.b16 %v4210
        %v4373 = vunpack.c.l.b16 %v4211
        %v4374 = vunpack.c.h.b16 %v4211
        %v4375 = vunpack.c.l.b16 %v4212
        %v4376 = vunpack.c.h.b16 %v4212
        %v4377 = vunpack.c.l.b16 %v4213
        %v4378 = vunpack.c.h.b16 %v4213
        %v4379 = vunpack.c.l.b16 %v4214
        %v4380 = vunpack.c.h.b16 %v4214
        %v4381 = vunpack.c.l.b16 %v4215
        %v4382 = vunpack.c.h.b16 %v4215
        %v4383 = vunpack.c.l.b16 %v4216
        %v4384 = vunpack.c.h.b16 %v4216
        %v4385 = vunpack.c.l.b16 %v4217
        %v4386 = vunpack.c.h.b16 %v4217
        %v4387 = vunpack.c.l.b16 %v4218
        %v4388 = vunpack.c.h.b16 %v4218
        %v4389 = vunpack.c.l.b16 %v4219
        %v4390 = vunpack.c.h.b16 %v4219
        %v4391 = vunpack.c.l.b16 %v4220
        %v4392 = vunpack.c.h.b16 %v4220
        %v4393 = vunpack.c.l.b16 %v4221
        %v4394 = vunpack.c.h.b16 %v4221
        %v4395 = vunpack.c.l.b16 %v4222
        %v4396 = vunpack.c.h.b16 %v4222
        %v4397 = vunpack.c.l.b16 %v4223
        %v4398 = vunpack.c.h.b16 %v4223
        %v4399 = vunpack.c.l.b16 %v4224
        %v4400 = vunpack.c.h.b16 %v4224
        %v4401 = vunpack.c.l.b16 %v4225
        %v4402 = vunpack.c.h.b16 %v4225
        %v4403 = vunpack.c.l.b16 %v4226
        %v4404 = vunpack.c.h.b16 %v4226
        %v4405 = vunpack.c.l.b16 %v4227
        %v4406 = vunpack.c.h.b16 %v4227
        %v4407 = vunpack.c.l.b16 %v4228
        %v4408 = vunpack.c.h.b16 %v4228
        %v4409 = vpack.c.b16 %v4361, %v4345
        %v4410 = vpack.c.b16 %v4362, %v4346
        %v4411 = vpack.c.b16 %v4363, %v4347
        %v4412 = vpack.c.b16 %v4364, %v4348
        %v4413 = vpack.c.b16 %v4365, %v4349
        %v4414 = vpack.c.b16 %v4366, %v4350
        %v4415 = vpack.c.b16 %v4367, %v4351
        %v4416 = vpack.c.b16 %v4368, %v4352
        %v4417 = vpack.c.b16 %v4369, %v4353
        %v4418 = vpack.c.b16 %v4370, %v4354
        %v4419 = vpack.c.b16 %v4371, %v4355
        %v4420 = vpack.c.b16 %v4372, %v4356
        %v4421 = vpack.c.b16 %v4373, %v4357
        %v4422 = vpack.c.b16 %v4374, %v4358
        %v4423 = vpack.c.b16 %v4375, %v4359
        %v4424 = vpack.c.b16 %v4376, %v4360
        %v4425 = vpack.c.b16 %v4393, %v4377
        %v4426 = vpack.c.b16 %v4394, %v4378
        %v4427 = vpack.c.b16 %v4395, %v4379
        %v4428 = vpack.c.b16 %v4396, %v4380
        %v4429 = vpack.c.b16 %v4397, %v4381
        %v4430 = vpack.c.b16 %v4398, %v4382
        %v4431 = vpack.c.b16 %v4399, %v4383
        %v4432 = vpack.c.b16 %v4400, %v4384
        %v4433 = vpack.c.b16 %v4401, %v4385
        %v4434 = vpack.c.b16 %v4402, %v4386
        %v4435 = vpack.c.b16 %v4403, %v4387
        %v4436 = vpack.c.b16 %v4404, %v4388
        %v4437 = vpack.c.b16 %v4405, %v4389
        %v4438 = vpack.c.b16 %v4406, %v4390
        %v4439 = vpack.c.b16 %v4407, %v4391
        %v4440 = vpack.c.b16 %v4408, %v4392
        %v4474 = vsel %vm762, %v4189, 0
        %v4477 = vsel %vm762, %v4190, 0
        %v4480 = vsel %vm762, %v4191, 0
        %v4483 = vsel %vm762, %v4192, 0
        %v4486 = vsel %vm762, %v4193, 0
        %v4489 = vsel %vm762, %v4194, 0
        %v4492 = vsel %vm762, %v4195, 0
        %v4495 = vsel %vm762, %v4196, 0
        %4497 = vmatprep.subr.bf16.mxu0 %v4410
        %4498 = vmatpush1.bf16.msra.mxu0 %v4409
        %4499 = vmatprep.subr.bf16.mxu0 %v4426
        %4500 = vmatpush1.bf16.msra.mxu0 %v4425
        %4501 = vmatprep.subr.bf16.mxu0 0
        %4502 = vmatpush1.bf16.msra.mxu0 0
        %4503 = vmatprep.subr.bf16.mxu0 0
        %4504 = vmatpush1.bf16.msra.mxu0 0
        %4505 = vmatprep.subr.bf16.mxu0 0
        %4506 = vmatpush1.bf16.msra.mxu0 0
        %4507 = vmatprep.subr.bf16.mxu0 0
        %4508 = vmatpush1.bf16.msra.mxu0 0
        %4509 = vmatprep.subr.bf16.mxu0 0
        %4510 = vmatpush1.bf16.msra.mxu0 0
        %4511 = vmatprep.subr.bf16.mxu0 0
        %4512 = vmatpush1.bf16.msra.mxu0 0
        %4513 = vmatprep.subr.bf16.mxu0 0
        %4514 = vmatpush1.bf16.msra.mxu0 0
        %4515 = vmatprep.subr.bf16.mxu0 0
        %4516 = vmatpush1.bf16.msra.mxu0 0
        %4517 = vmatprep.subr.bf16.mxu0 0
        %4518 = vmatpush1.bf16.msra.mxu0 0
        %4519 = vmatprep.subr.bf16.mxu0 0
        %4520 = vmatpush1.bf16.msra.mxu0 0
        %4521 = vmatprep.subr.bf16.mxu0 0
        %4522 = vmatpush1.bf16.msra.mxu0 0
        %4523 = vmatprep.subr.bf16.mxu0 0
        %4524 = vmatpush1.bf16.msra.mxu0 0
        %4525 = vmatprep.subr.bf16.mxu0 0
        %4526 = vmatpush1.bf16.msra.mxu0 0
        %4527 = vmatprep.subr.bf16.mxu0 0
        %4528 = vmatpush1.bf16.msra.mxu0 0
        %4529 = vmatprep.mubr.bf16.mxu0 0
        %4530 = vmatmul.mubr.bf16.gmra.mrb[0].mxu0 %v4474
        %v4531 = vpop.f32.mrb[0].mxu0
        %v4532 = vadd.f32 %v4236, %v4531
        %v4533 = vpop.f32.mrb[0].mxu0
        %v4534 = vadd.f32 %v4240, %v4533
        %v4535 = vpop.f32.mrb[0].mxu0
        %v4536 = vadd.f32 %v4236, %v4535
        %v4537 = vpop.f32.mrb[0].mxu0
        %v4538 = vadd.f32 %v4240, %v4537
        %4539 = vmatprep.mubr.bf16.mxu0 0
        %4540 = vmatmul.mubr.bf16.gmra.mrb[0].mxu0 %v4477
        %v4541 = vpop.f32.mrb[0].mxu0
        %v4542 = vadd.f32 %v4236, %v4541
        %v4543 = vpop.f32.mrb[0].mxu0
        %v4544 = vadd.f32 %v4240, %v4543
        %v4545 = vpop.f32.mrb[0].mxu0
        %v4546 = vadd.f32 %v4236, %v4545
        %v4547 = vpop.f32.mrb[0].mxu0
        %v4548 = vadd.f32 %v4240, %v4547
        %4549 = vmatprep.mubr.bf16.mxu0 0
        %4550 = vmatmul.mubr.bf16.gmra.mrb[0].mxu0 %v4480
        %v4551 = vpop.f32.mrb[0].mxu0
        %v4552 = vadd.f32 %v4236, %v4551
        %v4553 = vpop.f32.mrb[0].mxu0
        %v4554 = vadd.f32 %v4240, %v4553
        %v4555 = vpop.f32.mrb[0].mxu0
        %v4556 = vadd.f32 %v4236, %v4555
        %v4557 = vpop.f32.mrb[0].mxu0
        %v4558 = vadd.f32 %v4240, %v4557
        %4559 = vmatprep.mubr.bf16.mxu0 0
        %4560 = vmatmul.mubr.bf16.gmra.mrb[0].mxu0 %v4483
        %v4561 = vpop.f32.mrb[0].mxu0
        %v4562 = vadd.f32 %v4236, %v4561
        %v4563 = vpop.f32.mrb[0].mxu0
        %v4564 = vadd.f32 %v4240, %v4563
        %v4565 = vpop.f32.mrb[0].mxu0
        %v4566 = vadd.f32 %v4236, %v4565
        %v4567 = vpop.f32.mrb[0].mxu0
        %v4568 = vadd.f32 %v4240, %v4567
        %4569 = vmatprep.mubr.bf16.mxu0 0
        %4570 = vmatmul.mubr.bf16.gmra.mrb[0].mxu0 %v4486
        %v4571 = vpop.f32.mrb[0].mxu0
        %v4572 = vadd.f32 %v4236, %v4571
        %v4573 = vpop.f32.mrb[0].mxu0
        %v4574 = vadd.f32 %v4240, %v4573
        %v4575 = vpop.f32.mrb[0].mxu0
        %v4576 = vadd.f32 %v4236, %v4575
        %v4577 = vpop.f32.mrb[0].mxu0
        %v4578 = vadd.f32 %v4240, %v4577
        %4579 = vmatprep.mubr.bf16.mxu0 0
        %4580 = vmatmul.mubr.bf16.gmra.mrb[0].mxu0 %v4489
        %v4581 = vpop.f32.mrb[0].mxu0
        %v4582 = vadd.f32 %v4236, %v4581
        %v4583 = vpop.f32.mrb[0].mxu0
        %v4584 = vadd.f32 %v4240, %v4583
        %v4585 = vpop.f32.mrb[0].mxu0
        %v4586 = vadd.f32 %v4236, %v4585
        %v4587 = vpop.f32.mrb[0].mxu0
        %v4588 = vadd.f32 %v4240, %v4587
        %4589 = vmatprep.mubr.bf16.mxu0 0
        %4590 = vmatmul.mubr.bf16.gmra.mrb[0].mxu0 %v4492
        %v4591 = vpop.f32.mrb[0].mxu0
        %v4592 = vadd.f32 %v4236, %v4591
        %v4593 = vpop.f32.mrb[0].mxu0
        %v4594 = vadd.f32 %v4240, %v4593
        %v4595 = vpop.f32.mrb[0].mxu0
        %v4596 = vadd.f32 %v4236, %v4595
        %v4597 = vpop.f32.mrb[0].mxu0
        %v4598 = vadd.f32 %v4240, %v4597
        %4599 = vmatprep.mubr.bf16.mxu0 0
        %4600 = vmatmul.mubr.bf16.gmra.mrb[0].mxu0 %v4495
        %v4601 = vpop.f32.mrb[0].mxu0
        %v4602 = vadd.f32 %v4236, %v4601
        %v4603 = vpop.f32.mrb[0].mxu0
        %v4604 = vadd.f32 %v4240, %v4603
        %v4605 = vpop.f32.mrb[0].mxu0
        %v4606 = vadd.f32 %v4236, %v4605
        %v4607 = vpop.f32.mrb[0].mxu0
        %v4608 = vadd.f32 %v4240, %v4607
        %4609 = vdwg.mxu0
        %4610 = vmatprep.subr.bf16.mxu0 %v4412
        %4611 = vmatpush1.bf16.msra.mxu0 %v4411
        %4612 = vmatprep.subr.bf16.mxu0 %v4428
        %4613 = vmatpush1.bf16.msra.mxu0 %v4427
        %4614 = vmatprep.subr.bf16.mxu0 0
        %4615 = vmatpush1.bf16.msra.mxu0 0
        %4616 = vmatprep.subr.bf16.mxu0 0
        %4617 = vmatpush1.bf16.msra.mxu0 0
        %4618 = vmatprep.subr.bf16.mxu0 0
        %4619 = vmatpush1.bf16.msra.mxu0 0
        %4620 = vmatprep.subr.bf16.mxu0 0
        %4621 = vmatpush1.bf16.msra.mxu0 0
        %4622 = vmatprep.subr.bf16.mxu0 0
        %4623 = vmatpush1.bf16.msra.mxu0 0
        %4624 = vmatprep.subr.bf16.mxu0 0
        %4625 = vmatpush1.bf16.msra.mxu0 0
        %4626 = vmatprep.subr.bf16.mxu0 0
        %4627 = vmatpush1.bf16.msra.mxu0 0
        %4628 = vmatprep.subr.bf16.mxu0 0
        %4629 = vmatpush1.bf16.msra.mxu0 0
        %4630 = vmatprep.subr.bf16.mxu0 0
        %4631 = vmatpush1.bf16.msra.mxu0 0
        %4632 = vmatprep.subr.bf16.mxu0 0
        %4633 = vmatpush1.bf16.msra.mxu0 0
        %4634 = vmatprep.subr.bf16.mxu0 0
        %4635 = vmatpush1.bf16.msra.mxu0 0
        %4636 = vmatprep.subr.bf16.mxu0 0
        %4637 = vmatpush1.bf16.msra.mxu0 0
        %4638 = vmatprep.subr.bf16.mxu0 0
        %4639 = vmatpush1.bf16.msra.mxu0 0
        %4640 = vmatprep.subr.bf16.mxu0 0
        %4641 = vmatpush1.bf16.msra.mxu0 0
        %4642 = vmatprep.mubr.bf16.mxu0 0
        %4643 = vmatmul.mubr.bf16.gmra.mrb[0].mxu0 %v4474
        %v4644 = vpop.f32.mrb[0].mxu0
        %v4645 = vadd.f32 %v4244, %v4644
        %v4646 = vpop.f32.mrb[0].mxu0
        %v4647 = vadd.f32 %v4248, %v4646
        %v4648 = vpop.f32.mrb[0].mxu0
        %v4649 = vadd.f32 %v4244, %v4648
        %v4650 = vpop.f32.mrb[0].mxu0
        %v4651 = vadd.f32 %v4248, %v4650
        %4652 = vmatprep.mubr.bf16.mxu0 0
        %4653 = vmatmul.mubr.bf16.gmra.mrb[0].mxu0 %v4477
        %v4654 = vpop.f32.mrb[0].mxu0
        %v4655 = vadd.f32 %v4244, %v4654
        %v4656 = vpop.f32.mrb[0].mxu0
        %v4657 = vadd.f32 %v4248, %v4656
        %v4658 = vpop.f32.mrb[0].mxu0
        %v4659 = vadd.f32 %v4244, %v4658
        %v4660 = vpop.f32.mrb[0].mxu0
        %v4661 = vadd.f32 %v4248, %v4660
        %4662 = vmatprep.mubr.bf16.mxu0 0
        %4663 = vmatmul.mubr.bf16.gmra.mrb[0].mxu0 %v4480
        %v4664 = vpop.f32.mrb[0].mxu0
        %v4665 = vadd.f32 %v4244, %v4664
        %v4666 = vpop.f32.mrb[0].mxu0
        %v4667 = vadd.f32 %v4248, %v4666
        %v4668 = vpop.f32.mrb[0].mxu0
        %v4669 = vadd.f32 %v4244, %v4668
        %v4670 = vpop.f32.mrb[0].mxu0
        %v4671 = vadd.f32 %v4248, %v4670
        %4672 = vmatprep.mubr.bf16.mxu0 0
        %4673 = vmatmul.mubr.bf16.gmra.mrb[0].mxu0 %v4483
        %v4674 = vpop.f32.mrb[0].mxu0
        %v4675 = vadd.f32 %v4244, %v4674
        %v4676 = vpop.f32.mrb[0].mxu0
        %v4677 = vadd.f32 %v4248, %v4676
        %v4678 = vpop.f32.mrb[0].mxu0
        %v4679 = vadd.f32 %v4244, %v4678
        %v4680 = vpop.f32.mrb[0].mxu0
        %v4681 = vadd.f32 %v4248, %v4680
        %4682 = vmatprep.mubr.bf16.mxu0 0
        %4683 = vmatmul.mubr.bf16.gmra.mrb[0].mxu0 %v4486
        %v4684 = vpop.f32.mrb[0].mxu0
        %v4685 = vadd.f32 %v4244, %v4684
        %v4686 = vpop.f32.mrb[0].mxu0
        %v4687 = vadd.f32 %v4248, %v4686
        %v4688 = vpop.f32.mrb[0].mxu0
        %v4689 = vadd.f32 %v4244, %v4688
        %v4690 = vpop.f32.mrb[0].mxu0
        %v4691 = vadd.f32 %v4248, %v4690
        %4692 = vmatprep.mubr.bf16.mxu0 0
        %4693 = vmatmul.mubr.bf16.gmra.mrb[0].mxu0 %v4489
        %v4694 = vpop.f32.mrb[0].mxu0
        %v4695 = vadd.f32 %v4244, %v4694
        %v4696 = vpop.f32.mrb[0].mxu0
        %v4697 = vadd.f32 %v4248, %v4696
        %v4698 = vpop.f32.mrb[0].mxu0
        %v4699 = vadd.f32 %v4244, %v4698
        %v4700 = vpop.f32.mrb[0].mxu0
        %v4701 = vadd.f32 %v4248, %v4700
        %4702 = vmatprep.mubr.bf16.mxu0 0
        %4703 = vmatmul.mubr.bf16.gmra.mrb[0].mxu0 %v4492
        %v4704 = vpop.f32.mrb[0].mxu0
        %v4705 = vadd.f32 %v4244, %v4704
        %v4706 = vpop.f32.mrb[0].mxu0
        %v4707 = vadd.f32 %v4248, %v4706
        %v4708 = vpop.f32.mrb[0].mxu0
        %v4709 = vadd.f32 %v4244, %v4708
        %v4710 = vpop.f32.mrb[0].mxu0
        %v4711 = vadd.f32 %v4248, %v4710
        %4712 = vmatprep.mubr.bf16.mxu0 0
        %4713 = vmatmul.mubr.bf16.gmra.mrb[0].mxu0 %v4495
        %v4714 = vpop.f32.mrb[0].mxu0
        %v4715 = vadd.f32 %v4244, %v4714
        %v4716 = vpop.f32.mrb[0].mxu0
        %v4717 = vadd.f32 %v4248, %v4716
        %v4718 = vpop.f32.mrb[0].mxu0
        %v4719 = vadd.f32 %v4244, %v4718
        %v4720 = vpop.f32.mrb[0].mxu0
        %v4721 = vadd.f32 %v4248, %v4720
        %4722 = vdwg.mxu0
        %4723 = vmatprep.subr.bf16.mxu0 %v4414
        %4724 = vmatpush1.bf16.msra.mxu0 %v4413
        %4725 = vmatprep.subr.bf16.mxu0 %v4430
        %4726 = vmatpush1.bf16.msra.mxu0 %v4429
        %4727 = vmatprep.subr.bf16.mxu0 0
        %4728 = vmatpush1.bf16.msra.mxu0 0
        %4729 = vmatprep.subr.bf16.mxu0 0
        %4730 = vmatpush1.bf16.msra.mxu0 0
        %4731 = vmatprep.subr.bf16.mxu0 0
        %4732 = vmatpush1.bf16.msra.mxu0 0
        %4733 = vmatprep.subr.bf16.mxu0 0
        %4734 = vmatpush1.bf16.msra.mxu0 0
        %4735 = vmatprep.subr.bf16.mxu0 0
        %4736 = vmatpush1.bf16.msra.mxu0 0
        %4737 = vmatprep.subr.bf16.mxu0 0
        %4738 = vmatpush1.bf16.msra.mxu0 0
        %4739 = vmatprep.subr.bf16.mxu0 0
        %4740 = vmatpush1.bf16.msra.mxu0 0
        %4741 = vmatprep.subr.bf16.mxu0 0
        %4742 = vmatpush1.bf16.msra.mxu0 0
        %4743 = vmatprep.subr.bf16.mxu0 0
        %4744 = vmatpush1.bf16.msra.mxu0 0
        %4745 = vmatprep.subr.bf16.mxu0 0
        %4746 = vmatpush1.bf16.msra.mxu0 0
        %4747 = vmatprep.subr.bf16.mxu0 0
        %4748 = vmatpush1.bf16.msra.mxu0 0
        %4749 = vmatprep.subr.bf16.mxu0 0
        %4750 = vmatpush1.bf16.msra.mxu0 0
        %4751 = vmatprep.subr.bf16.mxu0 0
        %4752 = vmatpush1.bf16.msra.mxu0 0
        %4753 = vmatprep.subr.bf16.mxu0 0
        %4754 = vmatpush1.bf16.msra.mxu0 0
        %4755 = vmatprep.mubr.bf16.mxu0 0
        %4756 = vmatmul.mubr.bf16.gmra.mrb[0].mxu0 %v4474
        %v4757 = vpop.f32.mrb[0].mxu0
        %v4758 = vadd.f32 %v4252, %v4757
        %v4759 = vpop.f32.mrb[0].mxu0
        %v4760 = vadd.f32 %v4256, %v4759
        %v4761 = vpop.f32.mrb[0].mxu0
        %v4762 = vadd.f32 %v4252, %v4761
        %v4763 = vpop.f32.mrb[0].mxu0
        %v4764 = vadd.f32 %v4256, %v4763
        %4765 = vmatprep.mubr.bf16.mxu0 0
        %4766 = vmatmul.mubr.bf16.gmra.mrb[0].mxu0 %v4477
        %v4767 = vpop.f32.mrb[0].mxu0
        %v4768 = vadd.f32 %v4252, %v4767
        %v4769 = vpop.f32.mrb[0].mxu0
        %v4770 = vadd.f32 %v4256, %v4769
        %v4771 = vpop.f32.mrb[0].mxu0
        %v4772 = vadd.f32 %v4252, %v4771
        %v4773 = vpop.f32.mrb[0].mxu0
        %v4774 = vadd.f32 %v4256, %v4773
        %4775 = vmatprep.mubr.bf16.mxu0 0
        %4776 = vmatmul.mubr.bf16.gmra.mrb[0].mxu0 %v4480
        %v4777 = vpop.f32.mrb[0].mxu0
        %v4778 = vadd.f32 %v4252, %v4777
        %v4779 = vpop.f32.mrb[0].mxu0
        %v4780 = vadd.f32 %v4256, %v4779
        %v4781 = vpop.f32.mrb[0].mxu0
        %v4782 = vadd.f32 %v4252, %v4781
        %v4783 = vpop.f32.mrb[0].mxu0
        %v4784 = vadd.f32 %v4256, %v4783
        %4785 = vmatprep.mubr.bf16.mxu0 0
        %4786 = vmatmul.mubr.bf16.gmra.mrb[0].mxu0 %v4483
        %v4787 = vpop.f32.mrb[0].mxu0
        %v4788 = vadd.f32 %v4252, %v4787
        %v4789 = vpop.f32.mrb[0].mxu0
        %v4790 = vadd.f32 %v4256, %v4789
        %v4791 = vpop.f32.mrb[0].mxu0
        %v4792 = vadd.f32 %v4252, %v4791
        %v4793 = vpop.f32.mrb[0].mxu0
        %v4794 = vadd.f32 %v4256, %v4793
        %4795 = vmatprep.mubr.bf16.mxu0 0
        %4796 = vmatmul.mubr.bf16.gmra.mrb[0].mxu0 %v4486
        %v4797 = vpop.f32.mrb[0].mxu0
        %v4798 = vadd.f32 %v4252, %v4797
        %v4799 = vpop.f32.mrb[0].mxu0
        %v4800 = vadd.f32 %v4256, %v4799
        %v4801 = vpop.f32.mrb[0].mxu0
        %v4802 = vadd.f32 %v4252, %v4801
        %v4803 = vpop.f32.mrb[0].mxu0
        %v4804 = vadd.f32 %v4256, %v4803
        %4805 = vmatprep.mubr.bf16.mxu0 0
        %4806 = vmatmul.mubr.bf16.gmra.mrb[0].mxu0 %v4489
        %v4807 = vpop.f32.mrb[0].mxu0
        %v4808 = vadd.f32 %v4252, %v4807
        %v4809 = vpop.f32.mrb[0].mxu0
        %v4810 = vadd.f32 %v4256, %v4809
        %v4811 = vpop.f32.mrb[0].mxu0
        %v4812 = vadd.f32 %v4252, %v4811
        %v4813 = vpop.f32.mrb[0].mxu0
        %v4814 = vadd.f32 %v4256, %v4813
        %4815 = vmatprep.mubr.bf16.mxu0 0
        %4816 = vmatmul.mubr.bf16.gmra.mrb[0].mxu0 %v4492
        %v4817 = vpop.f32.mrb[0].mxu0
        %v4818 = vadd.f32 %v4252, %v4817
        %v4819 = vpop.f32.mrb[0].mxu0
        %v4820 = vadd.f32 %v4256, %v4819
        %v4821 = vpop.f32.mrb[0].mxu0
        %v4822 = vadd.f32 %v4252, %v4821
        %v4823 = vpop.f32.mrb[0].mxu0
        %v4824 = vadd.f32 %v4256, %v4823
        %4825 = vmatprep.mubr.bf16.mxu0 0
        %4826 = vmatmul.mubr.bf16.gmra.mrb[0].mxu0 %v4495
        %v4827 = vpop.f32.mrb[0].mxu0
        %v4828 = vadd.f32 %v4252, %v4827
        %v4829 = vpop.f32.mrb[0].mxu0
        %v4830 = vadd.f32 %v4256, %v4829
        %v4831 = vpop.f32.mrb[0].mxu0
        %v4832 = vadd.f32 %v4252, %v4831
        %v4833 = vpop.f32.mrb[0].mxu0
        %v4834 = vadd.f32 %v4256, %v4833
        %4835 = vdwg.mxu0
        %4836 = vmatprep.subr.bf16.mxu0 %v4416
        %4837 = vmatpush1.bf16.msra.mxu0 %v4415
        %4838 = vmatprep.subr.bf16.mxu0 %v4432
        %4839 = vmatpush1.bf16.msra.mxu0 %v4431
        %4840 = vmatprep.subr.bf16.mxu0 0
        %4841 = vmatpush1.bf16.msra.mxu0 0
        %4842 = vmatprep.subr.bf16.mxu0 0
        %4843 = vmatpush1.bf16.msra.mxu0 0
        %4844 = vmatprep.subr.bf16.mxu0 0
        %4845 = vmatpush1.bf16.msra.mxu0 0
        %4846 = vmatprep.subr.bf16.mxu0 0
        %4847 = vmatpush1.bf16.msra.mxu0 0
        %4848 = vmatprep.subr.bf16.mxu0 0
        %4849 = vmatpush1.bf16.msra.mxu0 0
        %4850 = vmatprep.subr.bf16.mxu0 0
        %4851 = vmatpush1.bf16.msra.mxu0 0
        %4852 = vmatprep.subr.bf16.mxu0 0
        %4853 = vmatpush1.bf16.msra.mxu0 0
        %4854 = vmatprep.subr.bf16.mxu0 0
        %4855 = vmatpush1.bf16.msra.mxu0 0
        %4856 = vmatprep.subr.bf16.mxu0 0
        %4857 = vmatpush1.bf16.msra.mxu0 0
        %4858 = vmatprep.subr.bf16.mxu0 0
        %4859 = vmatpush1.bf16.msra.mxu0 0
        %4860 = vmatprep.subr.bf16.mxu0 0
        %4861 = vmatpush1.bf16.msra.mxu0 0
        %4862 = vmatprep.subr.bf16.mxu0 0
        %4863 = vmatpush1.bf16.msra.mxu0 0
        %4864 = vmatprep.subr.bf16.mxu0 0
        %4865 = vmatpush1.bf16.msra.mxu0 0
        %4866 = vmatprep.subr.bf16.mxu0 0
        %4867 = vmatpush1.bf16.msra.mxu0 0
        %4868 = vmatprep.mubr.bf16.mxu0 0
        %4869 = vmatmul.mubr.bf16.gmra.mrb[0].mxu0 %v4474
        %v4870 = vpop.f32.mrb[0].mxu0
        %v4871 = vadd.f32 %v4260, %v4870
        %v4872 = vpop.f32.mrb[0].mxu0
        %v4873 = vadd.f32 %v4264, %v4872
        %v4874 = vpop.f32.mrb[0].mxu0
        %v4875 = vadd.f32 %v4260, %v4874
        %v4876 = vpop.f32.mrb[0].mxu0
        %v4877 = vadd.f32 %v4264, %v4876
        %4878 = vmatprep.mubr.bf16.mxu0 0
        %4879 = vmatmul.mubr.bf16.gmra.mrb[0].mxu0 %v4477
        %v4880 = vpop.f32.mrb[0].mxu0
        %v4881 = vadd.f32 %v4260, %v4880
        %v4882 = vpop.f32.mrb[0].mxu0
        %v4883 = vadd.f32 %v4264, %v4882
        %v4884 = vpop.f32.mrb[0].mxu0
        %v4885 = vadd.f32 %v4260, %v4884
        %v4886 = vpop.f32.mrb[0].mxu0
        %v4887 = vadd.f32 %v4264, %v4886
        %4888 = vmatprep.mubr.bf16.mxu0 0
        %4889 = vmatmul.mubr.bf16.gmra.mrb[0].mxu0 %v4480
        %v4890 = vpop.f32.mrb[0].mxu0
        %v4891 = vadd.f32 %v4260, %v4890
        %v4892 = vpop.f32.mrb[0].mxu0
        %v4893 = vadd.f32 %v4264, %v4892
        %v4894 = vpop.f32.mrb[0].mxu0
        %v4895 = vadd.f32 %v4260, %v4894
        %v4896 = vpop.f32.mrb[0].mxu0
        %v4897 = vadd.f32 %v4264, %v4896
        %4898 = vmatprep.mubr.bf16.mxu0 0
        %4899 = vmatmul.mubr.bf16.gmra.mrb[0].mxu0 %v4483
        %v4900 = vpop.f32.mrb[0].mxu0
        %v4901 = vadd.f32 %v4260, %v4900
        %v4902 = vpop.f32.mrb[0].mxu0
        %v4903 = vadd.f32 %v4264, %v4902
        %v4904 = vpop.f32.mrb[0].mxu0
        %v4905 = vadd.f32 %v4260, %v4904
        %v4906 = vpop.f32.mrb[0].mxu0
        %v4907 = vadd.f32 %v4264, %v4906
        %4908 = vmatprep.mubr.bf16.mxu0 0
        %4909 = vmatmul.mubr.bf16.gmra.mrb[0].mxu0 %v4486
        %v4910 = vpop.f32.mrb[0].mxu0
        %v4911 = vadd.f32 %v4260, %v4910
        %v4912 = vpop.f32.mrb[0].mxu0
        %v4913 = vadd.f32 %v4264, %v4912
        %v4914 = vpop.f32.mrb[0].mxu0
        %v4915 = vadd.f32 %v4260, %v4914
        %v4916 = vpop.f32.mrb[0].mxu0
        %v4917 = vadd.f32 %v4264, %v4916
        %4918 = vmatprep.mubr.bf16.mxu0 0
        %4919 = vmatmul.mubr.bf16.gmra.mrb[0].mxu0 %v4489
        %v4920 = vpop.f32.mrb[0].mxu0
        %v4921 = vadd.f32 %v4260, %v4920
        %v4922 = vpop.f32.mrb[0].mxu0
        %v4923 = vadd.f32 %v4264, %v4922
        %v4924 = vpop.f32.mrb[0].mxu0
        %v4925 = vadd.f32 %v4260, %v4924
        %v4926 = vpop.f32.mrb[0].mxu0
        %v4927 = vadd.f32 %v4264, %v4926
        %4928 = vmatprep.mubr.bf16.mxu0 0
        %4929 = vmatmul.mubr.bf16.gmra.mrb[0].mxu0 %v4492
        %v4930 = vpop.f32.mrb[0].mxu0
        %v4931 = vadd.f32 %v4260, %v4930
        %v4932 = vpop.f32.mrb[0].mxu0
        %v4933 = vadd.f32 %v4264, %v4932
        %v4934 = vpop.f32.mrb[0].mxu0
        %v4935 = vadd.f32 %v4260, %v4934
        %v4936 = vpop.f32.mrb[0].mxu0
        %v4937 = vadd.f32 %v4264, %v4936
        %4938 = vmatprep.mubr.bf16.mxu0 0
        %4939 = vmatmul.mubr.bf16.gmra.mrb[0].mxu0 %v4495
        %v4940 = vpop.f32.mrb[0].mxu0
        %v4941 = vadd.f32 %v4260, %v4940
        %v4942 = vpop.f32.mrb[0].mxu0
        %v4943 = vadd.f32 %v4264, %v4942
        %v4944 = vpop.f32.mrb[0].mxu0
        %v4945 = vadd.f32 %v4260, %v4944
        %v4946 = vpop.f32.mrb[0].mxu0
        %v4947 = vadd.f32 %v4264, %v4946
        %4948 = vdwg.mxu0
        %4949 = vmatprep.subr.bf16.mxu0 %v4418
        %4950 = vmatpush1.bf16.msra.mxu0 %v4417
        %4951 = vmatprep.subr.bf16.mxu0 %v4434
        %4952 = vmatpush1.bf16.msra.mxu0 %v4433
        %4953 = vmatprep.subr.bf16.mxu0 0
        %4954 = vmatpush1.bf16.msra.mxu0 0
        %4955 = vmatprep.subr.bf16.mxu0 0
        %4956 = vmatpush1.bf16.msra.mxu0 0
        %4957 = vmatprep.subr.bf16.mxu0 0
        %4958 = vmatpush1.bf16.msra.mxu0 0
        %4959 = vmatprep.subr.bf16.mxu0 0
        %4960 = vmatpush1.bf16.msra.mxu0 0
        %4961 = vmatprep.subr.bf16.mxu0 0
        %4962 = vmatpush1.bf16.msra.mxu0 0
        %4963 = vmatprep.subr.bf16.mxu0 0
        %4964 = vmatpush1.bf16.msra.mxu0 0
        %4965 = vmatprep.subr.bf16.mxu0 0
        %4966 = vmatpush1.bf16.msra.mxu0 0
        %4967 = vmatprep.subr.bf16.mxu0 0
        %4968 = vmatpush1.bf16.msra.mxu0 0
        %4969 = vmatprep.subr.bf16.mxu0 0
        %4970 = vmatpush1.bf16.msra.mxu0 0
        %4971 = vmatprep.subr.bf16.mxu0 0
        %4972 = vmatpush1.bf16.msra.mxu0 0
        %4973 = vmatprep.subr.bf16.mxu0 0
        %4974 = vmatpush1.bf16.msra.mxu0 0
        %4975 = vmatprep.subr.bf16.mxu0 0
        %4976 = vmatpush1.bf16.msra.mxu0 0
        %4977 = vmatprep.subr.bf16.mxu0 0
        %4978 = vmatpush1.bf16.msra.mxu0 0
        %4979 = vmatprep.subr.bf16.mxu0 0
        %4980 = vmatpush1.bf16.msra.mxu0 0
        %4981 = vmatprep.mubr.bf16.mxu0 0
        %4982 = vmatmul.mubr.bf16.gmra.mrb[0].mxu0 %v4474
        %v4983 = vpop.f32.mrb[0].mxu0
        %v4984 = vadd.f32 %v4268, %v4983
        %v4985 = vpop.f32.mrb[0].mxu0
        %v4986 = vadd.f32 %v4272, %v4985
        %v4987 = vpop.f32.mrb[0].mxu0
        %v4988 = vadd.f32 %v4268, %v4987
        %v4989 = vpop.f32.mrb[0].mxu0
        %v4990 = vadd.f32 %v4272, %v4989
        %4991 = vmatprep.mubr.bf16.mxu0 0
        %4992 = vmatmul.mubr.bf16.gmra.mrb[0].mxu0 %v4477
        %v4993 = vpop.f32.mrb[0].mxu0
        %v4994 = vadd.f32 %v4268, %v4993
        %v4995 = vpop.f32.mrb[0].mxu0
        %v4996 = vadd.f32 %v4272, %v4995
        %v4997 = vpop.f32.mrb[0].mxu0
        %v4998 = vadd.f32 %v4268, %v4997
        %v4999 = vpop.f32.mrb[0].mxu0
        %v5000 = vadd.f32 %v4272, %v4999
        %5001 = vmatprep.mubr.bf16.mxu0 0
        %5002 = vmatmul.mubr.bf16.gmra.mrb[0].mxu0 %v4480
        %v5003 = vpop.f32.mrb[0].mxu0
        %v5004 = vadd.f32 %v4268, %v5003
        %v5005 = vpop.f32.mrb[0].mxu0
        %v5006 = vadd.f32 %v4272, %v5005
        %v5007 = vpop.f32.mrb[0].mxu0
        %v5008 = vadd.f32 %v4268, %v5007
        %v5009 = vpop.f32.mrb[0].mxu0
        %v5010 = vadd.f32 %v4272, %v5009
        %5011 = vmatprep.mubr.bf16.mxu0 0
        %5012 = vmatmul.mubr.bf16.gmra.mrb[0].mxu0 %v4483
        %v5013 = vpop.f32.mrb[0].mxu0
        %v5014 = vadd.f32 %v4268, %v5013
        %v5015 = vpop.f32.mrb[0].mxu0
        %v5016 = vadd.f32 %v4272, %v5015
        %v5017 = vpop.f32.mrb[0].mxu0
        %v5018 = vadd.f32 %v4268, %v5017
        %v5019 = vpop.f32.mrb[0].mxu0
        %v5020 = vadd.f32 %v4272, %v5019
        %5021 = vmatprep.mubr.bf16.mxu0 0
        %5022 = vmatmul.mubr.bf16.gmra.mrb[0].mxu0 %v4486
        %v5023 = vpop.f32.mrb[0].mxu0
        %v5024 = vadd.f32 %v4268, %v5023
        %v5025 = vpop.f32.mrb[0].mxu0
        %v5026 = vadd.f32 %v4272, %v5025
        %v5027 = vpop.f32.mrb[0].mxu0
        %v5028 = vadd.f32 %v4268, %v5027
        %v5029 = vpop.f32.mrb[0].mxu0
        %v5030 = vadd.f32 %v4272, %v5029
        %5031 = vmatprep.mubr.bf16.mxu0 0
        %5032 = vmatmul.mubr.bf16.gmra.mrb[0].mxu0 %v4489
        %v5033 = vpop.f32.mrb[0].mxu0
        %v5034 = vadd.f32 %v4268, %v5033
        %v5035 = vpop.f32.mrb[0].mxu0
        %v5036 = vadd.f32 %v4272, %v5035
        %v5037 = vpop.f32.mrb[0].mxu0
        %v5038 = vadd.f32 %v4268, %v5037
        %v5039 = vpop.f32.mrb[0].mxu0
        %v5040 = vadd.f32 %v4272, %v5039
        %5041 = vmatprep.mubr.bf16.mxu0 0
        %5042 = vmatmul.mubr.bf16.gmra.mrb[0].mxu0 %v4492
        %v5043 = vpop.f32.mrb[0].mxu0
        %v5044 = vadd.f32 %v4268, %v5043
        %v5045 = vpop.f32.mrb[0].mxu0
        %v5046 = vadd.f32 %v4272, %v5045
        %v5047 = vpop.f32.mrb[0].mxu0
        %v5048 = vadd.f32 %v4268, %v5047
        %v5049 = vpop.f32.mrb[0].mxu0
        %v5050 = vadd.f32 %v4272, %v5049
        %5051 = vmatprep.mubr.bf16.mxu0 0
        %5052 = vmatmul.mubr.bf16.gmra.mrb[0].mxu0 %v4495
        %v5053 = vpop.f32.mrb[0].mxu0
        %v5054 = vadd.f32 %v4268, %v5053
        %v5055 = vpop.f32.mrb[0].mxu0
        %v5056 = vadd.f32 %v4272, %v5055
        %v5057 = vpop.f32.mrb[0].mxu0
        %v5058 = vadd.f32 %v4268, %v5057
        %v5059 = vpop.f32.mrb[0].mxu0
        %v5060 = vadd.f32 %v4272, %v5059
        %5061 = vdwg.mxu0
        %5062 = vmatprep.subr.bf16.mxu0 %v4420
        %5063 = vmatpush1.bf16.msra.mxu0 %v4419
        %5064 = vmatprep.subr.bf16.mxu0 %v4436
        %5065 = vmatpush1.bf16.msra.mxu0 %v4435
        %5066 = vmatprep.subr.bf16.mxu0 0
        %5067 = vmatpush1.bf16.msra.mxu0 0
        %5068 = vmatprep.subr.bf16.mxu0 0
        %5069 = vmatpush1.bf16.msra.mxu0 0
        %5070 = vmatprep.subr.bf16.mxu0 0
        %5071 = vmatpush1.bf16.msra.mxu0 0
        %5072 = vmatprep.subr.bf16.mxu0 0
        %5073 = vmatpush1.bf16.msra.mxu0 0
        %5074 = vmatprep.subr.bf16.mxu0 0
        %5075 = vmatpush1.bf16.msra.mxu0 0
        %5076 = vmatprep.subr.bf16.mxu0 0
        %5077 = vmatpush1.bf16.msra.mxu0 0
        %5078 = vmatprep.subr.bf16.mxu0 0
        %5079 = vmatpush1.bf16.msra.mxu0 0
        %5080 = vmatprep.subr.bf16.mxu0 0
        %5081 = vmatpush1.bf16.msra.mxu0 0
        %5082 = vmatprep.subr.bf16.mxu0 0
        %5083 = vmatpush1.bf16.msra.mxu0 0
        %5084 = vmatprep.subr.bf16.mxu0 0
        %5085 = vmatpush1.bf16.msra.mxu0 0
        %5086 = vmatprep.subr.bf16.mxu0 0
        %5087 = vmatpush1.bf16.msra.mxu0 0
        %5088 = vmatprep.subr.bf16.mxu0 0
        %5089 = vmatpush1.bf16.msra.mxu0 0
        %5090 = vmatprep.subr.bf16.mxu0 0
        %5091 = vmatpush1.bf16.msra.mxu0 0
        %5092 = vmatprep.subr.bf16.mxu0 0
        %5093 = vmatpush1.bf16.msra.mxu0 0
        %5094 = vmatprep.mubr.bf16.mxu0 0
        %5095 = vmatmul.mubr.bf16.gmra.mrb[0].mxu0 %v4474
        %v5096 = vpop.f32.mrb[0].mxu0
        %v5097 = vadd.f32 %v4276, %v5096
        %v5098 = vpop.f32.mrb[0].mxu0
        %v5099 = vadd.f32 %v4280, %v5098
        %v5100 = vpop.f32.mrb[0].mxu0
        %v5101 = vadd.f32 %v4276, %v5100
        %v5102 = vpop.f32.mrb[0].mxu0
        %v5103 = vadd.f32 %v4280, %v5102
        %5104 = vmatprep.mubr.bf16.mxu0 0
        %5105 = vmatmul.mubr.bf16.gmra.mrb[0].mxu0 %v4477
        %v5106 = vpop.f32.mrb[0].mxu0
        %v5107 = vadd.f32 %v4276, %v5106
        %v5108 = vpop.f32.mrb[0].mxu0
        %v5109 = vadd.f32 %v4280, %v5108
        %v5110 = vpop.f32.mrb[0].mxu0
        %v5111 = vadd.f32 %v4276, %v5110
        %v5112 = vpop.f32.mrb[0].mxu0
        %v5113 = vadd.f32 %v4280, %v5112
        %5114 = vmatprep.mubr.bf16.mxu0 0
        %5115 = vmatmul.mubr.bf16.gmra.mrb[0].mxu0 %v4480
        %v5116 = vpop.f32.mrb[0].mxu0
        %v5117 = vadd.f32 %v4276, %v5116
        %v5118 = vpop.f32.mrb[0].mxu0
        %v5119 = vadd.f32 %v4280, %v5118
        %v5120 = vpop.f32.mrb[0].mxu0
        %v5121 = vadd.f32 %v4276, %v5120
        %v5122 = vpop.f32.mrb[0].mxu0
        %v5123 = vadd.f32 %v4280, %v5122
        %5124 = vmatprep.mubr.bf16.mxu0 0
        %5125 = vmatmul.mubr.bf16.gmra.mrb[0].mxu0 %v4483
        %v5126 = vpop.f32.mrb[0].mxu0
        %v5127 = vadd.f32 %v4276, %v5126
        %v5128 = vpop.f32.mrb[0].mxu0
        %v5129 = vadd.f32 %v4280, %v5128
        %v5130 = vpop.f32.mrb[0].mxu0
        %v5131 = vadd.f32 %v4276, %v5130
        %v5132 = vpop.f32.mrb[0].mxu0
        %v5133 = vadd.f32 %v4280, %v5132
        %5134 = vmatprep.mubr.bf16.mxu0 0
        %5135 = vmatmul.mubr.bf16.gmra.mrb[0].mxu0 %v4486
        %v5136 = vpop.f32.mrb[0].mxu0
        %v5137 = vadd.f32 %v4276, %v5136
        %v5138 = vpop.f32.mrb[0].mxu0
        %v5139 = vadd.f32 %v4280, %v5138
        %v5140 = vpop.f32.mrb[0].mxu0
        %v5141 = vadd.f32 %v4276, %v5140
        %v5142 = vpop.f32.mrb[0].mxu0
        %v5143 = vadd.f32 %v4280, %v5142
        %5144 = vmatprep.mubr.bf16.mxu0 0
        %5145 = vmatmul.mubr.bf16.gmra.mrb[0].mxu0 %v4489
        %v5146 = vpop.f32.mrb[0].mxu0
        %v5147 = vadd.f32 %v4276, %v5146
        %v5148 = vpop.f32.mrb[0].mxu0
        %v5149 = vadd.f32 %v4280, %v5148
        %v5150 = vpop.f32.mrb[0].mxu0
        %v5151 = vadd.f32 %v4276, %v5150
        %v5152 = vpop.f32.mrb[0].mxu0
        %v5153 = vadd.f32 %v4280, %v5152
        %5154 = vmatprep.mubr.bf16.mxu0 0
        %5155 = vmatmul.mubr.bf16.gmra.mrb[0].mxu0 %v4492
        %v5156 = vpop.f32.mrb[0].mxu0
        %v5157 = vadd.f32 %v4276, %v5156
        %v5158 = vpop.f32.mrb[0].mxu0
        %v5159 = vadd.f32 %v4280, %v5158
        %v5160 = vpop.f32.mrb[0].mxu0
        %v5161 = vadd.f32 %v4276, %v5160
        %v5162 = vpop.f32.mrb[0].mxu0
        %v5163 = vadd.f32 %v4280, %v5162
        %5164 = vmatprep.mubr.bf16.mxu0 0
        %5165 = vmatmul.mubr.bf16.gmra.mrb[0].mxu0 %v4495
        %v5166 = vpop.f32.mrb[0].mxu0
        %v5167 = vadd.f32 %v4276, %v5166
        %v5168 = vpop.f32.mrb[0].mxu0
        %v5169 = vadd.f32 %v4280, %v5168
        %v5170 = vpop.f32.mrb[0].mxu0
        %v5171 = vadd.f32 %v4276, %v5170
        %v5172 = vpop.f32.mrb[0].mxu0
        %v5173 = vadd.f32 %v4280, %v5172
        %5174 = vdwg.mxu0
        %5175 = vmatprep.subr.bf16.mxu0 %v4422
        %5176 = vmatpush1.bf16.msra.mxu0 %v4421
        %5177 = vmatprep.subr.bf16.mxu0 %v4438
        %5178 = vmatpush1.bf16.msra.mxu0 %v4437
        %5179 = vmatprep.subr.bf16.mxu0 0
        %5180 = vmatpush1.bf16.msra.mxu0 0
        %5181 = vmatprep.subr.bf16.mxu0 0
        %5182 = vmatpush1.bf16.msra.mxu0 0
        %5183 = vmatprep.subr.bf16.mxu0 0
        %5184 = vmatpush1.bf16.msra.mxu0 0
        %5185 = vmatprep.subr.bf16.mxu0 0
        %5186 = vmatpush1.bf16.msra.mxu0 0
        %5187 = vmatprep.subr.bf16.mxu0 0
        %5188 = vmatpush1.bf16.msra.mxu0 0
        %5189 = vmatprep.subr.bf16.mxu0 0
        %5190 = vmatpush1.bf16.msra.mxu0 0
        %5191 = vmatprep.subr.bf16.mxu0 0
        %5192 = vmatpush1.bf16.msra.mxu0 0
        %5193 = vmatprep.subr.bf16.mxu0 0
        %5194 = vmatpush1.bf16.msra.mxu0 0
        %5195 = vmatprep.subr.bf16.mxu0 0
        %5196 = vmatpush1.bf16.msra.mxu0 0
        %5197 = vmatprep.subr.bf16.mxu0 0
        %5198 = vmatpush1.bf16.msra.mxu0 0
        %5199 = vmatprep.subr.bf16.mxu0 0
        %5200 = vmatpush1.bf16.msra.mxu0 0
        %5201 = vmatprep.subr.bf16.mxu0 0
        %5202 = vmatpush1.bf16.msra.mxu0 0
        %5203 = vmatprep.subr.bf16.mxu0 0
        %5204 = vmatpush1.bf16.msra.mxu0 0
        %5205 = vmatprep.subr.bf16.mxu0 0
        %5206 = vmatpush1.bf16.msra.mxu0 0
        %5207 = vmatprep.mubr.bf16.mxu0 0
        %5208 = vmatmul.mubr.bf16.gmra.mrb[0].mxu0 %v4474
        %v5209 = vpop.f32.mrb[0].mxu0
        %v5210 = vadd.f32 %v4284, %v5209
        %v5211 = vpop.f32.mrb[0].mxu0
        %v5212 = vadd.f32 %v4288, %v5211
        %v5213 = vpop.f32.mrb[0].mxu0
        %v5214 = vadd.f32 %v4284, %v5213
        %v5215 = vpop.f32.mrb[0].mxu0
        %v5216 = vadd.f32 %v4288, %v5215
        %5217 = vmatprep.mubr.bf16.mxu0 0
        %5218 = vmatmul.mubr.bf16.gmra.mrb[0].mxu0 %v4477
        %v5219 = vpop.f32.mrb[0].mxu0
        %v5220 = vadd.f32 %v4284, %v5219
        %v5221 = vpop.f32.mrb[0].mxu0
        %v5222 = vadd.f32 %v4288, %v5221
        %v5223 = vpop.f32.mrb[0].mxu0
        %v5224 = vadd.f32 %v4284, %v5223
        %v5225 = vpop.f32.mrb[0].mxu0
        %v5226 = vadd.f32 %v4288, %v5225
        %5227 = vmatprep.mubr.bf16.mxu0 0
        %5228 = vmatmul.mubr.bf16.gmra.mrb[0].mxu0 %v4480
        %v5229 = vpop.f32.mrb[0].mxu0
        %v5230 = vadd.f32 %v4284, %v5229
        %v5231 = vpop.f32.mrb[0].mxu0
        %v5232 = vadd.f32 %v4288, %v5231
        %v5233 = vpop.f32.mrb[0].mxu0
        %v5234 = vadd.f32 %v4284, %v5233
        %v5235 = vpop.f32.mrb[0].mxu0
        %v5236 = vadd.f32 %v4288, %v5235
        %5237 = vmatprep.mubr.bf16.mxu0 0
        %5238 = vmatmul.mubr.bf16.gmra.mrb[0].mxu0 %v4483
        %v5239 = vpop.f32.mrb[0].mxu0
        %v5240 = vadd.f32 %v4284, %v5239
        %v5241 = vpop.f32.mrb[0].mxu0
        %v5242 = vadd.f32 %v4288, %v5241
        %v5243 = vpop.f32.mrb[0].mxu0
        %v5244 = vadd.f32 %v4284, %v5243
        %v5245 = vpop.f32.mrb[0].mxu0
        %v5246 = vadd.f32 %v4288, %v5245
        %5247 = vmatprep.mubr.bf16.mxu0 0
        %5248 = vmatmul.mubr.bf16.gmra.mrb[0].mxu0 %v4486
        %v5249 = vpop.f32.mrb[0].mxu0
        %v5250 = vadd.f32 %v4284, %v5249
        %v5251 = vpop.f32.mrb[0].mxu0
        %v5252 = vadd.f32 %v4288, %v5251
        %v5253 = vpop.f32.mrb[0].mxu0
        %v5254 = vadd.f32 %v4284, %v5253
        %v5255 = vpop.f32.mrb[0].mxu0
        %v5256 = vadd.f32 %v4288, %v5255
        %5257 = vmatprep.mubr.bf16.mxu0 0
        %5258 = vmatmul.mubr.bf16.gmra.mrb[0].mxu0 %v4489
        %v5259 = vpop.f32.mrb[0].mxu0
        %v5260 = vadd.f32 %v4284, %v5259
        %v5261 = vpop.f32.mrb[0].mxu0
        %v5262 = vadd.f32 %v4288, %v5261
        %v5263 = vpop.f32.mrb[0].mxu0
        %v5264 = vadd.f32 %v4284, %v5263
        %v5265 = vpop.f32.mrb[0].mxu0
        %v5266 = vadd.f32 %v4288, %v5265
        %5267 = vmatprep.mubr.bf16.mxu0 0
        %5268 = vmatmul.mubr.bf16.gmra.mrb[0].mxu0 %v4492
        %v5269 = vpop.f32.mrb[0].mxu0
        %v5270 = vadd.f32 %v4284, %v5269
        %v5271 = vpop.f32.mrb[0].mxu0
        %v5272 = vadd.f32 %v4288, %v5271
        %v5273 = vpop.f32.mrb[0].mxu0
        %v5274 = vadd.f32 %v4284, %v5273
        %v5275 = vpop.f32.mrb[0].mxu0
        %v5276 = vadd.f32 %v4288, %v5275
        %5277 = vmatprep.mubr.bf16.mxu0 0
        %5278 = vmatmul.mubr.bf16.gmra.mrb[0].mxu0 %v4495
        %v5279 = vpop.f32.mrb[0].mxu0
        %v5280 = vadd.f32 %v4284, %v5279
        %v5281 = vpop.f32.mrb[0].mxu0
        %v5282 = vadd.f32 %v4288, %v5281
        %v5283 = vpop.f32.mrb[0].mxu0
        %v5284 = vadd.f32 %v4284, %v5283
        %v5285 = vpop.f32.mrb[0].mxu0
        %v5286 = vadd.f32 %v4288, %v5285
        %5287 = vdwg.mxu0
        %5288 = vmatprep.subr.bf16.mxu0 %v4424
        %5289 = vmatpush1.bf16.msra.mxu0 %v4423
        %5290 = vmatprep.subr.bf16.mxu0 %v4440
        %5291 = vmatpush1.bf16.msra.mxu0 %v4439
        %5292 = vmatprep.subr.bf16.mxu0 0
        %5293 = vmatpush1.bf16.msra.mxu0 0
        %5294 = vmatprep.subr.bf16.mxu0 0
        %5295 = vmatpush1.bf16.msra.mxu0 0
        %5296 = vmatprep.subr.bf16.mxu0 0
        %5297 = vmatpush1.bf16.msra.mxu0 0
        %5298 = vmatprep.subr.bf16.mxu0 0
        %5299 = vmatpush1.bf16.msra.mxu0 0
        %5300 = vmatprep.subr.bf16.mxu0 0
        %5301 = vmatpush1.bf16.msra.mxu0 0
        %5302 = vmatprep.subr.bf16.mxu0 0
        %5303 = vmatpush1.bf16.msra.mxu0 0
        %5304 = vmatprep.subr.bf16.mxu0 0
        %5305 = vmatpush1.bf16.msra.mxu0 0
        %5306 = vmatprep.subr.bf16.mxu0 0
        %5307 = vmatpush1.bf16.msra.mxu0 0
        %5308 = vmatprep.subr.bf16.mxu0 0
        %5309 = vmatpush1.bf16.msra.mxu0 0
        %5310 = vmatprep.subr.bf16.mxu0 0
        %5311 = vmatpush1.bf16.msra.mxu0 0
        %5312 = vmatprep.subr.bf16.mxu0 0
        %5313 = vmatpush1.bf16.msra.mxu0 0
        %5314 = vmatprep.subr.bf16.mxu0 0
        %5315 = vmatpush1.bf16.msra.mxu0 0
        %5316 = vmatprep.subr.bf16.mxu0 0
        %5317 = vmatpush1.bf16.msra.mxu0 0
        %5318 = vmatprep.subr.bf16.mxu0 0
        %5319 = vmatpush1.bf16.msra.mxu0 0
        %5320 = vmatprep.mubr.bf16.mxu0 0
        %5321 = vmatmul.mubr.bf16.gmra.mrb[0].mxu0 %v4474
        %v5322 = vpop.f32.mrb[0].mxu0
        %v5323 = vadd.f32 %v4292, %v5322
        %v5324 = vpop.f32.mrb[0].mxu0
        %v5325 = vadd.f32 %v4296, %v5324
        %v5326 = vpop.f32.mrb[0].mxu0
        %v5327 = vadd.f32 %v4292, %v5326
        %v5328 = vpop.f32.mrb[0].mxu0
        %v5329 = vadd.f32 %v4296, %v5328
        %5330 = vmatprep.mubr.bf16.mxu0 0
        %5331 = vmatmul.mubr.bf16.gmra.mrb[0].mxu0 %v4477
        %v5332 = vpop.f32.mrb[0].mxu0
        %v5333 = vadd.f32 %v4292, %v5332
        %v5334 = vpop.f32.mrb[0].mxu0
        %v5335 = vadd.f32 %v4296, %v5334
        %v5336 = vpop.f32.mrb[0].mxu0
        %v5337 = vadd.f32 %v4292, %v5336
        %v5338 = vpop.f32.mrb[0].mxu0
        %v5339 = vadd.f32 %v4296, %v5338
        %5340 = vmatprep.mubr.bf16.mxu0 0
        %5341 = vmatmul.mubr.bf16.gmra.mrb[0].mxu0 %v4480
        %v5342 = vpop.f32.mrb[0].mxu0
        %v5343 = vadd.f32 %v4292, %v5342
        %v5344 = vpop.f32.mrb[0].mxu0
        %v5345 = vadd.f32 %v4296, %v5344
        %v5346 = vpop.f32.mrb[0].mxu0
        %v5347 = vadd.f32 %v4292, %v5346
        %v5348 = vpop.f32.mrb[0].mxu0
        %v5349 = vadd.f32 %v4296, %v5348
        %5350 = vmatprep.mubr.bf16.mxu0 0
        %5351 = vmatmul.mubr.bf16.gmra.mrb[0].mxu0 %v4483
        %v5352 = vpop.f32.mrb[0].mxu0
        %v5353 = vadd.f32 %v4292, %v5352
        %v5354 = vpop.f32.mrb[0].mxu0
        %v5355 = vadd.f32 %v4296, %v5354
        %v5356 = vpop.f32.mrb[0].mxu0
        %v5357 = vadd.f32 %v4292, %v5356
        %v5358 = vpop.f32.mrb[0].mxu0
        %v5359 = vadd.f32 %v4296, %v5358
        %5360 = vmatprep.mubr.bf16.mxu0 0
        %5361 = vmatmul.mubr.bf16.gmra.mrb[0].mxu0 %v4486
        %v5362 = vpop.f32.mrb[0].mxu0
        %v5363 = vadd.f32 %v4292, %v5362
        %v5364 = vpop.f32.mrb[0].mxu0
        %v5365 = vadd.f32 %v4296, %v5364
        %v5366 = vpop.f32.mrb[0].mxu0
        %v5367 = vadd.f32 %v4292, %v5366
        %v5368 = vpop.f32.mrb[0].mxu0
        %v5369 = vadd.f32 %v4296, %v5368
        %5370 = vmatprep.mubr.bf16.mxu0 0
        %5371 = vmatmul.mubr.bf16.gmra.mrb[0].mxu0 %v4489
        %v5372 = vpop.f32.mrb[0].mxu0
        %v5373 = vadd.f32 %v4292, %v5372
        %v5374 = vpop.f32.mrb[0].mxu0
        %v5375 = vadd.f32 %v4296, %v5374
        %v5376 = vpop.f32.mrb[0].mxu0
        %v5377 = vadd.f32 %v4292, %v5376
        %v5378 = vpop.f32.mrb[0].mxu0
        %v5379 = vadd.f32 %v4296, %v5378
        %5380 = vmatprep.mubr.bf16.mxu0 0
        %5381 = vmatmul.mubr.bf16.gmra.mrb[0].mxu0 %v4492
        %v5382 = vpop.f32.mrb[0].mxu0
        %v5383 = vadd.f32 %v4292, %v5382
        %v5384 = vpop.f32.mrb[0].mxu0
        %v5385 = vadd.f32 %v4296, %v5384
        %v5386 = vpop.f32.mrb[0].mxu0
        %v5387 = vadd.f32 %v4292, %v5386
        %v5388 = vpop.f32.mrb[0].mxu0
        %v5389 = vadd.f32 %v4296, %v5388
        %5390 = vmatprep.mubr.bf16.mxu0 0
        %5391 = vmatmul.mubr.bf16.gmra.mrb[0].mxu0 %v4495
        %v5392 = vpop.f32.mrb[0].mxu0
        %v5393 = vadd.f32 %v4292, %v5392
        %v5394 = vpop.f32.mrb[0].mxu0
        %v5395 = vadd.f32 %v4296, %v5394
        %v5396 = vpop.f32.mrb[0].mxu0
        %v5397 = vadd.f32 %v4292, %v5396
        %v5398 = vpop.f32.mrb[0].mxu0
        %v5399 = vadd.f32 %v4296, %v5398
        %5400 = vdwg.mxu0
        %v5401 = vmax.f32 %v4532, 0.0
        %v5402 = vmax.f32 %v4534, 0.0
        %v5403 = vmax.f32 %v4645, 0.0
        %v5404 = vmax.f32 %v4647, 0.0
        %v5405 = vmax.f32 %v4758, 0.0
        %v5406 = vmax.f32 %v4760, 0.0
        %v5407 = vmax.f32 %v4871, 0.0
        %v5408 = vmax.f32 %v4873, 0.0
        %v5409 = vmax.f32 %v4984, 0.0
        %v5410 = vmax.f32 %v4986, 0.0
        %v5411 = vmax.f32 %v5097, 0.0
        %v5412 = vmax.f32 %v5099, 0.0
        %v5413 = vmax.f32 %v5210, 0.0
        %v5414 = vmax.f32 %v5212, 0.0
        %v5415 = vmax.f32 %v5323, 0.0
        %v5416 = vmax.f32 %v5325, 0.0
        %v5417 = vmax.f32 %v4536, 0.0
        %v5418 = vmax.f32 %v4538, 0.0
        %v5419 = vmax.f32 %v4649, 0.0
        %v5420 = vmax.f32 %v4651, 0.0
        %v5421 = vmax.f32 %v4762, 0.0
        %v5422 = vmax.f32 %v4764, 0.0
        %v5423 = vmax.f32 %v4875, 0.0
        %v5424 = vmax.f32 %v4877, 0.0
        %v5425 = vmax.f32 %v4988, 0.0
        %v5426 = vmax.f32 %v4990, 0.0
        %v5427 = vmax.f32 %v5101, 0.0
        %v5428 = vmax.f32 %v5103, 0.0
        %v5429 = vmax.f32 %v5214, 0.0
        %v5430 = vmax.f32 %v5216, 0.0
        %v5431 = vmax.f32 %v5327, 0.0
        %v5432 = vmax.f32 %v5329, 0.0
        %v5433 = vmax.f32 %v4542, 0.0
        %v5434 = vmax.f32 %v4544, 0.0
        %v5435 = vmax.f32 %v4655, 0.0
        %v5436 = vmax.f32 %v4657, 0.0
        %v5437 = vmax.f32 %v4768, 0.0
        %v5438 = vmax.f32 %v4770, 0.0
        %v5439 = vmax.f32 %v4881, 0.0
        %v5440 = vmax.f32 %v4883, 0.0
        %v5441 = vmax.f32 %v4994, 0.0
        %v5442 = vmax.f32 %v4996, 0.0
        %v5443 = vmax.f32 %v5107, 0.0
        %v5444 = vmax.f32 %v5109, 0.0
        %v5445 = vmax.f32 %v5220, 0.0
        %v5446 = vmax.f32 %v5222, 0.0
        %v5447 = vmax.f32 %v5333, 0.0
        %v5448 = vmax.f32 %v5335, 0.0
        %v5449 = vmax.f32 %v4546, 0.0
        %v5450 = vmax.f32 %v4548, 0.0
        %v5451 = vmax.f32 %v4659, 0.0
        %v5452 = vmax.f32 %v4661, 0.0
        %v5453 = vmax.f32 %v4772, 0.0
        %v5454 = vmax.f32 %v4774, 0.0
        %v5455 = vmax.f32 %v4885, 0.0
        %v5456 = vmax.f32 %v4887, 0.0
        %v5457 = vmax.f32 %v4998, 0.0
        %v5458 = vmax.f32 %v5000, 0.0
        %v5459 = vmax.f32 %v5111, 0.0
        %v5460 = vmax.f32 %v5113, 0.0
        %v5461 = vmax.f32 %v5224, 0.0
        %v5462 = vmax.f32 %v5226, 0.0
        %v5463 = vmax.f32 %v5337, 0.0
        %v5464 = vmax.f32 %v5339, 0.0
        %v5465 = vmax.f32 %v4552, 0.0
        %v5466 = vmax.f32 %v4554, 0.0
        %v5467 = vmax.f32 %v4665, 0.0
        %v5468 = vmax.f32 %v4667, 0.0
        %v5469 = vmax.f32 %v4778, 0.0
        %v5470 = vmax.f32 %v4780, 0.0
        %v5471 = vmax.f32 %v4891, 0.0
        %v5472 = vmax.f32 %v4893, 0.0
        %v5473 = vmax.f32 %v5004, 0.0
        %v5474 = vmax.f32 %v5006, 0.0
        %v5475 = vmax.f32 %v5117, 0.0
        %v5476 = vmax.f32 %v5119, 0.0
        %v5477 = vmax.f32 %v5230, 0.0
        %v5478 = vmax.f32 %v5232, 0.0
        %v5479 = vmax.f32 %v5343, 0.0
        %v5480 = vmax.f32 %v5345, 0.0
        %v5481 = vmax.f32 %v4556, 0.0
        %v5482 = vmax.f32 %v4558, 0.0
        %v5483 = vmax.f32 %v4669, 0.0
        %v5484 = vmax.f32 %v4671, 0.0
        %v5485 = vmax.f32 %v4782, 0.0
        %v5486 = vmax.f32 %v4784, 0.0
        %v5487 = vmax.f32 %v4895, 0.0
        %v5488 = vmax.f32 %v4897, 0.0
        %v5489 = vmax.f32 %v5008, 0.0
        %v5490 = vmax.f32 %v5010, 0.0
        %v5491 = vmax.f32 %v5121, 0.0
        %v5492 = vmax.f32 %v5123, 0.0
        %v5493 = vmax.f32 %v5234, 0.0
        %v5494 = vmax.f32 %v5236, 0.0
        %v5495 = vmax.f32 %v5347, 0.0
        %v5496 = vmax.f32 %v5349, 0.0
        %v5497 = vmax.f32 %v4562, 0.0
        %v5498 = vmax.f32 %v4564, 0.0
        %v5499 = vmax.f32 %v4675, 0.0
        %v5500 = vmax.f32 %v4677, 0.0
        %v5501 = vmax.f32 %v4788, 0.0
        %v5502 = vmax.f32 %v4790, 0.0
        %v5503 = vmax.f32 %v4901, 0.0
        %v5504 = vmax.f32 %v4903, 0.0
        %v5505 = vmax.f32 %v5014, 0.0
        %v5506 = vmax.f32 %v5016, 0.0
        %v5507 = vmax.f32 %v5127, 0.0
        %v5508 = vmax.f32 %v5129, 0.0
        %v5509 = vmax.f32 %v5240, 0.0
        %v5510 = vmax.f32 %v5242, 0.0
        %v5511 = vmax.f32 %v5353, 0.0
        %v5512 = vmax.f32 %v5355, 0.0
        %v5513 = vmax.f32 %v4566, 0.0
        %v5514 = vmax.f32 %v4568, 0.0
        %v5515 = vmax.f32 %v4679, 0.0
        %v5516 = vmax.f32 %v4681, 0.0
        %v5517 = vmax.f32 %v4792, 0.0
        %v5518 = vmax.f32 %v4794, 0.0
        %v5519 = vmax.f32 %v4905, 0.0
        %v5520 = vmax.f32 %v4907, 0.0
        %v5521 = vmax.f32 %v5018, 0.0
        %v5522 = vmax.f32 %v5020, 0.0
        %v5523 = vmax.f32 %v5131, 0.0
        %v5524 = vmax.f32 %v5133, 0.0
        %v5525 = vmax.f32 %v5244, 0.0
        %v5526 = vmax.f32 %v5246, 0.0
        %v5527 = vmax.f32 %v5357, 0.0
        %v5528 = vmax.f32 %v5359, 0.0
        %v5529 = vmax.f32 %v4572, 0.0
        %v5530 = vmax.f32 %v4574, 0.0
        %v5531 = vmax.f32 %v4685, 0.0
        %v5532 = vmax.f32 %v4687, 0.0
        %v5533 = vmax.f32 %v4798, 0.0
        %v5534 = vmax.f32 %v4800, 0.0
        %v5535 = vmax.f32 %v4911, 0.0
        %v5536 = vmax.f32 %v4913, 0.0
        %v5537 = vmax.f32 %v5024, 0.0
        %v5538 = vmax.f32 %v5026, 0.0
        %v5539 = vmax.f32 %v5137, 0.0
        %v5540 = vmax.f32 %v5139, 0.0
        %v5541 = vmax.f32 %v5250, 0.0
        %v5542 = vmax.f32 %v5252, 0.0
        %v5543 = vmax.f32 %v5363, 0.0
        %v5544 = vmax.f32 %v5365, 0.0
        %v5545 = vmax.f32 %v4576, 0.0
        %v5546 = vmax.f32 %v4578, 0.0
        %v5547 = vmax.f32 %v4689, 0.0
        %v5548 = vmax.f32 %v4691, 0.0
        %v5549 = vmax.f32 %v4802, 0.0
        %v5550 = vmax.f32 %v4804, 0.0
        %v5551 = vmax.f32 %v4915, 0.0
        %v5552 = vmax.f32 %v4917, 0.0
        %v5553 = vmax.f32 %v5028, 0.0
        %v5554 = vmax.f32 %v5030, 0.0
        %v5555 = vmax.f32 %v5141, 0.0
        %v5556 = vmax.f32 %v5143, 0.0
        %v5557 = vmax.f32 %v5254, 0.0
        %v5558 = vmax.f32 %v5256, 0.0
        %v5559 = vmax.f32 %v5367, 0.0
        %v5560 = vmax.f32 %v5369, 0.0
        %v5561 = vmax.f32 %v4582, 0.0
        %v5562 = vmax.f32 %v4584, 0.0
        %v5563 = vmax.f32 %v4695, 0.0
        %v5564 = vmax.f32 %v4697, 0.0
        %v5565 = vmax.f32 %v4808, 0.0
        %v5566 = vmax.f32 %v4810, 0.0
        %v5567 = vmax.f32 %v4921, 0.0
        %v5568 = vmax.f32 %v4923, 0.0
        %v5569 = vmax.f32 %v5034, 0.0
        %v5570 = vmax.f32 %v5036, 0.0
        %v5571 = vmax.f32 %v5147, 0.0
        %v5572 = vmax.f32 %v5149, 0.0
        %v5573 = vmax.f32 %v5260, 0.0
        %v5574 = vmax.f32 %v5262, 0.0
        %v5575 = vmax.f32 %v5373, 0.0
        %v5576 = vmax.f32 %v5375, 0.0
        %v5577 = vmax.f32 %v4586, 0.0
        %v5578 = vmax.f32 %v4588, 0.0
        %v5579 = vmax.f32 %v4699, 0.0
        %v5580 = vmax.f32 %v4701, 0.0
        %v5581 = vmax.f32 %v4812, 0.0
        %v5582 = vmax.f32 %v4814, 0.0
        %v5583 = vmax.f32 %v4925, 0.0
        %v5584 = vmax.f32 %v4927, 0.0
        %v5585 = vmax.f32 %v5038, 0.0
        %v5586 = vmax.f32 %v5040, 0.0
        %v5587 = vmax.f32 %v5151, 0.0
        %v5588 = vmax.f32 %v5153, 0.0
        %v5589 = vmax.f32 %v5264, 0.0
        %v5590 = vmax.f32 %v5266, 0.0
        %v5591 = vmax.f32 %v5377, 0.0
        %v5592 = vmax.f32 %v5379, 0.0
        %v5593 = vmax.f32 %v4592, 0.0
        %v5594 = vmax.f32 %v4594, 0.0
        %v5595 = vmax.f32 %v4705, 0.0
        %v5596 = vmax.f32 %v4707, 0.0
        %v5597 = vmax.f32 %v4818, 0.0
        %v5598 = vmax.f32 %v4820, 0.0
        %v5599 = vmax.f32 %v4931, 0.0
        %v5600 = vmax.f32 %v4933, 0.0
        %v5601 = vmax.f32 %v5044, 0.0
        %v5602 = vmax.f32 %v5046, 0.0
        %v5603 = vmax.f32 %v5157, 0.0
        %v5604 = vmax.f32 %v5159, 0.0
        %v5605 = vmax.f32 %v5270, 0.0
        %v5606 = vmax.f32 %v5272, 0.0
        %v5607 = vmax.f32 %v5383, 0.0
        %v5608 = vmax.f32 %v5385, 0.0
        %v5609 = vmax.f32 %v4596, 0.0
        %v5610 = vmax.f32 %v4598, 0.0
        %v5611 = vmax.f32 %v4709, 0.0
        %v5612 = vmax.f32 %v4711, 0.0
        %v5613 = vmax.f32 %v4822, 0.0
        %v5614 = vmax.f32 %v4824, 0.0
        %v5615 = vmax.f32 %v4935, 0.0
        %v5616 = vmax.f32 %v4937, 0.0
        %v5617 = vmax.f32 %v5048, 0.0
        %v5618 = vmax.f32 %v5050, 0.0
        %v5619 = vmax.f32 %v5161, 0.0
        %v5620 = vmax.f32 %v5163, 0.0
        %v5621 = vmax.f32 %v5274, 0.0
        %v5622 = vmax.f32 %v5276, 0.0
        %v5623 = vmax.f32 %v5387, 0.0
        %v5624 = vmax.f32 %v5389, 0.0
        %v5625 = vmax.f32 %v4602, 0.0
        %v5626 = vmax.f32 %v4604, 0.0
        %v5627 = vmax.f32 %v4715, 0.0
        %v5628 = vmax.f32 %v4717, 0.0
        %v5629 = vmax.f32 %v4828, 0.0
        %v5630 = vmax.f32 %v4830, 0.0
        %v5631 = vmax.f32 %v4941, 0.0
        %v5632 = vmax.f32 %v4943, 0.0
        %v5633 = vmax.f32 %v5054, 0.0
        %v5634 = vmax.f32 %v5056, 0.0
        %v5635 = vmax.f32 %v5167, 0.0
        %v5636 = vmax.f32 %v5169, 0.0
        %v5637 = vmax.f32 %v5280, 0.0
        %v5638 = vmax.f32 %v5282, 0.0
        %v5639 = vmax.f32 %v5393, 0.0
        %v5640 = vmax.f32 %v5395, 0.0
        %v5641 = vmax.f32 %v4606, 0.0
        %v5642 = vmax.f32 %v4608, 0.0
        %v5643 = vmax.f32 %v4719, 0.0
        %v5644 = vmax.f32 %v4721, 0.0
        %v5645 = vmax.f32 %v4832, 0.0
        %v5646 = vmax.f32 %v4834, 0.0
        %v5647 = vmax.f32 %v4945, 0.0
        %v5648 = vmax.f32 %v4947, 0.0
        %v5649 = vmax.f32 %v5058, 0.0
        %v5650 = vmax.f32 %v5060, 0.0
        %v5651 = vmax.f32 %v5171, 0.0
        %v5652 = vmax.f32 %v5173, 0.0
        %v5653 = vmax.f32 %v5284, 0.0
        %v5654 = vmax.f32 %v5286, 0.0
        %v5655 = vmax.f32 %v5397, 0.0
        %v5656 = vmax.f32 %v5399, 0.0
        %v5657 = vpack.c.bf16 %v5417, %v5401
        %v5658 = vpack.c.bf16 %v5418, %v5402
        %v5659 = vpack.c.bf16 %v5419, %v5403
        %v5660 = vpack.c.bf16 %v5420, %v5404
        %v5661 = vpack.c.bf16 %v5421, %v5405
        %v5662 = vpack.c.bf16 %v5422, %v5406
        %v5663 = vpack.c.bf16 %v5423, %v5407
        %v5664 = vpack.c.bf16 %v5424, %v5408
        %v5665 = vpack.c.bf16 %v5425, %v5409
        %v5666 = vpack.c.bf16 %v5426, %v5410
        %v5667 = vpack.c.bf16 %v5427, %v5411
        %v5668 = vpack.c.bf16 %v5428, %v5412
        %v5669 = vpack.c.bf16 %v5429, %v5413
        %v5670 = vpack.c.bf16 %v5430, %v5414
        %v5671 = vpack.c.bf16 %v5431, %v5415
        %v5672 = vpack.c.bf16 %v5432, %v5416
        %v5673 = vpack.c.bf16 %v5449, %v5433
        %v5674 = vpack.c.bf16 %v5450, %v5434
        %v5675 = vpack.c.bf16 %v5451, %v5435
        %v5676 = vpack.c.bf16 %v5452, %v5436
        %v5677 = vpack.c.bf16 %v5453, %v5437
        %v5678 = vpack.c.bf16 %v5454, %v5438
        %v5679 = vpack.c.bf16 %v5455, %v5439
        %v5680 = vpack.c.bf16 %v5456, %v5440
        %v5681 = vpack.c.bf16 %v5457, %v5441
        %v5682 = vpack.c.bf16 %v5458, %v5442
        %v5683 = vpack.c.bf16 %v5459, %v5443
        %v5684 = vpack.c.bf16 %v5460, %v5444
        %v5685 = vpack.c.bf16 %v5461, %v5445
        %v5686 = vpack.c.bf16 %v5462, %v5446
        %v5687 = vpack.c.bf16 %v5463, %v5447
        %v5688 = vpack.c.bf16 %v5464, %v5448
        %v5689 = vpack.c.bf16 %v5481, %v5465
        %v5690 = vpack.c.bf16 %v5482, %v5466
        %v5691 = vpack.c.bf16 %v5483, %v5467
        %v5692 = vpack.c.bf16 %v5484, %v5468
        %v5693 = vpack.c.bf16 %v5485, %v5469
        %v5694 = vpack.c.bf16 %v5486, %v5470
        %v5695 = vpack.c.bf16 %v5487, %v5471
        %v5696 = vpack.c.bf16 %v5488, %v5472
        %v5697 = vpack.c.bf16 %v5489, %v5473
        %v5698 = vpack.c.bf16 %v5490, %v5474
        %v5699 = vpack.c.bf16 %v5491, %v5475
        %v5700 = vpack.c.bf16 %v5492, %v5476
        %v5701 = vpack.c.bf16 %v5493, %v5477
        %v5702 = vpack.c.bf16 %v5494, %v5478
        %v5703 = vpack.c.bf16 %v5495, %v5479
        %v5704 = vpack.c.bf16 %v5496, %v5480
        %v5705 = vpack.c.bf16 %v5513, %v5497
        %v5706 = vpack.c.bf16 %v5514, %v5498
        %v5707 = vpack.c.bf16 %v5515, %v5499
        %v5708 = vpack.c.bf16 %v5516, %v5500
        %v5709 = vpack.c.bf16 %v5517, %v5501
        %v5710 = vpack.c.bf16 %v5518, %v5502
        %v5711 = vpack.c.bf16 %v5519, %v5503
        %v5712 = vpack.c.bf16 %v5520, %v5504
        %v5713 = vpack.c.bf16 %v5521, %v5505
        %v5714 = vpack.c.bf16 %v5522, %v5506
        %v5715 = vpack.c.bf16 %v5523, %v5507
        %v5716 = vpack.c.bf16 %v5524, %v5508
        %v5717 = vpack.c.bf16 %v5525, %v5509
        %v5718 = vpack.c.bf16 %v5526, %v5510
        %v5719 = vpack.c.bf16 %v5527, %v5511
        %v5720 = vpack.c.bf16 %v5528, %v5512
        %v5721 = vpack.c.bf16 %v5545, %v5529
        %v5722 = vpack.c.bf16 %v5546, %v5530
        %v5723 = vpack.c.bf16 %v5547, %v5531
        %v5724 = vpack.c.bf16 %v5548, %v5532
        %v5725 = vpack.c.bf16 %v5549, %v5533
        %v5726 = vpack.c.bf16 %v5550, %v5534
        %v5727 = vpack.c.bf16 %v5551, %v5535
        %v5728 = vpack.c.bf16 %v5552, %v5536
        %v5729 = vpack.c.bf16 %v5553, %v5537
        %v5730 = vpack.c.bf16 %v5554, %v5538
        %v5731 = vpack.c.bf16 %v5555, %v5539
        %v5732 = vpack.c.bf16 %v5556, %v5540
        %v5733 = vpack.c.bf16 %v5557, %v5541
        %v5734 = vpack.c.bf16 %v5558, %v5542
        %v5735 = vpack.c.bf16 %v5559, %v5543
        %v5736 = vpack.c.bf16 %v5560, %v5544
        %v5737 = vpack.c.bf16 %v5577, %v5561
        %v5738 = vpack.c.bf16 %v5578, %v5562
        %v5739 = vpack.c.bf16 %v5579, %v5563
        %v5740 = vpack.c.bf16 %v5580, %v5564
        %v5741 = vpack.c.bf16 %v5581, %v5565
        %v5742 = vpack.c.bf16 %v5582, %v5566
        %v5743 = vpack.c.bf16 %v5583, %v5567
        %v5744 = vpack.c.bf16 %v5584, %v5568
        %v5745 = vpack.c.bf16 %v5585, %v5569
        %v5746 = vpack.c.bf16 %v5586, %v5570
        %v5747 = vpack.c.bf16 %v5587, %v5571
        %v5748 = vpack.c.bf16 %v5588, %v5572
        %v5749 = vpack.c.bf16 %v5589, %v5573
        %v5750 = vpack.c.bf16 %v5590, %v5574
        %v5751 = vpack.c.bf16 %v5591, %v5575
        %v5752 = vpack.c.bf16 %v5592, %v5576
        %v5753 = vpack.c.bf16 %v5609, %v5593
        %v5754 = vpack.c.bf16 %v5610, %v5594
        %v5755 = vpack.c.bf16 %v5611, %v5595
        %v5756 = vpack.c.bf16 %v5612, %v5596
        %v5757 = vpack.c.bf16 %v5613, %v5597
        %v5758 = vpack.c.bf16 %v5614, %v5598
        %v5759 = vpack.c.bf16 %v5615, %v5599
        %v5760 = vpack.c.bf16 %v5616, %v5600
        %v5761 = vpack.c.bf16 %v5617, %v5601
        %v5762 = vpack.c.bf16 %v5618, %v5602
        %v5763 = vpack.c.bf16 %v5619, %v5603
        %v5764 = vpack.c.bf16 %v5620, %v5604
        %v5765 = vpack.c.bf16 %v5621, %v5605
        %v5766 = vpack.c.bf16 %v5622, %v5606
        %v5767 = vpack.c.bf16 %v5623, %v5607
        %v5768 = vpack.c.bf16 %v5624, %v5608
        %v5769 = vpack.c.bf16 %v5641, %v5625
        %v5770 = vpack.c.bf16 %v5642, %v5626
        %v5771 = vpack.c.bf16 %v5643, %v5627
        %v5772 = vpack.c.bf16 %v5644, %v5628
        %v5773 = vpack.c.bf16 %v5645, %v5629
        %v5774 = vpack.c.bf16 %v5646, %v5630
        %v5775 = vpack.c.bf16 %v5647, %v5631
        %v5776 = vpack.c.bf16 %v5648, %v5632
        %v5777 = vpack.c.bf16 %v5649, %v5633
        %v5778 = vpack.c.bf16 %v5650, %v5634
        %v5779 = vpack.c.bf16 %v5651, %v5635
        %v5780 = vpack.c.bf16 %v5652, %v5636
        %v5781 = vpack.c.bf16 %v5653, %v5637
        %v5782 = vpack.c.bf16 %v5654, %v5638
        %v5783 = vpack.c.bf16 %v5655, %v5639
        %v5784 = vpack.c.bf16 %v5656, %v5640
        %v5785 = vld [vmem:[%s464] sm:$0xf]
        %v5786 = vld [vmem:[%s464 + $0x4] sm:$0xf]
        %v5787 = vld [vmem:[%s464 + $0x8] sm:$0xf]
        %v5788 = vld [vmem:[%s464 + $0xc] sm:$0xf]
        %v5789 = vld [vmem:[%s464 + $0x10] sm:$0xf]
        %v5790 = vld [vmem:[%s464 + $0x14] sm:$0xf]
        %v5791 = vld [vmem:[%s464 + $0x18] sm:$0xf]
        %v5792 = vld [vmem:[%s464 + $0x1c] sm:$0xf]
        %v5793 = vld [vmem:[%s464 + $0x20] sm:$0xf]
        %v5794 = vld [vmem:[%s464 + $0x24] sm:$0xf]
        %v5795 = vld [vmem:[%s464 + $0x28] sm:$0xf]
        %v5796 = vld [vmem:[%s464 + $0x2c] sm:$0xf]
        %v5797 = vld [vmem:[%s464 + $0x30] sm:$0xf]
        %v5798 = vld [vmem:[%s464 + $0x34] sm:$0xf]
        %v5799 = vld [vmem:[%s464 + $0x38] sm:$0xf]
        %v5800 = vld [vmem:[%s464 + $0x3c] sm:$0xf]
        %v5801 = vld [vmem:[%s464 + $0x40] sm:$0xf]
        %v5802 = vld [vmem:[%s464 + $0x44] sm:$0xf]
        %v5803 = vld [vmem:[%s464 + $0x48] sm:$0xf]
        %v5804 = vld [vmem:[%s464 + $0x4c] sm:$0xf]
        %v5805 = vld [vmem:[%s464 + $0x50] sm:$0xf]
        %v5806 = vld [vmem:[%s464 + $0x54] sm:$0xf]
        %v5807 = vld [vmem:[%s464 + $0x58] sm:$0xf]
        %v5808 = vld [vmem:[%s464 + $0x5c] sm:$0xf]
        %v5809 = vld [vmem:[%s464 + $0x60] sm:$0xf]
        %v5810 = vld [vmem:[%s464 + $0x64] sm:$0xf]
        %v5811 = vld [vmem:[%s464 + $0x68] sm:$0xf]
        %v5812 = vld [vmem:[%s464 + $0x6c] sm:$0xf]
        %v5813 = vld [vmem:[%s464 + $0x70] sm:$0xf]
        %v5814 = vld [vmem:[%s464 + $0x74] sm:$0xf]
        %v5815 = vld [vmem:[%s464 + $0x78] sm:$0xf]
        %v5816 = vld [vmem:[%s464 + $0x7c] sm:$0xf]
        %v5817 = vld [vmem:[%s464 + $0x80] sm:$0xf]
        %v5818 = vld [vmem:[%s464 + $0x84] sm:$0xf]
        %v5819 = vld [vmem:[%s464 + $0x88] sm:$0xf]
        %v5820 = vld [vmem:[%s464 + $0x8c] sm:$0xf]
        %v5821 = vld [vmem:[%s464 + $0x90] sm:$0xf]
        %v5822 = vld [vmem:[%s464 + $0x94] sm:$0xf]
        %v5823 = vld [vmem:[%s464 + $0x98] sm:$0xf]
        %v5824 = vld [vmem:[%s464 + $0x9c] sm:$0xf]
        %v5825 = vld [vmem:[%s464 + $0xa0] sm:$0xf]
        %v5826 = vld [vmem:[%s464 + $0xa4] sm:$0xf]
        %v5827 = vld [vmem:[%s464 + $0xa8] sm:$0xf]
        %v5828 = vld [vmem:[%s464 + $0xac] sm:$0xf]
        %v5829 = vld [vmem:[%s464 + $0xb0] sm:$0xf]
        %v5830 = vld [vmem:[%s464 + $0xb4] sm:$0xf]
        %v5831 = vld [vmem:[%s464 + $0xb8] sm:$0xf]
        %v5832 = vld [vmem:[%s464 + $0xbc] sm:$0xf]
        %v5833 = vld [vmem:[%s464 + $0xc0] sm:$0xf]
        %v5834 = vld [vmem:[%s464 + $0xc4] sm:$0xf]
        %v5835 = vld [vmem:[%s464 + $0xc8] sm:$0xf]
        %v5836 = vld [vmem:[%s464 + $0xcc] sm:$0xf]
        %v5837 = vld [vmem:[%s464 + $0xd0] sm:$0xf]
        %v5838 = vld [vmem:[%s464 + $0xd4] sm:$0xf]
        %v5839 = vld [vmem:[%s464 + $0xd8] sm:$0xf]
        %v5840 = vld [vmem:[%s464 + $0xdc] sm:$0xf]
        %v5841 = vld [vmem:[%s464 + $0xe0] sm:$0xf]
        %v5842 = vld [vmem:[%s464 + $0xe4] sm:$0xf]
        %v5843 = vld [vmem:[%s464 + $0xe8] sm:$0xf]
        %v5844 = vld [vmem:[%s464 + $0xec] sm:$0xf]
        %v5845 = vld [vmem:[%s464 + $0xf0] sm:$0xf]
        %v5846 = vld [vmem:[%s464 + $0xf4] sm:$0xf]
        %v5847 = vld [vmem:[%s464 + $0xf8] sm:$0xf]
        %v5848 = vld [vmem:[%s464 + $0xfc] sm:$0xf]
        %v5849 = vld [vmem:[%s464 + $0x100] sm:$0xf]
        %v5850 = vld [vmem:[%s464 + $0x104] sm:$0xf]
        %v5851 = vld [vmem:[%s464 + $0x108] sm:$0xf]
        %v5852 = vld [vmem:[%s464 + $0x10c] sm:$0xf]
        %v5853 = vld [vmem:[%s464 + $0x110] sm:$0xf]
        %v5854 = vld [vmem:[%s464 + $0x114] sm:$0xf]
        %v5855 = vld [vmem:[%s464 + $0x118] sm:$0xf]
        %v5856 = vld [vmem:[%s464 + $0x11c] sm:$0xf]
        %v5857 = vld [vmem:[%s464 + $0x120] sm:$0xf]
        %v5858 = vld [vmem:[%s464 + $0x124] sm:$0xf]
        %v5859 = vld [vmem:[%s464 + $0x128] sm:$0xf]
        %v5860 = vld [vmem:[%s464 + $0x12c] sm:$0xf]
        %v5861 = vld [vmem:[%s464 + $0x130] sm:$0xf]
        %v5862 = vld [vmem:[%s464 + $0x134] sm:$0xf]
        %v5863 = vld [vmem:[%s464 + $0x138] sm:$0xf]
        %v5864 = vld [vmem:[%s464 + $0x13c] sm:$0xf]
        %v5865 = vld [vmem:[%s464 + $0x140] sm:$0xf]
        %v5866 = vld [vmem:[%s464 + $0x144] sm:$0xf]
        %v5867 = vld [vmem:[%s464 + $0x148] sm:$0xf]
        %v5868 = vld [vmem:[%s464 + $0x14c] sm:$0xf]
        %v5869 = vld [vmem:[%s464 + $0x150] sm:$0xf]
        %v5870 = vld [vmem:[%s464 + $0x154] sm:$0xf]
        %v5871 = vld [vmem:[%s464 + $0x158] sm:$0xf]
        %v5872 = vld [vmem:[%s464 + $0x15c] sm:$0xf]
        %v5873 = vld [vmem:[%s464 + $0x160] sm:$0xf]
        %v5874 = vld [vmem:[%s464 + $0x164] sm:$0xf]
        %v5875 = vld [vmem:[%s464 + $0x168] sm:$0xf]
        %v5876 = vld [vmem:[%s464 + $0x16c] sm:$0xf]
        %v5877 = vld [vmem:[%s464 + $0x170] sm:$0xf]
        %v5878 = vld [vmem:[%s464 + $0x174] sm:$0xf]
        %v5879 = vld [vmem:[%s464 + $0x178] sm:$0xf]
        %v5880 = vld [vmem:[%s464 + $0x17c] sm:$0xf]
        %v5881 = vld [vmem:[%s464 + $0x180] sm:$0xf]
        %v5882 = vld [vmem:[%s464 + $0x184] sm:$0xf]
        %v5883 = vld [vmem:[%s464 + $0x188] sm:$0xf]
        %v5884 = vld [vmem:[%s464 + $0x18c] sm:$0xf]
        %v5885 = vld [vmem:[%s464 + $0x190] sm:$0xf]
        %v5886 = vld [vmem:[%s464 + $0x194] sm:$0xf]
        %v5887 = vld [vmem:[%s464 + $0x198] sm:$0xf]
        %v5888 = vld [vmem:[%s464 + $0x19c] sm:$0xf]
        %v5889 = vld [vmem:[%s464 + $0x1a0] sm:$0xf]
        %v5890 = vld [vmem:[%s464 + $0x1a4] sm:$0xf]
        %v5891 = vld [vmem:[%s464 + $0x1a8] sm:$0xf]
        %v5892 = vld [vmem:[%s464 + $0x1ac] sm:$0xf]
        %v5893 = vld [vmem:[%s464 + $0x1b0] sm:$0xf]
        %v5894 = vld [vmem:[%s464 + $0x1b4] sm:$0xf]
        %v5895 = vld [vmem:[%s464 + $0x1b8] sm:$0xf]
        %v5896 = vld [vmem:[%s464 + $0x1bc] sm:$0xf]
        %v5897 = vld [vmem:[%s464 + $0x1c0] sm:$0xf]
        %v5898 = vld [vmem:[%s464 + $0x1c4] sm:$0xf]
        %v5899 = vld [vmem:[%s464 + $0x1c8] sm:$0xf]
        %v5900 = vld [vmem:[%s464 + $0x1cc] sm:$0xf]
        %v5901 = vld [vmem:[%s464 + $0x1d0] sm:$0xf]
        %v5902 = vld [vmem:[%s464 + $0x1d4] sm:$0xf]
        %v5903 = vld [vmem:[%s464 + $0x1d8] sm:$0xf]
        %v5904 = vld [vmem:[%s464 + $0x1dc] sm:$0xf]
        %v5905 = vld [vmem:[%s464 + $0x1e0] sm:$0xf]
        %v5906 = vld [vmem:[%s464 + $0x1e4] sm:$0xf]
        %v5907 = vld [vmem:[%s464 + $0x1e8] sm:$0xf]
        %v5908 = vld [vmem:[%s464 + $0x1ec] sm:$0xf]
        %v5909 = vld [vmem:[%s464 + $0x1f0] sm:$0xf]
        %v5910 = vld [vmem:[%s464 + $0x1f4] sm:$0xf]
        %v5911 = vld [vmem:[%s464 + $0x1f8] sm:$0xf]
        %v5912 = vld [vmem:[%s464 + $0x1fc] sm:$0xf]
        %v5913 = vld [vmem:[%s464 + $0x200] sm:$0xf]
        %v5914 = vld [vmem:[%s464 + $0x204] sm:$0xf]
        %v5915 = vld [vmem:[%s464 + $0x208] sm:$0xf]
        %v5916 = vld [vmem:[%s464 + $0x20c] sm:$0xf]
        %v5917 = vld [vmem:[%s464 + $0x210] sm:$0xf]
        %v5918 = vld [vmem:[%s464 + $0x214] sm:$0xf]
        %v5919 = vld [vmem:[%s464 + $0x218] sm:$0xf]
        %v5920 = vld [vmem:[%s464 + $0x21c] sm:$0xf]
        %v5921 = vld [vmem:[%s464 + $0x220] sm:$0xf]
        %v5922 = vld [vmem:[%s464 + $0x224] sm:$0xf]
        %v5923 = vld [vmem:[%s464 + $0x228] sm:$0xf]
        %v5924 = vld [vmem:[%s464 + $0x22c] sm:$0xf]
        %v5925 = vld [vmem:[%s464 + $0x230] sm:$0xf]
        %v5926 = vld [vmem:[%s464 + $0x234] sm:$0xf]
        %v5927 = vld [vmem:[%s464 + $0x238] sm:$0xf]
        %v5928 = vld [vmem:[%s464 + $0x23c] sm:$0xf]
        %v5929 = vld [vmem:[%s464 + $0x240] sm:$0xf]
        %v5930 = vld [vmem:[%s464 + $0x244] sm:$0xf]
        %v5931 = vld [vmem:[%s464 + $0x248] sm:$0xf]
        %v5932 = vld [vmem:[%s464 + $0x24c] sm:$0xf]
        %v5933 = vld [vmem:[%s464 + $0x250] sm:$0xf]
        %v5934 = vld [vmem:[%s464 + $0x254] sm:$0xf]
        %v5935 = vld [vmem:[%s464 + $0x258] sm:$0xf]
        %v5936 = vld [vmem:[%s464 + $0x25c] sm:$0xf]
        %v5937 = vld [vmem:[%s464 + $0x260] sm:$0xf]
        %v5938 = vld [vmem:[%s464 + $0x264] sm:$0xf]
        %v5939 = vld [vmem:[%s464 + $0x268] sm:$0xf]
        %v5940 = vld [vmem:[%s464 + $0x26c] sm:$0xf]
        %v5941 = vld [vmem:[%s464 + $0x270] sm:$0xf]
        %v5942 = vld [vmem:[%s464 + $0x274] sm:$0xf]
        %v5943 = vld [vmem:[%s464 + $0x278] sm:$0xf]
        %v5944 = vld [vmem:[%s464 + $0x27c] sm:$0xf]
        %v5945 = vld [vmem:[%s464 + $0x280] sm:$0xf]
        %v5946 = vld [vmem:[%s464 + $0x284] sm:$0xf]
        %v5947 = vld [vmem:[%s464 + $0x288] sm:$0xf]
        %v5948 = vld [vmem:[%s464 + $0x28c] sm:$0xf]
        %v5949 = vld [vmem:[%s464 + $0x290] sm:$0xf]
        %v5950 = vld [vmem:[%s464 + $0x294] sm:$0xf]
        %v5951 = vld [vmem:[%s464 + $0x298] sm:$0xf]
        %v5952 = vld [vmem:[%s464 + $0x29c] sm:$0xf]
        %v5953 = vld [vmem:[%s464 + $0x2a0] sm:$0xf]
        %v5954 = vld [vmem:[%s464 + $0x2a4] sm:$0xf]
        %v5955 = vld [vmem:[%s464 + $0x2a8] sm:$0xf]
        %v5956 = vld [vmem:[%s464 + $0x2ac] sm:$0xf]
        %v5957 = vld [vmem:[%s464 + $0x2b0] sm:$0xf]
        %v5958 = vld [vmem:[%s464 + $0x2b4] sm:$0xf]
        %v5959 = vld [vmem:[%s464 + $0x2b8] sm:$0xf]
        %v5960 = vld [vmem:[%s464 + $0x2bc] sm:$0xf]
        %v5961 = vld [vmem:[%s464 + $0x2c0] sm:$0xf]
        %v5962 = vld [vmem:[%s464 + $0x2c4] sm:$0xf]
        %v5963 = vld [vmem:[%s464 + $0x2c8] sm:$0xf]
        %v5964 = vld [vmem:[%s464 + $0x2cc] sm:$0xf]
        %v5965 = vld [vmem:[%s464 + $0x2d0] sm:$0xf]
        %v5966 = vld [vmem:[%s464 + $0x2d4] sm:$0xf]
        %v5967 = vld [vmem:[%s464 + $0x2d8] sm:$0xf]
        %v5968 = vld [vmem:[%s464 + $0x2dc] sm:$0xf]
        %v5969 = vld [vmem:[%s464 + $0x2e0] sm:$0xf]
        %v5970 = vld [vmem:[%s464 + $0x2e4] sm:$0xf]
        %v5971 = vld [vmem:[%s464 + $0x2e8] sm:$0xf]
        %v5972 = vld [vmem:[%s464 + $0x2ec] sm:$0xf]
        %v5973 = vld [vmem:[%s464 + $0x2f0] sm:$0xf]
        %v5974 = vld [vmem:[%s464 + $0x2f4] sm:$0xf]
        %v5975 = vld [vmem:[%s464 + $0x2f8] sm:$0xf]
        %v5976 = vld [vmem:[%s464 + $0x2fc] sm:$0xf]
        %v5977 = vld [vmem:[%s464 + $0x300] sm:$0xf]
        %v5978 = vld [vmem:[%s464 + $0x304] sm:$0xf]
        %v5979 = vld [vmem:[%s464 + $0x308] sm:$0xf]
        %v5980 = vld [vmem:[%s464 + $0x30c] sm:$0xf]
        %v5981 = vld [vmem:[%s464 + $0x310] sm:$0xf]
        %v5982 = vld [vmem:[%s464 + $0x314] sm:$0xf]
        %v5983 = vld [vmem:[%s464 + $0x318] sm:$0xf]
        %v5984 = vld [vmem:[%s464 + $0x31c] sm:$0xf]
        %v5985 = vld [vmem:[%s464 + $0x320] sm:$0xf]
        %v5986 = vld [vmem:[%s464 + $0x324] sm:$0xf]
        %v5987 = vld [vmem:[%s464 + $0x328] sm:$0xf]
        %v5988 = vld [vmem:[%s464 + $0x32c] sm:$0xf]
        %v5989 = vld [vmem:[%s464 + $0x330] sm:$0xf]
        %v5990 = vld [vmem:[%s464 + $0x334] sm:$0xf]
        %v5991 = vld [vmem:[%s464 + $0x338] sm:$0xf]
        %v5992 = vld [vmem:[%s464 + $0x33c] sm:$0xf]
        %v5993 = vld [vmem:[%s464 + $0x340] sm:$0xf]
        %v5994 = vld [vmem:[%s464 + $0x344] sm:$0xf]
        %v5995 = vld [vmem:[%s464 + $0x348] sm:$0xf]
        %v5996 = vld [vmem:[%s464 + $0x34c] sm:$0xf]
        %v5997 = vld [vmem:[%s464 + $0x350] sm:$0xf]
        %v5998 = vld [vmem:[%s464 + $0x354] sm:$0xf]
        %v5999 = vld [vmem:[%s464 + $0x358] sm:$0xf]
        %v6000 = vld [vmem:[%s464 + $0x35c] sm:$0xf]
        %v6001 = vld [vmem:[%s464 + $0x360] sm:$0xf]
        %v6002 = vld [vmem:[%s464 + $0x364] sm:$0xf]
        %v6003 = vld [vmem:[%s464 + $0x368] sm:$0xf]
        %v6004 = vld [vmem:[%s464 + $0x36c] sm:$0xf]
        %v6005 = vld [vmem:[%s464 + $0x370] sm:$0xf]
        %v6006 = vld [vmem:[%s464 + $0x374] sm:$0xf]
        %v6007 = vld [vmem:[%s464 + $0x378] sm:$0xf]
        %v6008 = vld [vmem:[%s464 + $0x37c] sm:$0xf]
        %v6009 = vld [vmem:[%s464 + $0x380] sm:$0xf]
        %v6010 = vld [vmem:[%s464 + $0x384] sm:$0xf]
        %v6011 = vld [vmem:[%s464 + $0x388] sm:$0xf]
        %v6012 = vld [vmem:[%s464 + $0x38c] sm:$0xf]
        %v6013 = vld [vmem:[%s464 + $0x390] sm:$0xf]
        %v6014 = vld [vmem:[%s464 + $0x394] sm:$0xf]
        %v6015 = vld [vmem:[%s464 + $0x398] sm:$0xf]
        %v6016 = vld [vmem:[%s464 + $0x39c] sm:$0xf]
        %v6017 = vld [vmem:[%s464 + $0x3a0] sm:$0xf]
        %v6018 = vld [vmem:[%s464 + $0x3a4] sm:$0xf]
        %v6019 = vld [vmem:[%s464 + $0x3a8] sm:$0xf]
        %v6020 = vld [vmem:[%s464 + $0x3ac] sm:$0xf]
        %v6021 = vld [vmem:[%s464 + $0x3b0] sm:$0xf]
        %v6022 = vld [vmem:[%s464 + $0x3b4] sm:$0xf]
        %v6023 = vld [vmem:[%s464 + $0x3b8] sm:$0xf]
        %v6024 = vld [vmem:[%s464 + $0x3bc] sm:$0xf]
        %v6025 = vld [vmem:[%s464 + $0x3c0] sm:$0xf]
        %v6026 = vld [vmem:[%s464 + $0x3c4] sm:$0xf]
        %v6027 = vld [vmem:[%s464 + $0x3c8] sm:$0xf]
        %v6028 = vld [vmem:[%s464 + $0x3cc] sm:$0xf]
        %v6029 = vld [vmem:[%s464 + $0x3d0] sm:$0xf]
        %v6030 = vld [vmem:[%s464 + $0x3d4] sm:$0xf]
        %v6031 = vld [vmem:[%s464 + $0x3d8] sm:$0xf]
        %v6032 = vld [vmem:[%s464 + $0x3dc] sm:$0xf]
        %v6033 = vld [vmem:[%s464 + $0x3e0] sm:$0xf]
        %v6034 = vld [vmem:[%s464 + $0x3e4] sm:$0xf]
        %v6035 = vld [vmem:[%s464 + $0x3e8] sm:$0xf]
        %v6036 = vld [vmem:[%s464 + $0x3ec] sm:$0xf]
        %v6037 = vld [vmem:[%s464 + $0x3f0] sm:$0xf]
        %v6038 = vld [vmem:[%s464 + $0x3f4] sm:$0xf]
        %v6039 = vld [vmem:[%s464 + $0x3f8] sm:$0xf]
        %v6040 = vld [vmem:[%s464 + $0x3fc] sm:$0xf]
        %v6041 = vlaneseq
        %v6042 = vshrl.u32 %v6041, 7
        %v6043 = vsub.s32 6, %v6042
        %v6044 = vrot.slane %v756, %v6043
        %v6301 = vunpack.c.l.b16 %v5785
        %v6302 = vunpack.c.l.b16 %v5786
        %v6303 = vunpack.c.l.b16 %v5787
        %v6304 = vunpack.c.l.b16 %v5788
        %v6305 = vunpack.c.l.b16 %v5789
        %v6306 = vunpack.c.l.b16 %v5790
        %v6307 = vunpack.c.l.b16 %v5791
        %v6308 = vunpack.c.l.b16 %v5792
        %v6309 = vunpack.c.l.b16 %v5793
        %v6310 = vunpack.c.l.b16 %v5794
        %v6311 = vunpack.c.l.b16 %v5795
        %v6312 = vunpack.c.l.b16 %v5796
        %v6313 = vunpack.c.l.b16 %v5797
        %v6314 = vunpack.c.l.b16 %v5798
        %v6315 = vunpack.c.l.b16 %v5799
        %v6316 = vunpack.c.l.b16 %v5800
        %v6317 = vunpack.c.l.b16 %v5801
        %v6318 = vunpack.c.l.b16 %v5802
        %v6319 = vunpack.c.l.b16 %v5803
        %v6320 = vunpack.c.l.b16 %v5804
        %v6321 = vunpack.c.l.b16 %v5805
        %v6322 = vunpack.c.l.b16 %v5806
        %v6323 = vunpack.c.l.b16 %v5807
        %v6324 = vunpack.c.l.b16 %v5808
        %v6325 = vunpack.c.l.b16 %v5809
        %v6326 = vunpack.c.l.b16 %v5810
        %v6327 = vunpack.c.l.b16 %v5811
        %v6328 = vunpack.c.l.b16 %v5812
        %v6329 = vunpack.c.l.b16 %v5813
        %v6330 = vunpack.c.l.b16 %v5814
        %v6331 = vunpack.c.l.b16 %v5815
        %v6332 = vunpack.c.l.b16 %v5816
        %v6333 = vunpack.c.l.b16 %v5817
        %v6334 = vunpack.c.l.b16 %v5818
        %v6335 = vunpack.c.l.b16 %v5819
        %v6336 = vunpack.c.l.b16 %v5820
        %v6337 = vunpack.c.l.b16 %v5821
        %v6338 = vunpack.c.l.b16 %v5822
        %v6339 = vunpack.c.l.b16 %v5823
        %v6340 = vunpack.c.l.b16 %v5824
        %v6341 = vunpack.c.l.b16 %v5825
        %v6342 = vunpack.c.l.b16 %v5826
        %v6343 = vunpack.c.l.b16 %v5827
        %v6344 = vunpack.c.l.b16 %v5828
        %v6345 = vunpack.c.l.b16 %v5829
        %v6346 = vunpack.c.l.b16 %v5830
        %v6347 = vunpack.c.l.b16 %v5831
        %v6348 = vunpack.c.l.b16 %v5832
        %v6349 = vunpack.c.l.b16 %v5833
        %v6350 = vunpack.c.l.b16 %v5834
        %v6351 = vunpack.c.l.b16 %v5835
        %v6352 = vunpack.c.l.b16 %v5836
        %v6353 = vunpack.c.l.b16 %v5837
        %v6354 = vunpack.c.l.b16 %v5838
        %v6355 = vunpack.c.l.b16 %v5839
        %v6356 = vunpack.c.l.b16 %v5840
        %v6357 = vunpack.c.l.b16 %v5841
        %v6358 = vunpack.c.l.b16 %v5842
        %v6359 = vunpack.c.l.b16 %v5843
        %v6360 = vunpack.c.l.b16 %v5844
        %v6361 = vunpack.c.l.b16 %v5845
        %v6362 = vunpack.c.l.b16 %v5846
        %v6363 = vunpack.c.l.b16 %v5847
        %v6364 = vunpack.c.l.b16 %v5848
        %v6365 = vunpack.c.l.b16 %v5849
        %v6366 = vunpack.c.l.b16 %v5850
        %v6367 = vunpack.c.l.b16 %v5851
        %v6368 = vunpack.c.l.b16 %v5852
        %v6369 = vunpack.c.l.b16 %v5853
        %v6370 = vunpack.c.l.b16 %v5854
        %v6371 = vunpack.c.l.b16 %v5855
        %v6372 = vunpack.c.l.b16 %v5856
        %v6373 = vunpack.c.l.b16 %v5857
        %v6374 = vunpack.c.l.b16 %v5858
        %v6375 = vunpack.c.l.b16 %v5859
        %v6376 = vunpack.c.l.b16 %v5860
        %v6377 = vunpack.c.l.b16 %v5861
        %v6378 = vunpack.c.l.b16 %v5862
        %v6379 = vunpack.c.l.b16 %v5863
        %v6380 = vunpack.c.l.b16 %v5864
        %v6381 = vunpack.c.l.b16 %v5865
        %v6382 = vunpack.c.l.b16 %v5866
        %v6383 = vunpack.c.l.b16 %v5867
        %v6384 = vunpack.c.l.b16 %v5868
        %v6385 = vunpack.c.l.b16 %v5869
        %v6386 = vunpack.c.l.b16 %v5870
        %v6387 = vunpack.c.l.b16 %v5871
        %v6388 = vunpack.c.l.b16 %v5872
        %v6389 = vunpack.c.l.b16 %v5873
        %v6390 = vunpack.c.l.b16 %v5874
        %v6391 = vunpack.c.l.b16 %v5875
        %v6392 = vunpack.c.l.b16 %v5876
        %v6393 = vunpack.c.l.b16 %v5877
        %v6394 = vunpack.c.l.b16 %v5878
        %v6395 = vunpack.c.l.b16 %v5879
        %v6396 = vunpack.c.l.b16 %v5880
        %v6397 = vunpack.c.l.b16 %v5881
        %v6398 = vunpack.c.l.b16 %v5882
        %v6399 = vunpack.c.l.b16 %v5883
        %v6400 = vunpack.c.l.b16 %v5884
        %v6401 = vunpack.c.l.b16 %v5885
        %v6402 = vunpack.c.l.b16 %v5886
        %v6403 = vunpack.c.l.b16 %v5887
        %v6404 = vunpack.c.l.b16 %v5888
        %v6405 = vunpack.c.l.b16 %v5889
        %v6406 = vunpack.c.l.b16 %v5890
        %v6407 = vunpack.c.l.b16 %v5891
        %v6408 = vunpack.c.l.b16 %v5892
        %v6409 = vunpack.c.l.b16 %v5893
        %v6410 = vunpack.c.l.b16 %v5894
        %v6411 = vunpack.c.l.b16 %v5895
        %v6412 = vunpack.c.l.b16 %v5896
        %v6413 = vunpack.c.l.b16 %v5897
        %v6414 = vunpack.c.l.b16 %v5898
        %v6415 = vunpack.c.l.b16 %v5899
        %v6416 = vunpack.c.l.b16 %v5900
        %v6417 = vunpack.c.l.b16 %v5901
        %v6418 = vunpack.c.l.b16 %v5902
        %v6419 = vunpack.c.l.b16 %v5903
        %v6420 = vunpack.c.l.b16 %v5904
        %v6421 = vunpack.c.l.b16 %v5905
        %v6422 = vunpack.c.l.b16 %v5906
        %v6423 = vunpack.c.l.b16 %v5907
        %v6424 = vunpack.c.l.b16 %v5908
        %v6425 = vunpack.c.l.b16 %v5909
        %v6426 = vunpack.c.l.b16 %v5910
        %v6427 = vunpack.c.l.b16 %v5911
        %v6428 = vunpack.c.l.b16 %v5912
        %v6429 = vunpack.c.l.b16 %v5913
        %v6430 = vunpack.c.l.b16 %v5914
        %v6431 = vunpack.c.l.b16 %v5915
        %v6432 = vunpack.c.l.b16 %v5916
        %v6433 = vunpack.c.l.b16 %v5917
        %v6434 = vunpack.c.l.b16 %v5918
        %v6435 = vunpack.c.l.b16 %v5919
        %v6436 = vunpack.c.l.b16 %v5920
        %v6437 = vunpack.c.l.b16 %v5921
        %v6438 = vunpack.c.l.b16 %v5922
        %v6439 = vunpack.c.l.b16 %v5923
        %v6440 = vunpack.c.l.b16 %v5924
        %v6441 = vunpack.c.l.b16 %v5925
        %v6442 = vunpack.c.l.b16 %v5926
        %v6443 = vunpack.c.l.b16 %v5927
        %v6444 = vunpack.c.l.b16 %v5928
        %v6445 = vunpack.c.l.b16 %v5929
        %v6446 = vunpack.c.l.b16 %v5930
        %v6447 = vunpack.c.l.b16 %v5931
        %v6448 = vunpack.c.l.b16 %v5932
        %v6449 = vunpack.c.l.b16 %v5933
        %v6450 = vunpack.c.l.b16 %v5934
        %v6451 = vunpack.c.l.b16 %v5935
        %v6452 = vunpack.c.l.b16 %v5936
        %v6453 = vunpack.c.l.b16 %v5937
        %v6454 = vunpack.c.l.b16 %v5938
        %v6455 = vunpack.c.l.b16 %v5939
        %v6456 = vunpack.c.l.b16 %v5940
        %v6457 = vunpack.c.l.b16 %v5941
        %v6458 = vunpack.c.l.b16 %v5942
        %v6459 = vunpack.c.l.b16 %v5943
        %v6460 = vunpack.c.l.b16 %v5944
        %v6461 = vunpack.c.l.b16 %v5945
        %v6462 = vunpack.c.l.b16 %v5946
        %v6463 = vunpack.c.l.b16 %v5947
        %v6464 = vunpack.c.l.b16 %v5948
        %v6465 = vunpack.c.l.b16 %v5949
        %v6466 = vunpack.c.l.b16 %v5950
        %v6467 = vunpack.c.l.b16 %v5951
        %v6468 = vunpack.c.l.b16 %v5952
        %v6469 = vunpack.c.l.b16 %v5953
        %v6470 = vunpack.c.l.b16 %v5954
        %v6471 = vunpack.c.l.b16 %v5955
        %v6472 = vunpack.c.l.b16 %v5956
        %v6473 = vunpack.c.l.b16 %v5957
        %v6474 = vunpack.c.l.b16 %v5958
        %v6475 = vunpack.c.l.b16 %v5959
        %v6476 = vunpack.c.l.b16 %v5960
        %v6477 = vunpack.c.l.b16 %v5961
        %v6478 = vunpack.c.l.b16 %v5962
        %v6479 = vunpack.c.l.b16 %v5963
        %v6480 = vunpack.c.l.b16 %v5964
        %v6481 = vunpack.c.l.b16 %v5965
        %v6482 = vunpack.c.l.b16 %v5966
        %v6483 = vunpack.c.l.b16 %v5967
        %v6484 = vunpack.c.l.b16 %v5968
        %v6485 = vunpack.c.l.b16 %v5969
        %v6486 = vunpack.c.l.b16 %v5970
        %v6487 = vunpack.c.l.b16 %v5971
        %v6488 = vunpack.c.l.b16 %v5972
        %v6489 = vunpack.c.l.b16 %v5973
        %v6490 = vunpack.c.l.b16 %v5974
        %v6491 = vunpack.c.l.b16 %v5975
        %v6492 = vunpack.c.l.b16 %v5976
        %v6493 = vunpack.c.l.b16 %v5977
        %v6494 = vunpack.c.l.b16 %v5978
        %v6495 = vunpack.c.l.b16 %v5979
        %v6496 = vunpack.c.l.b16 %v5980
        %v6497 = vunpack.c.l.b16 %v5981
        %v6498 = vunpack.c.l.b16 %v5982
        %v6499 = vunpack.c.l.b16 %v5983
        %v6500 = vunpack.c.l.b16 %v5984
        %v6501 = vunpack.c.l.b16 %v5985
        %v6502 = vunpack.c.l.b16 %v5986
        %v6503 = vunpack.c.l.b16 %v5987
        %v6504 = vunpack.c.l.b16 %v5988
        %v6505 = vunpack.c.l.b16 %v5989
        %v6506 = vunpack.c.l.b16 %v5990
        %v6507 = vunpack.c.l.b16 %v5991
        %v6508 = vunpack.c.l.b16 %v5992
        %v6509 = vunpack.c.l.b16 %v5993
        %v6510 = vunpack.c.l.b16 %v5994
        %v6511 = vunpack.c.l.b16 %v5995
        %v6512 = vunpack.c.l.b16 %v5996
        %v6513 = vunpack.c.l.b16 %v5997
        %v6514 = vunpack.c.l.b16 %v5998
        %v6515 = vunpack.c.l.b16 %v5999
        %v6516 = vunpack.c.l.b16 %v6000
        %v6517 = vunpack.c.l.b16 %v6001
        %v6518 = vunpack.c.l.b16 %v6002
        %v6519 = vunpack.c.l.b16 %v6003
        %v6520 = vunpack.c.l.b16 %v6004
        %v6521 = vunpack.c.l.b16 %v6005
        %v6522 = vunpack.c.l.b16 %v6006
        %v6523 = vunpack.c.l.b16 %v6007
        %v6524 = vunpack.c.l.b16 %v6008
        %v6525 = vunpack.c.l.b16 %v6009
        %v6526 = vunpack.c.l.b16 %v6010
        %v6527 = vunpack.c.l.b16 %v6011
        %v6528 = vunpack.c.l.b16 %v6012
        %v6529 = vunpack.c.l.b16 %v6013
        %v6530 = vunpack.c.l.b16 %v6014
        %v6531 = vunpack.c.l.b16 %v6015
        %v6532 = vunpack.c.l.b16 %v6016
        %v6533 = vunpack.c.l.b16 %v6017
        %v6534 = vunpack.c.l.b16 %v6018
        %v6535 = vunpack.c.l.b16 %v6019
        %v6536 = vunpack.c.l.b16 %v6020
        %v6537 = vunpack.c.l.b16 %v6021
        %v6538 = vunpack.c.l.b16 %v6022
        %v6539 = vunpack.c.l.b16 %v6023
        %v6540 = vunpack.c.l.b16 %v6024
        %v6541 = vunpack.c.l.b16 %v6025
        %v6542 = vunpack.c.l.b16 %v6026
        %v6543 = vunpack.c.l.b16 %v6027
        %v6544 = vunpack.c.l.b16 %v6028
        %v6545 = vunpack.c.l.b16 %v6029
        %v6546 = vunpack.c.l.b16 %v6030
        %v6547 = vunpack.c.l.b16 %v6031
        %v6548 = vunpack.c.l.b16 %v6032
        %v6549 = vunpack.c.l.b16 %v6033
        %v6550 = vunpack.c.l.b16 %v6034
        %v6551 = vunpack.c.l.b16 %v6035
        %v6552 = vunpack.c.l.b16 %v6036
        %v6553 = vunpack.c.l.b16 %v6037
        %v6554 = vunpack.c.l.b16 %v6038
        %v6555 = vunpack.c.l.b16 %v6039
        %v6556 = vunpack.c.l.b16 %v6040
        %v6557 = vpack.c.b16 %v6302, %v6301
        %v6558 = vpack.c.b16 %v6304, %v6303
        %v6559 = vpack.c.b16 %v6306, %v6305
        %v6560 = vpack.c.b16 %v6308, %v6307
        %v6561 = vpack.c.b16 %v6310, %v6309
        %v6562 = vpack.c.b16 %v6312, %v6311
        %v6563 = vpack.c.b16 %v6314, %v6313
        %v6564 = vpack.c.b16 %v6316, %v6315
        %v6565 = vpack.c.b16 %v6318, %v6317
        %v6566 = vpack.c.b16 %v6320, %v6319
        %v6567 = vpack.c.b16 %v6322, %v6321
        %v6568 = vpack.c.b16 %v6324, %v6323
        %v6569 = vpack.c.b16 %v6326, %v6325
        %v6570 = vpack.c.b16 %v6328, %v6327
        %v6571 = vpack.c.b16 %v6330, %v6329
        %v6572 = vpack.c.b16 %v6332, %v6331
        %v6573 = vpack.c.b16 %v6334, %v6333
        %v6574 = vpack.c.b16 %v6336, %v6335
        %v6575 = vpack.c.b16 %v6338, %v6337
        %v6576 = vpack.c.b16 %v6340, %v6339
        %v6577 = vpack.c.b16 %v6342, %v6341
        %v6578 = vpack.c.b16 %v6344, %v6343
        %v6579 = vpack.c.b16 %v6346, %v6345
        %v6580 = vpack.c.b16 %v6348, %v6347
        %v6581 = vpack.c.b16 %v6350, %v6349
        %v6582 = vpack.c.b16 %v6352, %v6351
        %v6583 = vpack.c.b16 %v6354, %v6353
        %v6584 = vpack.c.b16 %v6356, %v6355
        %v6585 = vpack.c.b16 %v6358, %v6357
        %v6586 = vpack.c.b16 %v6360, %v6359
        %v6587 = vpack.c.b16 %v6362, %v6361
        %v6588 = vpack.c.b16 %v6364, %v6363
        %v6589 = vpack.c.b16 %v6366, %v6365
        %v6590 = vpack.c.b16 %v6368, %v6367
        %v6591 = vpack.c.b16 %v6370, %v6369
        %v6592 = vpack.c.b16 %v6372, %v6371
        %v6593 = vpack.c.b16 %v6374, %v6373
        %v6594 = vpack.c.b16 %v6376, %v6375
        %v6595 = vpack.c.b16 %v6378, %v6377
        %v6596 = vpack.c.b16 %v6380, %v6379
        %v6597 = vpack.c.b16 %v6382, %v6381
        %v6598 = vpack.c.b16 %v6384, %v6383
        %v6599 = vpack.c.b16 %v6386, %v6385
        %v6600 = vpack.c.b16 %v6388, %v6387
        %v6601 = vpack.c.b16 %v6390, %v6389
        %v6602 = vpack.c.b16 %v6392, %v6391
        %v6603 = vpack.c.b16 %v6394, %v6393
        %v6604 = vpack.c.b16 %v6396, %v6395
        %v6605 = vpack.c.b16 %v6398, %v6397
        %v6606 = vpack.c.b16 %v6400, %v6399
        %v6607 = vpack.c.b16 %v6402, %v6401
        %v6608 = vpack.c.b16 %v6404, %v6403
        %v6609 = vpack.c.b16 %v6406, %v6405
        %v6610 = vpack.c.b16 %v6408, %v6407
        %v6611 = vpack.c.b16 %v6410, %v6409
        %v6612 = vpack.c.b16 %v6412, %v6411
        %v6613 = vpack.c.b16 %v6414, %v6413
        %v6614 = vpack.c.b16 %v6416, %v6415
        %v6615 = vpack.c.b16 %v6418, %v6417
        %v6616 = vpack.c.b16 %v6420, %v6419
        %v6617 = vpack.c.b16 %v6422, %v6421
        %v6618 = vpack.c.b16 %v6424, %v6423
        %v6619 = vpack.c.b16 %v6426, %v6425
        %v6620 = vpack.c.b16 %v6428, %v6427
        %v6621 = vpack.c.b16 %v6430, %v6429
        %v6622 = vpack.c.b16 %v6432, %v6431
        %v6623 = vpack.c.b16 %v6434, %v6433
        %v6624 = vpack.c.b16 %v6436, %v6435
        %v6625 = vpack.c.b16 %v6438, %v6437
        %v6626 = vpack.c.b16 %v6440, %v6439
        %v6627 = vpack.c.b16 %v6442, %v6441
        %v6628 = vpack.c.b16 %v6444, %v6443
        %v6629 = vpack.c.b16 %v6446, %v6445
        %v6630 = vpack.c.b16 %v6448, %v6447
        %v6631 = vpack.c.b16 %v6450, %v6449
        %v6632 = vpack.c.b16 %v6452, %v6451
        %v6633 = vpack.c.b16 %v6454, %v6453
        %v6634 = vpack.c.b16 %v6456, %v6455
        %v6635 = vpack.c.b16 %v6458, %v6457
        %v6636 = vpack.c.b16 %v6460, %v6459
        %v6637 = vpack.c.b16 %v6462, %v6461
        %v6638 = vpack.c.b16 %v6464, %v6463
        %v6639 = vpack.c.b16 %v6466, %v6465
        %v6640 = vpack.c.b16 %v6468, %v6467
        %v6641 = vpack.c.b16 %v6470, %v6469
        %v6642 = vpack.c.b16 %v6472, %v6471
        %v6643 = vpack.c.b16 %v6474, %v6473
        %v6644 = vpack.c.b16 %v6476, %v6475
        %v6645 = vpack.c.b16 %v6478, %v6477
        %v6646 = vpack.c.b16 %v6480, %v6479
        %v6647 = vpack.c.b16 %v6482, %v6481
        %v6648 = vpack.c.b16 %v6484, %v6483
        %v6649 = vpack.c.b16 %v6486, %v6485
        %v6650 = vpack.c.b16 %v6488, %v6487
        %v6651 = vpack.c.b16 %v6490, %v6489
        %v6652 = vpack.c.b16 %v6492, %v6491
        %v6653 = vpack.c.b16 %v6494, %v6493
        %v6654 = vpack.c.b16 %v6496, %v6495
        %v6655 = vpack.c.b16 %v6498, %v6497
        %v6656 = vpack.c.b16 %v6500, %v6499
        %v6657 = vpack.c.b16 %v6502, %v6501
        %v6658 = vpack.c.b16 %v6504, %v6503
        %v6659 = vpack.c.b16 %v6506, %v6505
        %v6660 = vpack.c.b16 %v6508, %v6507
        %v6661 = vpack.c.b16 %v6510, %v6509
        %v6662 = vpack.c.b16 %v6512, %v6511
        %v6663 = vpack.c.b16 %v6514, %v6513
        %v6664 = vpack.c.b16 %v6516, %v6515
        %v6665 = vpack.c.b16 %v6518, %v6517
        %v6666 = vpack.c.b16 %v6520, %v6519
        %v6667 = vpack.c.b16 %v6522, %v6521
        %v6668 = vpack.c.b16 %v6524, %v6523
        %v6669 = vpack.c.b16 %v6526, %v6525
        %v6670 = vpack.c.b16 %v6528, %v6527
        %v6671 = vpack.c.b16 %v6530, %v6529
        %v6672 = vpack.c.b16 %v6532, %v6531
        %v6673 = vpack.c.b16 %v6534, %v6533
        %v6674 = vpack.c.b16 %v6536, %v6535
        %v6675 = vpack.c.b16 %v6538, %v6537
        %v6676 = vpack.c.b16 %v6540, %v6539
        %v6677 = vpack.c.b16 %v6542, %v6541
        %v6678 = vpack.c.b16 %v6544, %v6543
        %v6679 = vpack.c.b16 %v6546, %v6545
        %v6680 = vpack.c.b16 %v6548, %v6547
        %v6681 = vpack.c.b16 %v6550, %v6549
        %v6682 = vpack.c.b16 %v6552, %v6551
        %v6683 = vpack.c.b16 %v6554, %v6553
        %v6684 = vpack.c.b16 %v6556, %v6555
        %6813 = vmatprep.subr.bf16.mxu0 0
        %6814 = vmatpush1.bf16.msra.mxu0 %v6557
        %6815 = vmatprep.subr.bf16.mxu0 0
        %6816 = vmatpush1.bf16.msra.mxu0 %v6558
        %6817 = vmatprep.subr.bf16.mxu0 0
        %6818 = vmatpush1.bf16.msra.mxu0 %v6559
        %6819 = vmatprep.subr.bf16.mxu0 0
        %6820 = vmatpush1.bf16.msra.mxu0 %v6560
        %6821 = vmatprep.subr.bf16.mxu0 0
        %6822 = vmatpush1.bf16.msra.mxu0 %v6561
        %6823 = vmatprep.subr.bf16.mxu0 0
        %6824 = vmatpush1.bf16.msra.mxu0 %v6562
        %6825 = vmatprep.subr.bf16.mxu0 0
        %6826 = vmatpush1.bf16.msra.mxu0 %v6563
        %6827 = vmatprep.subr.bf16.mxu0 0
        %6828 = vmatpush1.bf16.msra.mxu0 %v6564
        %6829 = vmatprep.subr.bf16.mxu0 0
        %6830 = vmatpush1.bf16.msra.mxu0 %v6565
        %6831 = vmatprep.subr.bf16.mxu0 0
        %6832 = vmatpush1.bf16.msra.mxu0 %v6566
        %6833 = vmatprep.subr.bf16.mxu0 0
        %6834 = vmatpush1.bf16.msra.mxu0 %v6567
        %6835 = vmatprep.subr.bf16.mxu0 0
        %6836 = vmatpush1.bf16.msra.mxu0 %v6568
        %6837 = vmatprep.subr.bf16.mxu0 0
        %6838 = vmatpush1.bf16.msra.mxu0 %v6569
        %6839 = vmatprep.subr.bf16.mxu0 0
        %6840 = vmatpush1.bf16.msra.mxu0 %v6570
        %6841 = vmatprep.subr.bf16.mxu0 0
        %6842 = vmatpush1.bf16.msra.mxu0 %v6571
        %6843 = vmatprep.subr.bf16.mxu0 0
        %6844 = vmatpush1.bf16.msra.mxu0 %v6572
        %6845 = vmatprep.mubr.bf16.mxu0 %v5658
        %6846 = vmatmul.mubr.bf16.gmra.mrb[0].mxu0 %v5657
        %v6847 = vpop.f32.mrb[0].mxu0
        %v6848 = vadd.f32 %v6044, %v6847
        %v6849 = vpop.f32.mrb[0].mxu0
        %v6850 = vpop.f32.mrb[0].mxu0
        %v6851 = vadd.f32 %v6044, %v6850
        %v6852 = vpop.f32.mrb[0].mxu0
        %6853 = vmatprep.mubr.bf16.mxu0 %v5674
        %6854 = vmatmul.mubr.bf16.gmra.mrb[0].mxu0 %v5673
        %v6855 = vpop.f32.mrb[0].mxu0
        %v6856 = vadd.f32 %v6044, %v6855
        %v6857 = vpop.f32.mrb[0].mxu0
        %v6858 = vpop.f32.mrb[0].mxu0
        %v6859 = vadd.f32 %v6044, %v6858
        %v6860 = vpop.f32.mrb[0].mxu0
        %6861 = vmatprep.mubr.bf16.mxu0 %v5690
        %6862 = vmatmul.mubr.bf16.gmra.mrb[0].mxu0 %v5689
        %v6863 = vpop.f32.mrb[0].mxu0
        %v6864 = vadd.f32 %v6044, %v6863
        %v6865 = vpop.f32.mrb[0].mxu0
        %v6866 = vpop.f32.mrb[0].mxu0
        %v6867 = vadd.f32 %v6044, %v6866
        %v6868 = vpop.f32.mrb[0].mxu0
        %6869 = vmatprep.mubr.bf16.mxu0 %v5706
        %6870 = vmatmul.mubr.bf16.gmra.mrb[0].mxu0 %v5705
        %v6871 = vpop.f32.mrb[0].mxu0
        %v6872 = vadd.f32 %v6044, %v6871
        %v6873 = vpop.f32.mrb[0].mxu0
        %v6874 = vpop.f32.mrb[0].mxu0
        %v6875 = vadd.f32 %v6044, %v6874
        %v6876 = vpop.f32.mrb[0].mxu0
        %6877 = vmatprep.mubr.bf16.mxu0 %v5722
        %6878 = vmatmul.mubr.bf16.gmra.mrb[0].mxu0 %v5721
        %v6879 = vpop.f32.mrb[0].mxu0
        %v6880 = vadd.f32 %v6044, %v6879
        %v6881 = vpop.f32.mrb[0].mxu0
        %v6882 = vpop.f32.mrb[0].mxu0
        %v6883 = vadd.f32 %v6044, %v6882
        %v6884 = vpop.f32.mrb[0].mxu0
        %6885 = vmatprep.mubr.bf16.mxu0 %v5738
        %6886 = vmatmul.mubr.bf16.gmra.mrb[0].mxu0 %v5737
        %v6887 = vpop.f32.mrb[0].mxu0
        %v6888 = vadd.f32 %v6044, %v6887
        %v6889 = vpop.f32.mrb[0].mxu0
        %v6890 = vpop.f32.mrb[0].mxu0
        %v6891 = vadd.f32 %v6044, %v6890
        %v6892 = vpop.f32.mrb[0].mxu0
        %6893 = vmatprep.mubr.bf16.mxu0 %v5754
        %6894 = vmatmul.mubr.bf16.gmra.mrb[0].mxu0 %v5753
        %v6895 = vpop.f32.mrb[0].mxu0
        %v6896 = vadd.f32 %v6044, %v6895
        %v6897 = vpop.f32.mrb[0].mxu0
        %v6898 = vpop.f32.mrb[0].mxu0
        %v6899 = vadd.f32 %v6044, %v6898
        %v6900 = vpop.f32.mrb[0].mxu0
        %6901 = vmatprep.mubr.bf16.mxu0 %v5770
        %6902 = vmatmul.mubr.bf16.gmra.mrb[0].mxu0 %v5769
        %v6903 = vpop.f32.mrb[0].mxu0
        %v6904 = vadd.f32 %v6044, %v6903
        %v6905 = vpop.f32.mrb[0].mxu0
        %v6906 = vpop.f32.mrb[0].mxu0
        %v6907 = vadd.f32 %v6044, %v6906
        %v6908 = vpop.f32.mrb[0].mxu0
        %6909 = vdwg.mxu0
        %6910 = vmatprep.subr.bf16.mxu0 0
        %6911 = vmatpush1.bf16.msra.mxu0 %v6573
        %6912 = vmatprep.subr.bf16.mxu0 0
        %6913 = vmatpush1.bf16.msra.mxu0 %v6574
        %6914 = vmatprep.subr.bf16.mxu0 0
        %6915 = vmatpush1.bf16.msra.mxu0 %v6575
        %6916 = vmatprep.subr.bf16.mxu0 0
        %6917 = vmatpush1.bf16.msra.mxu0 %v6576
        %6918 = vmatprep.subr.bf16.mxu0 0
        %6919 = vmatpush1.bf16.msra.mxu0 %v6577
        %6920 = vmatprep.subr.bf16.mxu0 0
        %6921 = vmatpush1.bf16.msra.mxu0 %v6578
        %6922 = vmatprep.subr.bf16.mxu0 0
        %6923 = vmatpush1.bf16.msra.mxu0 %v6579
        %6924 = vmatprep.subr.bf16.mxu0 0
        %6925 = vmatpush1.bf16.msra.mxu0 %v6580
        %6926 = vmatprep.subr.bf16.mxu0 0
        %6927 = vmatpush1.bf16.msra.mxu0 %v6581
        %6928 = vmatprep.subr.bf16.mxu0 0
        %6929 = vmatpush1.bf16.msra.mxu0 %v6582
        %6930 = vmatprep.subr.bf16.mxu0 0
        %6931 = vmatpush1.bf16.msra.mxu0 %v6583
        %6932 = vmatprep.subr.bf16.mxu0 0
        %6933 = vmatpush1.bf16.msra.mxu0 %v6584
        %6934 = vmatprep.subr.bf16.mxu0 0
        %6935 = vmatpush1.bf16.msra.mxu0 %v6585
        %6936 = vmatprep.subr.bf16.mxu0 0
        %6937 = vmatpush1.bf16.msra.mxu0 %v6586
        %6938 = vmatprep.subr.bf16.mxu0 0
        %6939 = vmatpush1.bf16.msra.mxu0 %v6587
        %6940 = vmatprep.subr.bf16.mxu0 0
        %6941 = vmatpush1.bf16.msra.mxu0 %v6588
        %6942 = vmatprep.mubr.bf16.mxu0 %v5660
        %6943 = vmatmul.mubr.bf16.gmra.mrb[0].mxu0 %v5659
        %v6944 = vpop.f32.mrb[0].mxu0
        %v6945 = vadd.f32 %v6848, %v6944
        %v6946 = vpop.f32.mrb[0].mxu0
        %v6947 = vpop.f32.mrb[0].mxu0
        %v6948 = vadd.f32 %v6851, %v6947
        %v6949 = vpop.f32.mrb[0].mxu0
        %6950 = vmatprep.mubr.bf16.mxu0 %v5676
        %6951 = vmatmul.mubr.bf16.gmra.mrb[0].mxu0 %v5675
        %v6952 = vpop.f32.mrb[0].mxu0
        %v6953 = vadd.f32 %v6856, %v6952
        %v6954 = vpop.f32.mrb[0].mxu0
        %v6955 = vpop.f32.mrb[0].mxu0
        %v6956 = vadd.f32 %v6859, %v6955
        %v6957 = vpop.f32.mrb[0].mxu0
        %6958 = vmatprep.mubr.bf16.mxu0 %v5692
        %6959 = vmatmul.mubr.bf16.gmra.mrb[0].mxu0 %v5691
        %v6960 = vpop.f32.mrb[0].mxu0
        %v6961 = vadd.f32 %v6864, %v6960
        %v6962 = vpop.f32.mrb[0].mxu0
        %v6963 = vpop.f32.mrb[0].mxu0
        %v6964 = vadd.f32 %v6867, %v6963
        %v6965 = vpop.f32.mrb[0].mxu0
        %6966 = vmatprep.mubr.bf16.mxu0 %v5708
        %6967 = vmatmul.mubr.bf16.gmra.mrb[0].mxu0 %v5707
        %v6968 = vpop.f32.mrb[0].mxu0
        %v6969 = vadd.f32 %v6872, %v6968
        %v6970 = vpop.f32.mrb[0].mxu0
        %v6971 = vpop.f32.mrb[0].mxu0
        %v6972 = vadd.f32 %v6875, %v6971
        %v6973 = vpop.f32.mrb[0].mxu0
        %6974 = vmatprep.mubr.bf16.mxu0 %v5724
        %6975 = vmatmul.mubr.bf16.gmra.mrb[0].mxu0 %v5723
        %v6976 = vpop.f32.mrb[0].mxu0
        %v6977 = vadd.f32 %v6880, %v6976
        %v6978 = vpop.f32.mrb[0].mxu0
        %v6979 = vpop.f32.mrb[0].mxu0
        %v6980 = vadd.f32 %v6883, %v6979
        %v6981 = vpop.f32.mrb[0].mxu0
        %6982 = vmatprep.mubr.bf16.mxu0 %v5740
        %6983 = vmatmul.mubr.bf16.gmra.mrb[0].mxu0 %v5739
        %v6984 = vpop.f32.mrb[0].mxu0
        %v6985 = vadd.f32 %v6888, %v6984
        %v6986 = vpop.f32.mrb[0].mxu0
        %v6987 = vpop.f32.mrb[0].mxu0
        %v6988 = vadd.f32 %v6891, %v6987
        %v6989 = vpop.f32.mrb[0].mxu0
        %6990 = vmatprep.mubr.bf16.mxu0 %v5756
        %6991 = vmatmul.mubr.bf16.gmra.mrb[0].mxu0 %v5755
        %v6992 = vpop.f32.mrb[0].mxu0
        %v6993 = vadd.f32 %v6896, %v6992
        %v6994 = vpop.f32.mrb[0].mxu0
        %v6995 = vpop.f32.mrb[0].mxu0
        %v6996 = vadd.f32 %v6899, %v6995
        %v6997 = vpop.f32.mrb[0].mxu0
        %6998 = vmatprep.mubr.bf16.mxu0 %v5772
        %6999 = vmatmul.mubr.bf16.gmra.mrb[0].mxu0 %v5771
        %v7000 = vpop.f32.mrb[0].mxu0
        %v7001 = vadd.f32 %v6904, %v7000
        %v7002 = vpop.f32.mrb[0].mxu0
        %v7003 = vpop.f32.mrb[0].mxu0
        %v7004 = vadd.f32 %v6907, %v7003
        %v7005 = vpop.f32.mrb[0].mxu0
        %7006 = vdwg.mxu0
        %7007 = vmatprep.subr.bf16.mxu0 0
        %7008 = vmatpush1.bf16.msra.mxu0 %v6589
        %7009 = vmatprep.subr.bf16.mxu0 0
        %7010 = vmatpush1.bf16.msra.mxu0 %v6590
        %7011 = vmatprep.subr.bf16.mxu0 0
        %7012 = vmatpush1.bf16.msra.mxu0 %v6591
        %7013 = vmatprep.subr.bf16.mxu0 0
        %7014 = vmatpush1.bf16.msra.mxu0 %v6592
        %7015 = vmatprep.subr.bf16.mxu0 0
        %7016 = vmatpush1.bf16.msra.mxu0 %v6593
        %7017 = vmatprep.subr.bf16.mxu0 0
        %7018 = vmatpush1.bf16.msra.mxu0 %v6594
        %7019 = vmatprep.subr.bf16.mxu0 0
        %7020 = vmatpush1.bf16.msra.mxu0 %v6595
        %7021 = vmatprep.subr.bf16.mxu0 0
        %7022 = vmatpush1.bf16.msra.mxu0 %v6596
        %7023 = vmatprep.subr.bf16.mxu0 0
        %7024 = vmatpush1.bf16.msra.mxu0 %v6597
        %7025 = vmatprep.subr.bf16.mxu0 0
        %7026 = vmatpush1.bf16.msra.mxu0 %v6598
        %7027 = vmatprep.subr.bf16.mxu0 0
        %7028 = vmatpush1.bf16.msra.mxu0 %v6599
        %7029 = vmatprep.subr.bf16.mxu0 0
        %7030 = vmatpush1.bf16.msra.mxu0 %v6600
        %7031 = vmatprep.subr.bf16.mxu0 0
        %7032 = vmatpush1.bf16.msra.mxu0 %v6601
        %7033 = vmatprep.subr.bf16.mxu0 0
        %7034 = vmatpush1.bf16.msra.mxu0 %v6602
        %7035 = vmatprep.subr.bf16.mxu0 0
        %7036 = vmatpush1.bf16.msra.mxu0 %v6603
        %7037 = vmatprep.subr.bf16.mxu0 0
        %7038 = vmatpush1.bf16.msra.mxu0 %v6604
        %7039 = vmatprep.mubr.bf16.mxu0 %v5662
        %7040 = vmatmul.mubr.bf16.gmra.mrb[0].mxu0 %v5661
        %v7041 = vpop.f32.mrb[0].mxu0
        %v7042 = vadd.f32 %v6945, %v7041
        %v7043 = vpop.f32.mrb[0].mxu0
        %v7044 = vpop.f32.mrb[0].mxu0
        %v7045 = vadd.f32 %v6948, %v7044
        %v7046 = vpop.f32.mrb[0].mxu0
        %7047 = vmatprep.mubr.bf16.mxu0 %v5678
        %7048 = vmatmul.mubr.bf16.gmra.mrb[0].mxu0 %v5677
        %v7049 = vpop.f32.mrb[0].mxu0
        %v7050 = vadd.f32 %v6953, %v7049
        %v7051 = vpop.f32.mrb[0].mxu0
        %v7052 = vpop.f32.mrb[0].mxu0
        %v7053 = vadd.f32 %v6956, %v7052
        %v7054 = vpop.f32.mrb[0].mxu0
        %7055 = vmatprep.mubr.bf16.mxu0 %v5694
        %7056 = vmatmul.mubr.bf16.gmra.mrb[0].mxu0 %v5693
        %v7057 = vpop.f32.mrb[0].mxu0
        %v7058 = vadd.f32 %v6961, %v7057
        %v7059 = vpop.f32.mrb[0].mxu0
        %v7060 = vpop.f32.mrb[0].mxu0
        %v7061 = vadd.f32 %v6964, %v7060
        %v7062 = vpop.f32.mrb[0].mxu0
        %7063 = vmatprep.mubr.bf16.mxu0 %v5710
        %7064 = vmatmul.mubr.bf16.gmra.mrb[0].mxu0 %v5709
        %v7065 = vpop.f32.mrb[0].mxu0
        %v7066 = vadd.f32 %v6969, %v7065
        %v7067 = vpop.f32.mrb[0].mxu0
        %v7068 = vpop.f32.mrb[0].mxu0
        %v7069 = vadd.f32 %v6972, %v7068
        %v7070 = vpop.f32.mrb[0].mxu0
        %7071 = vmatprep.mubr.bf16.mxu0 %v5726
        %7072 = vmatmul.mubr.bf16.gmra.mrb[0].mxu0 %v5725
        %v7073 = vpop.f32.mrb[0].mxu0
        %v7074 = vadd.f32 %v6977, %v7073
        %v7075 = vpop.f32.mrb[0].mxu0
        %v7076 = vpop.f32.mrb[0].mxu0
        %v7077 = vadd.f32 %v6980, %v7076
        %v7078 = vpop.f32.mrb[0].mxu0
        %7079 = vmatprep.mubr.bf16.mxu0 %v5742
        %7080 = vmatmul.mubr.bf16.gmra.mrb[0].mxu0 %v5741
        %v7081 = vpop.f32.mrb[0].mxu0
        %v7082 = vadd.f32 %v6985, %v7081
        %v7083 = vpop.f32.mrb[0].mxu0
        %v7084 = vpop.f32.mrb[0].mxu0
        %v7085 = vadd.f32 %v6988, %v7084
        %v7086 = vpop.f32.mrb[0].mxu0
        %7087 = vmatprep.mubr.bf16.mxu0 %v5758
        %7088 = vmatmul.mubr.bf16.gmra.mrb[0].mxu0 %v5757
        %v7089 = vpop.f32.mrb[0].mxu0
        %v7090 = vadd.f32 %v6993, %v7089
        %v7091 = vpop.f32.mrb[0].mxu0
        %v7092 = vpop.f32.mrb[0].mxu0
        %v7093 = vadd.f32 %v6996, %v7092
        %v7094 = vpop.f32.mrb[0].mxu0
        %7095 = vmatprep.mubr.bf16.mxu0 %v5774
        %7096 = vmatmul.mubr.bf16.gmra.mrb[0].mxu0 %v5773
        %v7097 = vpop.f32.mrb[0].mxu0
        %v7098 = vadd.f32 %v7001, %v7097
        %v7099 = vpop.f32.mrb[0].mxu0
        %v7100 = vpop.f32.mrb[0].mxu0
        %v7101 = vadd.f32 %v7004, %v7100
        %v7102 = vpop.f32.mrb[0].mxu0
        %7103 = vdwg.mxu0
        %7104 = vmatprep.subr.bf16.mxu0 0
        %7105 = vmatpush1.bf16.msra.mxu0 %v6605
        %7106 = vmatprep.subr.bf16.mxu0 0
        %7107 = vmatpush1.bf16.msra.mxu0 %v6606
        %7108 = vmatprep.subr.bf16.mxu0 0
        %7109 = vmatpush1.bf16.msra.mxu0 %v6607
        %7110 = vmatprep.subr.bf16.mxu0 0
        %7111 = vmatpush1.bf16.msra.mxu0 %v6608
        %7112 = vmatprep.subr.bf16.mxu0 0
        %7113 = vmatpush1.bf16.msra.mxu0 %v6609
        %7114 = vmatprep.subr.bf16.mxu0 0
        %7115 = vmatpush1.bf16.msra.mxu0 %v6610
        %7116 = vmatprep.subr.bf16.mxu0 0
        %7117 = vmatpush1.bf16.msra.mxu0 %v6611
        %7118 = vmatprep.subr.bf16.mxu0 0
        %7119 = vmatpush1.bf16.msra.mxu0 %v6612
        %7120 = vmatprep.subr.bf16.mxu0 0
        %7121 = vmatpush1.bf16.msra.mxu0 %v6613
        %7122 = vmatprep.subr.bf16.mxu0 0
        %7123 = vmatpush1.bf16.msra.mxu0 %v6614
        %7124 = vmatprep.subr.bf16.mxu0 0
        %7125 = vmatpush1.bf16.msra.mxu0 %v6615
        %7126 = vmatprep.subr.bf16.mxu0 0
        %7127 = vmatpush1.bf16.msra.mxu0 %v6616
        %7128 = vmatprep.subr.bf16.mxu0 0
        %7129 = vmatpush1.bf16.msra.mxu0 %v6617
        %7130 = vmatprep.subr.bf16.mxu0 0
        %7131 = vmatpush1.bf16.msra.mxu0 %v6618
        %7132 = vmatprep.subr.bf16.mxu0 0
        %7133 = vmatpush1.bf16.msra.mxu0 %v6619
        %7134 = vmatprep.subr.bf16.mxu0 0
        %7135 = vmatpush1.bf16.msra.mxu0 %v6620
        %7136 = vmatprep.mubr.bf16.mxu0 %v5664
        %7137 = vmatmul.mubr.bf16.gmra.mrb[0].mxu0 %v5663
        %v7138 = vpop.f32.mrb[0].mxu0
        %v7139 = vadd.f32 %v7042, %v7138
        %v7140 = vpop.f32.mrb[0].mxu0
        %v7141 = vpop.f32.mrb[0].mxu0
        %v7142 = vadd.f32 %v7045, %v7141
        %v7143 = vpop.f32.mrb[0].mxu0
        %7144 = vmatprep.mubr.bf16.mxu0 %v5680
        %7145 = vmatmul.mubr.bf16.gmra.mrb[0].mxu0 %v5679
        %v7146 = vpop.f32.mrb[0].mxu0
        %v7147 = vadd.f32 %v7050, %v7146
        %v7148 = vpop.f32.mrb[0].mxu0
        %v7149 = vpop.f32.mrb[0].mxu0
        %v7150 = vadd.f32 %v7053, %v7149
        %v7151 = vpop.f32.mrb[0].mxu0
        %7152 = vmatprep.mubr.bf16.mxu0 %v5696
        %7153 = vmatmul.mubr.bf16.gmra.mrb[0].mxu0 %v5695
        %v7154 = vpop.f32.mrb[0].mxu0
        %v7155 = vadd.f32 %v7058, %v7154
        %v7156 = vpop.f32.mrb[0].mxu0
        %v7157 = vpop.f32.mrb[0].mxu0
        %v7158 = vadd.f32 %v7061, %v7157
        %v7159 = vpop.f32.mrb[0].mxu0
        %7160 = vmatprep.mubr.bf16.mxu0 %v5712
        %7161 = vmatmul.mubr.bf16.gmra.mrb[0].mxu0 %v5711
        %v7162 = vpop.f32.mrb[0].mxu0
        %v7163 = vadd.f32 %v7066, %v7162
        %v7164 = vpop.f32.mrb[0].mxu0
        %v7165 = vpop.f32.mrb[0].mxu0
        %v7166 = vadd.f32 %v7069, %v7165
        %v7167 = vpop.f32.mrb[0].mxu0
        %7168 = vmatprep.mubr.bf16.mxu0 %v5728
        %7169 = vmatmul.mubr.bf16.gmra.mrb[0].mxu0 %v5727
        %v7170 = vpop.f32.mrb[0].mxu0
        %v7171 = vadd.f32 %v7074, %v7170
        %v7172 = vpop.f32.mrb[0].mxu0
        %v7173 = vpop.f32.mrb[0].mxu0
        %v7174 = vadd.f32 %v7077, %v7173
        %v7175 = vpop.f32.mrb[0].mxu0
        %7176 = vmatprep.mubr.bf16.mxu0 %v5744
        %7177 = vmatmul.mubr.bf16.gmra.mrb[0].mxu0 %v5743
        %v7178 = vpop.f32.mrb[0].mxu0
        %v7179 = vadd.f32 %v7082, %v7178
        %v7180 = vpop.f32.mrb[0].mxu0
        %v7181 = vpop.f32.mrb[0].mxu0
        %v7182 = vadd.f32 %v7085, %v7181
        %v7183 = vpop.f32.mrb[0].mxu0
        %7184 = vmatprep.mubr.bf16.mxu0 %v5760
        %7185 = vmatmul.mubr.bf16.gmra.mrb[0].mxu0 %v5759
        %v7186 = vpop.f32.mrb[0].mxu0
        %v7187 = vadd.f32 %v7090, %v7186
        %v7188 = vpop.f32.mrb[0].mxu0
        %v7189 = vpop.f32.mrb[0].mxu0
        %v7190 = vadd.f32 %v7093, %v7189
        %v7191 = vpop.f32.mrb[0].mxu0
        %7192 = vmatprep.mubr.bf16.mxu0 %v5776
        %7193 = vmatmul.mubr.bf16.gmra.mrb[0].mxu0 %v5775
        %v7194 = vpop.f32.mrb[0].mxu0
        %v7195 = vadd.f32 %v7098, %v7194
        %v7196 = vpop.f32.mrb[0].mxu0
        %v7197 = vpop.f32.mrb[0].mxu0
        %v7198 = vadd.f32 %v7101, %v7197
        %v7199 = vpop.f32.mrb[0].mxu0
        %7200 = vdwg.mxu0
        %7201 = vmatprep.subr.bf16.mxu0 0
        %7202 = vmatpush1.bf16.msra.mxu0 %v6621
        %7203 = vmatprep.subr.bf16.mxu0 0
        %7204 = vmatpush1.bf16.msra.mxu0 %v6622
        %7205 = vmatprep.subr.bf16.mxu0 0
        %7206 = vmatpush1.bf16.msra.mxu0 %v6623
        %7207 = vmatprep.subr.bf16.mxu0 0
        %7208 = vmatpush1.bf16.msra.mxu0 %v6624
        %7209 = vmatprep.subr.bf16.mxu0 0
        %7210 = vmatpush1.bf16.msra.mxu0 %v6625
        %7211 = vmatprep.subr.bf16.mxu0 0
        %7212 = vmatpush1.bf16.msra.mxu0 %v6626
        %7213 = vmatprep.subr.bf16.mxu0 0
        %7214 = vmatpush1.bf16.msra.mxu0 %v6627
        %7215 = vmatprep.subr.bf16.mxu0 0
        %7216 = vmatpush1.bf16.msra.mxu0 %v6628
        %7217 = vmatprep.subr.bf16.mxu0 0
        %7218 = vmatpush1.bf16.msra.mxu0 %v6629
        %7219 = vmatprep.subr.bf16.mxu0 0
        %7220 = vmatpush1.bf16.msra.mxu0 %v6630
        %7221 = vmatprep.subr.bf16.mxu0 0
        %7222 = vmatpush1.bf16.msra.mxu0 %v6631
        %7223 = vmatprep.subr.bf16.mxu0 0
        %7224 = vmatpush1.bf16.msra.mxu0 %v6632
        %7225 = vmatprep.subr.bf16.mxu0 0
        %7226 = vmatpush1.bf16.msra.mxu0 %v6633
        %7227 = vmatprep.subr.bf16.mxu0 0
        %7228 = vmatpush1.bf16.msra.mxu0 %v6634
        %7229 = vmatprep.subr.bf16.mxu0 0
        %7230 = vmatpush1.bf16.msra.mxu0 %v6635
        %7231 = vmatprep.subr.bf16.mxu0 0
        %7232 = vmatpush1.bf16.msra.mxu0 %v6636
        %7233 = vmatprep.mubr.bf16.mxu0 %v5666
        %7234 = vmatmul.mubr.bf16.gmra.mrb[0].mxu0 %v5665
        %v7235 = vpop.f32.mrb[0].mxu0
        %v7236 = vadd.f32 %v7139, %v7235
        %v7237 = vpop.f32.mrb[0].mxu0
        %v7238 = vpop.f32.mrb[0].mxu0
        %v7239 = vadd.f32 %v7142, %v7238
        %v7240 = vpop.f32.mrb[0].mxu0
        %7241 = vmatprep.mubr.bf16.mxu0 %v5682
        %7242 = vmatmul.mubr.bf16.gmra.mrb[0].mxu0 %v5681
        %v7243 = vpop.f32.mrb[0].mxu0
        %v7244 = vadd.f32 %v7147, %v7243
        %v7245 = vpop.f32.mrb[0].mxu0
        %v7246 = vpop.f32.mrb[0].mxu0
        %v7247 = vadd.f32 %v7150, %v7246
        %v7248 = vpop.f32.mrb[0].mxu0
        %7249 = vmatprep.mubr.bf16.mxu0 %v5698
        %7250 = vmatmul.mubr.bf16.gmra.mrb[0].mxu0 %v5697
        %v7251 = vpop.f32.mrb[0].mxu0
        %v7252 = vadd.f32 %v7155, %v7251
        %v7253 = vpop.f32.mrb[0].mxu0
        %v7254 = vpop.f32.mrb[0].mxu0
        %v7255 = vadd.f32 %v7158, %v7254
        %v7256 = vpop.f32.mrb[0].mxu0
        %7257 = vmatprep.mubr.bf16.mxu0 %v5714
        %7258 = vmatmul.mubr.bf16.gmra.mrb[0].mxu0 %v5713
        %v7259 = vpop.f32.mrb[0].mxu0
        %v7260 = vadd.f32 %v7163, %v7259
        %v7261 = vpop.f32.mrb[0].mxu0
        %v7262 = vpop.f32.mrb[0].mxu0
        %v7263 = vadd.f32 %v7166, %v7262
        %v7264 = vpop.f32.mrb[0].mxu0
        %7265 = vmatprep.mubr.bf16.mxu0 %v5730
        %7266 = vmatmul.mubr.bf16.gmra.mrb[0].mxu0 %v5729
        %v7267 = vpop.f32.mrb[0].mxu0
        %v7268 = vadd.f32 %v7171, %v7267
        %v7269 = vpop.f32.mrb[0].mxu0
        %v7270 = vpop.f32.mrb[0].mxu0
        %v7271 = vadd.f32 %v7174, %v7270
        %v7272 = vpop.f32.mrb[0].mxu0
        %7273 = vmatprep.mubr.bf16.mxu0 %v5746
        %7274 = vmatmul.mubr.bf16.gmra.mrb[0].mxu0 %v5745
        %v7275 = vpop.f32.mrb[0].mxu0
        %v7276 = vadd.f32 %v7179, %v7275
        %v7277 = vpop.f32.mrb[0].mxu0
        %v7278 = vpop.f32.mrb[0].mxu0
        %v7279 = vadd.f32 %v7182, %v7278
        %v7280 = vpop.f32.mrb[0].mxu0
        %7281 = vmatprep.mubr.bf16.mxu0 %v5762
        %7282 = vmatmul.mubr.bf16.gmra.mrb[0].mxu0 %v5761
        %v7283 = vpop.f32.mrb[0].mxu0
        %v7284 = vadd.f32 %v7187, %v7283
        %v7285 = vpop.f32.mrb[0].mxu0
        %v7286 = vpop.f32.mrb[0].mxu0
        %v7287 = vadd.f32 %v7190, %v7286
        %v7288 = vpop.f32.mrb[0].mxu0
        %7289 = vmatprep.mubr.bf16.mxu0 %v5778
        %7290 = vmatmul.mubr.bf16.gmra.mrb[0].mxu0 %v5777
        %v7291 = vpop.f32.mrb[0].mxu0
        %v7292 = vadd.f32 %v7195, %v7291
        %v7293 = vpop.f32.mrb[0].mxu0
        %v7294 = vpop.f32.mrb[0].mxu0
        %v7295 = vadd.f32 %v7198, %v7294
        %v7296 = vpop.f32.mrb[0].mxu0
        %7297 = vdwg.mxu0
        %7298 = vmatprep.subr.bf16.mxu0 0
        %7299 = vmatpush1.bf16.msra.mxu0 %v6637
        %7300 = vmatprep.subr.bf16.mxu0 0
        %7301 = vmatpush1.bf16.msra.mxu0 %v6638
        %7302 = vmatprep.subr.bf16.mxu0 0
        %7303 = vmatpush1.bf16.msra.mxu0 %v6639
        %7304 = vmatprep.subr.bf16.mxu0 0
        %7305 = vmatpush1.bf16.msra.mxu0 %v6640
        %7306 = vmatprep.subr.bf16.mxu0 0
        %7307 = vmatpush1.bf16.msra.mxu0 %v6641
        %7308 = vmatprep.subr.bf16.mxu0 0
        %7309 = vmatpush1.bf16.msra.mxu0 %v6642
        %7310 = vmatprep.subr.bf16.mxu0 0
        %7311 = vmatpush1.bf16.msra.mxu0 %v6643
        %7312 = vmatprep.subr.bf16.mxu0 0
        %7313 = vmatpush1.bf16.msra.mxu0 %v6644
        %7314 = vmatprep.subr.bf16.mxu0 0
        %7315 = vmatpush1.bf16.msra.mxu0 %v6645
        %7316 = vmatprep.subr.bf16.mxu0 0
        %7317 = vmatpush1.bf16.msra.mxu0 %v6646
        %7318 = vmatprep.subr.bf16.mxu0 0
        %7319 = vmatpush1.bf16.msra.mxu0 %v6647
        %7320 = vmatprep.subr.bf16.mxu0 0
        %7321 = vmatpush1.bf16.msra.mxu0 %v6648
        %7322 = vmatprep.subr.bf16.mxu0 0
        %7323 = vmatpush1.bf16.msra.mxu0 %v6649
        %7324 = vmatprep.subr.bf16.mxu0 0
        %7325 = vmatpush1.bf16.msra.mxu0 %v6650
        %7326 = vmatprep.subr.bf16.mxu0 0
        %7327 = vmatpush1.bf16.msra.mxu0 %v6651
        %7328 = vmatprep.subr.bf16.mxu0 0
        %7329 = vmatpush1.bf16.msra.mxu0 %v6652
        %7330 = vmatprep.mubr.bf16.mxu0 %v5668
        %7331 = vmatmul.mubr.bf16.gmra.mrb[0].mxu0 %v5667
        %v7332 = vpop.f32.mrb[0].mxu0
        %v7333 = vadd.f32 %v7236, %v7332
        %v7334 = vpop.f32.mrb[0].mxu0
        %v7335 = vpop.f32.mrb[0].mxu0
        %v7336 = vadd.f32 %v7239, %v7335
        %v7337 = vpop.f32.mrb[0].mxu0
        %7338 = vmatprep.mubr.bf16.mxu0 %v5684
        %7339 = vmatmul.mubr.bf16.gmra.mrb[0].mxu0 %v5683
        %v7340 = vpop.f32.mrb[0].mxu0
        %v7341 = vadd.f32 %v7244, %v7340
        %v7342 = vpop.f32.mrb[0].mxu0
        %v7343 = vpop.f32.mrb[0].mxu0
        %v7344 = vadd.f32 %v7247, %v7343
        %v7345 = vpop.f32.mrb[0].mxu0
        %7346 = vmatprep.mubr.bf16.mxu0 %v5700
        %7347 = vmatmul.mubr.bf16.gmra.mrb[0].mxu0 %v5699
        %v7348 = vpop.f32.mrb[0].mxu0
        %v7349 = vadd.f32 %v7252, %v7348
        %v7350 = vpop.f32.mrb[0].mxu0
        %v7351 = vpop.f32.mrb[0].mxu0
        %v7352 = vadd.f32 %v7255, %v7351
        %v7353 = vpop.f32.mrb[0].mxu0
        %7354 = vmatprep.mubr.bf16.mxu0 %v5716
        %7355 = vmatmul.mubr.bf16.gmra.mrb[0].mxu0 %v5715
        %v7356 = vpop.f32.mrb[0].mxu0
        %v7357 = vadd.f32 %v7260, %v7356
        %v7358 = vpop.f32.mrb[0].mxu0
        %v7359 = vpop.f32.mrb[0].mxu0
        %v7360 = vadd.f32 %v7263, %v7359
        %v7361 = vpop.f32.mrb[0].mxu0
        %7362 = vmatprep.mubr.bf16.mxu0 %v5732
        %7363 = vmatmul.mubr.bf16.gmra.mrb[0].mxu0 %v5731
        %v7364 = vpop.f32.mrb[0].mxu0
        %v7365 = vadd.f32 %v7268, %v7364
        %v7366 = vpop.f32.mrb[0].mxu0
        %v7367 = vpop.f32.mrb[0].mxu0
        %v7368 = vadd.f32 %v7271, %v7367
        %v7369 = vpop.f32.mrb[0].mxu0
        %7370 = vmatprep.mubr.bf16.mxu0 %v5748
        %7371 = vmatmul.mubr.bf16.gmra.mrb[0].mxu0 %v5747
        %v7372 = vpop.f32.mrb[0].mxu0
        %v7373 = vadd.f32 %v7276, %v7372
        %v7374 = vpop.f32.mrb[0].mxu0
        %v7375 = vpop.f32.mrb[0].mxu0
        %v7376 = vadd.f32 %v7279, %v7375
        %v7377 = vpop.f32.mrb[0].mxu0
        %7378 = vmatprep.mubr.bf16.mxu0 %v5764
        %7379 = vmatmul.mubr.bf16.gmra.mrb[0].mxu0 %v5763
        %v7380 = vpop.f32.mrb[0].mxu0
        %v7381 = vadd.f32 %v7284, %v7380
        %v7382 = vpop.f32.mrb[0].mxu0
        %v7383 = vpop.f32.mrb[0].mxu0
        %v7384 = vadd.f32 %v7287, %v7383
        %v7385 = vpop.f32.mrb[0].mxu0
        %7386 = vmatprep.mubr.bf16.mxu0 %v5780
        %7387 = vmatmul.mubr.bf16.gmra.mrb[0].mxu0 %v5779
        %v7388 = vpop.f32.mrb[0].mxu0
        %v7389 = vadd.f32 %v7292, %v7388
        %v7390 = vpop.f32.mrb[0].mxu0
        %v7391 = vpop.f32.mrb[0].mxu0
        %v7392 = vadd.f32 %v7295, %v7391
        %v7393 = vpop.f32.mrb[0].mxu0
        %7394 = vdwg.mxu0
        %7395 = vmatprep.subr.bf16.mxu0 0
        %7396 = vmatpush1.bf16.msra.mxu0 %v6653
        %7397 = vmatprep.subr.bf16.mxu0 0
        %7398 = vmatpush1.bf16.msra.mxu0 %v6654
        %7399 = vmatprep.subr.bf16.mxu0 0
        %7400 = vmatpush1.bf16.msra.mxu0 %v6655
        %7401 = vmatprep.subr.bf16.mxu0 0
        %7402 = vmatpush1.bf16.msra.mxu0 %v6656
        %7403 = vmatprep.subr.bf16.mxu0 0
        %7404 = vmatpush1.bf16.msra.mxu0 %v6657
        %7405 = vmatprep.subr.bf16.mxu0 0
        %7406 = vmatpush1.bf16.msra.mxu0 %v6658
        %7407 = vmatprep.subr.bf16.mxu0 0
        %7408 = vmatpush1.bf16.msra.mxu0 %v6659
        %7409 = vmatprep.subr.bf16.mxu0 0
        %7410 = vmatpush1.bf16.msra.mxu0 %v6660
        %7411 = vmatprep.subr.bf16.mxu0 0
        %7412 = vmatpush1.bf16.msra.mxu0 %v6661
        %7413 = vmatprep.subr.bf16.mxu0 0
        %7414 = vmatpush1.bf16.msra.mxu0 %v6662
        %7415 = vmatprep.subr.bf16.mxu0 0
        %7416 = vmatpush1.bf16.msra.mxu0 %v6663
        %7417 = vmatprep.subr.bf16.mxu0 0
        %7418 = vmatpush1.bf16.msra.mxu0 %v6664
        %7419 = vmatprep.subr.bf16.mxu0 0
        %7420 = vmatpush1.bf16.msra.mxu0 %v6665
        %7421 = vmatprep.subr.bf16.mxu0 0
        %7422 = vmatpush1.bf16.msra.mxu0 %v6666
        %7423 = vmatprep.subr.bf16.mxu0 0
        %7424 = vmatpush1.bf16.msra.mxu0 %v6667
        %7425 = vmatprep.subr.bf16.mxu0 0
        %7426 = vmatpush1.bf16.msra.mxu0 %v6668
        %7427 = vmatprep.mubr.bf16.mxu0 %v5670
        %7428 = vmatmul.mubr.bf16.gmra.mrb[0].mxu0 %v5669
        %v7429 = vpop.f32.mrb[0].mxu0
        %v7430 = vadd.f32 %v7333, %v7429
        %v7431 = vpop.f32.mrb[0].mxu0
        %v7432 = vpop.f32.mrb[0].mxu0
        %v7433 = vadd.f32 %v7336, %v7432
        %v7434 = vpop.f32.mrb[0].mxu0
        %7435 = vmatprep.mubr.bf16.mxu0 %v5686
        %7436 = vmatmul.mubr.bf16.gmra.mrb[0].mxu0 %v5685
        %v7437 = vpop.f32.mrb[0].mxu0
        %v7438 = vadd.f32 %v7341, %v7437
        %v7439 = vpop.f32.mrb[0].mxu0
        %v7440 = vpop.f32.mrb[0].mxu0
        %v7441 = vadd.f32 %v7344, %v7440
        %v7442 = vpop.f32.mrb[0].mxu0
        %7443 = vmatprep.mubr.bf16.mxu0 %v5702
        %7444 = vmatmul.mubr.bf16.gmra.mrb[0].mxu0 %v5701
        %v7445 = vpop.f32.mrb[0].mxu0
        %v7446 = vadd.f32 %v7349, %v7445
        %v7447 = vpop.f32.mrb[0].mxu0
        %v7448 = vpop.f32.mrb[0].mxu0
        %v7449 = vadd.f32 %v7352, %v7448
        %v7450 = vpop.f32.mrb[0].mxu0
        %7451 = vmatprep.mubr.bf16.mxu0 %v5718
        %7452 = vmatmul.mubr.bf16.gmra.mrb[0].mxu0 %v5717
        %v7453 = vpop.f32.mrb[0].mxu0
        %v7454 = vadd.f32 %v7357, %v7453
        %v7455 = vpop.f32.mrb[0].mxu0
        %v7456 = vpop.f32.mrb[0].mxu0
        %v7457 = vadd.f32 %v7360, %v7456
        %v7458 = vpop.f32.mrb[0].mxu0
        %7459 = vmatprep.mubr.bf16.mxu0 %v5734
        %7460 = vmatmul.mubr.bf16.gmra.mrb[0].mxu0 %v5733
        %v7461 = vpop.f32.mrb[0].mxu0
        %v7462 = vadd.f32 %v7365, %v7461
        %v7463 = vpop.f32.mrb[0].mxu0
        %v7464 = vpop.f32.mrb[0].mxu0
        %v7465 = vadd.f32 %v7368, %v7464
        %v7466 = vpop.f32.mrb[0].mxu0
        %7467 = vmatprep.mubr.bf16.mxu0 %v5750
        %7468 = vmatmul.mubr.bf16.gmra.mrb[0].mxu0 %v5749
        %v7469 = vpop.f32.mrb[0].mxu0
        %v7470 = vadd.f32 %v7373, %v7469
        %v7471 = vpop.f32.mrb[0].mxu0
        %v7472 = vpop.f32.mrb[0].mxu0
        %v7473 = vadd.f32 %v7376, %v7472
        %v7474 = vpop.f32.mrb[0].mxu0
        %7475 = vmatprep.mubr.bf16.mxu0 %v5766
        %7476 = vmatmul.mubr.bf16.gmra.mrb[0].mxu0 %v5765
        %v7477 = vpop.f32.mrb[0].mxu0
        %v7478 = vadd.f32 %v7381, %v7477
        %v7479 = vpop.f32.mrb[0].mxu0
        %v7480 = vpop.f32.mrb[0].mxu0
        %v7481 = vadd.f32 %v7384, %v7480
        %v7482 = vpop.f32.mrb[0].mxu0
        %7483 = vmatprep.mubr.bf16.mxu0 %v5782
        %7484 = vmatmul.mubr.bf16.gmra.mrb[0].mxu0 %v5781
        %v7485 = vpop.f32.mrb[0].mxu0
        %v7486 = vadd.f32 %v7389, %v7485
        %v7487 = vpop.f32.mrb[0].mxu0
        %v7488 = vpop.f32.mrb[0].mxu0
        %v7489 = vadd.f32 %v7392, %v7488
        %v7490 = vpop.f32.mrb[0].mxu0
        %7491 = vdwg.mxu0
        %7492 = vmatprep.subr.bf16.mxu0 0
        %7493 = vmatpush1.bf16.msra.mxu0 %v6669
        %7494 = vmatprep.subr.bf16.mxu0 0
        %7495 = vmatpush1.bf16.msra.mxu0 %v6670
        %7496 = vmatprep.subr.bf16.mxu0 0
        %7497 = vmatpush1.bf16.msra.mxu0 %v6671
        %7498 = vmatprep.subr.bf16.mxu0 0
        %7499 = vmatpush1.bf16.msra.mxu0 %v6672
        %7500 = vmatprep.subr.bf16.mxu0 0
        %7501 = vmatpush1.bf16.msra.mxu0 %v6673
        %7502 = vmatprep.subr.bf16.mxu0 0
        %7503 = vmatpush1.bf16.msra.mxu0 %v6674
        %7504 = vmatprep.subr.bf16.mxu0 0
        %7505 = vmatpush1.bf16.msra.mxu0 %v6675
        %7506 = vmatprep.subr.bf16.mxu0 0
        %7507 = vmatpush1.bf16.msra.mxu0 %v6676
        %7508 = vmatprep.subr.bf16.mxu0 0
        %7509 = vmatpush1.bf16.msra.mxu0 %v6677
        %7510 = vmatprep.subr.bf16.mxu0 0
        %7511 = vmatpush1.bf16.msra.mxu0 %v6678
        %7512 = vmatprep.subr.bf16.mxu0 0
        %7513 = vmatpush1.bf16.msra.mxu0 %v6679
        %7514 = vmatprep.subr.bf16.mxu0 0
        %7515 = vmatpush1.bf16.msra.mxu0 %v6680
        %7516 = vmatprep.subr.bf16.mxu0 0
        %7517 = vmatpush1.bf16.msra.mxu0 %v6681
        %7518 = vmatprep.subr.bf16.mxu0 0
        %7519 = vmatpush1.bf16.msra.mxu0 %v6682
        %7520 = vmatprep.subr.bf16.mxu0 0
        %7521 = vmatpush1.bf16.msra.mxu0 %v6683
        %7522 = vmatprep.subr.bf16.mxu0 0
        %7523 = vmatpush1.bf16.msra.mxu0 %v6684
        %7524 = vmatprep.mubr.bf16.mxu0 %v5672
        %7525 = vmatmul.mubr.bf16.gmra.mrb[0].mxu0 %v5671
        %v7526 = vpop.f32.mrb[0].mxu0
        %v7527 = vadd.f32 %v7430, %v7526
        %v7528 = vpop.f32.mrb[0].mxu0
        %v7529 = vpop.f32.mrb[0].mxu0
        %v7530 = vadd.f32 %v7433, %v7529
        %v7531 = vpop.f32.mrb[0].mxu0
        %7532 = vmatprep.mubr.bf16.mxu0 %v5688
        %7533 = vmatmul.mubr.bf16.gmra.mrb[0].mxu0 %v5687
        %v7534 = vpop.f32.mrb[0].mxu0
        %v7535 = vadd.f32 %v7438, %v7534
        %v7536 = vpop.f32.mrb[0].mxu0
        %v7537 = vpop.f32.mrb[0].mxu0
        %v7538 = vadd.f32 %v7441, %v7537
        %v7539 = vpop.f32.mrb[0].mxu0
        %7540 = vmatprep.mubr.bf16.mxu0 %v5704
        %7541 = vmatmul.mubr.bf16.gmra.mrb[0].mxu0 %v5703
        %v7542 = vpop.f32.mrb[0].mxu0
        %v7543 = vadd.f32 %v7446, %v7542
        %v7544 = vpop.f32.mrb[0].mxu0
        %v7545 = vpop.f32.mrb[0].mxu0
        %v7546 = vadd.f32 %v7449, %v7545
        %v7547 = vpop.f32.mrb[0].mxu0
        %7548 = vmatprep.mubr.bf16.mxu0 %v5720
        %7549 = vmatmul.mubr.bf16.gmra.mrb[0].mxu0 %v5719
        %v7550 = vpop.f32.mrb[0].mxu0
        %v7551 = vadd.f32 %v7454, %v7550
        %v7552 = vpop.f32.mrb[0].mxu0
        %v7553 = vpop.f32.mrb[0].mxu0
        %v7554 = vadd.f32 %v7457, %v7553
        %v7555 = vpop.f32.mrb[0].mxu0
        %7556 = vmatprep.mubr.bf16.mxu0 %v5736
        %7557 = vmatmul.mubr.bf16.gmra.mrb[0].mxu0 %v5735
        %v7558 = vpop.f32.mrb[0].mxu0
        %v7559 = vadd.f32 %v7462, %v7558
        %v7560 = vpop.f32.mrb[0].mxu0
        %v7561 = vpop.f32.mrb[0].mxu0
        %v7562 = vadd.f32 %v7465, %v7561
        %v7563 = vpop.f32.mrb[0].mxu0
        %7564 = vmatprep.mubr.bf16.mxu0 %v5752
        %7565 = vmatmul.mubr.bf16.gmra.mrb[0].mxu0 %v5751
        %v7566 = vpop.f32.mrb[0].mxu0
        %v7567 = vadd.f32 %v7470, %v7566
        %v7568 = vpop.f32.mrb[0].mxu0
        %v7569 = vpop.f32.mrb[0].mxu0
        %v7570 = vadd.f32 %v7473, %v7569
        %v7571 = vpop.f32.mrb[0].mxu0
        %7572 = vmatprep.mubr.bf16.mxu0 %v5768
        %7573 = vmatmul.mubr.bf16.gmra.mrb[0].mxu0 %v5767
        %v7574 = vpop.f32.mrb[0].mxu0
        %v7575 = vadd.f32 %v7478, %v7574
        %v7576 = vpop.f32.mrb[0].mxu0
        %v7577 = vpop.f32.mrb[0].mxu0
        %v7578 = vadd.f32 %v7481, %v7577
        %v7579 = vpop.f32.mrb[0].mxu0
        %7580 = vmatprep.mubr.bf16.mxu0 %v5784
        %7581 = vmatmul.mubr.bf16.gmra.mrb[0].mxu0 %v5783
        %v7582 = vpop.f32.mrb[0].mxu0
        %v7583 = vadd.f32 %v7486, %v7582
        %v7584 = vpop.f32.mrb[0].mxu0
        %v7585 = vpop.f32.mrb[0].mxu0
        %v7586 = vadd.f32 %v7489, %v7585
        %v7587 = vpop.f32.mrb[0].mxu0
        %7588 = vdwg.mxu0
        %v7589 = vadd.f32 %v4173, %v7527
        %v7590 = vadd.f32 %v4174, %v7530
        %v7591 = vadd.f32 %v4175, %v7535
        %v7592 = vadd.f32 %v4176, %v7538
        %v7593 = vadd.f32 %v4177, %v7543
        %v7594 = vadd.f32 %v4178, %v7546
        %v7595 = vadd.f32 %v4179, %v7551
        %v7596 = vadd.f32 %v4180, %v7554
        %v7597 = vadd.f32 %v4181, %v7559
        %v7598 = vadd.f32 %v4182, %v7562
        %v7599 = vadd.f32 %v4183, %v7567
        %v7600 = vadd.f32 %v4184, %v7570
        %v7601 = vadd.f32 %v4185, %v7575
        %v7602 = vadd.f32 %v4186, %v7578
        %v7603 = vadd.f32 %v4187, %v7583
        %v7604 = vadd.f32 %v4188, %v7586
        %v7605 = vsel %vm762, %v7589, 0.0
        %7606 = vadd.xlane.f32.xlu0 %v7605
        %v7607 = vpop.xlane.xlu0 %7606
        %v7608 = vsel %vm762, %v7590, 0.0
        %7609 = vadd.xlane.f32.xlu0 %v7608
        %v7610 = vpop.xlane.xlu0 %7609
        %v7611 = vsel %vm762, %v7591, 0.0
        %7612 = vadd.xlane.f32.xlu0 %v7611
        %v7613 = vpop.xlane.xlu0 %7612
        %v7614 = vsel %vm762, %v7592, 0.0
        %7615 = vadd.xlane.f32.xlu0 %v7614
        %v7616 = vpop.xlane.xlu0 %7615
        %v7617 = vsel %vm762, %v7593, 0.0
        %7618 = vadd.xlane.f32.xlu0 %v7617
        %v7619 = vpop.xlane.xlu0 %7618
        %v7620 = vsel %vm762, %v7594, 0.0
        %7621 = vadd.xlane.f32.xlu0 %v7620
        %v7622 = vpop.xlane.xlu0 %7621
        %v7623 = vsel %vm762, %v7595, 0.0
        %7624 = vadd.xlane.f32.xlu0 %v7623
        %v7625 = vpop.xlane.xlu0 %7624
        %v7626 = vsel %vm762, %v7596, 0.0
        %7627 = vadd.xlane.f32.xlu0 %v7626
        %v7628 = vpop.xlane.xlu0 %7627
        %v7629 = vsel %vm762, %v7597, 0.0
        %7630 = vadd.xlane.f32.xlu0 %v7629
        %v7631 = vpop.xlane.xlu0 %7630
        %v7632 = vsel %vm762, %v7598, 0.0
        %7633 = vadd.xlane.f32.xlu0 %v7632
        %v7634 = vpop.xlane.xlu0 %7633
        %v7635 = vsel %vm762, %v7599, 0.0
        %7636 = vadd.xlane.f32.xlu0 %v7635
        %v7637 = vpop.xlane.xlu0 %7636
        %v7638 = vsel %vm762, %v7600, 0.0
        %7639 = vadd.xlane.f32.xlu0 %v7638
        %v7640 = vpop.xlane.xlu0 %7639
        %v7641 = vsel %vm762, %v7601, 0.0
        %7642 = vadd.xlane.f32.xlu0 %v7641
        %v7643 = vpop.xlane.xlu0 %7642
        %v7644 = vsel %vm762, %v7602, 0.0
        %7645 = vadd.xlane.f32.xlu0 %v7644
        %v7646 = vpop.xlane.xlu0 %7645
        %v7647 = vsel %vm762, %v7603, 0.0
        %7648 = vadd.xlane.f32.xlu0 %v7647
        %v7649 = vpop.xlane.xlu0 %7648
        %v7650 = vsel %vm762, %v7604, 0.0
        %7651 = vadd.xlane.f32.xlu0 %v7650
        %v7652 = vpop.xlane.xlu0 %7651
        %v7653 = vmul.f32 %v7607, %v3988
        %v7654 = vmul.f32 %v7610, %v3988
        %v7655 = vmul.f32 %v7613, %v3988
        %v7656 = vmul.f32 %v7616, %v3988
        %v7657 = vmul.f32 %v7619, %v3988
        %v7658 = vmul.f32 %v7622, %v3988
        %v7659 = vmul.f32 %v7625, %v3988
        %v7660 = vmul.f32 %v7628, %v3988
        %v7661 = vmul.f32 %v7631, %v3988
        %v7662 = vmul.f32 %v7634, %v3988
        %v7663 = vmul.f32 %v7637, %v3988
        %v7664 = vmul.f32 %v7640, %v3988
        %v7665 = vmul.f32 %v7643, %v3988
        %v7666 = vmul.f32 %v7646, %v3988
        %v7667 = vmul.f32 %v7649, %v3988
        %v7668 = vmul.f32 %v7652, %v3988
        %v7669 = vsub.f32 %v7589, %v7653
        %v7670 = vsub.f32 %v7590, %v7654
        %v7671 = vsub.f32 %v7591, %v7655
        %v7672 = vsub.f32 %v7592, %v7656
        %v7673 = vsub.f32 %v7593, %v7657
        %v7674 = vsub.f32 %v7594, %v7658
        %v7675 = vsub.f32 %v7595, %v7659
        %v7676 = vsub.f32 %v7596, %v7660
        %v7677 = vsub.f32 %v7597, %v7661
        %v7678 = vsub.f32 %v7598, %v7662
        %v7679 = vsub.f32 %v7599, %v7663
        %v7680 = vsub.f32 %v7600, %v7664
        %v7681 = vsub.f32 %v7601, %v7665
        %v7682 = vsub.f32 %v7602, %v7666
        %v7683 = vsub.f32 %v7603, %v7667
        %v7684 = vsub.f32 %v7604, %v7668
        %v7685 = vmul.f32 %v7669, %v7669
        %v7686 = vmul.f32 %v7670, %v7670
        %v7687 = vmul.f32 %v7671, %v7671
        %v7688 = vmul.f32 %v7672, %v7672
        %v7689 = vmul.f32 %v7673, %v7673
        %v7690 = vmul.f32 %v7674, %v7674
        %v7691 = vmul.f32 %v7675, %v7675
        %v7692 = vmul.f32 %v7676, %v7676
        %v7693 = vmul.f32 %v7677, %v7677
        %v7694 = vmul.f32 %v7678, %v7678
        %v7695 = vmul.f32 %v7679, %v7679
        %v7696 = vmul.f32 %v7680, %v7680
        %v7697 = vmul.f32 %v7681, %v7681
        %v7698 = vmul.f32 %v7682, %v7682
        %v7699 = vmul.f32 %v7683, %v7683
        %v7700 = vmul.f32 %v7684, %v7684
        %v7701 = vsel %vm762, %v7685, 0.0
        %7702 = vadd.xlane.f32.xlu0 %v7701
        %v7703 = vpop.xlane.xlu0 %7702
        %v7704 = vsel %vm762, %v7686, 0.0
        %7705 = vadd.xlane.f32.xlu0 %v7704
        %v7706 = vpop.xlane.xlu0 %7705
        %v7707 = vsel %vm762, %v7687, 0.0
        %7708 = vadd.xlane.f32.xlu0 %v7707
        %v7709 = vpop.xlane.xlu0 %7708
        %v7710 = vsel %vm762, %v7688, 0.0
        %7711 = vadd.xlane.f32.xlu0 %v7710
        %v7712 = vpop.xlane.xlu0 %7711
        %v7713 = vsel %vm762, %v7689, 0.0
        %7714 = vadd.xlane.f32.xlu0 %v7713
        %v7715 = vpop.xlane.xlu0 %7714
        %v7716 = vsel %vm762, %v7690, 0.0
        %7717 = vadd.xlane.f32.xlu0 %v7716
        %v7718 = vpop.xlane.xlu0 %7717
        %v7719 = vsel %vm762, %v7691, 0.0
        %7720 = vadd.xlane.f32.xlu0 %v7719
        %v7721 = vpop.xlane.xlu0 %7720
        %v7722 = vsel %vm762, %v7692, 0.0
        %7723 = vadd.xlane.f32.xlu0 %v7722
        %v7724 = vpop.xlane.xlu0 %7723
        %v7725 = vsel %vm762, %v7693, 0.0
        %7726 = vadd.xlane.f32.xlu0 %v7725
        %v7727 = vpop.xlane.xlu0 %7726
        %v7728 = vsel %vm762, %v7694, 0.0
        %7729 = vadd.xlane.f32.xlu0 %v7728
        %v7730 = vpop.xlane.xlu0 %7729
        %v7731 = vsel %vm762, %v7695, 0.0
        %7732 = vadd.xlane.f32.xlu0 %v7731
        %v7733 = vpop.xlane.xlu0 %7732
        %v7734 = vsel %vm762, %v7696, 0.0
        %7735 = vadd.xlane.f32.xlu0 %v7734
        %v7736 = vpop.xlane.xlu0 %7735
        %v7737 = vsel %vm762, %v7697, 0.0
        %7738 = vadd.xlane.f32.xlu0 %v7737
        %v7739 = vpop.xlane.xlu0 %7738
        %v7740 = vsel %vm762, %v7698, 0.0
        %7741 = vadd.xlane.f32.xlu0 %v7740
        %v7742 = vpop.xlane.xlu0 %7741
        %v7743 = vsel %vm762, %v7699, 0.0
        %7744 = vadd.xlane.f32.xlu0 %v7743
        %v7745 = vpop.xlane.xlu0 %7744
        %v7746 = vsel %vm762, %v7700, 0.0
        %7747 = vadd.xlane.f32.xlu0 %v7746
        %v7748 = vpop.xlane.xlu0 %7747
        %v7749 = vmul.f32 %v7703, %v3988
        %v7750 = vmul.f32 %v7706, %v3988
        %v7751 = vmul.f32 %v7709, %v3988
        %v7752 = vmul.f32 %v7712, %v3988
        %v7753 = vmul.f32 %v7715, %v3988
        %v7754 = vmul.f32 %v7718, %v3988
        %v7755 = vmul.f32 %v7721, %v3988
        %v7756 = vmul.f32 %v7724, %v3988
        %v7757 = vmul.f32 %v7727, %v3988
        %v7758 = vmul.f32 %v7730, %v3988
        %v7759 = vmul.f32 %v7733, %v3988
        %v7760 = vmul.f32 %v7736, %v3988
        %v7761 = vmul.f32 %v7739, %v3988
        %v7762 = vmul.f32 %v7742, %v3988
        %v7763 = vmul.f32 %v7745, %v3988
        %v7764 = vmul.f32 %v7748, %v3988
        %v7765 = vadd.f32 %v7749, 1e-05
        %v7766 = vadd.f32 %v7750, 1e-05
        %v7767 = vadd.f32 %v7751, 1e-05
        %v7768 = vadd.f32 %v7752, 1e-05
        %v7769 = vadd.f32 %v7753, 1e-05
        %v7770 = vadd.f32 %v7754, 1e-05
        %v7771 = vadd.f32 %v7755, 1e-05
        %v7772 = vadd.f32 %v7756, 1e-05
        %v7773 = vadd.f32 %v7757, 1e-05
        %v7774 = vadd.f32 %v7758, 1e-05
        %v7775 = vadd.f32 %v7759, 1e-05
        %v7776 = vadd.f32 %v7760, 1e-05
        %v7777 = vadd.f32 %v7761, 1e-05
        %v7778 = vadd.f32 %v7762, 1e-05
        %v7779 = vadd.f32 %v7763, 1e-05
        %v7780 = vadd.f32 %v7764, 1e-05
        %v7781 = vrsqrt.pop %v7765
        %v7782 = vrsqrt.pop %v7766
        %v7783 = vrsqrt.pop %v7767
        %v7784 = vrsqrt.pop %v7768
        %v7785 = vrsqrt.pop %v7769
        %v7786 = vrsqrt.pop %v7770
        %v7787 = vrsqrt.pop %v7771
        %v7788 = vrsqrt.pop %v7772
        %v7789 = vrsqrt.pop %v7773
        %v7790 = vrsqrt.pop %v7774
        %v7791 = vrsqrt.pop %v7775
        %v7792 = vrsqrt.pop %v7776
        %v7793 = vrsqrt.pop %v7777
        %v7794 = vrsqrt.pop %v7778
        %v7795 = vrsqrt.pop %v7779
        %v7796 = vrsqrt.pop %v7780
        %v7797 = vmul.f32 %v7669, %v7781
        %v7798 = vmul.f32 %v7670, %v7782
        %v7799 = vmul.f32 %v7671, %v7783
        %v7800 = vmul.f32 %v7672, %v7784
        %v7801 = vmul.f32 %v7673, %v7785
        %v7802 = vmul.f32 %v7674, %v7786
        %v7803 = vmul.f32 %v7675, %v7787
        %v7804 = vmul.f32 %v7676, %v7788
        %v7805 = vmul.f32 %v7677, %v7789
        %v7806 = vmul.f32 %v7678, %v7790
        %v7807 = vmul.f32 %v7679, %v7791
        %v7808 = vmul.f32 %v7680, %v7792
        %v7809 = vmul.f32 %v7681, %v7793
        %v7810 = vmul.f32 %v7682, %v7794
        %v7811 = vmul.f32 %v7683, %v7795
        %v7812 = vmul.f32 %v7684, %v7796
        %v7813 = vlaneseq
        %v7814 = vshrl.u32 %v7813, 7
        %v7815 = vsub.s32 7, %v7814
        %v7816 = vrot.slane %v756, %v7815
        %v7817 = vmul.f32 %v7797, %v7816
        %v7818 = vmul.f32 %v7798, %v7816
        %v7819 = vmul.f32 %v7799, %v7816
        %v7820 = vmul.f32 %v7800, %v7816
        %v7821 = vmul.f32 %v7801, %v7816
        %v7822 = vmul.f32 %v7802, %v7816
        %v7823 = vmul.f32 %v7803, %v7816
        %v7824 = vmul.f32 %v7804, %v7816
        %v7825 = vmul.f32 %v7805, %v7816
        %v7826 = vmul.f32 %v7806, %v7816
        %v7827 = vmul.f32 %v7807, %v7816
        %v7828 = vmul.f32 %v7808, %v7816
        %v7829 = vmul.f32 %v7809, %v7816
        %v7830 = vmul.f32 %v7810, %v7816
        %v7831 = vmul.f32 %v7811, %v7816
        %v7832 = vmul.f32 %v7812, %v7816
        %v7833 = vlaneseq
        %v7834 = vshrl.u32 %v7833, 7
        %v7835 = vsub.s32 0, %v7834
        %v7836 = vrot.slane %v757, %v7835
        %v7837 = vadd.f32 %v7817, %v7836
        %v7838 = vadd.f32 %v7818, %v7836
        %v7839 = vadd.f32 %v7819, %v7836
        %v7840 = vadd.f32 %v7820, %v7836
        %v7841 = vadd.f32 %v7821, %v7836
        %v7842 = vadd.f32 %v7822, %v7836
        %v7843 = vadd.f32 %v7823, %v7836
        %v7844 = vadd.f32 %v7824, %v7836
        %v7845 = vadd.f32 %v7825, %v7836
        %v7846 = vadd.f32 %v7826, %v7836
        %v7847 = vadd.f32 %v7827, %v7836
        %v7848 = vadd.f32 %v7828, %v7836
        %v7849 = vadd.f32 %v7829, %v7836
        %v7850 = vadd.f32 %v7830, %v7836
        %v7851 = vadd.f32 %v7831, %v7836
        %v7852 = vadd.f32 %v7832, %v7836
        %7853 = vst.msk [vmem:[#allocation2] sm:$0xff] %vm762, %v7837
        %7854 = vst.msk [vmem:[#allocation2 + $0x8] sm:$0xff] %vm762, %v7838
        %7855 = vst.msk [vmem:[#allocation2 + $0x10] sm:$0xff] %vm762, %v7839
        %7856 = vst.msk [vmem:[#allocation2 + $0x18] sm:$0xff] %vm762, %v7840
        %7857 = vst.msk [vmem:[#allocation2 + $0x20] sm:$0xff] %vm762, %v7841
        %7858 = vst.msk [vmem:[#allocation2 + $0x28] sm:$0xff] %vm762, %v7842
        %7859 = vst.msk [vmem:[#allocation2 + $0x30] sm:$0xff] %vm762, %v7843
        %7860 = vst.msk [vmem:[#allocation2 + $0x38] sm:$0xff] %vm762, %v7844
        %7861 = vst.msk [vmem:[#allocation2 + $0x40] sm:$0xff] %vm762, %v7845
        %7862 = vst.msk [vmem:[#allocation2 + $0x48] sm:$0xff] %vm762, %v7846
        %7863 = vst.msk [vmem:[#allocation2 + $0x50] sm:$0xff] %vm762, %v7847
        %7864 = vst.msk [vmem:[#allocation2 + $0x58] sm:$0xff] %vm762, %v7848
        %7865 = vst.msk [vmem:[#allocation2 + $0x60] sm:$0xff] %vm762, %v7849
        %7866 = vst.msk [vmem:[#allocation2 + $0x68] sm:$0xff] %vm762, %v7850
        %7867 = vst.msk [vmem:[#allocation2 + $0x70] sm:$0xff] %vm762, %v7851
        %7868 = vst.msk [vmem:[#allocation2 + $0x78] sm:$0xff] %vm762, %v7852
        %p7869 = scmp.eq.s32.totalorder %s23, 1
        // Predicated region
        $region69: #{encoder_forward.1} parent=63 // pred_check
          %p7870 = pneg %p7869
        $region70: #{encoder_forward.1} parent=63 // pred_check_branch
          %7872 = sbr.rel (%p7870) target = $region72
        $region71: #{encoder_forward.1} parent=63 // pred_region
          %v7873 = vld [vmem:[%s4] sm:$0xff]
          %v7874 = vld [vmem:[%s4 + $0x8] sm:$0xff]
          %v7875 = vld [vmem:[%s4 + $0x10] sm:$0xff]
          %v7876 = vld [vmem:[%s4 + $0x18] sm:$0xff]
          %v7877 = vld [vmem:[%s4 + $0x20] sm:$0xff]
          %v7878 = vld [vmem:[%s4 + $0x28] sm:$0xff]
          %v7879 = vld [vmem:[%s4 + $0x30] sm:$0xff]
          %v7880 = vld [vmem:[%s4 + $0x38] sm:$0xff]
          %v7881 = vld [vmem:[%s4 + $0x40] sm:$0xff]
          %v7882 = vld [vmem:[%s4 + $0x48] sm:$0xff]
          %v7883 = vld [vmem:[%s4 + $0x50] sm:$0xff]
          %v7884 = vld [vmem:[%s4 + $0x58] sm:$0xff]
          %v7885 = vld [vmem:[%s4 + $0x60] sm:$0xff]
          %v7886 = vld [vmem:[%s4 + $0x68] sm:$0xff]
          %v7887 = vld [vmem:[%s4 + $0x70] sm:$0xff]
          %v7888 = vld [vmem:[%s4 + $0x78] sm:$0xff]
          %7890 = vset.pattern.permute.xlu0 0
          %7891 = vperm.xlu0 %7890, %v7873
          %v7892 = vpop.permute.xlu0 %7891
          %7895 = vset.pattern.permute.xlu0 0
          %7896 = vperm.xlu0 %7895, %v7874
          %v7897 = vpop.permute.xlu0 %7896
          %7900 = vset.pattern.permute.xlu0 0
          %7901 = vperm.xlu0 %7900, %v7875
          %v7902 = vpop.permute.xlu0 %7901
          %7905 = vset.pattern.permute.xlu0 0
          %7906 = vperm.xlu0 %7905, %v7876
          %v7907 = vpop.permute.xlu0 %7906
          %7910 = vset.pattern.permute.xlu0 0
          %7911 = vperm.xlu0 %7910, %v7877
          %v7912 = vpop.permute.xlu0 %7911
          %7915 = vset.pattern.permute.xlu0 0
          %7916 = vperm.xlu0 %7915, %v7878
          %v7917 = vpop.permute.xlu0 %7916
          %7920 = vset.pattern.permute.xlu0 0
          %7921 = vperm.xlu0 %7920, %v7879
          %v7922 = vpop.permute.xlu0 %7921
          %7925 = vset.pattern.permute.xlu0 0
          %7926 = vperm.xlu0 %7925, %v7880
          %v7927 = vpop.permute.xlu0 %7926
          %7930 = vset.pattern.permute.xlu0 0
          %7931 = vperm.xlu0 %7930, %v7881
          %v7932 = vpop.permute.xlu0 %7931
          %7935 = vset.pattern.permute.xlu0 0
          %7936 = vperm.xlu0 %7935, %v7882
          %v7937 = vpop.permute.xlu0 %7936
          %7940 = vset.pattern.permute.xlu0 0
          %7941 = vperm.xlu0 %7940, %v7883
          %v7942 = vpop.permute.xlu0 %7941
          %7945 = vset.pattern.permute.xlu0 0
          %7946 = vperm.xlu0 %7945, %v7884
          %v7947 = vpop.permute.xlu0 %7946
          %7950 = vset.pattern.permute.xlu0 0
          %7951 = vperm.xlu0 %7950, %v7885
          %v7952 = vpop.permute.xlu0 %7951
          %7955 = vset.pattern.permute.xlu0 0
          %7956 = vperm.xlu0 %7955, %v7886
          %v7957 = vpop.permute.xlu0 %7956
          %7960 = vset.pattern.permute.xlu0 0
          %7961 = vperm.xlu0 %7960, %v7887
          %v7962 = vpop.permute.xlu0 %7961
          %7965 = vset.pattern.permute.xlu0 0
          %7966 = vperm.xlu0 %7965, %v7888
          %v7967 = vpop.permute.xlu0 %7966
          %v7969 = vmul.f32 %v7837, %v7892
          %v7970 = vmul.f32 %v7838, %v7897
          %v7971 = vmul.f32 %v7839, %v7902
          %v7972 = vmul.f32 %v7840, %v7907
          %v7973 = vmul.f32 %v7841, %v7912
          %v7974 = vmul.f32 %v7842, %v7917
          %v7975 = vmul.f32 %v7843, %v7922
          %v7976 = vmul.f32 %v7844, %v7927
          %v7977 = vmul.f32 %v7845, %v7932
          %v7978 = vmul.f32 %v7846, %v7937
          %v7979 = vmul.f32 %v7847, %v7942
          %v7980 = vmul.f32 %v7848, %v7947
          %v7981 = vmul.f32 %v7849, %v7952
          %v7982 = vmul.f32 %v7850, %v7957
          %v7983 = vmul.f32 %v7851, %v7962
          %v7984 = vmul.f32 %v7852, %v7967
          %7985 = vst.msk [vmem:[#allocation3] sm:$0xff] %vm762, %v7969
          %7986 = vst.msk [vmem:[#allocation3 + $0x8] sm:$0xff] %vm762, %v7970
          %7987 = vst.msk [vmem:[#allocation3 + $0x10] sm:$0xff] %vm762, %v7971
          %7988 = vst.msk [vmem:[#allocation3 + $0x18] sm:$0xff] %vm762, %v7972
          %7989 = vst.msk [vmem:[#allocation3 + $0x20] sm:$0xff] %vm762, %v7973
          %7990 = vst.msk [vmem:[#allocation3 + $0x28] sm:$0xff] %vm762, %v7974
          %7991 = vst.msk [vmem:[#allocation3 + $0x30] sm:$0xff] %vm762, %v7975
          %7992 = vst.msk [vmem:[#allocation3 + $0x38] sm:$0xff] %vm762, %v7976
          %7993 = vst.msk [vmem:[#allocation3 + $0x40] sm:$0xff] %vm762, %v7977
          %7994 = vst.msk [vmem:[#allocation3 + $0x48] sm:$0xff] %vm762, %v7978
          %7995 = vst.msk [vmem:[#allocation3 + $0x50] sm:$0xff] %vm762, %v7979
          %7996 = vst.msk [vmem:[#allocation3 + $0x58] sm:$0xff] %vm762, %v7980
          %7997 = vst.msk [vmem:[#allocation3 + $0x60] sm:$0xff] %vm762, %v7981
          %7998 = vst.msk [vmem:[#allocation3 + $0x68] sm:$0xff] %vm762, %v7982
          %7999 = vst.msk [vmem:[#allocation3 + $0x70] sm:$0xff] %vm762, %v7983
          %8000 = vst.msk [vmem:[#allocation3 + $0x78] sm:$0xff] %vm762, %v7984
        $region72: #{encoder_forward.1} parent=63 // pred_fallthru
          _
        // Predicated region
        $region73: #{encoder_forward.1} parent=63 // pred_check
          %p8001 = pneg %p297
        $region74: #{encoder_forward.1} parent=63 // pred_check_branch
          %8003 = sbr.rel (%p8001) target = $region76
        $region75: #{encoder_forward.1} parent=63 // pred_region
          %s8005 = ssub.s32 2048, 2048
          %8006 = vsyncadd [#allocation4], %s8005
          %s8007 = sshll.u32 [#allocation3], 4
          %s8008 = int_to_ptr.vmem [resolvable:$true] %s8007
          %8013 = dma.vmem_to_hbm [thread:$0]  %s8008, 2048, %s11, [#allocation4], 128, 128, 8
        $region76: #{encoder_forward.1} parent=63 // pred_fallthru
          _
        // Predicated region
        $region77: #{encoder_forward.1} parent=63 // pred_check
          %p8014 = pneg %p297
        $region78: #{encoder_forward.1} parent=63 // pred_check_branch
          %8016 = sbr.rel (%p8014) target = $region80
        $region79: #{encoder_forward.1} parent=63 // pred_region
          %8017 = dma.done [#allocation4], 2048
        $region80: #{encoder_forward.1} parent=63 // pred_fallthru
          _
      $region64: #{encoder_forward.1} parent=5 // pred_fallthru
        _
      %p8018 = scmp.le.s32.totalorder 2, %s18
      // Predicated region
      $region81: #{encoder_forward.1} parent=5 // pred_check
        %p8019 = pneg %p8018
      $region82: #{encoder_forward.1} parent=5 // pred_check_branch
        %8021 = sbr.rel (%p8019) target = $region84
      $region83: #{encoder_forward.1} parent=5 // pred_region
        %s8022 = ssub.s32 %s18, 2
      $region84: #{encoder_forward.1} parent=5 // pred_fallthru
        _
    $region6: #{encoder_forward.1} parent=1 // loop_footer
      %s22 = sadd.s32 1, %s18
    $region7: #{encoder_forward.1} parent=1 // loop_footer_branch
      %17 = sbr.rel target = $region3
    $region8: #{encoder_forward.1} parent=1 // loop_exit
      _
    %8023 = vsyncpa [#allocation4], 1
    %s8024 = scalar_lea.sflag [#allocation4], 1
    %8025 = vsyncpa %s8024, 1

</llo_original>
